<compile_context>
chip_gen: v7x
topology: tpu7x:2x2x1
jax: 0.10.0
libtpu: 0.0.40
codegen_flags: <defaults>
</compile_context>

<pallas_src>
import jax
import jax.numpy as jnp
from jax.experimental import pallas as pl
from jax.experimental.pallas import tpu as pltpu

# ---- synthetic config (mirrors GNN(config).__init__) ----
NODE_DIM = 32          # config.hidden_size
EDGE_DIM = 8           # config.edge_size
MSG_LEN = 8            # config.message_length
NUM_GNN_LAYERS = 2     # config.num_GNN_layers
SHRINK_DIM = 8         # config.shrink_node_feature_dim (== EDGE_DIM so the
                       # elementwise shrink*edge broadcast in the module is valid)
MLP_HIDDEN = 128       # MLP default hidden_size
NUM_HEADS = 4          # config.num_attention_heads
EDGE_UPDATE_WEIGHT = 0.2

BATCH = 8
NUM_NODES = 8

F32 = jnp.float32
BF16 = jnp.bfloat16


def gnn_kernel(node_ref, edge_ref, r_self_ref, s_sum_ref,
               wsh_ref, bsh_ref,
               wm1_ref, wm2_ref, wm3_ref,
               wn1a_ref, wn1b_ref, wn2_ref, wn3_ref,
               wsab_ref, bsab_ref, we1c_ref, we2_ref, we3_ref,
               wmask_ref, bmask_ref,
               node_out_ref, edge_out_ref):
    node = node_ref[...]          # (TB*N, Dn)      f32
    edge = edge_ref[...]          # (TB*N*N, De)    f32, row e = (b*N+i)*N + j
    r_self = r_self_ref[...]      # (TB*N*N, TB*N)  bf16 0/1: picks node (b, i)
    s_sum = s_sum_ref[...]        # (TB*N, TB*N*N)  bf16 1/N: mean over j

    wsh = wsh_ref[...]; bsh = bsh_ref[...]
    wm1 = wm1_ref[...]; wm2 = wm2_ref[...]; wm3 = wm3_ref[...]
    wn1a = wn1a_ref[...]; wn1b = wn1b_ref[...]
    wn2 = wn2_ref[...]; wn3 = wn3_ref[...]
    wsab = wsab_ref[...]; bsab = bsab_ref[...]
    we1c = we1c_ref[...]; we2 = we2_ref[...]; we3 = we3_ref[...]
    wmask = wmask_ref[...]; bmask = bmask_ref[...]

    n = NUM_NODES
    tile_b = node.shape[0] // n

    def mxu(x_bf, w_bf):
        """MXU matmul: bf16 operands (already cast), f32 accumulation."""
        return jnp.dot(x_bf, w_bf, preferred_element_type=F32)

    def repl_nb(x):
        """(TB*N, D) -> (TB*N*N, D): row (b*N+i)*N + j gets x[b*N + j].

        Per batch the N-row block is tiled N times along rows.  This is a
        leading-dim broadcast plus tile-aligned reshapes (the second-minor dim
        stays a multiple of 8), i.e. cheap VMEM copies off the MXU.
        """
        _, d = x.shape
        x3 = x.reshape(tile_b, n, d)
        x4 = jnp.broadcast_to(x3[:, None, :, :], (tile_b, n, n, d))
        return x4.reshape(tile_b * n * n, d)

    def mlp_tail(h, w2, w3):
        h = jnp.maximum(mxu(h.astype(BF16), w2), 0.0)
        return mxu(h.astype(BF16), w3)

    # Networks are shared across GNN layers, exactly as in the PyTorch module.
    for _ in range(NUM_GNN_LAYERS):
        node_bf = node.astype(BF16)     # feeds wsh and wn1a
        edge_bf = edge.astype(BF16)     # feeds we1c

        # --- message passing ---
        shrink = mxu(node_bf, wsh) + bsh                     # (TBN, Dsh) f32
        messages_all = repl_nb(shrink) * edge                # (TBNN, Dsh) f32
        # mean over neighbours j; 1/N is folded into s_sum in the wrapper
        message = mxu(s_sum, messages_all.astype(BF16))      # (TBN, Dsh) f32
        h = jnp.maximum(mxu(message.astype(BF16), wm1), 0.0)
        message = mlp_tail(h, wm2, wm3)                      # (TBN, MSG_LEN)

        # --- node update: MLP(cat(node, message)) via split first-layer weight ---
        h = jnp.maximum(mxu(node_bf, wn1a)
                        + mxu(message.astype(BF16), wn1b), 0.0)
        node = node + mlp_tail(h, wn2, wn3)                  # (TBN, Dn)

        # --- edge update ---
        # (node @ wsh + bsh) @ [we1a | we1b] is precomposed into wsab/bsab, so
        # the whole self/neighbor first-layer contribution is ONE matmul.
        a = mxu(node.astype(BF16), wsab) + bsab              # (TBN, 2H) f32
        a_self = a[:, :MLP_HIDDEN]                           # we1a part
        a_nb = a[:, MLP_HIDDEN:]                             # we1b part
        # TODO(synk): the self-path replication needs a sublane (second-minor
        # 1->N) broadcast; until that Mosaic lowering is verified it stays as
        # one small 0/1 selection matmul.
        h = jnp.maximum(mxu(r_self, a_self.astype(BF16))
                        + repl_nb(a_nb)
                        + mxu(edge_bf, we1c), 0.0)           # (TBNN, H)
        new_edge = mlp_tail(h, we2, we3)                     # (TBNN, De)
        mask = (edge > 0.0).astype(F32) * EDGE_UPDATE_WEIGHT
        edge = edge + new_edge * mask

    node_out_ref[...] = node
    # build_edge_mask head: Linear(De -> num_attention_heads)
    edge_out_ref[...] = mxu(edge.astype(BF16), wmask) + bmask


def _selection_matrices(tile_b, n):
    """Self-selection matrix and the (1/N)-scaled mean matrix, block diagonal
    over the tile_b batches of one grid step."""
    nn_t = tile_b * n * n
    nv_t = tile_b * n
    e = jnp.arange(nn_t)
    v = jnp.arange(nv_t)
    self_idx = e // n                              # row e picks node (b, i)
    sel = self_idx[:, None] == v[None, :]
    r_self = sel.astype(BF16)                      # (NN_T, NV_T)
    s_sum = (sel.T.astype(F32) * (1.0 / n)).astype(BF16)   # (NV_T, NN_T), 1/N exact in bf16
    return r_self, s_sum


def _default_tile_b(batch):
    """Pick TILE_B so there is exactly one grid step per TensorCore.

    v5e/v6e are single-TC -> grid=1 (biggest M, no per-step fixed overhead).
    v7x has 2 TCs -> grid=2 so both cores get a step.  (If the production
    batch grows, size TILE_B so each v7x core gets >= 2 steps and the weight /
    selection-matrix prologue DMA is hidden by the pipeline.)
    """
    try:
        kind = jax.devices()[0].device_kind.lower()
    except Exception:
        kind = ""
    num_tc = 2 if ("v7" in kind or "7x" in kind) else 1
    tile_b = max(1, batch // num_tc)
    while batch % tile_b:
        tile_b -= 1
    return tile_b


def _derived_weights(params):
    """Fold node_shrink through the edge-MLP first layer (self|neighbor parts)."""
    we1ab = jnp.concatenate([params["we1a"], params["we1b"]], axis=1)  # (Dsh, 2H)
    wsab = params["wsh"] @ we1ab                                       # (Dn, 2H)
    bsab = params["bsh"] @ we1ab                                       # (1, 2H)
    return wsab, bsab


def gnn_forward(node, edge4, params, tile_b=None):
    B, N, Dn = node.shape
    De = edge4.shape[-1]
    assert edge4.shape == (B, N, N, De)
    if tile_b is None:
        tile_b = _default_tile_b(B)
    assert B % tile_b == 0, "BATCH must be divisible by TILE_B"
    NV_T = tile_b * N
    NN_T = tile_b * N * N

    node_flat = node.reshape(B * N, Dn)
    edge_flat = edge4.reshape(B * N * N, De)
    r_self, s_sum = _selection_matrices(tile_b, N)

    wsab, bsab = _derived_weights(params)
    biases = {"bsh", "bsab", "bmask"}          # stay f32 (added post-accumulation)
    named = [("wsh", params["wsh"]), ("bsh", params["bsh"]),
             ("wm1", params["wm1"]), ("wm2", params["wm2"]), ("wm3", params["wm3"]),
             ("wn1a", params["wn1a"]), ("wn1b", params["wn1b"]),
             ("wn2", params["wn2"]), ("wn3", params["wn3"]),
             ("wsab", wsab), ("bsab", bsab),
             ("we1c", params["we1c"]), ("we2", params["we2"]), ("we3", params["we3"]),
             ("wmask", params["wmask"]), ("bmask", params["bmask"])]
    weights = [w if k in biases else w.astype(BF16) for k, w in named]

    def full_spec(w):
        nd = w.ndim
        return pl.BlockSpec(w.shape, lambda b, _nd=nd: (0,) * _nd)

    in_specs = (
        [pl.BlockSpec((NV_T, Dn), lambda b: (b, 0)),         # node tile
         pl.BlockSpec((NN_T, De), lambda b: (b, 0)),         # edge tile
         full_spec(r_self), full_spec(s_sum)]
        + [full_spec(w) for w in weights])

    # Outputs stay in the natural (rows, small-feature) layout: only ~24 KB per
    # step, so lane-dense repacking would cost more than the masked stores.
    out_specs = (pl.BlockSpec((NV_T, Dn), lambda b: (b, 0)),
                 pl.BlockSpec((NN_T, NUM_HEADS), lambda b: (b, 0)))

    # Advisory cost estimate for XLA's scheduler (useful MACs x2).
    H = MLP_HIDDEN
    mlp_msg = SHRINK_DIM * H + H * H + H * MSG_LEN
    mlp_node = (NODE_DIM + MSG_LEN) * H + H * H + H * NODE_DIM
    per_layer = (N * NODE_DIM * SHRINK_DIM                 # shrink
                 + N * N * N * SHRINK_DIM                  # neighbour mean
                 + N * (mlp_msg + mlp_node)
                 + N * NODE_DIM * 2 * H                    # fused wsab
                 + N * N * N * H                           # r_self gather
                 + N * N * (EDGE_DIM * H + H * H + H * EDGE_DIM))
    flops = 2 * B * (NUM_GNN_LAYERS * per_layer + N * N * EDGE_DIM * NUM_HEADS)
    bytes_accessed = (node_flat.nbytes + edge_flat.nbytes
                      + r_self.nbytes + s_sum.nbytes
                      + sum(int(w.nbytes) for w in weights)
                      + B * N * Dn * 4 + B * N * N * NUM_HEADS * 4)

    node_out, edge_out_flat = pl.pallas_call(
        gnn_kernel,
        out_shape=(jax.ShapeDtypeStruct((B * N, Dn), F32),
                   jax.ShapeDtypeStruct((B * N * N, NUM_HEADS), F32)),
        grid=(B // tile_b,),
        in_specs=in_specs,
        out_specs=out_specs,
        cost_estimate=pl.CostEstimate(flops=int(flops), transcendentals=0,
                                      bytes_accessed=int(bytes_accessed)),
        compiler_params=pltpu.CompilerParams(dimension_semantics=("parallel",)),
    )(node_flat, edge_flat, r_self, s_sum, *weights)

    return node_out.reshape(B, N, Dn), edge_out_flat.reshape(B, N, N, NUM_HEADS)


def init_params(key):
    ks = jax.random.split(key, 16)

    def w(k, shape, scale=0.1):
        return (scale * jax.random.normal(k, shape)).astype(F32)

    return {
        "wsh":   w(ks[0], (NODE_DIM, SHRINK_DIM)),
        "bsh":   w(ks[1], (1, SHRINK_DIM)),
        "wm1":   w(ks[2], (SHRINK_DIM, MLP_HIDDEN)),
        "wm2":   w(ks[3], (MLP_HIDDEN, MLP_HIDDEN)),
        "wm3":   w(ks[4], (MLP_HIDDEN, MSG_LEN)),
        "wn1a":  w(ks[5], (NODE_DIM, MLP_HIDDEN)),    # first-layer weight, node part
        "wn1b":  w(ks[6], (MSG_LEN, MLP_HIDDEN)),     # first-layer weight, message part
        "wn2":   w(ks[7], (MLP_HIDDEN, MLP_HIDDEN)),
        "wn3":   w(ks[8], (MLP_HIDDEN, NODE_DIM)),
        "we1a":  w(ks[9], (SHRINK_DIM, MLP_HIDDEN)),  # shrink_self part
        "we1b":  w(ks[10], (SHRINK_DIM, MLP_HIDDEN)), # shrink_neighbor part
        "we1c":  w(ks[11], (EDGE_DIM, MLP_HIDDEN)),   # edge part
        "we2":   w(ks[12], (MLP_HIDDEN, MLP_HIDDEN)),
        "we3":   w(ks[13], (MLP_HIDDEN, EDGE_DIM)),
        "wmask": w(ks[14], (EDGE_DIM, NUM_HEADS)),
        "bmask": w(ks[15], (1, NUM_HEADS)),
    }


def gnn_reference(node, edge4, p):
    """Pure-JAX reference mirroring the PyTorch forward structure.

    It applies the same matmul precision policy as the kernel (bf16 operands,
    f32 accumulation); broadcasts, mean, relu, masks and residuals are f32.
    (The kernel additionally composes wsh into the edge-MLP first layer, so
    small bf16-level differences remain.)
    """
    def dotb(x, w):
        return jnp.einsum("...i,ij->...j", x.astype(BF16), w.astype(BF16),
                          preferred_element_type=F32)

    def mlp3(x, w1, w2, w3):
        h = jnp.maximum(dotb(x, w1), 0.0)
        h = jnp.maximum(dotb(h, w2), 0.0)
        return dotb(h, w3)

    B, N, _ = node.shape
    wn1 = jnp.concatenate([p["wn1a"], p["wn1b"]], axis=0)
    we1 = jnp.concatenate([p["we1a"], p["we1b"], p["we1c"]], axis=0)
    for _ in range(NUM_GNN_LAYERS):
        shrink = dotb(node, p["wsh"]) + p["bsh"]
        rep_nb = jnp.broadcast_to(shrink[:, None, :, :], (B, N, N, SHRINK_DIM))
        message = (rep_nb * edge4).mean(axis=2)
        message = mlp3(message, p["wm1"], p["wm2"], p["wm3"])
        node = node + mlp3(jnp.concatenate([node, message], axis=-1),
                           wn1, p["wn2"], p["wn3"])
        shrink = dotb(node, p["wsh"]) + p["bsh"]
        rep_self = jnp.broadcast_to(shrink[:, :, None, :], (B, N, N, SHRINK_DIM))
        rep_nb = jnp.broadcast_to(shrink[:, None, :, :], (B, N, N, SHRINK_DIM))
        ein = jnp.concatenate([rep_self, rep_nb, edge4], axis=-1)
        new_edge = mlp3(ein, we1, p["we2"], p["we3"])
        mask = (edge4 > 0).astype(F32) * EDGE_UPDATE_WEIGHT
        edge4 = edge4 + new_edge * mask
    edge_out = dotb(edge4, p["wmask"]) + p["bmask"][0]
    return node, edge_out


if __name__ == "__main__":
    key = jax.random.PRNGKey(0)
    kp, kn, ke = jax.random.split(key, 3)
    params = init_params(kp)
    node = jax.random.normal(kn, (BATCH, NUM_NODES, NODE_DIM), dtype=F32)
    edge_raw = jax.random.normal(
        ke, (BATCH, NUM_NODES, NUM_NODES, EDGE_DIM), dtype=F32)
    # Keep |edge| >= 0.5 so the discrete (edge > 0) update mask is not sensitive
    # to sub-1e-3 differences between the bf16 MXU path and the reference.
    edge = jnp.where(edge_raw >= 0, edge_raw + 0.5, edge_raw - 0.5)

    node_out, edge_out = gnn_forward(node, edge, params)
    jax.block_until_ready((node_out, edge_out))

    node_ref, edge_ref = gnn_reference(node, edge, params)
    assert node_out.shape == (BATCH, NUM_NODES, NODE_DIM)
    assert edge_out.shape == (BATCH, NUM_NODES, NUM_NODES, NUM_HEADS)
    # Tolerance reflects the bf16-operand matmul policy plus the f32-composed
    # (wsh @ we1a|we1b) weight; typical max-abs diff is a few 1e-3.
    assert jnp.allclose(node_out, node_ref, rtol=2e-2, atol=2e-2), (
        float(jnp.max(jnp.abs(node_out - node_ref))))
    assert jnp.allclose(edge_out, edge_ref, rtol=2e-2, atol=2e-2), (
        float(jnp.max(jnp.abs(edge_out - edge_ref))))
    print("KERNEL_OK")
</pallas_src>

<mosaic_0001>
module attributes {stable_mosaic.version = 11 : i64} {
  func.func @gnn_kernel(%arg0: i32, %arg1: memref<64x32xf32, #tpu.memory_space<vmem>>, %arg2: memref<512x8xf32, #tpu.memory_space<vmem>>, %arg3: memref<512x64xbf16, #tpu.memory_space<vmem>>, %arg4: memref<64x512xbf16, #tpu.memory_space<vmem>>, %arg5: memref<32x8xbf16, #tpu.memory_space<vmem>>, %arg6: memref<1x8xf32, #tpu.memory_space<vmem>>, %arg7: memref<8x128xbf16, #tpu.memory_space<vmem>>, %arg8: memref<128x128xbf16, #tpu.memory_space<vmem>>, %arg9: memref<128x8xbf16, #tpu.memory_space<vmem>>, %arg10: memref<32x128xbf16, #tpu.memory_space<vmem>>, %arg11: memref<8x128xbf16, #tpu.memory_space<vmem>>, %arg12: memref<128x128xbf16, #tpu.memory_space<vmem>>, %arg13: memref<128x32xbf16, #tpu.memory_space<vmem>>, %arg14: memref<32x256xbf16, #tpu.memory_space<vmem>>, %arg15: memref<1x256xf32, #tpu.memory_space<vmem>>, %arg16: memref<8x128xbf16, #tpu.memory_space<vmem>>, %arg17: memref<128x128xbf16, #tpu.memory_space<vmem>>, %arg18: memref<128x8xbf16, #tpu.memory_space<vmem>>, %arg19: memref<8x4xbf16, #tpu.memory_space<vmem>>, %arg20: memref<1x4xf32, #tpu.memory_space<vmem>>, %arg21: memref<64x32xf32, #tpu.memory_space<vmem>>, %arg22: memref<512x4xf32, #tpu.memory_space<vmem>>) attributes {dimension_semantics = [#tpu.dimension_semantics<parallel>], iteration_bounds = array<i64: 1>, scalar_prefetch = 0 : i64, scratch_operands = 0 : i64, tpu.core_type = #tpu.core_type<tc>, window_params = [{transform_indices = @transform_0, window_bounds = array<i64: 64, 32>}, {transform_indices = @transform_1, window_bounds = array<i64: 512, 8>}, {pipeline_mode = #tpu.pipeline_mode<synchronous>, transform_indices = @transform_2, window_bounds = array<i64: 512, 64>}, {pipeline_mode = #tpu.pipeline_mode<synchronous>, transform_indices = @transform_3, window_bounds = array<i64: 64, 512>}, {pipeline_mode = #tpu.pipeline_mode<synchronous>, transform_indices = @transform_4, window_bounds = array<i64: 32, 8>}, {pipeline_mode = #tpu.pipeline_mode<synchronous>, transform_indices = @transform_5, window_bounds = array<i64: 1, 8>}, {pipeline_mode = #tpu.pipeline_mode<synchronous>, transform_indices = @transform_6, window_bounds = array<i64: 8, 128>}, {pipeline_mode = #tpu.pipeline_mode<synchronous>, transform_indices = @transform_7, window_bounds = array<i64: 128, 128>}, {pipeline_mode = #tpu.pipeline_mode<synchronous>, transform_indices = @transform_8, window_bounds = array<i64: 128, 8>}, {pipeline_mode = #tpu.pipeline_mode<synchronous>, transform_indices = @transform_9, window_bounds = array<i64: 32, 128>}, {pipeline_mode = #tpu.pipeline_mode<synchronous>, transform_indices = @transform_10, window_bounds = array<i64: 8, 128>}, {pipeline_mode = #tpu.pipeline_mode<synchronous>, transform_indices = @transform_11, window_bounds = array<i64: 128, 128>}, {pipeline_mode = #tpu.pipeline_mode<synchronous>, transform_indices = @transform_12, window_bounds = array<i64: 128, 32>}, {pipeline_mode = #tpu.pipeline_mode<synchronous>, transform_indices = @transform_13, window_bounds = array<i64: 32, 256>}, {pipeline_mode = #tpu.pipeline_mode<synchronous>, transform_indices = @transform_14, window_bounds = array<i64: 1, 256>}, {pipeline_mode = #tpu.pipeline_mode<synchronous>, transform_indices = @transform_15, window_bounds = array<i64: 8, 128>}, {pipeline_mode = #tpu.pipeline_mode<synchronous>, transform_indices = @transform_16, window_bounds = array<i64: 128, 128>}, {pipeline_mode = #tpu.pipeline_mode<synchronous>, transform_indices = @transform_17, window_bounds = array<i64: 128, 8>}, {pipeline_mode = #tpu.pipeline_mode<synchronous>, transform_indices = @transform_18, window_bounds = array<i64: 8, 4>}, {pipeline_mode = #tpu.pipeline_mode<synchronous>, transform_indices = @transform_19, window_bounds = array<i64: 1, 4>}, {transform_indices = @transform_20, window_bounds = array<i64: 64, 32>}, {transform_indices = @transform_21, window_bounds = array<i64: 512, 4>}]} {
    %c0 = arith.constant 0 : index
    %c0_0 = arith.constant 0 : index
    %0 = vector.load %arg1[%c0, %c0_0] : memref<64x32xf32, #tpu.memory_space<vmem>>, vector<64x32xf32>
    %c0_1 = arith.constant 0 : index
    %c0_2 = arith.constant 0 : index
    %1 = vector.load %arg2[%c0_1, %c0_2] : memref<512x8xf32, #tpu.memory_space<vmem>>, vector<512x8xf32>
    %c0_3 = arith.constant 0 : index
    %c0_4 = arith.constant 0 : index
    %2 = vector.load %arg3[%c0_3, %c0_4] : memref<512x64xbf16, #tpu.memory_space<vmem>>, vector<512x64xbf16>
    %c0_5 = arith.constant 0 : index
    %c0_6 = arith.constant 0 : index
    %3 = vector.load %arg4[%c0_5, %c0_6] : memref<64x512xbf16, #tpu.memory_space<vmem>>, vector<64x512xbf16>
    %c0_7 = arith.constant 0 : index
    %c0_8 = arith.constant 0 : index
    %4 = vector.load %arg5[%c0_7, %c0_8] : memref<32x8xbf16, #tpu.memory_space<vmem>>, vector<32x8xbf16>
    %c0_9 = arith.constant 0 : index
    %c0_10 = arith.constant 0 : index
    %5 = vector.load %arg6[%c0_9, %c0_10] : memref<1x8xf32, #tpu.memory_space<vmem>>, vector<1x8xf32>
    %c0_11 = arith.constant 0 : index
    %c0_12 = arith.constant 0 : index
    %6 = vector.load %arg7[%c0_11, %c0_12] : memref<8x128xbf16, #tpu.memory_space<vmem>>, vector<8x128xbf16>
    %c0_13 = arith.constant 0 : index
    %c0_14 = arith.constant 0 : index
    %7 = vector.load %arg8[%c0_13, %c0_14] : memref<128x128xbf16, #tpu.memory_space<vmem>>, vector<128x128xbf16>
    %c0_15 = arith.constant 0 : index
    %c0_16 = arith.constant 0 : index
    %8 = vector.load %arg9[%c0_15, %c0_16] : memref<128x8xbf16, #tpu.memory_space<vmem>>, vector<128x8xbf16>
    %c0_17 = arith.constant 0 : index
    %c0_18 = arith.constant 0 : index
    %9 = vector.load %arg10[%c0_17, %c0_18] : memref<32x128xbf16, #tpu.memory_space<vmem>>, vector<32x128xbf16>
    %c0_19 = arith.constant 0 : index
    %c0_20 = arith.constant 0 : index
    %10 = vector.load %arg11[%c0_19, %c0_20] : memref<8x128xbf16, #tpu.memory_space<vmem>>, vector<8x128xbf16>
    %c0_21 = arith.constant 0 : index
    %c0_22 = arith.constant 0 : index
    %11 = vector.load %arg12[%c0_21, %c0_22] : memref<128x128xbf16, #tpu.memory_space<vmem>>, vector<128x128xbf16>
    %c0_23 = arith.constant 0 : index
    %c0_24 = arith.constant 0 : index
    %12 = vector.load %arg13[%c0_23, %c0_24] : memref<128x32xbf16, #tpu.memory_space<vmem>>, vector<128x32xbf16>
    %c0_25 = arith.constant 0 : index
    %c0_26 = arith.constant 0 : index
    %13 = vector.load %arg14[%c0_25, %c0_26] : memref<32x256xbf16, #tpu.memory_space<vmem>>, vector<32x256xbf16>
    %c0_27 = arith.constant 0 : index
    %c0_28 = arith.constant 0 : index
    %14 = vector.load %arg15[%c0_27, %c0_28] : memref<1x256xf32, #tpu.memory_space<vmem>>, vector<1x256xf32>
    %c0_29 = arith.constant 0 : index
    %c0_30 = arith.constant 0 : index
    %15 = vector.load %arg16[%c0_29, %c0_30] : memref<8x128xbf16, #tpu.memory_space<vmem>>, vector<8x128xbf16>
    %c0_31 = arith.constant 0 : index
    %c0_32 = arith.constant 0 : index
    %16 = vector.load %arg17[%c0_31, %c0_32] : memref<128x128xbf16, #tpu.memory_space<vmem>>, vector<128x128xbf16>
    %c0_33 = arith.constant 0 : index
    %c0_34 = arith.constant 0 : index
    %17 = vector.load %arg18[%c0_33, %c0_34] : memref<128x8xbf16, #tpu.memory_space<vmem>>, vector<128x8xbf16>
    %c0_35 = arith.constant 0 : index
    %c0_36 = arith.constant 0 : index
    %18 = vector.load %arg19[%c0_35, %c0_36] : memref<8x4xbf16, #tpu.memory_space<vmem>>, vector<8x4xbf16>
    %c0_37 = arith.constant 0 : index
    %c0_38 = arith.constant 0 : index
    %19 = vector.load %arg20[%c0_37, %c0_38] : memref<1x4xf32, #tpu.memory_space<vmem>>, vector<1x4xf32>
    %20 = arith.truncf %0 : vector<64x32xf32> to vector<64x32xbf16>
    %21 = arith.truncf %1 : vector<512x8xf32> to vector<512x8xbf16>
    %cst = arith.constant dense<0.000000e+00> : vector<64x8xf32>
    %22 = tpu.matmul %20, %4, %cst {dimension_numbers = #tpu.dot_dimension_numbers<[1], [0], [0], [1], [0, 0, 1, 1], [], []>} : vector<64x32xbf16>, vector<32x8xbf16>, vector<64x8xf32> -> vector<64x8xf32>
    %23 = vector.broadcast %5 : vector<1x8xf32> to vector<64x8xf32>
    %24 = arith.addf %22, %23 : vector<64x8xf32>
    %25 = vector.shape_cast %24 : vector<64x8xf32> to vector<8x8x8xf32>
    %26 = vector.shape_cast %25 : vector<8x8x8xf32> to vector<8x1x8x8xf32>
    %27 = vector.shape_cast %26 : vector<8x1x8x8xf32> to vector<8x1x8x8xf32>
    %28 = vector.broadcast %27 : vector<8x1x8x8xf32> to vector<8x8x8x8xf32>
    %29 = vector.shape_cast %28 : vector<8x8x8x8xf32> to vector<512x8xf32>
    %30 = arith.mulf %29, %1 : vector<512x8xf32>
    %31 = arith.truncf %30 : vector<512x8xf32> to vector<512x8xbf16>
    %cst_39 = arith.constant dense<0.000000e+00> : vector<64x8xf32>
    %32 = tpu.matmul %3, %31, %cst_39 {dimension_numbers = #tpu.dot_dimension_numbers<[1], [0], [0], [1], [0, 0, 1, 1], [], []>} : vector<64x512xbf16>, vector<512x8xbf16>, vector<64x8xf32> -> vector<64x8xf32>
    %33 = arith.truncf %32 : vector<64x8xf32> to vector<64x8xbf16>
    %cst_40 = arith.constant dense<0.000000e+00> : vector<64x128xf32>
    %34 = tpu.matmul %33, %6, %cst_40 {dimension_numbers = #tpu.dot_dimension_numbers<[1], [0], [0], [1], [0, 0, 1, 1], [], []>} : vector<64x8xbf16>, vector<8x128xbf16>, vector<64x128xf32> -> vector<64x128xf32>
    %cst_41 = arith.constant 0.000000e+00 : f32
    %35 = vector.broadcast %cst_41 : f32 to vector<64x128xf32>
    %36 = arith.maximumf %34, %35 : vector<64x128xf32>
    %37 = arith.truncf %36 : vector<64x128xf32> to vector<64x128xbf16>
    %cst_42 = arith.constant dense<0.000000e+00> : vector<64x128xf32>
    %38 = tpu.matmul %37, %7, %cst_42 {dimension_numbers = #tpu.dot_dimension_numbers<[1], [0], [0], [1], [0, 0, 1, 1], [], []>} : vector<64x128xbf16>, vector<128x128xbf16>, vector<64x128xf32> -> vector<64x128xf32>
    %cst_43 = arith.constant 0.000000e+00 : f32
    %39 = vector.broadcast %cst_43 : f32 to vector<64x128xf32>
    %40 = arith.maximumf %38, %39 : vector<64x128xf32>
    %41 = arith.truncf %40 : vector<64x128xf32> to vector<64x128xbf16>
    %cst_44 = arith.constant dense<0.000000e+00> : vector<64x8xf32>
    %42 = tpu.matmul %41, %8, %cst_44 {dimension_numbers = #tpu.dot_dimension_numbers<[1], [0], [0], [1], [0, 0, 1, 1], [], []>} : vector<64x128xbf16>, vector<128x8xbf16>, vector<64x8xf32> -> vector<64x8xf32>
    %cst_45 = arith.constant dense<0.000000e+00> : vector<64x128xf32>
    %43 = tpu.matmul %20, %9, %cst_45 {dimension_numbers = #tpu.dot_dimension_numbers<[1], [0], [0], [1], [0, 0, 1, 1], [], []>} : vector<64x32xbf16>, vector<32x128xbf16>, vector<64x128xf32> -> vector<64x128xf32>
    %44 = arith.truncf %42 : vector<64x8xf32> to vector<64x8xbf16>
    %cst_46 = arith.constant dense<0.000000e+00> : vector<64x128xf32>
    %45 = tpu.matmul %44, %10, %cst_46 {dimension_numbers = #tpu.dot_dimension_numbers<[1], [0], [0], [1], [0, 0, 1, 1], [], []>} : vector<64x8xbf16>, vector<8x128xbf16>, vector<64x128xf32> -> vector<64x128xf32>
    %46 = arith.addf %43, %45 : vector<64x128xf32>
    %cst_47 = arith.constant 0.000000e+00 : f32
    %47 = vector.broadcast %cst_47 : f32 to vector<64x128xf32>
    %48 = arith.maximumf %46, %47 : vector<64x128xf32>
    %49 = arith.truncf %48 : vector<64x128xf32> to vector<64x128xbf16>
    %cst_48 = arith.constant dense<0.000000e+00> : vector<64x128xf32>
    %50 = tpu.matmul %49, %11, %cst_48 {dimension_numbers = #tpu.dot_dimension_numbers<[1], [0], [0], [1], [0, 0, 1, 1], [], []>} : vector<64x128xbf16>, vector<128x128xbf16>, vector<64x128xf32> -> vector<64x128xf32>
    %cst_49 = arith.constant 0.000000e+00 : f32
    %51 = vector.broadcast %cst_49 : f32 to vector<64x128xf32>
    %52 = arith.maximumf %50, %51 : vector<64x128xf32>
    %53 = arith.truncf %52 : vector<64x128xf32> to vector<64x128xbf16>
    %cst_50 = arith.constant dense<0.000000e+00> : vector<64x32xf32>
    %54 = tpu.matmul %53, %12, %cst_50 {dimension_numbers = #tpu.dot_dimension_numbers<[1], [0], [0], [1], [0, 0, 1, 1], [], []>} : vector<64x128xbf16>, vector<128x32xbf16>, vector<64x32xf32> -> vector<64x32xf32>
    %55 = arith.addf %0, %54 : vector<64x32xf32>
    %56 = arith.truncf %55 : vector<64x32xf32> to vector<64x32xbf16>
    %cst_51 = arith.constant dense<0.000000e+00> : vector<64x256xf32>
    %57 = tpu.matmul %56, %13, %cst_51 {dimension_numbers = #tpu.dot_dimension_numbers<[1], [0], [0], [1], [0, 0, 1, 1], [], []>} : vector<64x32xbf16>, vector<32x256xbf16>, vector<64x256xf32> -> vector<64x256xf32>
    %58 = vector.broadcast %14 : vector<1x256xf32> to vector<64x256xf32>
    %59 = arith.addf %57, %58 : vector<64x256xf32>
    %60 = vector.extract_strided_slice %59 {offsets = [0, 0], sizes = [64, 128], strides = [1, 1]} : vector<64x256xf32> to vector<64x128xf32>
    %61 = vector.extract_strided_slice %59 {offsets = [0, 128], sizes = [64, 128], strides = [1, 1]} : vector<64x256xf32> to vector<64x128xf32>
    %62 = arith.truncf %60 : vector<64x128xf32> to vector<64x128xbf16>
    %cst_52 = arith.constant dense<0.000000e+00> : vector<512x128xf32>
    %63 = tpu.matmul %2, %62, %cst_52 {dimension_numbers = #tpu.dot_dimension_numbers<[1], [0], [0], [1], [0, 0, 1, 1], [], []>} : vector<512x64xbf16>, vector<64x128xbf16>, vector<512x128xf32> -> vector<512x128xf32>
    %64 = vector.shape_cast %61 : vector<64x128xf32> to vector<8x8x128xf32>
    %65 = vector.shape_cast %64 : vector<8x8x128xf32> to vector<8x1x8x128xf32>
    %66 = vector.shape_cast %65 : vector<8x1x8x128xf32> to vector<8x1x8x128xf32>
    %67 = vector.broadcast %66 : vector<8x1x8x128xf32> to vector<8x8x8x128xf32>
    %68 = vector.shape_cast %67 : vector<8x8x8x128xf32> to vector<512x128xf32>
    %69 = arith.addf %63, %68 : vector<512x128xf32>
    %cst_53 = arith.constant dense<0.000000e+00> : vector<512x128xf32>
    %70 = tpu.matmul %21, %15, %cst_53 {dimension_numbers = #tpu.dot_dimension_numbers<[1], [0], [0], [1], [0, 0, 1, 1], [], []>} : vector<512x8xbf16>, vector<8x128xbf16>, vector<512x128xf32> -> vector<512x128xf32>
    %71 = arith.addf %69, %70 : vector<512x128xf32>
    %cst_54 = arith.constant 0.000000e+00 : f32
    %72 = vector.broadcast %cst_54 : f32 to vector<512x128xf32>
    %73 = arith.maximumf %71, %72 : vector<512x128xf32>
    %74 = arith.truncf %73 : vector<512x128xf32> to vector<512x128xbf16>
    %cst_55 = arith.constant dense<0.000000e+00> : vector<512x128xf32>
    %75 = tpu.matmul %74, %16, %cst_55 {dimension_numbers = #tpu.dot_dimension_numbers<[1], [0], [0], [1], [0, 0, 1, 1], [], []>} : vector<512x128xbf16>, vector<128x128xbf16>, vector<512x128xf32> -> vector<512x128xf32>
    %cst_56 = arith.constant 0.000000e+00 : f32
    %76 = vector.broadcast %cst_56 : f32 to vector<512x128xf32>
    %77 = arith.maximumf %75, %76 : vector<512x128xf32>
    %78 = arith.truncf %77 : vector<512x128xf32> to vector<512x128xbf16>
    %cst_57 = arith.constant dense<0.000000e+00> : vector<512x8xf32>
    %79 = tpu.matmul %78, %17, %cst_57 {dimension_numbers = #tpu.dot_dimension_numbers<[1], [0], [0], [1], [0, 0, 1, 1], [], []>} : vector<512x128xbf16>, vector<128x8xbf16>, vector<512x8xf32> -> vector<512x8xf32>
    %cst_58 = arith.constant 0.000000e+00 : f32
    %80 = vector.broadcast %cst_58 : f32 to vector<512x8xf32>
    %81 = arith.cmpf ogt, %1, %80 : vector<512x8xf32>
    %82 = arith.extui %81 : vector<512x8xi1> to vector<512x8xi32>
    %83 = arith.sitofp %82 : vector<512x8xi32> to vector<512x8xf32>
    %cst_59 = arith.constant 2.000000e-01 : f32
    %84 = vector.broadcast %cst_59 : f32 to vector<512x8xf32>
    %85 = arith.mulf %83, %84 : vector<512x8xf32>
    %86 = arith.mulf %79, %85 : vector<512x8xf32>
    %87 = arith.addf %1, %86 : vector<512x8xf32>
    %88 = arith.truncf %55 : vector<64x32xf32> to vector<64x32xbf16>
    %89 = arith.truncf %87 : vector<512x8xf32> to vector<512x8xbf16>
    %cst_60 = arith.constant dense<0.000000e+00> : vector<64x8xf32>
    %90 = tpu.matmul %88, %4, %cst_60 {dimension_numbers = #tpu.dot_dimension_numbers<[1], [0], [0], [1], [0, 0, 1, 1], [], []>} : vector<64x32xbf16>, vector<32x8xbf16>, vector<64x8xf32> -> vector<64x8xf32>
    %91 = vector.broadcast %5 : vector<1x8xf32> to vector<64x8xf32>
    %92 = arith.addf %90, %91 : vector<64x8xf32>
    %93 = vector.shape_cast %92 : vector<64x8xf32> to vector<8x8x8xf32>
    %94 = vector.shape_cast %93 : vector<8x8x8xf32> to vector<8x1x8x8xf32>
    %95 = vector.shape_cast %94 : vector<8x1x8x8xf32> to vector<8x1x8x8xf32>
    %96 = vector.broadcast %95 : vector<8x1x8x8xf32> to vector<8x8x8x8xf32>
    %97 = vector.shape_cast %96 : vector<8x8x8x8xf32> to vector<512x8xf32>
    %98 = arith.mulf %97, %87 : vector<512x8xf32>
    %99 = arith.truncf %98 : vector<512x8xf32> to vector<512x8xbf16>
    %cst_61 = arith.constant dense<0.000000e+00> : vector<64x8xf32>
    %100 = tpu.matmul %3, %99, %cst_61 {dimension_numbers = #tpu.dot_dimension_numbers<[1], [0], [0], [1], [0, 0, 1, 1], [], []>} : vector<64x512xbf16>, vector<512x8xbf16>, vector<64x8xf32> -> vector<64x8xf32>
    %101 = arith.truncf %100 : vector<64x8xf32> to vector<64x8xbf16>
    %cst_62 = arith.constant dense<0.000000e+00> : vector<64x128xf32>
    %102 = tpu.matmul %101, %6, %cst_62 {dimension_numbers = #tpu.dot_dimension_numbers<[1], [0], [0], [1], [0, 0, 1, 1], [], []>} : vector<64x8xbf16>, vector<8x128xbf16>, vector<64x128xf32> -> vector<64x128xf32>
    %cst_63 = arith.constant 0.000000e+00 : f32
    %103 = vector.broadcast %cst_63 : f32 to vector<64x128xf32>
    %104 = arith.maximumf %102, %103 : vector<64x128xf32>
    %105 = arith.truncf %104 : vector<64x128xf32> to vector<64x128xbf16>
    %cst_64 = arith.constant dense<0.000000e+00> : vector<64x128xf32>
    %106 = tpu.matmul %105, %7, %cst_64 {dimension_numbers = #tpu.dot_dimension_numbers<[1], [0], [0], [1], [0, 0, 1, 1], [], []>} : vector<64x128xbf16>, vector<128x128xbf16>, vector<64x128xf32> -> vector<64x128xf32>
    %cst_65 = arith.constant 0.000000e+00 : f32
    %107 = vector.broadcast %cst_65 : f32 to vector<64x128xf32>
    %108 = arith.maximumf %106, %107 : vector<64x128xf32>
    %109 = arith.truncf %108 : vector<64x128xf32> to vector<64x128xbf16>
    %cst_66 = arith.constant dense<0.000000e+00> : vector<64x8xf32>
    %110 = tpu.matmul %109, %8, %cst_66 {dimension_numbers = #tpu.dot_dimension_numbers<[1], [0], [0], [1], [0, 0, 1, 1], [], []>} : vector<64x128xbf16>, vector<128x8xbf16>, vector<64x8xf32> -> vector<64x8xf32>
    %cst_67 = arith.constant dense<0.000000e+00> : vector<64x128xf32>
    %111 = tpu.matmul %88, %9, %cst_67 {dimension_numbers = #tpu.dot_dimension_numbers<[1], [0], [0], [1], [0, 0, 1, 1], [], []>} : vector<64x32xbf16>, vector<32x128xbf16>, vector<64x128xf32> -> vector<64x128xf32>
    %112 = arith.truncf %110 : vector<64x8xf32> to vector<64x8xbf16>
    %cst_68 = arith.constant dense<0.000000e+00> : vector<64x128xf32>
    %113 = tpu.matmul %112, %10, %cst_68 {dimension_numbers = #tpu.dot_dimension_numbers<[1], [0], [0], [1], [0, 0, 1, 1], [], []>} : vector<64x8xbf16>, vector<8x128xbf16>, vector<64x128xf32> -> vector<64x128xf32>
    %114 = arith.addf %111, %113 : vector<64x128xf32>
    %cst_69 = arith.constant 0.000000e+00 : f32
    %115 = vector.broadcast %cst_69 : f32 to vector<64x128xf32>
    %116 = arith.maximumf %114, %115 : vector<64x128xf32>
    %117 = arith.truncf %116 : vector<64x128xf32> to vector<64x128xbf16>
    %cst_70 = arith.constant dense<0.000000e+00> : vector<64x128xf32>
    %118 = tpu.matmul %117, %11, %cst_70 {dimension_numbers = #tpu.dot_dimension_numbers<[1], [0], [0], [1], [0, 0, 1, 1], [], []>} : vector<64x128xbf16>, vector<128x128xbf16>, vector<64x128xf32> -> vector<64x128xf32>
    %cst_71 = arith.constant 0.000000e+00 : f32
    %119 = vector.broadcast %cst_71 : f32 to vector<64x128xf32>
    %120 = arith.maximumf %118, %119 : vector<64x128xf32>
    %121 = arith.truncf %120 : vector<64x128xf32> to vector<64x128xbf16>
    %cst_72 = arith.constant dense<0.000000e+00> : vector<64x32xf32>
    %122 = tpu.matmul %121, %12, %cst_72 {dimension_numbers = #tpu.dot_dimension_numbers<[1], [0], [0], [1], [0, 0, 1, 1], [], []>} : vector<64x128xbf16>, vector<128x32xbf16>, vector<64x32xf32> -> vector<64x32xf32>
    %123 = arith.addf %55, %122 : vector<64x32xf32>
    %124 = arith.truncf %123 : vector<64x32xf32> to vector<64x32xbf16>
    %cst_73 = arith.constant dense<0.000000e+00> : vector<64x256xf32>
    %125 = tpu.matmul %124, %13, %cst_73 {dimension_numbers = #tpu.dot_dimension_numbers<[1], [0], [0], [1], [0, 0, 1, 1], [], []>} : vector<64x32xbf16>, vector<32x256xbf16>, vector<64x256xf32> -> vector<64x256xf32>
    %126 = vector.broadcast %14 : vector<1x256xf32> to vector<64x256xf32>
    %127 = arith.addf %125, %126 : vector<64x256xf32>
    %128 = vector.extract_strided_slice %127 {offsets = [0, 0], sizes = [64, 128], strides = [1, 1]} : vector<64x256xf32> to vector<64x128xf32>
    %129 = vector.extract_strided_slice %127 {offsets = [0, 128], sizes = [64, 128], strides = [1, 1]} : vector<64x256xf32> to vector<64x128xf32>
    %130 = arith.truncf %128 : vector<64x128xf32> to vector<64x128xbf16>
    %cst_74 = arith.constant dense<0.000000e+00> : vector<512x128xf32>
    %131 = tpu.matmul %2, %130, %cst_74 {dimension_numbers = #tpu.dot_dimension_numbers<[1], [0], [0], [1], [0, 0, 1, 1], [], []>} : vector<512x64xbf16>, vector<64x128xbf16>, vector<512x128xf32> -> vector<512x128xf32>
    %132 = vector.shape_cast %129 : vector<64x128xf32> to vector<8x8x128xf32>
    %133 = vector.shape_cast %132 : vector<8x8x128xf32> to vector<8x1x8x128xf32>
    %134 = vector.shape_cast %133 : vector<8x1x8x128xf32> to vector<8x1x8x128xf32>
    %135 = vector.broadcast %134 : vector<8x1x8x128xf32> to vector<8x8x8x128xf32>
    %136 = vector.shape_cast %135 : vector<8x8x8x128xf32> to vector<512x128xf32>
    %137 = arith.addf %131, %136 : vector<512x128xf32>
    %cst_75 = arith.constant dense<0.000000e+00> : vector<512x128xf32>
    %138 = tpu.matmul %89, %15, %cst_75 {dimension_numbers = #tpu.dot_dimension_numbers<[1], [0], [0], [1], [0, 0, 1, 1], [], []>} : vector<512x8xbf16>, vector<8x128xbf16>, vector<512x128xf32> -> vector<512x128xf32>
    %139 = arith.addf %137, %138 : vector<512x128xf32>
    %cst_76 = arith.constant 0.000000e+00 : f32
    %140 = vector.broadcast %cst_76 : f32 to vector<512x128xf32>
    %141 = arith.maximumf %139, %140 : vector<512x128xf32>
    %142 = arith.truncf %141 : vector<512x128xf32> to vector<512x128xbf16>
    %cst_77 = arith.constant dense<0.000000e+00> : vector<512x128xf32>
    %143 = tpu.matmul %142, %16, %cst_77 {dimension_numbers = #tpu.dot_dimension_numbers<[1], [0], [0], [1], [0, 0, 1, 1], [], []>} : vector<512x128xbf16>, vector<128x128xbf16>, vector<512x128xf32> -> vector<512x128xf32>
    %cst_78 = arith.constant 0.000000e+00 : f32
    %144 = vector.broadcast %cst_78 : f32 to vector<512x128xf32>
    %145 = arith.maximumf %143, %144 : vector<512x128xf32>
    %146 = arith.truncf %145 : vector<512x128xf32> to vector<512x128xbf16>
    %cst_79 = arith.constant dense<0.000000e+00> : vector<512x8xf32>
    %147 = tpu.matmul %146, %17, %cst_79 {dimension_numbers = #tpu.dot_dimension_numbers<[1], [0], [0], [1], [0, 0, 1, 1], [], []>} : vector<512x128xbf16>, vector<128x8xbf16>, vector<512x8xf32> -> vector<512x8xf32>
    %cst_80 = arith.constant 0.000000e+00 : f32
    %148 = vector.broadcast %cst_80 : f32 to vector<512x8xf32>
    %149 = arith.cmpf ogt, %87, %148 : vector<512x8xf32>
    %150 = arith.extui %149 : vector<512x8xi1> to vector<512x8xi32>
    %151 = arith.sitofp %150 : vector<512x8xi32> to vector<512x8xf32>
    %cst_81 = arith.constant 2.000000e-01 : f32
    %152 = vector.broadcast %cst_81 : f32 to vector<512x8xf32>
    %153 = arith.mulf %151, %152 : vector<512x8xf32>
    %154 = arith.mulf %147, %153 : vector<512x8xf32>
    %155 = arith.addf %87, %154 : vector<512x8xf32>
    %c0_82 = arith.constant 0 : index
    %c0_83 = arith.constant 0 : index
    %156 = vector.load %arg21[%c0_82, %c0_83] : memref<64x32xf32, #tpu.memory_space<vmem>>, vector<64x32xf32>
    tpu.vector_store %arg21[%c0_82, %c0_83], %123 {strides = array<i32>} : memref<64x32xf32, #tpu.memory_space<vmem>>, vector<64x32xf32>,
    %157 = arith.truncf %155 : vector<512x8xf32> to vector<512x8xbf16>
    %cst_84 = arith.constant dense<0.000000e+00> : vector<512x4xf32>
    %158 = tpu.matmul %157, %18, %cst_84 {dimension_numbers = #tpu.dot_dimension_numbers<[1], [0], [0], [1], [0, 0, 1, 1], [], []>} : vector<512x8xbf16>, vector<8x4xbf16>, vector<512x4xf32> -> vector<512x4xf32>
    %159 = vector.broadcast %19 : vector<1x4xf32> to vector<512x4xf32>
    %160 = arith.addf %158, %159 : vector<512x4xf32>
    %c0_85 = arith.constant 0 : index
    %c0_86 = arith.constant 0 : index
    %161 = vector.load %arg22[%c0_85, %c0_86] : memref<512x4xf32, #tpu.memory_space<vmem>>, vector<512x4xf32>
    tpu.vector_store %arg22[%c0_85, %c0_86], %160 {strides = array<i32>} : memref<512x4xf32, #tpu.memory_space<vmem>>, vector<512x4xf32>,
    return
  }
  func.func @transform_0(%arg0: i32) -> (i32, i32) {
    %c0_i32 = arith.constant 0 : i32
    %c0_i32_0 = arith.constant 0 : i32
    return %arg0, %c0_i32 : i32, i32
  }
  func.func @transform_1(%arg0: i32) -> (i32, i32) {
    %c0_i32 = arith.constant 0 : i32
    %c0_i32_0 = arith.constant 0 : i32
    return %arg0, %c0_i32 : i32, i32
  }
  func.func @transform_2(%arg0: i32) -> (i32, i32) {
    %c0_i32 = arith.constant 0 : i32
    %c0_i32_0 = arith.constant 0 : i32
    %c0_i32_1 = arith.constant 0 : i32
    return %c0_i32, %c0_i32_0 : i32, i32
  }
  func.func @transform_3(%arg0: i32) -> (i32, i32) {
    %c0_i32 = arith.constant 0 : i32
    %c0_i32_0 = arith.constant 0 : i32
    %c0_i32_1 = arith.constant 0 : i32
    return %c0_i32, %c0_i32_0 : i32, i32
  }
  func.func @transform_4(%arg0: i32) -> (i32, i32) {
    %c0_i32 = arith.constant 0 : i32
    %c0_i32_0 = arith.constant 0 : i32
    %c0_i32_1 = arith.constant 0 : i32
    return %c0_i32, %c0_i32_0 : i32, i32
  }
  func.func @transform_5(%arg0: i32) -> (i32, i32) {
    %c0_i32 = arith.constant 0 : i32
    %c0_i32_0 = arith.constant 0 : i32
    %c0_i32_1 = arith.constant 0 : i32
    return %c0_i32, %c0_i32_0 : i32, i32
  }
  func.func @transform_6(%arg0: i32) -> (i32, i32) {
    %c0_i32 = arith.constant 0 : i32
    %c0_i32_0 = arith.constant 0 : i32
    %c0_i32_1 = arith.constant 0 : i32
    return %c0_i32, %c0_i32_0 : i32, i32
  }
  func.func @transform_7(%arg0: i32) -> (i32, i32) {
    %c0_i32 = arith.constant 0 : i32
    %c0_i32_0 = arith.constant 0 : i32
    %c0_i32_1 = arith.constant 0 : i32
    return %c0_i32, %c0_i32_0 : i32, i32
  }
  func.func @transform_8(%arg0: i32) -> (i32, i32) {
    %c0_i32 = arith.constant 0 : i32
    %c0_i32_0 = arith.constant 0 : i32
    %c0_i32_1 = arith.constant 0 : i32
    return %c0_i32, %c0_i32_0 : i32, i32
  }
  func.func @transform_9(%arg0: i32) -> (i32, i32) {
    %c0_i32 = arith.constant 0 : i32
    %c0_i32_0 = arith.constant 0 : i32
    %c0_i32_1 = arith.constant 0 : i32
    return %c0_i32, %c0_i32_0 : i32, i32
  }
  func.func @transform_10(%arg0: i32) -> (i32, i32) {
    %c0_i32 = arith.constant 0 : i32
    %c0_i32_0 = arith.constant 0 : i32
    %c0_i32_1 = arith.constant 0 : i32
    return %c0_i32, %c0_i32_0 : i32, i32
  }
  func.func @transform_11(%arg0: i32) -> (i32, i32) {
    %c0_i32 = arith.constant 0 : i32
    %c0_i32_0 = arith.constant 0 : i32
    %c0_i32_1 = arith.constant 0 : i32
    return %c0_i32, %c0_i32_0 : i32, i32
  }
  func.func @transform_12(%arg0: i32) -> (i32, i32) {
    %c0_i32 = arith.constant 0 : i32
    %c0_i32_0 = arith.constant 0 : i32
    %c0_i32_1 = arith.constant 0 : i32
    return %c0_i32, %c0_i32_0 : i32, i32
  }
  func.func @transform_13(%arg0: i32) -> (i32, i32) {
    %c0_i32 = arith.constant 0 : i32
    %c0_i32_0 = arith.constant 0 : i32
    %c0_i32_1 = arith.constant 0 : i32
    return %c0_i32, %c0_i32_0 : i32, i32
  }
  func.func @transform_14(%arg0: i32) -> (i32, i32) {
    %c0_i32 = arith.constant 0 : i32
    %c0_i32_0 = arith.constant 0 : i32
    %c0_i32_1 = arith.constant 0 : i32
    return %c0_i32, %c0_i32_0 : i32, i32
  }
  func.func @transform_15(%arg0: i32) -> (i32, i32) {
    %c0_i32 = arith.constant 0 : i32
    %c0_i32_0 = arith.constant 0 : i32
    %c0_i32_1 = arith.constant 0 : i32
    return %c0_i32, %c0_i32_0 : i32, i32
  }
  func.func @transform_16(%arg0: i32) -> (i32, i32) {
    %c0_i32 = arith.constant 0 : i32
    %c0_i32_0 = arith.constant 0 : i32
    %c0_i32_1 = arith.constant 0 : i32
    return %c0_i32, %c0_i32_0 : i32, i32
  }
  func.func @transform_17(%arg0: i32) -> (i32, i32) {
    %c0_i32 = arith.constant 0 : i32
    %c0_i32_0 = arith.constant 0 : i32
    %c0_i32_1 = arith.constant 0 : i32
    return %c0_i32, %c0_i32_0 : i32, i32
  }
  func.func @transform_18(%arg0: i32) -> (i32, i32) {
    %c0_i32 = arith.constant 0 : i32
    %c0_i32_0 = arith.constant 0 : i32
    %c0_i32_1 = arith.constant 0 : i32
    return %c0_i32, %c0_i32_0 : i32, i32
  }
  func.func @transform_19(%arg0: i32) -> (i32, i32) {
    %c0_i32 = arith.constant 0 : i32
    %c0_i32_0 = arith.constant 0 : i32
    %c0_i32_1 = arith.constant 0 : i32
    return %c0_i32, %c0_i32_0 : i32, i32
  }
  func.func @transform_20(%arg0: i32) -> (i32, i32) {
    %c0_i32 = arith.constant 0 : i32
    %c0_i32_0 = arith.constant 0 : i32
    return %arg0, %c0_i32 : i32, i32
  }
  func.func @transform_21(%arg0: i32) -> (i32, i32) {
    %c0_i32 = arith.constant 0 : i32
    %c0_i32_0 = arith.constant 0 : i32
    return %arg0, %c0_i32 : i32, i32
  }
}

</mosaic_0001>

<llo_original>
// kernel: tpu_custom_call.1
$region0: #{tpu_custom_call.1}
  #allocation0 [shape = 'u32[]', space=smem, size = 0x4, offset = 0x4, fixed_abs, tag = 'smem constant byte address 0x4 - core index']
  #allocation1 [shape = 'u32[144,128]{1,0:T(1,128)}', space=vmem, size = 0x12000, scoped, tag = 'internal scratch']
  %s0 = inlined_call_operand.vmem [shape: f32[64,32], index: 0, kind: input, shape index: {}]
  %s1 = inlined_call_operand.vmem [shape: f32[512,8], index: 1, kind: input, shape index: {}]
  %s2 = inlined_call_operand.vmem [shape: bf16[512,64], index: 2, kind: input, shape index: {}]
  %s3 = inlined_call_operand.vmem [shape: bf16[64,512], index: 3, kind: input, shape index: {}]
  %s4 = inlined_call_operand.vmem [shape: bf16[32,8], index: 4, kind: input, shape index: {}]
  %s5 = inlined_call_operand.vmem [shape: f32[1,8], index: 5, kind: input, shape index: {}]
  %s6 = inlined_call_operand.vmem [shape: bf16[8,128], index: 6, kind: input, shape index: {}]
  %s7 = inlined_call_operand.vmem [shape: bf16[128,128], index: 7, kind: input, shape index: {}]
  %s8 = inlined_call_operand.vmem [shape: bf16[128,8], index: 8, kind: input, shape index: {}]
  %s9 = inlined_call_operand.vmem [shape: bf16[32,128], index: 9, kind: input, shape index: {}]
  %s10 = inlined_call_operand.vmem [shape: bf16[8,128], index: 10, kind: input, shape index: {}]
  %s11 = inlined_call_operand.vmem [shape: bf16[128,128], index: 11, kind: input, shape index: {}]
  %s12 = inlined_call_operand.vmem [shape: bf16[128,32], index: 12, kind: input, shape index: {}]
  %s13 = inlined_call_operand.vmem [shape: bf16[32,256], index: 13, kind: input, shape index: {}]
  %s14 = inlined_call_operand.vmem [shape: f32[1,256], index: 14, kind: input, shape index: {}]
  %s15 = inlined_call_operand.vmem [shape: bf16[8,128], index: 15, kind: input, shape index: {}]
  %s16 = inlined_call_operand.vmem [shape: bf16[128,128], index: 16, kind: input, shape index: {}]
  %s17 = inlined_call_operand.vmem [shape: bf16[128,8], index: 17, kind: input, shape index: {}]
  %s18 = inlined_call_operand.vmem [shape: bf16[8,4], index: 18, kind: input, shape index: {}]
  %s19 = inlined_call_operand.vmem [shape: f32[1,4], index: 19, kind: input, shape index: {}]
  %s20 = inlined_call_operand.vmem [shape: f32[64,32], index: 20, kind: output, shape index: {0}]
  %s21 = inlined_call_operand.vmem [shape: f32[512,4], index: 21, kind: output, shape index: {1}]
  %22 = xla_tuple %s20, %s21
  %s23 = sld [smem:[#allocation0]]
  $region98: #{tpu_custom_call.1} parent=0
    _
  %s25 = ssub.s32 1, %s23
  %s26 = scalar_select 0, %s25, %s23
  // Predicated region
  $region2: #{tpu_custom_call.1} parent=0 // pred_check
    _
  $region3: #{tpu_custom_call.1} parent=0 // pred_check_branch
    %28 = sbr.rel (0) target = $region5
  $region4: #{tpu_custom_call.1} parent=0 // pred_region
    _
  $region5: #{tpu_custom_call.1} parent=0 // pred_fallthru
    _
  // Predicated region
  $region6: #{tpu_custom_call.1} parent=0 // pred_check
    _
  $region7: #{tpu_custom_call.1} parent=0 // pred_check_branch
    %30 = sbr.rel (0) target = $region9
  $region8: #{tpu_custom_call.1} parent=0 // pred_region
    _
  $region9: #{tpu_custom_call.1} parent=0 // pred_fallthru
    _
  // Predicated region
  $region10: #{tpu_custom_call.1} parent=0 // pred_check
    _
  $region11: #{tpu_custom_call.1} parent=0 // pred_check_branch
    %32 = sbr.rel (0) target = $region13
  $region12: #{tpu_custom_call.1} parent=0 // pred_region
    _
  $region13: #{tpu_custom_call.1} parent=0 // pred_fallthru
    _
  // Predicated region
  $region14: #{tpu_custom_call.1} parent=0 // pred_check
    _
  $region15: #{tpu_custom_call.1} parent=0 // pred_check_branch
    %34 = sbr.rel (0) target = $region17
  $region16: #{tpu_custom_call.1} parent=0 // pred_region
    _
  $region17: #{tpu_custom_call.1} parent=0 // pred_fallthru
    _
  // Predicated region
  $region18: #{tpu_custom_call.1} parent=0 // pred_check
    _
  $region19: #{tpu_custom_call.1} parent=0 // pred_check_branch
    %36 = sbr.rel (0) target = $region21
  $region20: #{tpu_custom_call.1} parent=0 // pred_region
    _
  $region21: #{tpu_custom_call.1} parent=0 // pred_fallthru
    _
  // Predicated region
  $region22: #{tpu_custom_call.1} parent=0 // pred_check
    _
  $region23: #{tpu_custom_call.1} parent=0 // pred_check_branch
    %38 = sbr.rel (0) target = $region25
  $region24: #{tpu_custom_call.1} parent=0 // pred_region
    _
  $region25: #{tpu_custom_call.1} parent=0 // pred_fallthru
    _
  // Predicated region
  $region26: #{tpu_custom_call.1} parent=0 // pred_check
    _
  $region27: #{tpu_custom_call.1} parent=0 // pred_check_branch
    %40 = sbr.rel (0) target = $region29
  $region28: #{tpu_custom_call.1} parent=0 // pred_region
    _
  $region29: #{tpu_custom_call.1} parent=0 // pred_fallthru
    _
  // Predicated region
  $region30: #{tpu_custom_call.1} parent=0 // pred_check
    _
  $region31: #{tpu_custom_call.1} parent=0 // pred_check_branch
    %42 = sbr.rel (0) target = $region33
  $region32: #{tpu_custom_call.1} parent=0 // pred_region
    _
  $region33: #{tpu_custom_call.1} parent=0 // pred_fallthru
    _
  // Predicated region
  $region34: #{tpu_custom_call.1} parent=0 // pred_check
    _
  $region35: #{tpu_custom_call.1} parent=0 // pred_check_branch
    %44 = sbr.rel (0) target = $region37
  $region36: #{tpu_custom_call.1} parent=0 // pred_region
    _
  $region37: #{tpu_custom_call.1} parent=0 // pred_fallthru
    _
  // Predicated region
  $region38: #{tpu_custom_call.1} parent=0 // pred_check
    _
  $region39: #{tpu_custom_call.1} parent=0 // pred_check_branch
    %46 = sbr.rel (0) target = $region41
  $region40: #{tpu_custom_call.1} parent=0 // pred_region
    _
  $region41: #{tpu_custom_call.1} parent=0 // pred_fallthru
    _
  // Predicated region
  $region42: #{tpu_custom_call.1} parent=0 // pred_check
    _
  $region43: #{tpu_custom_call.1} parent=0 // pred_check_branch
    %48 = sbr.rel (0) target = $region45
  $region44: #{tpu_custom_call.1} parent=0 // pred_region
    _
  $region45: #{tpu_custom_call.1} parent=0 // pred_fallthru
    _
  // Predicated region
  $region46: #{tpu_custom_call.1} parent=0 // pred_check
    _
  $region47: #{tpu_custom_call.1} parent=0 // pred_check_branch
    %50 = sbr.rel (0) target = $region49
  $region48: #{tpu_custom_call.1} parent=0 // pred_region
    _
  $region49: #{tpu_custom_call.1} parent=0 // pred_fallthru
    _
  // Predicated region
  $region50: #{tpu_custom_call.1} parent=0 // pred_check
    _
  $region51: #{tpu_custom_call.1} parent=0 // pred_check_branch
    %52 = sbr.rel (0) target = $region53
  $region52: #{tpu_custom_call.1} parent=0 // pred_region
    _
  $region53: #{tpu_custom_call.1} parent=0 // pred_fallthru
    _
  // Predicated region
  $region54: #{tpu_custom_call.1} parent=0 // pred_check
    _
  $region55: #{tpu_custom_call.1} parent=0 // pred_check_branch
    %54 = sbr.rel (0) target = $region57
  $region56: #{tpu_custom_call.1} parent=0 // pred_region
    _
  $region57: #{tpu_custom_call.1} parent=0 // pred_fallthru
    _
  // Predicated region
  $region58: #{tpu_custom_call.1} parent=0 // pred_check
    _
  $region59: #{tpu_custom_call.1} parent=0 // pred_check_branch
    %56 = sbr.rel (0) target = $region61
  $region60: #{tpu_custom_call.1} parent=0 // pred_region
    _
  $region61: #{tpu_custom_call.1} parent=0 // pred_fallthru
    _
  // Predicated region
  $region62: #{tpu_custom_call.1} parent=0 // pred_check
    _
  $region63: #{tpu_custom_call.1} parent=0 // pred_check_branch
    %58 = sbr.rel (0) target = $region65
  $region64: #{tpu_custom_call.1} parent=0 // pred_region
    _
  $region65: #{tpu_custom_call.1} parent=0 // pred_fallthru
    _
  // Predicated region
  $region66: #{tpu_custom_call.1} parent=0 // pred_check
    _
  $region67: #{tpu_custom_call.1} parent=0 // pred_check_branch
    %60 = sbr.rel (0) target = $region69
  $region68: #{tpu_custom_call.1} parent=0 // pred_region
    _
  $region69: #{tpu_custom_call.1} parent=0 // pred_fallthru
    _
  // Predicated region
  $region70: #{tpu_custom_call.1} parent=0 // pred_check
    _
  $region71: #{tpu_custom_call.1} parent=0 // pred_check_branch
    %62 = sbr.rel (0) target = $region73
  $region72: #{tpu_custom_call.1} parent=0 // pred_region
    _
  $region73: #{tpu_custom_call.1} parent=0 // pred_fallthru
    _
  // Predicated region
  $region74: #{tpu_custom_call.1} parent=0 // pred_check
    _
  $region75: #{tpu_custom_call.1} parent=0 // pred_check_branch
    %64 = sbr.rel (0) target = $region77
  $region76: #{tpu_custom_call.1} parent=0 // pred_region
    _
  $region77: #{tpu_custom_call.1} parent=0 // pred_fallthru
    _
  // Predicated region
  $region78: #{tpu_custom_call.1} parent=0 // pred_check
    _
  $region79: #{tpu_custom_call.1} parent=0 // pred_check_branch
    %66 = sbr.rel (0) target = $region81
  $region80: #{tpu_custom_call.1} parent=0 // pred_region
    _
  $region81: #{tpu_custom_call.1} parent=0 // pred_fallthru
    _
  %v68 = vld [vmem:[%s0] sm:$0xff]
  %v69 = vld [vmem:[%s0 + $0x8] sm:$0xff]
  %v70 = vld [vmem:[%s0 + $0x10] sm:$0xff]
  %v71 = vld [vmem:[%s0 + $0x18] sm:$0xff]
  %v72 = vld [vmem:[%s0 + $0x20] sm:$0xff]
  %v73 = vld [vmem:[%s0 + $0x28] sm:$0xff]
  %v74 = vld [vmem:[%s0 + $0x30] sm:$0xff]
  %v75 = vld [vmem:[%s0 + $0x38] sm:$0xff]
  %v76 = vld [vmem:[%s1] sm:$0xff]
  %v77 = vld [vmem:[%s1 + $0x8] sm:$0xff]
  %v78 = vld [vmem:[%s1 + $0x10] sm:$0xff]
  %v79 = vld [vmem:[%s1 + $0x18] sm:$0xff]
  %v80 = vld [vmem:[%s1 + $0x20] sm:$0xff]
  %v81 = vld [vmem:[%s1 + $0x28] sm:$0xff]
  %v82 = vld [vmem:[%s1 + $0x30] sm:$0xff]
  %v83 = vld [vmem:[%s1 + $0x38] sm:$0xff]
  %v84 = vld [vmem:[%s1 + $0x40] sm:$0xff]
  %v85 = vld [vmem:[%s1 + $0x48] sm:$0xff]
  %v86 = vld [vmem:[%s1 + $0x50] sm:$0xff]
  %v87 = vld [vmem:[%s1 + $0x58] sm:$0xff]
  %v88 = vld [vmem:[%s1 + $0x60] sm:$0xff]
  %v89 = vld [vmem:[%s1 + $0x68] sm:$0xff]
  %v90 = vld [vmem:[%s1 + $0x70] sm:$0xff]
  %v91 = vld [vmem:[%s1 + $0x78] sm:$0xff]
  %v92 = vld [vmem:[%s1 + $0x80] sm:$0xff]
  %v93 = vld [vmem:[%s1 + $0x88] sm:$0xff]
  %v94 = vld [vmem:[%s1 + $0x90] sm:$0xff]
  %v95 = vld [vmem:[%s1 + $0x98] sm:$0xff]
  %v96 = vld [vmem:[%s1 + $0xa0] sm:$0xff]
  %v97 = vld [vmem:[%s1 + $0xa8] sm:$0xff]
  %v98 = vld [vmem:[%s1 + $0xb0] sm:$0xff]
  %v99 = vld [vmem:[%s1 + $0xb8] sm:$0xff]
  %v100 = vld [vmem:[%s1 + $0xc0] sm:$0xff]
  %v101 = vld [vmem:[%s1 + $0xc8] sm:$0xff]
  %v102 = vld [vmem:[%s1 + $0xd0] sm:$0xff]
  %v103 = vld [vmem:[%s1 + $0xd8] sm:$0xff]
  %v104 = vld [vmem:[%s1 + $0xe0] sm:$0xff]
  %v105 = vld [vmem:[%s1 + $0xe8] sm:$0xff]
  %v106 = vld [vmem:[%s1 + $0xf0] sm:$0xff]
  %v107 = vld [vmem:[%s1 + $0xf8] sm:$0xff]
  %v108 = vld [vmem:[%s1 + $0x100] sm:$0xff]
  %v109 = vld [vmem:[%s1 + $0x108] sm:$0xff]
  %v110 = vld [vmem:[%s1 + $0x110] sm:$0xff]
  %v111 = vld [vmem:[%s1 + $0x118] sm:$0xff]
  %v112 = vld [vmem:[%s1 + $0x120] sm:$0xff]
  %v113 = vld [vmem:[%s1 + $0x128] sm:$0xff]
  %v114 = vld [vmem:[%s1 + $0x130] sm:$0xff]
  %v115 = vld [vmem:[%s1 + $0x138] sm:$0xff]
  %v116 = vld [vmem:[%s1 + $0x140] sm:$0xff]
  %v117 = vld [vmem:[%s1 + $0x148] sm:$0xff]
  %v118 = vld [vmem:[%s1 + $0x150] sm:$0xff]
  %v119 = vld [vmem:[%s1 + $0x158] sm:$0xff]
  %v120 = vld [vmem:[%s1 + $0x160] sm:$0xff]
  %v121 = vld [vmem:[%s1 + $0x168] sm:$0xff]
  %v122 = vld [vmem:[%s1 + $0x170] sm:$0xff]
  %v123 = vld [vmem:[%s1 + $0x178] sm:$0xff]
  %v124 = vld [vmem:[%s1 + $0x180] sm:$0xff]
  %v125 = vld [vmem:[%s1 + $0x188] sm:$0xff]
  %v126 = vld [vmem:[%s1 + $0x190] sm:$0xff]
  %v127 = vld [vmem:[%s1 + $0x198] sm:$0xff]
  %v128 = vld [vmem:[%s1 + $0x1a0] sm:$0xff]
  %v129 = vld [vmem:[%s1 + $0x1a8] sm:$0xff]
  %v130 = vld [vmem:[%s1 + $0x1b0] sm:$0xff]
  %v131 = vld [vmem:[%s1 + $0x1b8] sm:$0xff]
  %v132 = vld [vmem:[%s1 + $0x1c0] sm:$0xff]
  %v133 = vld [vmem:[%s1 + $0x1c8] sm:$0xff]
  %v134 = vld [vmem:[%s1 + $0x1d0] sm:$0xff]
  %v135 = vld [vmem:[%s1 + $0x1d8] sm:$0xff]
  %v136 = vld [vmem:[%s1 + $0x1e0] sm:$0xff]
  %v137 = vld [vmem:[%s1 + $0x1e8] sm:$0xff]
  %v138 = vld [vmem:[%s1 + $0x1f0] sm:$0xff]
  %v139 = vld [vmem:[%s1 + $0x1f8] sm:$0xff]
  %v140 = vld [vmem:[%s2] sm:$0xf]
  %v141 = vld [vmem:[%s2 + $0x4] sm:$0xf]
  %v142 = vld [vmem:[%s2 + $0x8] sm:$0xf]
  %v143 = vld [vmem:[%s2 + $0xc] sm:$0xf]
  %v144 = vld [vmem:[%s2 + $0x10] sm:$0xf]
  %v145 = vld [vmem:[%s2 + $0x14] sm:$0xf]
  %v146 = vld [vmem:[%s2 + $0x18] sm:$0xf]
  %v147 = vld [vmem:[%s2 + $0x1c] sm:$0xf]
  %v148 = vld [vmem:[%s2 + $0x20] sm:$0xf]
  %v149 = vld [vmem:[%s2 + $0x24] sm:$0xf]
  %v150 = vld [vmem:[%s2 + $0x28] sm:$0xf]
  %v151 = vld [vmem:[%s2 + $0x2c] sm:$0xf]
  %v152 = vld [vmem:[%s2 + $0x30] sm:$0xf]
  %v153 = vld [vmem:[%s2 + $0x34] sm:$0xf]
  %v154 = vld [vmem:[%s2 + $0x38] sm:$0xf]
  %v155 = vld [vmem:[%s2 + $0x3c] sm:$0xf]
  %v156 = vld [vmem:[%s2 + $0x40] sm:$0xf]
  %v157 = vld [vmem:[%s2 + $0x44] sm:$0xf]
  %v158 = vld [vmem:[%s2 + $0x48] sm:$0xf]
  %v159 = vld [vmem:[%s2 + $0x4c] sm:$0xf]
  %v160 = vld [vmem:[%s2 + $0x50] sm:$0xf]
  %v161 = vld [vmem:[%s2 + $0x54] sm:$0xf]
  %v162 = vld [vmem:[%s2 + $0x58] sm:$0xf]
  %v163 = vld [vmem:[%s2 + $0x5c] sm:$0xf]
  %v164 = vld [vmem:[%s2 + $0x60] sm:$0xf]
  %v165 = vld [vmem:[%s2 + $0x64] sm:$0xf]
  %v166 = vld [vmem:[%s2 + $0x68] sm:$0xf]
  %v167 = vld [vmem:[%s2 + $0x6c] sm:$0xf]
  %v168 = vld [vmem:[%s2 + $0x70] sm:$0xf]
  %v169 = vld [vmem:[%s2 + $0x74] sm:$0xf]
  %v170 = vld [vmem:[%s2 + $0x78] sm:$0xf]
  %v171 = vld [vmem:[%s2 + $0x7c] sm:$0xf]
  %v172 = vld [vmem:[%s2 + $0x80] sm:$0xf]
  %v173 = vld [vmem:[%s2 + $0x84] sm:$0xf]
  %v174 = vld [vmem:[%s2 + $0x88] sm:$0xf]
  %v175 = vld [vmem:[%s2 + $0x8c] sm:$0xf]
  %v176 = vld [vmem:[%s2 + $0x90] sm:$0xf]
  %v177 = vld [vmem:[%s2 + $0x94] sm:$0xf]
  %v178 = vld [vmem:[%s2 + $0x98] sm:$0xf]
  %v179 = vld [vmem:[%s2 + $0x9c] sm:$0xf]
  %v180 = vld [vmem:[%s2 + $0xa0] sm:$0xf]
  %v181 = vld [vmem:[%s2 + $0xa4] sm:$0xf]
  %v182 = vld [vmem:[%s2 + $0xa8] sm:$0xf]
  %v183 = vld [vmem:[%s2 + $0xac] sm:$0xf]
  %v184 = vld [vmem:[%s2 + $0xb0] sm:$0xf]
  %v185 = vld [vmem:[%s2 + $0xb4] sm:$0xf]
  %v186 = vld [vmem:[%s2 + $0xb8] sm:$0xf]
  %v187 = vld [vmem:[%s2 + $0xbc] sm:$0xf]
  %v188 = vld [vmem:[%s2 + $0xc0] sm:$0xf]
  %v189 = vld [vmem:[%s2 + $0xc4] sm:$0xf]
  %v190 = vld [vmem:[%s2 + $0xc8] sm:$0xf]
  %v191 = vld [vmem:[%s2 + $0xcc] sm:$0xf]
  %v192 = vld [vmem:[%s2 + $0xd0] sm:$0xf]
  %v193 = vld [vmem:[%s2 + $0xd4] sm:$0xf]
  %v194 = vld [vmem:[%s2 + $0xd8] sm:$0xf]
  %v195 = vld [vmem:[%s2 + $0xdc] sm:$0xf]
  %v196 = vld [vmem:[%s2 + $0xe0] sm:$0xf]
  %v197 = vld [vmem:[%s2 + $0xe4] sm:$0xf]
  %v198 = vld [vmem:[%s2 + $0xe8] sm:$0xf]
  %v199 = vld [vmem:[%s2 + $0xec] sm:$0xf]
  %v200 = vld [vmem:[%s2 + $0xf0] sm:$0xf]
  %v201 = vld [vmem:[%s2 + $0xf4] sm:$0xf]
  %v202 = vld [vmem:[%s2 + $0xf8] sm:$0xf]
  %v203 = vld [vmem:[%s2 + $0xfc] sm:$0xf]
  %v204 = vld [vmem:[%s3] sm:$0xff]
  %v205 = vld [vmem:[%s3 + $0x8] sm:$0xff]
  %v206 = vld [vmem:[%s3 + $0x10] sm:$0xff]
  %v207 = vld [vmem:[%s3 + $0x18] sm:$0xff]
  %v208 = vld [vmem:[%s3 + $0x20] sm:$0xff]
  %v209 = vld [vmem:[%s3 + $0x28] sm:$0xff]
  %v210 = vld [vmem:[%s3 + $0x30] sm:$0xff]
  %v211 = vld [vmem:[%s3 + $0x38] sm:$0xff]
  %v212 = vld [vmem:[%s3 + $0x40] sm:$0xff]
  %v213 = vld [vmem:[%s3 + $0x48] sm:$0xff]
  %v214 = vld [vmem:[%s3 + $0x50] sm:$0xff]
  %v215 = vld [vmem:[%s3 + $0x58] sm:$0xff]
  %v216 = vld [vmem:[%s3 + $0x60] sm:$0xff]
  %v217 = vld [vmem:[%s3 + $0x68] sm:$0xff]
  %v218 = vld [vmem:[%s3 + $0x70] sm:$0xff]
  %v219 = vld [vmem:[%s3 + $0x78] sm:$0xff]
  %v220 = vld [vmem:[%s4] sm:$0xf]
  %v221 = vld [vmem:[%s4 + $0x4] sm:$0xf]
  %v222 = vld [vmem:[%s4 + $0x8] sm:$0xf]
  %v223 = vld [vmem:[%s4 + $0xc] sm:$0xf]
  %v224 = vld [vmem:[%s5] sm:$0x1]
  %v225 = vld [vmem:[%s6] sm:$0xf]
  %v226 = vld [vmem:[%s7] sm:$0xf]
  %v227 = vld [vmem:[%s7 + $0x4] sm:$0xf]
  %v228 = vld [vmem:[%s7 + $0x8] sm:$0xf]
  %v229 = vld [vmem:[%s7 + $0xc] sm:$0xf]
  %v230 = vld [vmem:[%s7 + $0x10] sm:$0xf]
  %v231 = vld [vmem:[%s7 + $0x14] sm:$0xf]
  %v232 = vld [vmem:[%s7 + $0x18] sm:$0xf]
  %v233 = vld [vmem:[%s7 + $0x1c] sm:$0xf]
  %v234 = vld [vmem:[%s7 + $0x20] sm:$0xf]
  %v235 = vld [vmem:[%s7 + $0x24] sm:$0xf]
  %v236 = vld [vmem:[%s7 + $0x28] sm:$0xf]
  %v237 = vld [vmem:[%s7 + $0x2c] sm:$0xf]
  %v238 = vld [vmem:[%s7 + $0x30] sm:$0xf]
  %v239 = vld [vmem:[%s7 + $0x34] sm:$0xf]
  %v240 = vld [vmem:[%s7 + $0x38] sm:$0xf]
  %v241 = vld [vmem:[%s7 + $0x3c] sm:$0xf]
  %v242 = vld [vmem:[%s8] sm:$0xf]
  %v243 = vld [vmem:[%s8 + $0x4] sm:$0xf]
  %v244 = vld [vmem:[%s8 + $0x8] sm:$0xf]
  %v245 = vld [vmem:[%s8 + $0xc] sm:$0xf]
  %v246 = vld [vmem:[%s8 + $0x10] sm:$0xf]
  %v247 = vld [vmem:[%s8 + $0x14] sm:$0xf]
  %v248 = vld [vmem:[%s8 + $0x18] sm:$0xf]
  %v249 = vld [vmem:[%s8 + $0x1c] sm:$0xf]
  %v250 = vld [vmem:[%s8 + $0x20] sm:$0xf]
  %v251 = vld [vmem:[%s8 + $0x24] sm:$0xf]
  %v252 = vld [vmem:[%s8 + $0x28] sm:$0xf]
  %v253 = vld [vmem:[%s8 + $0x2c] sm:$0xf]
  %v254 = vld [vmem:[%s8 + $0x30] sm:$0xf]
  %v255 = vld [vmem:[%s8 + $0x34] sm:$0xf]
  %v256 = vld [vmem:[%s8 + $0x38] sm:$0xf]
  %v257 = vld [vmem:[%s8 + $0x3c] sm:$0xf]
  %v258 = vld [vmem:[%s9] sm:$0xf]
  %v259 = vld [vmem:[%s9 + $0x4] sm:$0xf]
  %v260 = vld [vmem:[%s9 + $0x8] sm:$0xf]
  %v261 = vld [vmem:[%s9 + $0xc] sm:$0xf]
  %v262 = vld [vmem:[%s10] sm:$0xf]
  %v263 = vld [vmem:[%s11] sm:$0xf]
  %v264 = vld [vmem:[%s11 + $0x4] sm:$0xf]
  %v265 = vld [vmem:[%s11 + $0x8] sm:$0xf]
  %v266 = vld [vmem:[%s11 + $0xc] sm:$0xf]
  %v267 = vld [vmem:[%s11 + $0x10] sm:$0xf]
  %v268 = vld [vmem:[%s11 + $0x14] sm:$0xf]
  %v269 = vld [vmem:[%s11 + $0x18] sm:$0xf]
  %v270 = vld [vmem:[%s11 + $0x1c] sm:$0xf]
  %v271 = vld [vmem:[%s11 + $0x20] sm:$0xf]
  %v272 = vld [vmem:[%s11 + $0x24] sm:$0xf]
  %v273 = vld [vmem:[%s11 + $0x28] sm:$0xf]
  %v274 = vld [vmem:[%s11 + $0x2c] sm:$0xf]
  %v275 = vld [vmem:[%s11 + $0x30] sm:$0xf]
  %v276 = vld [vmem:[%s11 + $0x34] sm:$0xf]
  %v277 = vld [vmem:[%s11 + $0x38] sm:$0xf]
  %v278 = vld [vmem:[%s11 + $0x3c] sm:$0xf]
  %v279 = vld [vmem:[%s12] sm:$0xf]
  %v280 = vld [vmem:[%s12 + $0x4] sm:$0xf]
  %v281 = vld [vmem:[%s12 + $0x8] sm:$0xf]
  %v282 = vld [vmem:[%s12 + $0xc] sm:$0xf]
  %v283 = vld [vmem:[%s12 + $0x10] sm:$0xf]
  %v284 = vld [vmem:[%s12 + $0x14] sm:$0xf]
  %v285 = vld [vmem:[%s12 + $0x18] sm:$0xf]
  %v286 = vld [vmem:[%s12 + $0x1c] sm:$0xf]
  %v287 = vld [vmem:[%s12 + $0x20] sm:$0xf]
  %v288 = vld [vmem:[%s12 + $0x24] sm:$0xf]
  %v289 = vld [vmem:[%s12 + $0x28] sm:$0xf]
  %v290 = vld [vmem:[%s12 + $0x2c] sm:$0xf]
  %v291 = vld [vmem:[%s12 + $0x30] sm:$0xf]
  %v292 = vld [vmem:[%s12 + $0x34] sm:$0xf]
  %v293 = vld [vmem:[%s12 + $0x38] sm:$0xf]
  %v294 = vld [vmem:[%s12 + $0x3c] sm:$0xf]
  %v295 = vld [vmem:[%s13] sm:$0xff]
  %v296 = vld [vmem:[%s13 + $0x8] sm:$0xff]
  %v297 = vld [vmem:[%s13 + $0x10] sm:$0xff]
  %v298 = vld [vmem:[%s13 + $0x18] sm:$0xff]
  %v299 = vld [vmem:[%s14] sm:$0x3]
  %v300 = vld [vmem:[%s15] sm:$0xf]
  %v301 = vld [vmem:[%s16] sm:$0xf]
  %v302 = vld [vmem:[%s16 + $0x4] sm:$0xf]
  %v303 = vld [vmem:[%s16 + $0x8] sm:$0xf]
  %v304 = vld [vmem:[%s16 + $0xc] sm:$0xf]
  %v305 = vld [vmem:[%s16 + $0x10] sm:$0xf]
  %v306 = vld [vmem:[%s16 + $0x14] sm:$0xf]
  %v307 = vld [vmem:[%s16 + $0x18] sm:$0xf]
  %v308 = vld [vmem:[%s16 + $0x1c] sm:$0xf]
  %v309 = vld [vmem:[%s16 + $0x20] sm:$0xf]
  %v310 = vld [vmem:[%s16 + $0x24] sm:$0xf]
  %v311 = vld [vmem:[%s16 + $0x28] sm:$0xf]
  %v312 = vld [vmem:[%s16 + $0x2c] sm:$0xf]
  %v313 = vld [vmem:[%s16 + $0x30] sm:$0xf]
  %v314 = vld [vmem:[%s16 + $0x34] sm:$0xf]
  %v315 = vld [vmem:[%s16 + $0x38] sm:$0xf]
  %v316 = vld [vmem:[%s16 + $0x3c] sm:$0xf]
  %v317 = vld [vmem:[%s17] sm:$0xf]
  %v318 = vld [vmem:[%s17 + $0x4] sm:$0xf]
  %v319 = vld [vmem:[%s17 + $0x8] sm:$0xf]
  %v320 = vld [vmem:[%s17 + $0xc] sm:$0xf]
  %v321 = vld [vmem:[%s17 + $0x10] sm:$0xf]
  %v322 = vld [vmem:[%s17 + $0x14] sm:$0xf]
  %v323 = vld [vmem:[%s17 + $0x18] sm:$0xf]
  %v324 = vld [vmem:[%s17 + $0x1c] sm:$0xf]
  %v325 = vld [vmem:[%s17 + $0x20] sm:$0xf]
  %v326 = vld [vmem:[%s17 + $0x24] sm:$0xf]
  %v327 = vld [vmem:[%s17 + $0x28] sm:$0xf]
  %v328 = vld [vmem:[%s17 + $0x2c] sm:$0xf]
  %v329 = vld [vmem:[%s17 + $0x30] sm:$0xf]
  %v330 = vld [vmem:[%s17 + $0x34] sm:$0xf]
  %v331 = vld [vmem:[%s17 + $0x38] sm:$0xf]
  %v332 = vld [vmem:[%s17 + $0x3c] sm:$0xf]
  %v333 = vld [vmem:[%s18] sm:$0xf]
  %v334 = vld [vmem:[%s19] sm:$0x1]
  %v335 = vpack.c.bf16 %v69, %v68
  %v336 = vpack.c.bf16 %v71, %v70
  %v337 = vpack.c.bf16 %v73, %v72
  %v338 = vpack.c.bf16 %v75, %v74
  %v339 = vpack.c.bf16 %v77, %v76
  %v340 = vpack.c.bf16 %v79, %v78
  %v341 = vpack.c.bf16 %v81, %v80
  %v342 = vpack.c.bf16 %v83, %v82
  %v343 = vpack.c.bf16 %v85, %v84
  %v344 = vpack.c.bf16 %v87, %v86
  %v345 = vpack.c.bf16 %v89, %v88
  %v346 = vpack.c.bf16 %v91, %v90
  %v347 = vpack.c.bf16 %v93, %v92
  %v348 = vpack.c.bf16 %v95, %v94
  %v349 = vpack.c.bf16 %v97, %v96
  %v350 = vpack.c.bf16 %v99, %v98
  %v351 = vpack.c.bf16 %v101, %v100
  %v352 = vpack.c.bf16 %v103, %v102
  %v353 = vpack.c.bf16 %v105, %v104
  %v354 = vpack.c.bf16 %v107, %v106
  %v355 = vpack.c.bf16 %v109, %v108
  %v356 = vpack.c.bf16 %v111, %v110
  %v357 = vpack.c.bf16 %v113, %v112
  %v358 = vpack.c.bf16 %v115, %v114
  %v359 = vpack.c.bf16 %v117, %v116
  %v360 = vpack.c.bf16 %v119, %v118
  %v361 = vpack.c.bf16 %v121, %v120
  %v362 = vpack.c.bf16 %v123, %v122
  %v363 = vpack.c.bf16 %v125, %v124
  %v364 = vpack.c.bf16 %v127, %v126
  %v365 = vpack.c.bf16 %v129, %v128
  %v366 = vpack.c.bf16 %v131, %v130
  %v367 = vpack.c.bf16 %v133, %v132
  %v368 = vpack.c.bf16 %v135, %v134
  %v369 = vpack.c.bf16 %v137, %v136
  %v370 = vpack.c.bf16 %v139, %v138
  %v372 = vlaneseq
  %v373 = vshrl.u32 %v372, 7
  %v374 = vsub.s32 0, %v373
  %v375 = vrot.slane %v224, %v374
  %v381 = vunpack.c.l.b16 %v220
  %v382 = vunpack.c.l.b16 %v221
  %v383 = vunpack.c.l.b16 %v222
  %v384 = vunpack.c.l.b16 %v223
  %v385 = vpack.c.b16 %v382, %v381
  %v386 = vpack.c.b16 %v384, %v383
  %vm389 = vcmask 261120
  %v391 = vsel %vm389, %v335, 0
  %v394 = vsel %vm389, %v336, 0
  %v397 = vsel %vm389, %v337, 0
  %v400 = vsel %vm389, %v338, 0
  %402 = vmatprep.subr.bf16.mxu0 0
  %403 = vmatpush1.bf16.msra.mxu0 %v385
  %404 = vmatprep.subr.bf16.mxu0 0
  %405 = vmatpush1.bf16.msra.mxu0 %v386
  %406 = vmatprep.subr.bf16.mxu0 0
  %407 = vmatpush1.bf16.msra.mxu0 0
  %408 = vmatprep.subr.bf16.mxu0 0
  %409 = vmatpush1.bf16.msra.mxu0 0
  %410 = vmatprep.subr.bf16.mxu0 0
  %411 = vmatpush1.bf16.msra.mxu0 0
  %412 = vmatprep.subr.bf16.mxu0 0
  %413 = vmatpush1.bf16.msra.mxu0 0
  %414 = vmatprep.subr.bf16.mxu0 0
  %415 = vmatpush1.bf16.msra.mxu0 0
  %416 = vmatprep.subr.bf16.mxu0 0
  %417 = vmatpush1.bf16.msra.mxu0 0
  %418 = vmatprep.subr.bf16.mxu0 0
  %419 = vmatpush1.bf16.msra.mxu0 0
  %420 = vmatprep.subr.bf16.mxu0 0
  %421 = vmatpush1.bf16.msra.mxu0 0
  %422 = vmatprep.subr.bf16.mxu0 0
  %423 = vmatpush1.bf16.msra.mxu0 0
  %424 = vmatprep.subr.bf16.mxu0 0
  %425 = vmatpush1.bf16.msra.mxu0 0
  %426 = vmatprep.subr.bf16.mxu0 0
  %427 = vmatpush1.bf16.msra.mxu0 0
  %428 = vmatprep.subr.bf16.mxu0 0
  %429 = vmatpush1.bf16.msra.mxu0 0
  %430 = vmatprep.subr.bf16.mxu0 0
  %431 = vmatpush1.bf16.msra.mxu0 0
  %432 = vmatprep.subr.bf16.mxu0 0
  %433 = vmatpush1.bf16.msra.mxu0 0
  %434 = vmatprep.mubr.bf16.mxu0 0
  %435 = vmatmul.mubr.bf16.gmra.mrb[0].mxu0 %v391
  %v436 = vpop.f32.mrb[0].mxu0
  %v437 = vadd.f32 %v375, %v436
  %v438 = vpop.f32.mrb[0].mxu0
  %v439 = vpop.f32.mrb[0].mxu0
  %v440 = vadd.f32 %v375, %v439
  %v441 = vpop.f32.mrb[0].mxu0
  %442 = vmatprep.mubr.bf16.mxu0 0
  %443 = vmatmul.mubr.bf16.gmra.mrb[0].mxu0 %v394
  %v444 = vpop.f32.mrb[0].mxu0
  %v445 = vadd.f32 %v375, %v444
  %v446 = vpop.f32.mrb[0].mxu0
  %v447 = vpop.f32.mrb[0].mxu0
  %v448 = vadd.f32 %v375, %v447
  %v449 = vpop.f32.mrb[0].mxu0
  %450 = vmatprep.mubr.bf16.mxu0 0
  %451 = vmatmul.mubr.bf16.gmra.mrb[0].mxu0 %v397
  %v452 = vpop.f32.mrb[0].mxu0
  %v453 = vadd.f32 %v375, %v452
  %v454 = vpop.f32.mrb[0].mxu0
  %v455 = vpop.f32.mrb[0].mxu0
  %v456 = vadd.f32 %v375, %v455
  %v457 = vpop.f32.mrb[0].mxu0
  %458 = vmatprep.mubr.bf16.mxu0 0
  %459 = vmatmul.mubr.bf16.gmra.mrb[0].mxu0 %v400
  %v460 = vpop.f32.mrb[0].mxu0
  %v461 = vadd.f32 %v375, %v460
  %v462 = vpop.f32.mrb[0].mxu0
  %v463 = vpop.f32.mrb[0].mxu0
  %v464 = vadd.f32 %v375, %v463
  %v465 = vpop.f32.mrb[0].mxu0
  %466 = vdwg.mxu0
  %v467 = vmul.f32 %v437, %v76
  %v468 = vmul.f32 %v437, %v77
  %v469 = vmul.f32 %v437, %v78
  %v470 = vmul.f32 %v437, %v79
  %v471 = vmul.f32 %v437, %v80
  %v472 = vmul.f32 %v437, %v81
  %v473 = vmul.f32 %v437, %v82
  %v474 = vmul.f32 %v437, %v83
  %v475 = vmul.f32 %v440, %v84
  %v476 = vmul.f32 %v440, %v85
  %v477 = vmul.f32 %v440, %v86
  %v478 = vmul.f32 %v440, %v87
  %v479 = vmul.f32 %v440, %v88
  %v480 = vmul.f32 %v440, %v89
  %v481 = vmul.f32 %v440, %v90
  %v482 = vmul.f32 %v440, %v91
  %v483 = vmul.f32 %v445, %v92
  %v484 = vmul.f32 %v445, %v93
  %v485 = vmul.f32 %v445, %v94
  %v486 = vmul.f32 %v445, %v95
  %v487 = vmul.f32 %v445, %v96
  %v488 = vmul.f32 %v445, %v97
  %v489 = vmul.f32 %v445, %v98
  %v490 = vmul.f32 %v445, %v99
  %v491 = vmul.f32 %v448, %v100
  %v492 = vmul.f32 %v448, %v101
  %v493 = vmul.f32 %v448, %v102
  %v494 = vmul.f32 %v448, %v103
  %v495 = vmul.f32 %v448, %v104
  %v496 = vmul.f32 %v448, %v105
  %v497 = vmul.f32 %v448, %v106
  %v498 = vmul.f32 %v448, %v107
  %v499 = vmul.f32 %v453, %v108
  %v500 = vmul.f32 %v453, %v109
  %v501 = vmul.f32 %v453, %v110
  %v502 = vmul.f32 %v453, %v111
  %v503 = vmul.f32 %v453, %v112
  %v504 = vmul.f32 %v453, %v113
  %v505 = vmul.f32 %v453, %v114
  %v506 = vmul.f32 %v453, %v115
  %v507 = vmul.f32 %v456, %v116
  %v508 = vmul.f32 %v456, %v117
  %v509 = vmul.f32 %v456, %v118
  %v510 = vmul.f32 %v456, %v119
  %v511 = vmul.f32 %v456, %v120
  %v512 = vmul.f32 %v456, %v121
  %v513 = vmul.f32 %v456, %v122
  %v514 = vmul.f32 %v456, %v123
  %v515 = vmul.f32 %v461, %v124
  %v516 = vmul.f32 %v461, %v125
  %v517 = vmul.f32 %v461, %v126
  %v518 = vmul.f32 %v461, %v127
  %v519 = vmul.f32 %v461, %v128
  %v520 = vmul.f32 %v461, %v129
  %v521 = vmul.f32 %v461, %v130
  %v522 = vmul.f32 %v461, %v131
  %v523 = vmul.f32 %v464, %v132
  %v524 = vmul.f32 %v464, %v133
  %v525 = vmul.f32 %v464, %v134
  %v526 = vmul.f32 %v464, %v135
  %v527 = vmul.f32 %v464, %v136
  %v528 = vmul.f32 %v464, %v137
  %v529 = vmul.f32 %v464, %v138
  %v530 = vmul.f32 %v464, %v139
  %v531 = vpack.c.bf16 %v468, %v467
  %v532 = vpack.c.bf16 %v470, %v469
  %v533 = vpack.c.bf16 %v472, %v471
  %v534 = vpack.c.bf16 %v474, %v473
  %v535 = vpack.c.bf16 %v476, %v475
  %v536 = vpack.c.bf16 %v478, %v477
  %v537 = vpack.c.bf16 %v480, %v479
  %v538 = vpack.c.bf16 %v482, %v481
  %v539 = vpack.c.bf16 %v484, %v483
  %v540 = vpack.c.bf16 %v486, %v485
  %v541 = vpack.c.bf16 %v488, %v487
  %v542 = vpack.c.bf16 %v490, %v489
  %v543 = vpack.c.bf16 %v492, %v491
  %v544 = vpack.c.bf16 %v494, %v493
  %v545 = vpack.c.bf16 %v496, %v495
  %v546 = vpack.c.bf16 %v498, %v497
  %v547 = vpack.c.bf16 %v500, %v499
  %v548 = vpack.c.bf16 %v502, %v501
  %v549 = vpack.c.bf16 %v504, %v503
  %v550 = vpack.c.bf16 %v506, %v505
  %v551 = vpack.c.bf16 %v508, %v507
  %v552 = vpack.c.bf16 %v510, %v509
  %v553 = vpack.c.bf16 %v512, %v511
  %v554 = vpack.c.bf16 %v514, %v513
  %v555 = vpack.c.bf16 %v516, %v515
  %v556 = vpack.c.bf16 %v518, %v517
  %v557 = vpack.c.bf16 %v520, %v519
  %v558 = vpack.c.bf16 %v522, %v521
  %v559 = vpack.c.bf16 %v524, %v523
  %v560 = vpack.c.bf16 %v526, %v525
  %v561 = vpack.c.bf16 %v528, %v527
  %v562 = vpack.c.bf16 %v530, %v529
  %v579 = vunpack.c.l.b16 %v204
  %v580 = vunpack.c.h.b16 %v204
  %v581 = vunpack.c.l.b16 %v205
  %v582 = vunpack.c.h.b16 %v205
  %v583 = vunpack.c.l.b16 %v206
  %v584 = vunpack.c.h.b16 %v206
  %v585 = vunpack.c.l.b16 %v207
  %v586 = vunpack.c.h.b16 %v207
  %v587 = vunpack.c.l.b16 %v208
  %v588 = vunpack.c.h.b16 %v208
  %v589 = vunpack.c.l.b16 %v209
  %v590 = vunpack.c.h.b16 %v209
  %v591 = vunpack.c.l.b16 %v210
  %v592 = vunpack.c.h.b16 %v210
  %v593 = vunpack.c.l.b16 %v211
  %v594 = vunpack.c.h.b16 %v211
  %v595 = vunpack.c.l.b16 %v212
  %v596 = vunpack.c.h.b16 %v212
  %v597 = vunpack.c.l.b16 %v213
  %v598 = vunpack.c.h.b16 %v213
  %v599 = vunpack.c.l.b16 %v214
  %v600 = vunpack.c.h.b16 %v214
  %v601 = vunpack.c.l.b16 %v215
  %v602 = vunpack.c.h.b16 %v215
  %v603 = vunpack.c.l.b16 %v216
  %v604 = vunpack.c.h.b16 %v216
  %v605 = vunpack.c.l.b16 %v217
  %v606 = vunpack.c.h.b16 %v217
  %v607 = vunpack.c.l.b16 %v218
  %v608 = vunpack.c.h.b16 %v218
  %v609 = vunpack.c.l.b16 %v219
  %v610 = vunpack.c.h.b16 %v219
  %v611 = vpack.c.b16 %v583, %v579
  %v612 = vpack.c.b16 %v584, %v580
  %v613 = vpack.c.b16 %v585, %v581
  %v614 = vpack.c.b16 %v586, %v582
  %v615 = vpack.c.b16 %v591, %v587
  %v616 = vpack.c.b16 %v592, %v588
  %v617 = vpack.c.b16 %v593, %v589
  %v618 = vpack.c.b16 %v594, %v590
  %v619 = vpack.c.b16 %v599, %v595
  %v620 = vpack.c.b16 %v600, %v596
  %v621 = vpack.c.b16 %v601, %v597
  %v622 = vpack.c.b16 %v602, %v598
  %v623 = vpack.c.b16 %v607, %v603
  %v624 = vpack.c.b16 %v608, %v604
  %v625 = vpack.c.b16 %v609, %v605
  %v626 = vpack.c.b16 %v610, %v606
  %643 = vmatprep.subr.bf16.mxu0 0
  %644 = vmatpush1.bf16.msra.mxu0 %v531
  %645 = vmatprep.subr.bf16.mxu0 0
  %646 = vmatpush1.bf16.msra.mxu0 %v532
  %647 = vmatprep.subr.bf16.mxu0 0
  %648 = vmatpush1.bf16.msra.mxu0 %v533
  %649 = vmatprep.subr.bf16.mxu0 0
  %650 = vmatpush1.bf16.msra.mxu0 %v534
  %651 = vmatprep.subr.bf16.mxu0 0
  %652 = vmatpush1.bf16.msra.mxu0 %v535
  %653 = vmatprep.subr.bf16.mxu0 0
  %654 = vmatpush1.bf16.msra.mxu0 %v536
  %655 = vmatprep.subr.bf16.mxu0 0
  %656 = vmatpush1.bf16.msra.mxu0 %v537
  %657 = vmatprep.subr.bf16.mxu0 0
  %658 = vmatpush1.bf16.msra.mxu0 %v538
  %659 = vmatprep.subr.bf16.mxu0 0
  %660 = vmatpush1.bf16.msra.mxu0 %v539
  %661 = vmatprep.subr.bf16.mxu0 0
  %662 = vmatpush1.bf16.msra.mxu0 %v540
  %663 = vmatprep.subr.bf16.mxu0 0
  %664 = vmatpush1.bf16.msra.mxu0 %v541
  %665 = vmatprep.subr.bf16.mxu0 0
  %666 = vmatpush1.bf16.msra.mxu0 %v542
  %667 = vmatprep.subr.bf16.mxu0 0
  %668 = vmatpush1.bf16.msra.mxu0 %v543
  %669 = vmatprep.subr.bf16.mxu0 0
  %670 = vmatpush1.bf16.msra.mxu0 %v544
  %671 = vmatprep.subr.bf16.mxu0 0
  %672 = vmatpush1.bf16.msra.mxu0 %v545
  %673 = vmatprep.subr.bf16.mxu0 0
  %674 = vmatpush1.bf16.msra.mxu0 %v546
  %675 = vmatprep.mubr.bf16.mxu0 %v612
  %676 = vmatmul.mubr.bf16.gmra.mrb[0].mxu0 %v611
  %v677 = vpop.f32.mrb[0].mxu0
  %v678 = vadd.f32 0.0, %v677
  %v679 = vpop.f32.mrb[0].mxu0
  %v680 = vpop.f32.mrb[0].mxu0
  %v681 = vadd.f32 0.0, %v680
  %v682 = vpop.f32.mrb[0].mxu0
  %683 = vmatprep.mubr.bf16.mxu0 %v616
  %684 = vmatmul.mubr.bf16.gmra.mrb[0].mxu0 %v615
  %v685 = vpop.f32.mrb[0].mxu0
  %v686 = vadd.f32 0.0, %v685
  %v687 = vpop.f32.mrb[0].mxu0
  %v688 = vpop.f32.mrb[0].mxu0
  %v689 = vadd.f32 0.0, %v688
  %v690 = vpop.f32.mrb[0].mxu0
  %691 = vmatprep.mubr.bf16.mxu0 %v620
  %692 = vmatmul.mubr.bf16.gmra.mrb[0].mxu0 %v619
  %v693 = vpop.f32.mrb[0].mxu0
  %v694 = vadd.f32 0.0, %v693
  %v695 = vpop.f32.mrb[0].mxu0
  %v696 = vpop.f32.mrb[0].mxu0
  %v697 = vadd.f32 0.0, %v696
  %v698 = vpop.f32.mrb[0].mxu0
  %699 = vmatprep.mubr.bf16.mxu0 %v624
  %700 = vmatmul.mubr.bf16.gmra.mrb[0].mxu0 %v623
  %v701 = vpop.f32.mrb[0].mxu0
  %v702 = vadd.f32 0.0, %v701
  %v703 = vpop.f32.mrb[0].mxu0
  %v704 = vpop.f32.mrb[0].mxu0
  %v705 = vadd.f32 0.0, %v704
  %v706 = vpop.f32.mrb[0].mxu0
  %707 = vdwg.mxu0
  %708 = vmatprep.subr.bf16.mxu0 0
  %709 = vmatpush1.bf16.msra.mxu0 %v547
  %710 = vmatprep.subr.bf16.mxu0 0
  %711 = vmatpush1.bf16.msra.mxu0 %v548
  %712 = vmatprep.subr.bf16.mxu0 0
  %713 = vmatpush1.bf16.msra.mxu0 %v549
  %714 = vmatprep.subr.bf16.mxu0 0
  %715 = vmatpush1.bf16.msra.mxu0 %v550
  %716 = vmatprep.subr.bf16.mxu0 0
  %717 = vmatpush1.bf16.msra.mxu0 %v551
  %718 = vmatprep.subr.bf16.mxu0 0
  %719 = vmatpush1.bf16.msra.mxu0 %v552
  %720 = vmatprep.subr.bf16.mxu0 0
  %721 = vmatpush1.bf16.msra.mxu0 %v553
  %722 = vmatprep.subr.bf16.mxu0 0
  %723 = vmatpush1.bf16.msra.mxu0 %v554
  %724 = vmatprep.subr.bf16.mxu0 0
  %725 = vmatpush1.bf16.msra.mxu0 %v555
  %726 = vmatprep.subr.bf16.mxu0 0
  %727 = vmatpush1.bf16.msra.mxu0 %v556
  %728 = vmatprep.subr.bf16.mxu0 0
  %729 = vmatpush1.bf16.msra.mxu0 %v557
  %730 = vmatprep.subr.bf16.mxu0 0
  %731 = vmatpush1.bf16.msra.mxu0 %v558
  %732 = vmatprep.subr.bf16.mxu0 0
  %733 = vmatpush1.bf16.msra.mxu0 %v559
  %734 = vmatprep.subr.bf16.mxu0 0
  %735 = vmatpush1.bf16.msra.mxu0 %v560
  %736 = vmatprep.subr.bf16.mxu0 0
  %737 = vmatpush1.bf16.msra.mxu0 %v561
  %738 = vmatprep.subr.bf16.mxu0 0
  %739 = vmatpush1.bf16.msra.mxu0 %v562
  %740 = vmatprep.mubr.bf16.mxu0 %v614
  %741 = vmatmul.mubr.bf16.gmra.mrb[0].mxu0 %v613
  %v742 = vpop.f32.mrb[0].mxu0
  %v743 = vadd.f32 %v678, %v742
  %v744 = vpop.f32.mrb[0].mxu0
  %v745 = vpop.f32.mrb[0].mxu0
  %v746 = vadd.f32 %v681, %v745
  %v747 = vpop.f32.mrb[0].mxu0
  %748 = vmatprep.mubr.bf16.mxu0 %v618
  %749 = vmatmul.mubr.bf16.gmra.mrb[0].mxu0 %v617
  %v750 = vpop.f32.mrb[0].mxu0
  %v751 = vadd.f32 %v686, %v750
  %v752 = vpop.f32.mrb[0].mxu0
  %v753 = vpop.f32.mrb[0].mxu0
  %v754 = vadd.f32 %v689, %v753
  %v755 = vpop.f32.mrb[0].mxu0
  %756 = vmatprep.mubr.bf16.mxu0 %v622
  %757 = vmatmul.mubr.bf16.gmra.mrb[0].mxu0 %v621
  %v758 = vpop.f32.mrb[0].mxu0
  %v759 = vadd.f32 %v694, %v758
  %v760 = vpop.f32.mrb[0].mxu0
  %v761 = vpop.f32.mrb[0].mxu0
  %v762 = vadd.f32 %v697, %v761
  %v763 = vpop.f32.mrb[0].mxu0
  %764 = vmatprep.mubr.bf16.mxu0 %v626
  %765 = vmatmul.mubr.bf16.gmra.mrb[0].mxu0 %v625
  %v766 = vpop.f32.mrb[0].mxu0
  %v767 = vadd.f32 %v702, %v766
  %v768 = vpop.f32.mrb[0].mxu0
  %v769 = vpop.f32.mrb[0].mxu0
  %v770 = vadd.f32 %v705, %v769
  %v771 = vpop.f32.mrb[0].mxu0
  %772 = vdwg.mxu0
  %v773 = vpack.c.bf16 %v746, %v743
  %v774 = vpack.c.bf16 %v754, %v751
  %v775 = vpack.c.bf16 %v762, %v759
  %v776 = vpack.c.bf16 %v770, %v767
  %vm777 = vcmask 64512
  %v779 = vsel %vm777, %v773, 0
  %v782 = vsel %vm777, %v774, 0
  %v785 = vsel %vm777, %v775, 0
  %v788 = vsel %vm777, %v776, 0
  %vm790 = vcmask 1043456
  %v792 = vsel %vm790, %v225, 0
  %794 = vmatprep.subr.bf16.mxu0 0
  %795 = vmatpush1.bf16.msra.mxu0 %v792
  %796 = vmatprep.subr.bf16.mxu0 0
  %797 = vmatpush1.bf16.msra.mxu0 0
  %798 = vmatprep.subr.bf16.mxu0 0
  %799 = vmatpush1.bf16.msra.mxu0 0
  %800 = vmatprep.subr.bf16.mxu0 0
  %801 = vmatpush1.bf16.msra.mxu0 0
  %802 = vmatprep.subr.bf16.mxu0 0
  %803 = vmatpush1.bf16.msra.mxu0 0
  %804 = vmatprep.subr.bf16.mxu0 0
  %805 = vmatpush1.bf16.msra.mxu0 0
  %806 = vmatprep.subr.bf16.mxu0 0
  %807 = vmatpush1.bf16.msra.mxu0 0
  %808 = vmatprep.subr.bf16.mxu0 0
  %809 = vmatpush1.bf16.msra.mxu0 0
  %810 = vmatprep.subr.bf16.mxu0 0
  %811 = vmatpush1.bf16.msra.mxu0 0
  %812 = vmatprep.subr.bf16.mxu0 0
  %813 = vmatpush1.bf16.msra.mxu0 0
  %814 = vmatprep.subr.bf16.mxu0 0
  %815 = vmatpush1.bf16.msra.mxu0 0
  %816 = vmatprep.subr.bf16.mxu0 0
  %817 = vmatpush1.bf16.msra.mxu0 0
  %818 = vmatprep.subr.bf16.mxu0 0
  %819 = vmatpush1.bf16.msra.mxu0 0
  %820 = vmatprep.subr.bf16.mxu0 0
  %821 = vmatpush1.bf16.msra.mxu0 0
  %822 = vmatprep.subr.bf16.mxu0 0
  %823 = vmatpush1.bf16.msra.mxu0 0
  %824 = vmatprep.subr.bf16.mxu0 0
  %825 = vmatpush1.bf16.msra.mxu0 0
  %826 = vmatprep.mubr.bf16.mxu0 0
  %827 = vmatmul.mubr.bf16.gmra.mrb[0].mxu0 %v779
  %v828 = vpop.f32.mrb[0].mxu0
  %v829 = vadd.f32 0.0, %v828
  %v830 = vpop.f32.mrb[0].mxu0
  %v831 = vpop.f32.mrb[0].mxu0
  %v832 = vadd.f32 0.0, %v831
  %v833 = vpop.f32.mrb[0].mxu0
  %834 = vmatprep.mubr.bf16.mxu0 0
  %835 = vmatmul.mubr.bf16.gmra.mrb[0].mxu0 %v782
  %v836 = vpop.f32.mrb[0].mxu0
  %v837 = vadd.f32 0.0, %v836
  %v838 = vpop.f32.mrb[0].mxu0
  %v839 = vpop.f32.mrb[0].mxu0
  %v840 = vadd.f32 0.0, %v839
  %v841 = vpop.f32.mrb[0].mxu0
  %842 = vmatprep.mubr.bf16.mxu0 0
  %843 = vmatmul.mubr.bf16.gmra.mrb[0].mxu0 %v785
  %v844 = vpop.f32.mrb[0].mxu0
  %v845 = vadd.f32 0.0, %v844
  %v846 = vpop.f32.mrb[0].mxu0
  %v847 = vpop.f32.mrb[0].mxu0
  %v848 = vadd.f32 0.0, %v847
  %v849 = vpop.f32.mrb[0].mxu0
  %850 = vmatprep.mubr.bf16.mxu0 0
  %851 = vmatmul.mubr.bf16.gmra.mrb[0].mxu0 %v788
  %v852 = vpop.f32.mrb[0].mxu0
  %v853 = vadd.f32 0.0, %v852
  %v854 = vpop.f32.mrb[0].mxu0
  %v855 = vpop.f32.mrb[0].mxu0
  %v856 = vadd.f32 0.0, %v855
  %v857 = vpop.f32.mrb[0].mxu0
  %858 = vdwg.mxu0
  %v859 = vmax.f32 %v829, 0.0
  %v860 = vmax.f32 %v832, 0.0
  %v861 = vmax.f32 %v837, 0.0
  %v862 = vmax.f32 %v840, 0.0
  %v863 = vmax.f32 %v845, 0.0
  %v864 = vmax.f32 %v848, 0.0
  %v865 = vmax.f32 %v853, 0.0
  %v866 = vmax.f32 %v856, 0.0
  %v867 = vpack.c.bf16 %v860, %v859
  %v868 = vpack.c.bf16 %v862, %v861
  %v869 = vpack.c.bf16 %v864, %v863
  %v870 = vpack.c.bf16 %v866, %v865
  %v887 = vunpack.c.l.b16 %v226
  %v888 = vunpack.c.l.b16 %v227
  %v889 = vunpack.c.l.b16 %v228
  %v890 = vunpack.c.l.b16 %v229
  %v891 = vunpack.c.l.b16 %v230
  %v892 = vunpack.c.l.b16 %v231
  %v893 = vunpack.c.l.b16 %v232
  %v894 = vunpack.c.l.b16 %v233
  %v895 = vunpack.c.l.b16 %v234
  %v896 = vunpack.c.l.b16 %v235
  %v897 = vunpack.c.l.b16 %v236
  %v898 = vunpack.c.l.b16 %v237
  %v899 = vunpack.c.l.b16 %v238
  %v900 = vunpack.c.l.b16 %v239
  %v901 = vunpack.c.l.b16 %v240
  %v902 = vunpack.c.l.b16 %v241
  %v903 = vpack.c.b16 %v888, %v887
  %v904 = vpack.c.b16 %v890, %v889
  %v905 = vpack.c.b16 %v892, %v891
  %v906 = vpack.c.b16 %v894, %v893
  %v907 = vpack.c.b16 %v896, %v895
  %v908 = vpack.c.b16 %v898, %v897
  %v909 = vpack.c.b16 %v900, %v899
  %v910 = vpack.c.b16 %v902, %v901
  %919 = vmatprep.subr.bf16.mxu0 0
  %920 = vmatpush1.bf16.msra.mxu0 %v903
  %921 = vmatprep.subr.bf16.mxu0 0
  %922 = vmatpush1.bf16.msra.mxu0 %v904
  %923 = vmatprep.subr.bf16.mxu0 0
  %924 = vmatpush1.bf16.msra.mxu0 %v905
  %925 = vmatprep.subr.bf16.mxu0 0
  %926 = vmatpush1.bf16.msra.mxu0 %v906
  %927 = vmatprep.subr.bf16.mxu0 0
  %928 = vmatpush1.bf16.msra.mxu0 %v907
  %929 = vmatprep.subr.bf16.mxu0 0
  %930 = vmatpush1.bf16.msra.mxu0 %v908
  %931 = vmatprep.subr.bf16.mxu0 0
  %932 = vmatpush1.bf16.msra.mxu0 %v909
  %933 = vmatprep.subr.bf16.mxu0 0
  %934 = vmatpush1.bf16.msra.mxu0 %v910
  %935 = vmatprep.subr.bf16.mxu0 0
  %936 = vmatpush1.bf16.msra.mxu0 0
  %937 = vmatprep.subr.bf16.mxu0 0
  %938 = vmatpush1.bf16.msra.mxu0 0
  %939 = vmatprep.subr.bf16.mxu0 0
  %940 = vmatpush1.bf16.msra.mxu0 0
  %941 = vmatprep.subr.bf16.mxu0 0
  %942 = vmatpush1.bf16.msra.mxu0 0
  %943 = vmatprep.subr.bf16.mxu0 0
  %944 = vmatpush1.bf16.msra.mxu0 0
  %945 = vmatprep.subr.bf16.mxu0 0
  %946 = vmatpush1.bf16.msra.mxu0 0
  %947 = vmatprep.subr.bf16.mxu0 0
  %948 = vmatpush1.bf16.msra.mxu0 0
  %949 = vmatprep.subr.bf16.mxu0 0
  %950 = vmatpush1.bf16.msra.mxu0 0
  %951 = vmatprep.mubr.bf16.mxu0 0
  %952 = vmatmul.mubr.bf16.gmra.mrb[0].mxu0 %v867
  %v953 = vpop.f32.mrb[0].mxu0
  %v954 = vadd.f32 0.0, %v953
  %v955 = vpop.f32.mrb[0].mxu0
  %v956 = vpop.f32.mrb[0].mxu0
  %v957 = vadd.f32 0.0, %v956
  %v958 = vpop.f32.mrb[0].mxu0
  %959 = vmatprep.mubr.bf16.mxu0 0
  %960 = vmatmul.mubr.bf16.gmra.mrb[0].mxu0 %v868
  %v961 = vpop.f32.mrb[0].mxu0
  %v962 = vadd.f32 0.0, %v961
  %v963 = vpop.f32.mrb[0].mxu0
  %v964 = vpop.f32.mrb[0].mxu0
  %v965 = vadd.f32 0.0, %v964
  %v966 = vpop.f32.mrb[0].mxu0
  %967 = vmatprep.mubr.bf16.mxu0 0
  %968 = vmatmul.mubr.bf16.gmra.mrb[0].mxu0 %v869
  %v969 = vpop.f32.mrb[0].mxu0
  %v970 = vadd.f32 0.0, %v969
  %v971 = vpop.f32.mrb[0].mxu0
  %v972 = vpop.f32.mrb[0].mxu0
  %v973 = vadd.f32 0.0, %v972
  %v974 = vpop.f32.mrb[0].mxu0
  %975 = vmatprep.mubr.bf16.mxu0 0
  %976 = vmatmul.mubr.bf16.gmra.mrb[0].mxu0 %v870
  %v977 = vpop.f32.mrb[0].mxu0
  %v978 = vadd.f32 0.0, %v977
  %v979 = vpop.f32.mrb[0].mxu0
  %v980 = vpop.f32.mrb[0].mxu0
  %v981 = vadd.f32 0.0, %v980
  %v982 = vpop.f32.mrb[0].mxu0
  %983 = vdwg.mxu0
  %v984 = vmax.f32 %v954, 0.0
  %v985 = vmax.f32 %v957, 0.0
  %v986 = vmax.f32 %v962, 0.0
  %v987 = vmax.f32 %v965, 0.0
  %v988 = vmax.f32 %v970, 0.0
  %v989 = vmax.f32 %v973, 0.0
  %v990 = vmax.f32 %v978, 0.0
  %v991 = vmax.f32 %v981, 0.0
  %v992 = vpack.c.bf16 %v985, %v984
  %v993 = vpack.c.bf16 %v987, %v986
  %v994 = vpack.c.bf16 %v989, %v988
  %v995 = vpack.c.bf16 %v991, %v990
  %v1012 = vunpack.c.l.b16 %v242
  %v1013 = vunpack.c.l.b16 %v243
  %v1014 = vunpack.c.l.b16 %v244
  %v1015 = vunpack.c.l.b16 %v245
  %v1016 = vunpack.c.l.b16 %v246
  %v1017 = vunpack.c.l.b16 %v247
  %v1018 = vunpack.c.l.b16 %v248
  %v1019 = vunpack.c.l.b16 %v249
  %v1020 = vunpack.c.l.b16 %v250
  %v1021 = vunpack.c.l.b16 %v251
  %v1022 = vunpack.c.l.b16 %v252
  %v1023 = vunpack.c.l.b16 %v253
  %v1024 = vunpack.c.l.b16 %v254
  %v1025 = vunpack.c.l.b16 %v255
  %v1026 = vunpack.c.l.b16 %v256
  %v1027 = vunpack.c.l.b16 %v257
  %v1028 = vpack.c.b16 %v1013, %v1012
  %v1029 = vpack.c.b16 %v1015, %v1014
  %v1030 = vpack.c.b16 %v1017, %v1016
  %v1031 = vpack.c.b16 %v1019, %v1018
  %v1032 = vpack.c.b16 %v1021, %v1020
  %v1033 = vpack.c.b16 %v1023, %v1022
  %v1034 = vpack.c.b16 %v1025, %v1024
  %v1035 = vpack.c.b16 %v1027, %v1026
  %1044 = vmatprep.subr.bf16.mxu0 0
  %1045 = vmatpush1.bf16.msra.mxu0 %v1028
  %1046 = vmatprep.subr.bf16.mxu0 0
  %1047 = vmatpush1.bf16.msra.mxu0 %v1029
  %1048 = vmatprep.subr.bf16.mxu0 0
  %1049 = vmatpush1.bf16.msra.mxu0 %v1030
  %1050 = vmatprep.subr.bf16.mxu0 0
  %1051 = vmatpush1.bf16.msra.mxu0 %v1031
  %1052 = vmatprep.subr.bf16.mxu0 0
  %1053 = vmatpush1.bf16.msra.mxu0 %v1032
  %1054 = vmatprep.subr.bf16.mxu0 0
  %1055 = vmatpush1.bf16.msra.mxu0 %v1033
  %1056 = vmatprep.subr.bf16.mxu0 0
  %1057 = vmatpush1.bf16.msra.mxu0 %v1034
  %1058 = vmatprep.subr.bf16.mxu0 0
  %1059 = vmatpush1.bf16.msra.mxu0 %v1035
  %1060 = vmatprep.subr.bf16.mxu0 0
  %1061 = vmatpush1.bf16.msra.mxu0 0
  %1062 = vmatprep.subr.bf16.mxu0 0
  %1063 = vmatpush1.bf16.msra.mxu0 0
  %1064 = vmatprep.subr.bf16.mxu0 0
  %1065 = vmatpush1.bf16.msra.mxu0 0
  %1066 = vmatprep.subr.bf16.mxu0 0
  %1067 = vmatpush1.bf16.msra.mxu0 0
  %1068 = vmatprep.subr.bf16.mxu0 0
  %1069 = vmatpush1.bf16.msra.mxu0 0
  %1070 = vmatprep.subr.bf16.mxu0 0
  %1071 = vmatpush1.bf16.msra.mxu0 0
  %1072 = vmatprep.subr.bf16.mxu0 0
  %1073 = vmatpush1.bf16.msra.mxu0 0
  %1074 = vmatprep.subr.bf16.mxu0 0
  %1075 = vmatpush1.bf16.msra.mxu0 0
  %1076 = vmatprep.mubr.bf16.mxu0 0
  %1077 = vmatmul.mubr.bf16.gmra.mrb[0].mxu0 %v992
  %v1078 = vpop.f32.mrb[0].mxu0
  %v1079 = vadd.f32 0.0, %v1078
  %v1080 = vpop.f32.mrb[0].mxu0
  %v1081 = vpop.f32.mrb[0].mxu0
  %v1082 = vadd.f32 0.0, %v1081
  %v1083 = vpop.f32.mrb[0].mxu0
  %1084 = vmatprep.mubr.bf16.mxu0 0
  %1085 = vmatmul.mubr.bf16.gmra.mrb[0].mxu0 %v993
  %v1086 = vpop.f32.mrb[0].mxu0
  %v1087 = vadd.f32 0.0, %v1086
  %v1088 = vpop.f32.mrb[0].mxu0
  %v1089 = vpop.f32.mrb[0].mxu0
  %v1090 = vadd.f32 0.0, %v1089
  %v1091 = vpop.f32.mrb[0].mxu0
  %1092 = vmatprep.mubr.bf16.mxu0 0
  %1093 = vmatmul.mubr.bf16.gmra.mrb[0].mxu0 %v994
  %v1094 = vpop.f32.mrb[0].mxu0
  %v1095 = vadd.f32 0.0, %v1094
  %v1096 = vpop.f32.mrb[0].mxu0
  %v1097 = vpop.f32.mrb[0].mxu0
  %v1098 = vadd.f32 0.0, %v1097
  %v1099 = vpop.f32.mrb[0].mxu0
  %1100 = vmatprep.mubr.bf16.mxu0 0
  %1101 = vmatmul.mubr.bf16.gmra.mrb[0].mxu0 %v995
  %v1102 = vpop.f32.mrb[0].mxu0
  %v1103 = vadd.f32 0.0, %v1102
  %v1104 = vpop.f32.mrb[0].mxu0
  %v1105 = vpop.f32.mrb[0].mxu0
  %v1106 = vadd.f32 0.0, %v1105
  %v1107 = vpop.f32.mrb[0].mxu0
  %1108 = vdwg.mxu0
  %v1109 = vpack.c.bf16 %v1082, %v1079
  %v1110 = vpack.c.bf16 %v1090, %v1087
  %v1111 = vpack.c.bf16 %v1098, %v1095
  %v1112 = vpack.c.bf16 %v1106, %v1103
  %v1114 = vsel %vm777, %v1109, 0
  %v1117 = vsel %vm777, %v1110, 0
  %v1120 = vsel %vm777, %v1111, 0
  %v1123 = vsel %vm777, %v1112, 0
  %v1126 = vsel %vm790, %v262, 0
  %1128 = vmatprep.subr.bf16.mxu0 0
  %1129 = vmatpush1.bf16.msra.mxu0 %v1126
  %1130 = vmatprep.subr.bf16.mxu0 0
  %1131 = vmatpush1.bf16.msra.mxu0 0
  %1132 = vmatprep.subr.bf16.mxu0 0
  %1133 = vmatpush1.bf16.msra.mxu0 0
  %1134 = vmatprep.subr.bf16.mxu0 0
  %1135 = vmatpush1.bf16.msra.mxu0 0
  %1136 = vmatprep.subr.bf16.mxu0 0
  %1137 = vmatpush1.bf16.msra.mxu0 0
  %1138 = vmatprep.subr.bf16.mxu0 0
  %1139 = vmatpush1.bf16.msra.mxu0 0
  %1140 = vmatprep.subr.bf16.mxu0 0
  %1141 = vmatpush1.bf16.msra.mxu0 0
  %1142 = vmatprep.subr.bf16.mxu0 0
  %1143 = vmatpush1.bf16.msra.mxu0 0
  %1144 = vmatprep.subr.bf16.mxu0 0
  %1145 = vmatpush1.bf16.msra.mxu0 0
  %1146 = vmatprep.subr.bf16.mxu0 0
  %1147 = vmatpush1.bf16.msra.mxu0 0
  %1148 = vmatprep.subr.bf16.mxu0 0
  %1149 = vmatpush1.bf16.msra.mxu0 0
  %1150 = vmatprep.subr.bf16.mxu0 0
  %1151 = vmatpush1.bf16.msra.mxu0 0
  %1152 = vmatprep.subr.bf16.mxu0 0
  %1153 = vmatpush1.bf16.msra.mxu0 0
  %1154 = vmatprep.subr.bf16.mxu0 0
  %1155 = vmatpush1.bf16.msra.mxu0 0
  %1156 = vmatprep.subr.bf16.mxu0 0
  %1157 = vmatpush1.bf16.msra.mxu0 0
  %1158 = vmatprep.subr.bf16.mxu0 0
  %1159 = vmatpush1.bf16.msra.mxu0 0
  %1160 = vmatprep.mubr.bf16.mxu0 0
  %1161 = vmatmul.mubr.bf16.gmra.mrb[0].mxu0 %v1114
  %v1162 = vpop.f32.mrb[0].mxu0
  %v1163 = vadd.f32 0.0, %v1162
  %v1164 = vpop.f32.mrb[0].mxu0
  %v1165 = vpop.f32.mrb[0].mxu0
  %v1166 = vadd.f32 0.0, %v1165
  %v1167 = vpop.f32.mrb[0].mxu0
  %1168 = vmatprep.mubr.bf16.mxu0 0
  %1169 = vmatmul.mubr.bf16.gmra.mrb[0].mxu0 %v1117
  %v1170 = vpop.f32.mrb[0].mxu0
  %v1171 = vadd.f32 0.0, %v1170
  %v1172 = vpop.f32.mrb[0].mxu0
  %v1173 = vpop.f32.mrb[0].mxu0
  %v1174 = vadd.f32 0.0, %v1173
  %v1175 = vpop.f32.mrb[0].mxu0
  %1176 = vmatprep.mubr.bf16.mxu0 0
  %1177 = vmatmul.mubr.bf16.gmra.mrb[0].mxu0 %v1120
  %v1178 = vpop.f32.mrb[0].mxu0
  %v1179 = vadd.f32 0.0, %v1178
  %v1180 = vpop.f32.mrb[0].mxu0
  %v1181 = vpop.f32.mrb[0].mxu0
  %v1182 = vadd.f32 0.0, %v1181
  %v1183 = vpop.f32.mrb[0].mxu0
  %1184 = vmatprep.mubr.bf16.mxu0 0
  %1185 = vmatmul.mubr.bf16.gmra.mrb[0].mxu0 %v1123
  %v1186 = vpop.f32.mrb[0].mxu0
  %v1187 = vadd.f32 0.0, %v1186
  %v1188 = vpop.f32.mrb[0].mxu0
  %v1189 = vpop.f32.mrb[0].mxu0
  %v1190 = vadd.f32 0.0, %v1189
  %v1191 = vpop.f32.mrb[0].mxu0
  %1192 = vdwg.mxu0
  %v1197 = vunpack.c.l.b16 %v258
  %v1198 = vunpack.c.l.b16 %v259
  %v1199 = vunpack.c.l.b16 %v260
  %v1200 = vunpack.c.l.b16 %v261
  %v1201 = vpack.c.b16 %v1198, %v1197
  %v1202 = vpack.c.b16 %v1200, %v1199
  %1205 = vmatprep.subr.bf16.mxu0 0
  %1206 = vmatpush1.bf16.msra.mxu0 %v1201
  %1207 = vmatprep.subr.bf16.mxu0 0
  %1208 = vmatpush1.bf16.msra.mxu0 %v1202
  %1209 = vmatprep.subr.bf16.mxu0 0
  %1210 = vmatpush1.bf16.msra.mxu0 0
  %1211 = vmatprep.subr.bf16.mxu0 0
  %1212 = vmatpush1.bf16.msra.mxu0 0
  %1213 = vmatprep.subr.bf16.mxu0 0
  %1214 = vmatpush1.bf16.msra.mxu0 0
  %1215 = vmatprep.subr.bf16.mxu0 0
  %1216 = vmatpush1.bf16.msra.mxu0 0
  %1217 = vmatprep.subr.bf16.mxu0 0
  %1218 = vmatpush1.bf16.msra.mxu0 0
  %1219 = vmatprep.subr.bf16.mxu0 0
  %1220 = vmatpush1.bf16.msra.mxu0 0
  %1221 = vmatprep.subr.bf16.mxu0 0
  %1222 = vmatpush1.bf16.msra.mxu0 0
  %1223 = vmatprep.subr.bf16.mxu0 0
  %1224 = vmatpush1.bf16.msra.mxu0 0
  %1225 = vmatprep.subr.bf16.mxu0 0
  %1226 = vmatpush1.bf16.msra.mxu0 0
  %1227 = vmatprep.subr.bf16.mxu0 0
  %1228 = vmatpush1.bf16.msra.mxu0 0
  %1229 = vmatprep.subr.bf16.mxu0 0
  %1230 = vmatpush1.bf16.msra.mxu0 0
  %1231 = vmatprep.subr.bf16.mxu0 0
  %1232 = vmatpush1.bf16.msra.mxu0 0
  %1233 = vmatprep.subr.bf16.mxu0 0
  %1234 = vmatpush1.bf16.msra.mxu0 0
  %1235 = vmatprep.subr.bf16.mxu0 0
  %1236 = vmatpush1.bf16.msra.mxu0 0
  %1237 = vmatprep.mubr.bf16.mxu0 0
  %1238 = vmatmul.mubr.bf16.gmra.mrb[0].mxu0 %v391
  %v1239 = vpop.f32.mrb[0].mxu0
  %v1240 = vadd.f32 %v1163, %v1239
  %v1241 = vpop.f32.mrb[0].mxu0
  %v1242 = vpop.f32.mrb[0].mxu0
  %v1243 = vadd.f32 %v1166, %v1242
  %v1244 = vpop.f32.mrb[0].mxu0
  %1245 = vmatprep.mubr.bf16.mxu0 0
  %1246 = vmatmul.mubr.bf16.gmra.mrb[0].mxu0 %v394
  %v1247 = vpop.f32.mrb[0].mxu0
  %v1248 = vadd.f32 %v1171, %v1247
  %v1249 = vpop.f32.mrb[0].mxu0
  %v1250 = vpop.f32.mrb[0].mxu0
  %v1251 = vadd.f32 %v1174, %v1250
  %v1252 = vpop.f32.mrb[0].mxu0
  %1253 = vmatprep.mubr.bf16.mxu0 0
  %1254 = vmatmul.mubr.bf16.gmra.mrb[0].mxu0 %v397
  %v1255 = vpop.f32.mrb[0].mxu0
  %v1256 = vadd.f32 %v1179, %v1255
  %v1257 = vpop.f32.mrb[0].mxu0
  %v1258 = vpop.f32.mrb[0].mxu0
  %v1259 = vadd.f32 %v1182, %v1258
  %v1260 = vpop.f32.mrb[0].mxu0
  %1261 = vmatprep.mubr.bf16.mxu0 0
  %1262 = vmatmul.mubr.bf16.gmra.mrb[0].mxu0 %v400
  %v1263 = vpop.f32.mrb[0].mxu0
  %v1264 = vadd.f32 %v1187, %v1263
  %v1265 = vpop.f32.mrb[0].mxu0
  %v1266 = vpop.f32.mrb[0].mxu0
  %v1267 = vadd.f32 %v1190, %v1266
  %v1268 = vpop.f32.mrb[0].mxu0
  %1269 = vdwg.mxu0
  %v1270 = vmax.f32 %v1240, 0.0
  %v1271 = vmax.f32 %v1243, 0.0
  %v1272 = vmax.f32 %v1248, 0.0
  %v1273 = vmax.f32 %v1251, 0.0
  %v1274 = vmax.f32 %v1256, 0.0
  %v1275 = vmax.f32 %v1259, 0.0
  %v1276 = vmax.f32 %v1264, 0.0
  %v1277 = vmax.f32 %v1267, 0.0
  %v1278 = vpack.c.bf16 %v1271, %v1270
  %v1279 = vpack.c.bf16 %v1273, %v1272
  %v1280 = vpack.c.bf16 %v1275, %v1274
  %v1281 = vpack.c.bf16 %v1277, %v1276
  %v1298 = vunpack.c.l.b16 %v263
  %v1299 = vunpack.c.l.b16 %v264
  %v1300 = vunpack.c.l.b16 %v265
  %v1301 = vunpack.c.l.b16 %v266
  %v1302 = vunpack.c.l.b16 %v267
  %v1303 = vunpack.c.l.b16 %v268
  %v1304 = vunpack.c.l.b16 %v269
  %v1305 = vunpack.c.l.b16 %v270
  %v1306 = vunpack.c.l.b16 %v271
  %v1307 = vunpack.c.l.b16 %v272
  %v1308 = vunpack.c.l.b16 %v273
  %v1309 = vunpack.c.l.b16 %v274
  %v1310 = vunpack.c.l.b16 %v275
  %v1311 = vunpack.c.l.b16 %v276
  %v1312 = vunpack.c.l.b16 %v277
  %v1313 = vunpack.c.l.b16 %v278
  %v1314 = vpack.c.b16 %v1299, %v1298
  %v1315 = vpack.c.b16 %v1301, %v1300
  %v1316 = vpack.c.b16 %v1303, %v1302
  %v1317 = vpack.c.b16 %v1305, %v1304
  %v1318 = vpack.c.b16 %v1307, %v1306
  %v1319 = vpack.c.b16 %v1309, %v1308
  %v1320 = vpack.c.b16 %v1311, %v1310
  %v1321 = vpack.c.b16 %v1313, %v1312
  %1330 = vmatprep.subr.bf16.mxu0 0
  %1331 = vmatpush1.bf16.msra.mxu0 %v1314
  %1332 = vmatprep.subr.bf16.mxu0 0
  %1333 = vmatpush1.bf16.msra.mxu0 %v1315
  %1334 = vmatprep.subr.bf16.mxu0 0
  %1335 = vmatpush1.bf16.msra.mxu0 %v1316
  %1336 = vmatprep.subr.bf16.mxu0 0
  %1337 = vmatpush1.bf16.msra.mxu0 %v1317
  %1338 = vmatprep.subr.bf16.mxu0 0
  %1339 = vmatpush1.bf16.msra.mxu0 %v1318
  %1340 = vmatprep.subr.bf16.mxu0 0
  %1341 = vmatpush1.bf16.msra.mxu0 %v1319
  %1342 = vmatprep.subr.bf16.mxu0 0
  %1343 = vmatpush1.bf16.msra.mxu0 %v1320
  %1344 = vmatprep.subr.bf16.mxu0 0
  %1345 = vmatpush1.bf16.msra.mxu0 %v1321
  %1346 = vmatprep.subr.bf16.mxu0 0
  %1347 = vmatpush1.bf16.msra.mxu0 0
  %1348 = vmatprep.subr.bf16.mxu0 0
  %1349 = vmatpush1.bf16.msra.mxu0 0
  %1350 = vmatprep.subr.bf16.mxu0 0
  %1351 = vmatpush1.bf16.msra.mxu0 0
  %1352 = vmatprep.subr.bf16.mxu0 0
  %1353 = vmatpush1.bf16.msra.mxu0 0
  %1354 = vmatprep.subr.bf16.mxu0 0
  %1355 = vmatpush1.bf16.msra.mxu0 0
  %1356 = vmatprep.subr.bf16.mxu0 0
  %1357 = vmatpush1.bf16.msra.mxu0 0
  %1358 = vmatprep.subr.bf16.mxu0 0
  %1359 = vmatpush1.bf16.msra.mxu0 0
  %1360 = vmatprep.subr.bf16.mxu0 0
  %1361 = vmatpush1.bf16.msra.mxu0 0
  %1362 = vmatprep.mubr.bf16.mxu0 0
  %1363 = vmatmul.mubr.bf16.gmra.mrb[0].mxu0 %v1278
  %v1364 = vpop.f32.mrb[0].mxu0
  %v1365 = vadd.f32 0.0, %v1364
  %v1366 = vpop.f32.mrb[0].mxu0
  %v1367 = vpop.f32.mrb[0].mxu0
  %v1368 = vadd.f32 0.0, %v1367
  %v1369 = vpop.f32.mrb[0].mxu0
  %1370 = vmatprep.mubr.bf16.mxu0 0
  %1371 = vmatmul.mubr.bf16.gmra.mrb[0].mxu0 %v1279
  %v1372 = vpop.f32.mrb[0].mxu0
  %v1373 = vadd.f32 0.0, %v1372
  %v1374 = vpop.f32.mrb[0].mxu0
  %v1375 = vpop.f32.mrb[0].mxu0
  %v1376 = vadd.f32 0.0, %v1375
  %v1377 = vpop.f32.mrb[0].mxu0
  %1378 = vmatprep.mubr.bf16.mxu0 0
  %1379 = vmatmul.mubr.bf16.gmra.mrb[0].mxu0 %v1280
  %v1380 = vpop.f32.mrb[0].mxu0
  %v1381 = vadd.f32 0.0, %v1380
  %v1382 = vpop.f32.mrb[0].mxu0
  %v1383 = vpop.f32.mrb[0].mxu0
  %v1384 = vadd.f32 0.0, %v1383
  %v1385 = vpop.f32.mrb[0].mxu0
  %1386 = vmatprep.mubr.bf16.mxu0 0
  %1387 = vmatmul.mubr.bf16.gmra.mrb[0].mxu0 %v1281
  %v1388 = vpop.f32.mrb[0].mxu0
  %v1389 = vadd.f32 0.0, %v1388
  %v1390 = vpop.f32.mrb[0].mxu0
  %v1391 = vpop.f32.mrb[0].mxu0
  %v1392 = vadd.f32 0.0, %v1391
  %v1393 = vpop.f32.mrb[0].mxu0
  %1394 = vdwg.mxu0
  %v1395 = vmax.f32 %v1365, 0.0
  %v1396 = vmax.f32 %v1368, 0.0
  %v1397 = vmax.f32 %v1373, 0.0
  %v1398 = vmax.f32 %v1376, 0.0
  %v1399 = vmax.f32 %v1381, 0.0
  %v1400 = vmax.f32 %v1384, 0.0
  %v1401 = vmax.f32 %v1389, 0.0
  %v1402 = vmax.f32 %v1392, 0.0
  %v1403 = vpack.c.bf16 %v1396, %v1395
  %v1404 = vpack.c.bf16 %v1398, %v1397
  %v1405 = vpack.c.bf16 %v1400, %v1399
  %v1406 = vpack.c.bf16 %v1402, %v1401
  %v1423 = vunpack.c.l.b16 %v279
  %v1424 = vunpack.c.l.b16 %v280
  %v1425 = vunpack.c.l.b16 %v281
  %v1426 = vunpack.c.l.b16 %v282
  %v1427 = vunpack.c.l.b16 %v283
  %v1428 = vunpack.c.l.b16 %v284
  %v1429 = vunpack.c.l.b16 %v285
  %v1430 = vunpack.c.l.b16 %v286
  %v1431 = vunpack.c.l.b16 %v287
  %v1432 = vunpack.c.l.b16 %v288
  %v1433 = vunpack.c.l.b16 %v289
  %v1434 = vunpack.c.l.b16 %v290
  %v1435 = vunpack.c.l.b16 %v291
  %v1436 = vunpack.c.l.b16 %v292
  %v1437 = vunpack.c.l.b16 %v293
  %v1438 = vunpack.c.l.b16 %v294
  %v1439 = vpack.c.b16 %v1424, %v1423
  %v1440 = vpack.c.b16 %v1426, %v1425
  %v1441 = vpack.c.b16 %v1428, %v1427
  %v1442 = vpack.c.b16 %v1430, %v1429
  %v1443 = vpack.c.b16 %v1432, %v1431
  %v1444 = vpack.c.b16 %v1434, %v1433
  %v1445 = vpack.c.b16 %v1436, %v1435
  %v1446 = vpack.c.b16 %v1438, %v1437
  %1455 = vmatprep.subr.bf16.mxu0 0
  %1456 = vmatpush1.bf16.msra.mxu0 %v1439
  %1457 = vmatprep.subr.bf16.mxu0 0
  %1458 = vmatpush1.bf16.msra.mxu0 %v1440
  %1459 = vmatprep.subr.bf16.mxu0 0
  %1460 = vmatpush1.bf16.msra.mxu0 %v1441
  %1461 = vmatprep.subr.bf16.mxu0 0
  %1462 = vmatpush1.bf16.msra.mxu0 %v1442
  %1463 = vmatprep.subr.bf16.mxu0 0
  %1464 = vmatpush1.bf16.msra.mxu0 %v1443
  %1465 = vmatprep.subr.bf16.mxu0 0
  %1466 = vmatpush1.bf16.msra.mxu0 %v1444
  %1467 = vmatprep.subr.bf16.mxu0 0
  %1468 = vmatpush1.bf16.msra.mxu0 %v1445
  %1469 = vmatprep.subr.bf16.mxu0 0
  %1470 = vmatpush1.bf16.msra.mxu0 %v1446
  %1471 = vmatprep.subr.bf16.mxu0 0
  %1472 = vmatpush1.bf16.msra.mxu0 0
  %1473 = vmatprep.subr.bf16.mxu0 0
  %1474 = vmatpush1.bf16.msra.mxu0 0
  %1475 = vmatprep.subr.bf16.mxu0 0
  %1476 = vmatpush1.bf16.msra.mxu0 0
  %1477 = vmatprep.subr.bf16.mxu0 0
  %1478 = vmatpush1.bf16.msra.mxu0 0
  %1479 = vmatprep.subr.bf16.mxu0 0
  %1480 = vmatpush1.bf16.msra.mxu0 0
  %1481 = vmatprep.subr.bf16.mxu0 0
  %1482 = vmatpush1.bf16.msra.mxu0 0
  %1483 = vmatprep.subr.bf16.mxu0 0
  %1484 = vmatpush1.bf16.msra.mxu0 0
  %1485 = vmatprep.subr.bf16.mxu0 0
  %1486 = vmatpush1.bf16.msra.mxu0 0
  %1487 = vmatprep.mubr.bf16.mxu0 0
  %1488 = vmatmul.mubr.bf16.gmra.mrb[0].mxu0 %v1403
  %v1489 = vpop.f32.mrb[0].mxu0
  %v1490 = vadd.f32 0.0, %v1489
  %v1491 = vpop.f32.mrb[0].mxu0
  %v1492 = vpop.f32.mrb[0].mxu0
  %v1493 = vadd.f32 0.0, %v1492
  %v1494 = vpop.f32.mrb[0].mxu0
  %1495 = vmatprep.mubr.bf16.mxu0 0
  %1496 = vmatmul.mubr.bf16.gmra.mrb[0].mxu0 %v1404
  %v1497 = vpop.f32.mrb[0].mxu0
  %v1498 = vadd.f32 0.0, %v1497
  %v1499 = vpop.f32.mrb[0].mxu0
  %v1500 = vpop.f32.mrb[0].mxu0
  %v1501 = vadd.f32 0.0, %v1500
  %v1502 = vpop.f32.mrb[0].mxu0
  %1503 = vmatprep.mubr.bf16.mxu0 0
  %1504 = vmatmul.mubr.bf16.gmra.mrb[0].mxu0 %v1405
  %v1505 = vpop.f32.mrb[0].mxu0
  %v1506 = vadd.f32 0.0, %v1505
  %v1507 = vpop.f32.mrb[0].mxu0
  %v1508 = vpop.f32.mrb[0].mxu0
  %v1509 = vadd.f32 0.0, %v1508
  %v1510 = vpop.f32.mrb[0].mxu0
  %1511 = vmatprep.mubr.bf16.mxu0 0
  %1512 = vmatmul.mubr.bf16.gmra.mrb[0].mxu0 %v1406
  %v1513 = vpop.f32.mrb[0].mxu0
  %v1514 = vadd.f32 0.0, %v1513
  %v1515 = vpop.f32.mrb[0].mxu0
  %v1516 = vpop.f32.mrb[0].mxu0
  %v1517 = vadd.f32 0.0, %v1516
  %v1518 = vpop.f32.mrb[0].mxu0
  %1519 = vdwg.mxu0
  %v1520 = vadd.f32 %v68, %v1490
  %v1521 = vadd.f32 %v69, %v1493
  %v1522 = vadd.f32 %v70, %v1498
  %v1523 = vadd.f32 %v71, %v1501
  %v1524 = vadd.f32 %v72, %v1506
  %v1525 = vadd.f32 %v73, %v1509
  %v1526 = vadd.f32 %v74, %v1514
  %v1527 = vadd.f32 %v75, %v1517
  %v1528 = vpack.c.bf16 %v1521, %v1520
  %v1529 = vpack.c.bf16 %v1523, %v1522
  %v1530 = vpack.c.bf16 %v1525, %v1524
  %v1531 = vpack.c.bf16 %v1527, %v1526
  %v1533 = vlaneseq
  %v1534 = vshrl.u32 %v1533, 7
  %v1535 = vsub.s32 0, %v1534
  %v1536 = vrot.slane %v299, %v1535
  %v1537 = vlaneseq
  %v1538 = vshrl.u32 %v1537, 7
  %v1539 = vsub.s32 1, %v1538
  %v1540 = vrot.slane %v299, %v1539
  %v1547 = vunpack.c.l.b16 %v295
  %v1548 = vunpack.c.h.b16 %v295
  %v1549 = vunpack.c.l.b16 %v296
  %v1550 = vunpack.c.h.b16 %v296
  %v1551 = vunpack.c.l.b16 %v297
  %v1552 = vunpack.c.h.b16 %v297
  %v1553 = vunpack.c.l.b16 %v298
  %v1554 = vunpack.c.h.b16 %v298
  %v1555 = vpack.c.b16 %v1549, %v1547
  %v1556 = vpack.c.b16 %v1550, %v1548
  %v1557 = vpack.c.b16 %v1553, %v1551
  %v1558 = vpack.c.b16 %v1554, %v1552
  %v1564 = vsel %vm389, %v1528, 0
  %v1567 = vsel %vm389, %v1529, 0
  %v1570 = vsel %vm389, %v1530, 0
  %v1573 = vsel %vm389, %v1531, 0
  %1575 = vmatprep.subr.bf16.mxu0 %v1556
  %1576 = vmatpush1.bf16.msra.mxu0 %v1555
  %1577 = vmatprep.subr.bf16.mxu0 %v1558
  %1578 = vmatpush1.bf16.msra.mxu0 %v1557
  %1579 = vmatprep.subr.bf16.mxu0 0
  %1580 = vmatpush1.bf16.msra.mxu0 0
  %1581 = vmatprep.subr.bf16.mxu0 0
  %1582 = vmatpush1.bf16.msra.mxu0 0
  %1583 = vmatprep.subr.bf16.mxu0 0
  %1584 = vmatpush1.bf16.msra.mxu0 0
  %1585 = vmatprep.subr.bf16.mxu0 0
  %1586 = vmatpush1.bf16.msra.mxu0 0
  %1587 = vmatprep.subr.bf16.mxu0 0
  %1588 = vmatpush1.bf16.msra.mxu0 0
  %1589 = vmatprep.subr.bf16.mxu0 0
  %1590 = vmatpush1.bf16.msra.mxu0 0
  %1591 = vmatprep.subr.bf16.mxu0 0
  %1592 = vmatpush1.bf16.msra.mxu0 0
  %1593 = vmatprep.subr.bf16.mxu0 0
  %1594 = vmatpush1.bf16.msra.mxu0 0
  %1595 = vmatprep.subr.bf16.mxu0 0
  %1596 = vmatpush1.bf16.msra.mxu0 0
  %1597 = vmatprep.subr.bf16.mxu0 0
  %1598 = vmatpush1.bf16.msra.mxu0 0
  %1599 = vmatprep.subr.bf16.mxu0 0
  %1600 = vmatpush1.bf16.msra.mxu0 0
  %1601 = vmatprep.subr.bf16.mxu0 0
  %1602 = vmatpush1.bf16.msra.mxu0 0
  %1603 = vmatprep.subr.bf16.mxu0 0
  %1604 = vmatpush1.bf16.msra.mxu0 0
  %1605 = vmatprep.subr.bf16.mxu0 0
  %1606 = vmatpush1.bf16.msra.mxu0 0
  %1607 = vmatprep.mubr.bf16.mxu0 0
  %1608 = vmatmul.mubr.bf16.gmra.mrb[0].mxu0 %v1564
  %v1609 = vpop.f32.mrb[0].mxu0
  %v1610 = vadd.f32 %v1536, %v1609
  %v1611 = vpop.f32.mrb[0].mxu0
  %v1612 = vadd.f32 %v1540, %v1611
  %v1613 = vpop.f32.mrb[0].mxu0
  %v1614 = vadd.f32 %v1536, %v1613
  %v1615 = vpop.f32.mrb[0].mxu0
  %v1616 = vadd.f32 %v1540, %v1615
  %1617 = vmatprep.mubr.bf16.mxu0 0
  %1618 = vmatmul.mubr.bf16.gmra.mrb[0].mxu0 %v1567
  %v1619 = vpop.f32.mrb[0].mxu0
  %v1620 = vadd.f32 %v1536, %v1619
  %v1621 = vpop.f32.mrb[0].mxu0
  %v1622 = vadd.f32 %v1540, %v1621
  %v1623 = vpop.f32.mrb[0].mxu0
  %v1624 = vadd.f32 %v1536, %v1623
  %v1625 = vpop.f32.mrb[0].mxu0
  %v1626 = vadd.f32 %v1540, %v1625
  %1627 = vmatprep.mubr.bf16.mxu0 0
  %1628 = vmatmul.mubr.bf16.gmra.mrb[0].mxu0 %v1570
  %v1629 = vpop.f32.mrb[0].mxu0
  %v1630 = vadd.f32 %v1536, %v1629
  %v1631 = vpop.f32.mrb[0].mxu0
  %v1632 = vadd.f32 %v1540, %v1631
  %v1633 = vpop.f32.mrb[0].mxu0
  %v1634 = vadd.f32 %v1536, %v1633
  %v1635 = vpop.f32.mrb[0].mxu0
  %v1636 = vadd.f32 %v1540, %v1635
  %1637 = vmatprep.mubr.bf16.mxu0 0
  %1638 = vmatmul.mubr.bf16.gmra.mrb[0].mxu0 %v1573
  %v1639 = vpop.f32.mrb[0].mxu0
  %v1640 = vadd.f32 %v1536, %v1639
  %v1641 = vpop.f32.mrb[0].mxu0
  %v1642 = vadd.f32 %v1540, %v1641
  %v1643 = vpop.f32.mrb[0].mxu0
  %v1644 = vadd.f32 %v1536, %v1643
  %v1645 = vpop.f32.mrb[0].mxu0
  %v1646 = vadd.f32 %v1540, %v1645
  %1647 = vdwg.mxu0
  %v1648 = vpack.c.bf16 %v1614, %v1610
  %v1649 = vpack.c.bf16 %v1624, %v1620
  %v1650 = vpack.c.bf16 %v1634, %v1630
  %v1651 = vpack.c.bf16 %v1644, %v1640
  %v1716 = vunpack.c.l.b16 %v140
  %v1717 = vunpack.c.l.b16 %v141
  %v1718 = vunpack.c.l.b16 %v142
  %v1719 = vunpack.c.l.b16 %v143
  %v1720 = vunpack.c.l.b16 %v144
  %v1721 = vunpack.c.l.b16 %v145
  %v1722 = vunpack.c.l.b16 %v146
  %v1723 = vunpack.c.l.b16 %v147
  %v1724 = vunpack.c.l.b16 %v148
  %v1725 = vunpack.c.l.b16 %v149
  %v1726 = vunpack.c.l.b16 %v150
  %v1727 = vunpack.c.l.b16 %v151
  %v1728 = vunpack.c.l.b16 %v152
  %v1729 = vunpack.c.l.b16 %v153
  %v1730 = vunpack.c.l.b16 %v154
  %v1731 = vunpack.c.l.b16 %v155
  %v1732 = vunpack.c.l.b16 %v156
  %v1733 = vunpack.c.l.b16 %v157
  %v1734 = vunpack.c.l.b16 %v158
  %v1735 = vunpack.c.l.b16 %v159
  %v1736 = vunpack.c.l.b16 %v160
  %v1737 = vunpack.c.l.b16 %v161
  %v1738 = vunpack.c.l.b16 %v162
  %v1739 = vunpack.c.l.b16 %v163
  %v1740 = vunpack.c.l.b16 %v164
  %v1741 = vunpack.c.l.b16 %v165
  %v1742 = vunpack.c.l.b16 %v166
  %v1743 = vunpack.c.l.b16 %v167
  %v1744 = vunpack.c.l.b16 %v168
  %v1745 = vunpack.c.l.b16 %v169
  %v1746 = vunpack.c.l.b16 %v170
  %v1747 = vunpack.c.l.b16 %v171
  %v1748 = vunpack.c.l.b16 %v172
  %v1749 = vunpack.c.l.b16 %v173
  %v1750 = vunpack.c.l.b16 %v174
  %v1751 = vunpack.c.l.b16 %v175
  %v1752 = vunpack.c.l.b16 %v176
  %v1753 = vunpack.c.l.b16 %v177
  %v1754 = vunpack.c.l.b16 %v178
  %v1755 = vunpack.c.l.b16 %v179
  %v1756 = vunpack.c.l.b16 %v180
  %v1757 = vunpack.c.l.b16 %v181
  %v1758 = vunpack.c.l.b16 %v182
  %v1759 = vunpack.c.l.b16 %v183
  %v1760 = vunpack.c.l.b16 %v184
  %v1761 = vunpack.c.l.b16 %v185
  %v1762 = vunpack.c.l.b16 %v186
  %v1763 = vunpack.c.l.b16 %v187
  %v1764 = vunpack.c.l.b16 %v188
  %v1765 = vunpack.c.l.b16 %v189
  %v1766 = vunpack.c.l.b16 %v190
  %v1767 = vunpack.c.l.b16 %v191
  %v1768 = vunpack.c.l.b16 %v192
  %v1769 = vunpack.c.l.b16 %v193
  %v1770 = vunpack.c.l.b16 %v194
  %v1771 = vunpack.c.l.b16 %v195
  %v1772 = vunpack.c.l.b16 %v196
  %v1773 = vunpack.c.l.b16 %v197
  %v1774 = vunpack.c.l.b16 %v198
  %v1775 = vunpack.c.l.b16 %v199
  %v1776 = vunpack.c.l.b16 %v200
  %v1777 = vunpack.c.l.b16 %v201
  %v1778 = vunpack.c.l.b16 %v202
  %v1779 = vunpack.c.l.b16 %v203
  %v1780 = vpack.c.b16 %v1717, %v1716
  %v1781 = vpack.c.b16 %v1719, %v1718
  %v1782 = vpack.c.b16 %v1721, %v1720
  %v1783 = vpack.c.b16 %v1723, %v1722
  %v1784 = vpack.c.b16 %v1725, %v1724
  %v1785 = vpack.c.b16 %v1727, %v1726
  %v1786 = vpack.c.b16 %v1729, %v1728
  %v1787 = vpack.c.b16 %v1731, %v1730
  %v1788 = vpack.c.b16 %v1733, %v1732
  %v1789 = vpack.c.b16 %v1735, %v1734
  %v1790 = vpack.c.b16 %v1737, %v1736
  %v1791 = vpack.c.b16 %v1739, %v1738
  %v1792 = vpack.c.b16 %v1741, %v1740
  %v1793 = vpack.c.b16 %v1743, %v1742
  %v1794 = vpack.c.b16 %v1745, %v1744
  %v1795 = vpack.c.b16 %v1747, %v1746
  %v1796 = vpack.c.b16 %v1749, %v1748
  %v1797 = vpack.c.b16 %v1751, %v1750
  %v1798 = vpack.c.b16 %v1753, %v1752
  %v1799 = vpack.c.b16 %v1755, %v1754
  %v1800 = vpack.c.b16 %v1757, %v1756
  %v1801 = vpack.c.b16 %v1759, %v1758
  %v1802 = vpack.c.b16 %v1761, %v1760
  %v1803 = vpack.c.b16 %v1763, %v1762
  %v1804 = vpack.c.b16 %v1765, %v1764
  %v1805 = vpack.c.b16 %v1767, %v1766
  %v1806 = vpack.c.b16 %v1769, %v1768
  %v1807 = vpack.c.b16 %v1771, %v1770
  %v1808 = vpack.c.b16 %v1773, %v1772
  %v1809 = vpack.c.b16 %v1775, %v1774
  %v1810 = vpack.c.b16 %v1777, %v1776
  %v1811 = vpack.c.b16 %v1779, %v1778
  %vm1812 = vcmask 523264
  %v1814 = vsel %vm1812, %v1780, 0
  %v1817 = vsel %vm1812, %v1781, 0
  %v1820 = vsel %vm1812, %v1782, 0
  %v1823 = vsel %vm1812, %v1783, 0
  %v1826 = vsel %vm1812, %v1784, 0
  %v1829 = vsel %vm1812, %v1785, 0
  %v1832 = vsel %vm1812, %v1786, 0
  %v1835 = vsel %vm1812, %v1787, 0
  %v1838 = vsel %vm1812, %v1788, 0
  %v1841 = vsel %vm1812, %v1789, 0
  %v1844 = vsel %vm1812, %v1790, 0
  %v1847 = vsel %vm1812, %v1791, 0
  %v1850 = vsel %vm1812, %v1792, 0
  %v1853 = vsel %vm1812, %v1793, 0
  %v1856 = vsel %vm1812, %v1794, 0
  %v1859 = vsel %vm1812, %v1795, 0
  %v1862 = vsel %vm1812, %v1796, 0
  %v1865 = vsel %vm1812, %v1797, 0
  %v1868 = vsel %vm1812, %v1798, 0
  %v1871 = vsel %vm1812, %v1799, 0
  %v1874 = vsel %vm1812, %v1800, 0
  %v1877 = vsel %vm1812, %v1801, 0
  %v1880 = vsel %vm1812, %v1802, 0
  %v1883 = vsel %vm1812, %v1803, 0
  %v1886 = vsel %vm1812, %v1804, 0
  %v1889 = vsel %vm1812, %v1805, 0
  %v1892 = vsel %vm1812, %v1806, 0
  %v1895 = vsel %vm1812, %v1807, 0
  %v1898 = vsel %vm1812, %v1808, 0
  %v1901 = vsel %vm1812, %v1809, 0
  %v1904 = vsel %vm1812, %v1810, 0
  %v1907 = vsel %vm1812, %v1811, 0
  %1909 = vmatprep.subr.bf16.mxu0 0
  %1910 = vmatpush1.bf16.msra.mxu0 %v1648
  %1911 = vmatprep.subr.bf16.mxu0 0
  %1912 = vmatpush1.bf16.msra.mxu0 %v1649
  %1913 = vmatprep.subr.bf16.mxu0 0
  %1914 = vmatpush1.bf16.msra.mxu0 %v1650
  %1915 = vmatprep.subr.bf16.mxu0 0
  %1916 = vmatpush1.bf16.msra.mxu0 %v1651
  %1917 = vmatprep.subr.bf16.mxu0 0
  %1918 = vmatpush1.bf16.msra.mxu0 0
  %1919 = vmatprep.subr.bf16.mxu0 0
  %1920 = vmatpush1.bf16.msra.mxu0 0
  %1921 = vmatprep.subr.bf16.mxu0 0
  %1922 = vmatpush1.bf16.msra.mxu0 0
  %1923 = vmatprep.subr.bf16.mxu0 0
  %1924 = vmatpush1.bf16.msra.mxu0 0
  %1925 = vmatprep.subr.bf16.mxu0 0
  %1926 = vmatpush1.bf16.msra.mxu0 0
  %1927 = vmatprep.subr.bf16.mxu0 0
  %1928 = vmatpush1.bf16.msra.mxu0 0
  %1929 = vmatprep.subr.bf16.mxu0 0
  %1930 = vmatpush1.bf16.msra.mxu0 0
  %1931 = vmatprep.subr.bf16.mxu0 0
  %1932 = vmatpush1.bf16.msra.mxu0 0
  %1933 = vmatprep.subr.bf16.mxu0 0
  %1934 = vmatpush1.bf16.msra.mxu0 0
  %1935 = vmatprep.subr.bf16.mxu0 0
  %1936 = vmatpush1.bf16.msra.mxu0 0
  %1937 = vmatprep.subr.bf16.mxu0 0
  %1938 = vmatpush1.bf16.msra.mxu0 0
  %1939 = vmatprep.subr.bf16.mxu0 0
  %1940 = vmatpush1.bf16.msra.mxu0 0
  %1941 = vmatprep.mubr.bf16.mxu0 0
  %1942 = vmatmul.mubr.bf16.gmra.mrb[0].mxu0 %v1814
  %v1943 = vpop.f32.mrb[0].mxu0
  %v1944 = vadd.f32 %v1612, %v1943
  %v1945 = vpop.f32.mrb[0].mxu0
  %v1946 = vpop.f32.mrb[0].mxu0
  %v1947 = vadd.f32 %v1612, %v1946
  %v1948 = vpop.f32.mrb[0].mxu0
  %1949 = vmatprep.mubr.bf16.mxu0 0
  %1950 = vmatmul.mubr.bf16.gmra.mrb[0].mxu0 %v1817
  %v1951 = vpop.f32.mrb[0].mxu0
  %v1952 = vadd.f32 %v1612, %v1951
  %v1953 = vpop.f32.mrb[0].mxu0
  %v1954 = vpop.f32.mrb[0].mxu0
  %v1955 = vadd.f32 %v1612, %v1954
  %v1956 = vpop.f32.mrb[0].mxu0
  %1957 = vmatprep.mubr.bf16.mxu0 0
  %1958 = vmatmul.mubr.bf16.gmra.mrb[0].mxu0 %v1820
  %v1959 = vpop.f32.mrb[0].mxu0
  %v1960 = vadd.f32 %v1612, %v1959
  %v1961 = vpop.f32.mrb[0].mxu0
  %v1962 = vpop.f32.mrb[0].mxu0
  %v1963 = vadd.f32 %v1612, %v1962
  %v1964 = vpop.f32.mrb[0].mxu0
  %1965 = vmatprep.mubr.bf16.mxu0 0
  %1966 = vmatmul.mubr.bf16.gmra.mrb[0].mxu0 %v1823
  %v1967 = vpop.f32.mrb[0].mxu0
  %v1968 = vadd.f32 %v1612, %v1967
  %v1969 = vpop.f32.mrb[0].mxu0
  %v1970 = vpop.f32.mrb[0].mxu0
  %v1971 = vadd.f32 %v1612, %v1970
  %v1972 = vpop.f32.mrb[0].mxu0
  %1973 = vmatprep.mubr.bf16.mxu0 0
  %1974 = vmatmul.mubr.bf16.gmra.mrb[0].mxu0 %v1826
  %v1975 = vpop.f32.mrb[0].mxu0
  %v1976 = vadd.f32 %v1616, %v1975
  %v1977 = vpop.f32.mrb[0].mxu0
  %v1978 = vpop.f32.mrb[0].mxu0
  %v1979 = vadd.f32 %v1616, %v1978
  %v1980 = vpop.f32.mrb[0].mxu0
  %1981 = vmatprep.mubr.bf16.mxu0 0
  %1982 = vmatmul.mubr.bf16.gmra.mrb[0].mxu0 %v1829
  %v1983 = vpop.f32.mrb[0].mxu0
  %v1984 = vadd.f32 %v1616, %v1983
  %v1985 = vpop.f32.mrb[0].mxu0
  %v1986 = vpop.f32.mrb[0].mxu0
  %v1987 = vadd.f32 %v1616, %v1986
  %v1988 = vpop.f32.mrb[0].mxu0
  %1989 = vmatprep.mubr.bf16.mxu0 0
  %1990 = vmatmul.mubr.bf16.gmra.mrb[0].mxu0 %v1832
  %v1991 = vpop.f32.mrb[0].mxu0
  %v1992 = vadd.f32 %v1616, %v1991
  %v1993 = vpop.f32.mrb[0].mxu0
  %v1994 = vpop.f32.mrb[0].mxu0
  %v1995 = vadd.f32 %v1616, %v1994
  %v1996 = vpop.f32.mrb[0].mxu0
  %1997 = vmatprep.mubr.bf16.mxu0 0
  %1998 = vmatmul.mubr.bf16.gmra.mrb[0].mxu0 %v1835
  %v1999 = vpop.f32.mrb[0].mxu0
  %v2000 = vadd.f32 %v1616, %v1999
  %v2001 = vpop.f32.mrb[0].mxu0
  %v2002 = vpop.f32.mrb[0].mxu0
  %v2003 = vadd.f32 %v1616, %v2002
  %v2004 = vpop.f32.mrb[0].mxu0
  %2005 = vmatprep.mubr.bf16.mxu0 0
  %2006 = vmatmul.mubr.bf16.gmra.mrb[0].mxu0 %v1838
  %v2007 = vpop.f32.mrb[0].mxu0
  %v2008 = vadd.f32 %v1622, %v2007
  %v2009 = vpop.f32.mrb[0].mxu0
  %v2010 = vpop.f32.mrb[0].mxu0
  %v2011 = vadd.f32 %v1622, %v2010
  %v2012 = vpop.f32.mrb[0].mxu0
  %2013 = vmatprep.mubr.bf16.mxu0 0
  %2014 = vmatmul.mubr.bf16.gmra.mrb[0].mxu0 %v1841
  %v2015 = vpop.f32.mrb[0].mxu0
  %v2016 = vadd.f32 %v1622, %v2015
  %v2017 = vpop.f32.mrb[0].mxu0
  %v2018 = vpop.f32.mrb[0].mxu0
  %v2019 = vadd.f32 %v1622, %v2018
  %v2020 = vpop.f32.mrb[0].mxu0
  %2021 = vmatprep.mubr.bf16.mxu0 0
  %2022 = vmatmul.mubr.bf16.gmra.mrb[0].mxu0 %v1844
  %v2023 = vpop.f32.mrb[0].mxu0
  %v2024 = vadd.f32 %v1622, %v2023
  %v2025 = vpop.f32.mrb[0].mxu0
  %v2026 = vpop.f32.mrb[0].mxu0
  %v2027 = vadd.f32 %v1622, %v2026
  %v2028 = vpop.f32.mrb[0].mxu0
  %2029 = vmatprep.mubr.bf16.mxu0 0
  %2030 = vmatmul.mubr.bf16.gmra.mrb[0].mxu0 %v1847
  %v2031 = vpop.f32.mrb[0].mxu0
  %v2032 = vadd.f32 %v1622, %v2031
  %v2033 = vpop.f32.mrb[0].mxu0
  %v2034 = vpop.f32.mrb[0].mxu0
  %v2035 = vadd.f32 %v1622, %v2034
  %v2036 = vpop.f32.mrb[0].mxu0
  %2037 = vmatprep.mubr.bf16.mxu0 0
  %2038 = vmatmul.mubr.bf16.gmra.mrb[0].mxu0 %v1850
  %v2039 = vpop.f32.mrb[0].mxu0
  %v2040 = vadd.f32 %v1626, %v2039
  %v2041 = vpop.f32.mrb[0].mxu0
  %v2042 = vpop.f32.mrb[0].mxu0
  %v2043 = vadd.f32 %v1626, %v2042
  %v2044 = vpop.f32.mrb[0].mxu0
  %2045 = vmatprep.mubr.bf16.mxu0 0
  %2046 = vmatmul.mubr.bf16.gmra.mrb[0].mxu0 %v1853
  %v2047 = vpop.f32.mrb[0].mxu0
  %v2048 = vadd.f32 %v1626, %v2047
  %v2049 = vpop.f32.mrb[0].mxu0
  %v2050 = vpop.f32.mrb[0].mxu0
  %v2051 = vadd.f32 %v1626, %v2050
  %v2052 = vpop.f32.mrb[0].mxu0
  %2053 = vmatprep.mubr.bf16.mxu0 0
  %2054 = vmatmul.mubr.bf16.gmra.mrb[0].mxu0 %v1856
  %v2055 = vpop.f32.mrb[0].mxu0
  %v2056 = vadd.f32 %v1626, %v2055
  %v2057 = vpop.f32.mrb[0].mxu0
  %v2058 = vpop.f32.mrb[0].mxu0
  %v2059 = vadd.f32 %v1626, %v2058
  %v2060 = vpop.f32.mrb[0].mxu0
  %2061 = vmatprep.mubr.bf16.mxu0 0
  %2062 = vmatmul.mubr.bf16.gmra.mrb[0].mxu0 %v1859
  %v2063 = vpop.f32.mrb[0].mxu0
  %v2064 = vadd.f32 %v1626, %v2063
  %v2065 = vpop.f32.mrb[0].mxu0
  %v2066 = vpop.f32.mrb[0].mxu0
  %v2067 = vadd.f32 %v1626, %v2066
  %v2068 = vpop.f32.mrb[0].mxu0
  %2069 = vmatprep.mubr.bf16.mxu0 0
  %2070 = vmatmul.mubr.bf16.gmra.mrb[0].mxu0 %v1862
  %v2071 = vpop.f32.mrb[0].mxu0
  %v2072 = vadd.f32 %v1632, %v2071
  %v2073 = vpop.f32.mrb[0].mxu0
  %v2074 = vpop.f32.mrb[0].mxu0
  %v2075 = vadd.f32 %v1632, %v2074
  %v2076 = vpop.f32.mrb[0].mxu0
  %2077 = vmatprep.mubr.bf16.mxu0 0
  %2078 = vmatmul.mubr.bf16.gmra.mrb[0].mxu0 %v1865
  %v2079 = vpop.f32.mrb[0].mxu0
  %v2080 = vadd.f32 %v1632, %v2079
  %v2081 = vpop.f32.mrb[0].mxu0
  %v2082 = vpop.f32.mrb[0].mxu0
  %v2083 = vadd.f32 %v1632, %v2082
  %v2084 = vpop.f32.mrb[0].mxu0
  %2085 = vmatprep.mubr.bf16.mxu0 0
  %2086 = vmatmul.mubr.bf16.gmra.mrb[0].mxu0 %v1868
  %v2087 = vpop.f32.mrb[0].mxu0
  %v2088 = vadd.f32 %v1632, %v2087
  %v2089 = vpop.f32.mrb[0].mxu0
  %v2090 = vpop.f32.mrb[0].mxu0
  %v2091 = vadd.f32 %v1632, %v2090
  %v2092 = vpop.f32.mrb[0].mxu0
  %2093 = vmatprep.mubr.bf16.mxu0 0
  %2094 = vmatmul.mubr.bf16.gmra.mrb[0].mxu0 %v1871
  %v2095 = vpop.f32.mrb[0].mxu0
  %v2096 = vadd.f32 %v1632, %v2095
  %v2097 = vpop.f32.mrb[0].mxu0
  %v2098 = vpop.f32.mrb[0].mxu0
  %v2099 = vadd.f32 %v1632, %v2098
  %v2100 = vpop.f32.mrb[0].mxu0
  %2101 = vmatprep.mubr.bf16.mxu0 0
  %2102 = vmatmul.mubr.bf16.gmra.mrb[0].mxu0 %v1874
  %v2103 = vpop.f32.mrb[0].mxu0
  %v2104 = vadd.f32 %v1636, %v2103
  %v2105 = vpop.f32.mrb[0].mxu0
  %v2106 = vpop.f32.mrb[0].mxu0
  %v2107 = vadd.f32 %v1636, %v2106
  %v2108 = vpop.f32.mrb[0].mxu0
  %2109 = vmatprep.mubr.bf16.mxu0 0
  %2110 = vmatmul.mubr.bf16.gmra.mrb[0].mxu0 %v1877
  %v2111 = vpop.f32.mrb[0].mxu0
  %v2112 = vadd.f32 %v1636, %v2111
  %v2113 = vpop.f32.mrb[0].mxu0
  %v2114 = vpop.f32.mrb[0].mxu0
  %v2115 = vadd.f32 %v1636, %v2114
  %v2116 = vpop.f32.mrb[0].mxu0
  %2117 = vmatprep.mubr.bf16.mxu0 0
  %2118 = vmatmul.mubr.bf16.gmra.mrb[0].mxu0 %v1880
  %v2119 = vpop.f32.mrb[0].mxu0
  %v2120 = vadd.f32 %v1636, %v2119
  %v2121 = vpop.f32.mrb[0].mxu0
  %v2122 = vpop.f32.mrb[0].mxu0
  %v2123 = vadd.f32 %v1636, %v2122
  %v2124 = vpop.f32.mrb[0].mxu0
  %2125 = vmatprep.mubr.bf16.mxu0 0
  %2126 = vmatmul.mubr.bf16.gmra.mrb[0].mxu0 %v1883
  %v2127 = vpop.f32.mrb[0].mxu0
  %v2128 = vadd.f32 %v1636, %v2127
  %v2129 = vpop.f32.mrb[0].mxu0
  %v2130 = vpop.f32.mrb[0].mxu0
  %v2131 = vadd.f32 %v1636, %v2130
  %v2132 = vpop.f32.mrb[0].mxu0
  %2133 = vmatprep.mubr.bf16.mxu0 0
  %2134 = vmatmul.mubr.bf16.gmra.mrb[0].mxu0 %v1886
  %v2135 = vpop.f32.mrb[0].mxu0
  %v2136 = vadd.f32 %v1642, %v2135
  %v2137 = vpop.f32.mrb[0].mxu0
  %v2138 = vpop.f32.mrb[0].mxu0
  %v2139 = vadd.f32 %v1642, %v2138
  %v2140 = vpop.f32.mrb[0].mxu0
  %2141 = vmatprep.mubr.bf16.mxu0 0
  %2142 = vmatmul.mubr.bf16.gmra.mrb[0].mxu0 %v1889
  %v2143 = vpop.f32.mrb[0].mxu0
  %v2144 = vadd.f32 %v1642, %v2143
  %v2145 = vpop.f32.mrb[0].mxu0
  %v2146 = vpop.f32.mrb[0].mxu0
  %v2147 = vadd.f32 %v1642, %v2146
  %v2148 = vpop.f32.mrb[0].mxu0
  %2149 = vmatprep.mubr.bf16.mxu0 0
  %2150 = vmatmul.mubr.bf16.gmra.mrb[0].mxu0 %v1892
  %v2151 = vpop.f32.mrb[0].mxu0
  %v2152 = vadd.f32 %v1642, %v2151
  %v2153 = vpop.f32.mrb[0].mxu0
  %v2154 = vpop.f32.mrb[0].mxu0
  %v2155 = vadd.f32 %v1642, %v2154
  %v2156 = vpop.f32.mrb[0].mxu0
  %2157 = vmatprep.mubr.bf16.mxu0 0
  %2158 = vmatmul.mubr.bf16.gmra.mrb[0].mxu0 %v1895
  %v2159 = vpop.f32.mrb[0].mxu0
  %v2160 = vadd.f32 %v1642, %v2159
  %v2161 = vpop.f32.mrb[0].mxu0
  %v2162 = vpop.f32.mrb[0].mxu0
  %v2163 = vadd.f32 %v1642, %v2162
  %v2164 = vpop.f32.mrb[0].mxu0
  %2165 = vmatprep.mubr.bf16.mxu0 0
  %2166 = vmatmul.mubr.bf16.gmra.mrb[0].mxu0 %v1898
  %v2167 = vpop.f32.mrb[0].mxu0
  %v2168 = vadd.f32 %v1646, %v2167
  %v2169 = vpop.f32.mrb[0].mxu0
  %v2170 = vpop.f32.mrb[0].mxu0
  %v2171 = vadd.f32 %v1646, %v2170
  %v2172 = vpop.f32.mrb[0].mxu0
  %2173 = vmatprep.mubr.bf16.mxu0 0
  %2174 = vmatmul.mubr.bf16.gmra.mrb[0].mxu0 %v1901
  %v2175 = vpop.f32.mrb[0].mxu0
  %v2176 = vadd.f32 %v1646, %v2175
  %v2177 = vpop.f32.mrb[0].mxu0
  %v2178 = vpop.f32.mrb[0].mxu0
  %v2179 = vadd.f32 %v1646, %v2178
  %v2180 = vpop.f32.mrb[0].mxu0
  %2181 = vmatprep.mubr.bf16.mxu0 0
  %2182 = vmatmul.mubr.bf16.gmra.mrb[0].mxu0 %v1904
  %v2183 = vpop.f32.mrb[0].mxu0
  %v2184 = vadd.f32 %v1646, %v2183
  %v2185 = vpop.f32.mrb[0].mxu0
  %v2186 = vpop.f32.mrb[0].mxu0
  %v2187 = vadd.f32 %v1646, %v2186
  %v2188 = vpop.f32.mrb[0].mxu0
  %2189 = vmatprep.mubr.bf16.mxu0 0
  %2190 = vmatmul.mubr.bf16.gmra.mrb[0].mxu0 %v1907
  %v2191 = vpop.f32.mrb[0].mxu0
  %v2192 = vadd.f32 %v1646, %v2191
  %v2193 = vpop.f32.mrb[0].mxu0
  %v2194 = vpop.f32.mrb[0].mxu0
  %v2195 = vadd.f32 %v1646, %v2194
  %v2196 = vpop.f32.mrb[0].mxu0
  %2197 = vdwg.mxu0
  %v2199 = vsel %vm777, %v339, 0
  %v2202 = vsel %vm777, %v340, 0
  %v2205 = vsel %vm777, %v341, 0
  %v2208 = vsel %vm777, %v342, 0
  %v2211 = vsel %vm777, %v343, 0
  %v2214 = vsel %vm777, %v344, 0
  %v2217 = vsel %vm777, %v345, 0
  %v2220 = vsel %vm777, %v346, 0
  %v2223 = vsel %vm777, %v347, 0
  %v2226 = vsel %vm777, %v348, 0
  %v2229 = vsel %vm777, %v349, 0
  %v2232 = vsel %vm777, %v350, 0
  %v2235 = vsel %vm777, %v351, 0
  %v2238 = vsel %vm777, %v352, 0
  %v2241 = vsel %vm777, %v353, 0
  %v2244 = vsel %vm777, %v354, 0
  %v2247 = vsel %vm777, %v355, 0
  %v2250 = vsel %vm777, %v356, 0
  %v2253 = vsel %vm777, %v357, 0
  %v2256 = vsel %vm777, %v358, 0
  %v2259 = vsel %vm777, %v359, 0
  %v2262 = vsel %vm777, %v360, 0
  %v2265 = vsel %vm777, %v361, 0
  %v2268 = vsel %vm777, %v362, 0
  %v2271 = vsel %vm777, %v363, 0
  %v2274 = vsel %vm777, %v364, 0
  %v2277 = vsel %vm777, %v365, 0
  %v2280 = vsel %vm777, %v366, 0
  %v2283 = vsel %vm777, %v367, 0
  %v2286 = vsel %vm777, %v368, 0
  %v2289 = vsel %vm777, %v369, 0
  %v2292 = vsel %vm777, %v370, 0
  %v2295 = vsel %vm790, %v300, 0
  %2297 = vmatprep.subr.bf16.mxu0 0
  %2298 = vmatpush1.bf16.msra.mxu0 %v2295
  %2299 = vmatprep.subr.bf16.mxu0 0
  %2300 = vmatpush1.bf16.msra.mxu0 0
  %2301 = vmatprep.subr.bf16.mxu0 0
  %2302 = vmatpush1.bf16.msra.mxu0 0
  %2303 = vmatprep.subr.bf16.mxu0 0
  %2304 = vmatpush1.bf16.msra.mxu0 0
  %2305 = vmatprep.subr.bf16.mxu0 0
  %2306 = vmatpush1.bf16.msra.mxu0 0
  %2307 = vmatprep.subr.bf16.mxu0 0
  %2308 = vmatpush1.bf16.msra.mxu0 0
  %2309 = vmatprep.subr.bf16.mxu0 0
  %2310 = vmatpush1.bf16.msra.mxu0 0
  %2311 = vmatprep.subr.bf16.mxu0 0
  %2312 = vmatpush1.bf16.msra.mxu0 0
  %2313 = vmatprep.subr.bf16.mxu0 0
  %2314 = vmatpush1.bf16.msra.mxu0 0
  %2315 = vmatprep.subr.bf16.mxu0 0
  %2316 = vmatpush1.bf16.msra.mxu0 0
  %2317 = vmatprep.subr.bf16.mxu0 0
  %2318 = vmatpush1.bf16.msra.mxu0 0
  %2319 = vmatprep.subr.bf16.mxu0 0
  %2320 = vmatpush1.bf16.msra.mxu0 0
  %2321 = vmatprep.subr.bf16.mxu0 0
  %2322 = vmatpush1.bf16.msra.mxu0 0
  %2323 = vmatprep.subr.bf16.mxu0 0
  %2324 = vmatpush1.bf16.msra.mxu0 0
  %2325 = vmatprep.subr.bf16.mxu0 0
  %2326 = vmatpush1.bf16.msra.mxu0 0
  %2327 = vmatprep.subr.bf16.mxu0 0
  %2328 = vmatpush1.bf16.msra.mxu0 0
  %2329 = vmatprep.mubr.bf16.mxu0 0
  %2330 = vmatmul.mubr.bf16.gmra.mrb[0].mxu0 %v2199
  %v2331 = vpop.f32.mrb[0].mxu0
  %v2332 = vadd.f32 0.0, %v2331
  %v2333 = vpop.f32.mrb[0].mxu0
  %v2334 = vpop.f32.mrb[0].mxu0
  %v2335 = vadd.f32 0.0, %v2334
  %v2336 = vpop.f32.mrb[0].mxu0
  %2337 = vmatprep.mubr.bf16.mxu0 0
  %2338 = vmatmul.mubr.bf16.gmra.mrb[0].mxu0 %v2202
  %v2339 = vpop.f32.mrb[0].mxu0
  %v2340 = vadd.f32 0.0, %v2339
  %v2341 = vpop.f32.mrb[0].mxu0
  %v2342 = vpop.f32.mrb[0].mxu0
  %v2343 = vadd.f32 0.0, %v2342
  %v2344 = vpop.f32.mrb[0].mxu0
  %2345 = vmatprep.mubr.bf16.mxu0 0
  %2346 = vmatmul.mubr.bf16.gmra.mrb[0].mxu0 %v2205
  %v2347 = vpop.f32.mrb[0].mxu0
  %v2348 = vadd.f32 0.0, %v2347
  %v2349 = vpop.f32.mrb[0].mxu0
  %v2350 = vpop.f32.mrb[0].mxu0
  %v2351 = vadd.f32 0.0, %v2350
  %v2352 = vpop.f32.mrb[0].mxu0
  %2353 = vmatprep.mubr.bf16.mxu0 0
  %2354 = vmatmul.mubr.bf16.gmra.mrb[0].mxu0 %v2208
  %v2355 = vpop.f32.mrb[0].mxu0
  %v2356 = vadd.f32 0.0, %v2355
  %v2357 = vpop.f32.mrb[0].mxu0
  %v2358 = vpop.f32.mrb[0].mxu0
  %v2359 = vadd.f32 0.0, %v2358
  %v2360 = vpop.f32.mrb[0].mxu0
  %2361 = vmatprep.mubr.bf16.mxu0 0
  %2362 = vmatmul.mubr.bf16.gmra.mrb[0].mxu0 %v2211
  %v2363 = vpop.f32.mrb[0].mxu0
  %v2364 = vadd.f32 0.0, %v2363
  %v2365 = vpop.f32.mrb[0].mxu0
  %v2366 = vpop.f32.mrb[0].mxu0
  %v2367 = vadd.f32 0.0, %v2366
  %v2368 = vpop.f32.mrb[0].mxu0
  %2369 = vmatprep.mubr.bf16.mxu0 0
  %2370 = vmatmul.mubr.bf16.gmra.mrb[0].mxu0 %v2214
  %v2371 = vpop.f32.mrb[0].mxu0
  %v2372 = vadd.f32 0.0, %v2371
  %v2373 = vpop.f32.mrb[0].mxu0
  %v2374 = vpop.f32.mrb[0].mxu0
  %v2375 = vadd.f32 0.0, %v2374
  %v2376 = vpop.f32.mrb[0].mxu0
  %2377 = vmatprep.mubr.bf16.mxu0 0
  %2378 = vmatmul.mubr.bf16.gmra.mrb[0].mxu0 %v2217
  %v2379 = vpop.f32.mrb[0].mxu0
  %v2380 = vadd.f32 0.0, %v2379
  %v2381 = vpop.f32.mrb[0].mxu0
  %v2382 = vpop.f32.mrb[0].mxu0
  %v2383 = vadd.f32 0.0, %v2382
  %v2384 = vpop.f32.mrb[0].mxu0
  %2385 = vmatprep.mubr.bf16.mxu0 0
  %2386 = vmatmul.mubr.bf16.gmra.mrb[0].mxu0 %v2220
  %v2387 = vpop.f32.mrb[0].mxu0
  %v2388 = vadd.f32 0.0, %v2387
  %v2389 = vpop.f32.mrb[0].mxu0
  %v2390 = vpop.f32.mrb[0].mxu0
  %v2391 = vadd.f32 0.0, %v2390
  %v2392 = vpop.f32.mrb[0].mxu0
  %2393 = vmatprep.mubr.bf16.mxu0 0
  %2394 = vmatmul.mubr.bf16.gmra.mrb[0].mxu0 %v2223
  %v2395 = vpop.f32.mrb[0].mxu0
  %v2396 = vadd.f32 0.0, %v2395
  %v2397 = vpop.f32.mrb[0].mxu0
  %v2398 = vpop.f32.mrb[0].mxu0
  %v2399 = vadd.f32 0.0, %v2398
  %v2400 = vpop.f32.mrb[0].mxu0
  %2401 = vmatprep.mubr.bf16.mxu0 0
  %2402 = vmatmul.mubr.bf16.gmra.mrb[0].mxu0 %v2226
  %v2403 = vpop.f32.mrb[0].mxu0
  %v2404 = vadd.f32 0.0, %v2403
  %v2405 = vpop.f32.mrb[0].mxu0
  %v2406 = vpop.f32.mrb[0].mxu0
  %v2407 = vadd.f32 0.0, %v2406
  %v2408 = vpop.f32.mrb[0].mxu0
  %2409 = vmatprep.mubr.bf16.mxu0 0
  %2410 = vmatmul.mubr.bf16.gmra.mrb[0].mxu0 %v2229
  %v2411 = vpop.f32.mrb[0].mxu0
  %v2412 = vadd.f32 0.0, %v2411
  %v2413 = vpop.f32.mrb[0].mxu0
  %v2414 = vpop.f32.mrb[0].mxu0
  %v2415 = vadd.f32 0.0, %v2414
  %v2416 = vpop.f32.mrb[0].mxu0
  %2417 = vmatprep.mubr.bf16.mxu0 0
  %2418 = vmatmul.mubr.bf16.gmra.mrb[0].mxu0 %v2232
  %v2419 = vpop.f32.mrb[0].mxu0
  %v2420 = vadd.f32 0.0, %v2419
  %v2421 = vpop.f32.mrb[0].mxu0
  %v2422 = vpop.f32.mrb[0].mxu0
  %v2423 = vadd.f32 0.0, %v2422
  %v2424 = vpop.f32.mrb[0].mxu0
  %2425 = vmatprep.mubr.bf16.mxu0 0
  %2426 = vmatmul.mubr.bf16.gmra.mrb[0].mxu0 %v2235
  %v2427 = vpop.f32.mrb[0].mxu0
  %v2428 = vadd.f32 0.0, %v2427
  %v2429 = vpop.f32.mrb[0].mxu0
  %v2430 = vpop.f32.mrb[0].mxu0
  %v2431 = vadd.f32 0.0, %v2430
  %v2432 = vpop.f32.mrb[0].mxu0
  %2433 = vmatprep.mubr.bf16.mxu0 0
  %2434 = vmatmul.mubr.bf16.gmra.mrb[0].mxu0 %v2238
  %v2435 = vpop.f32.mrb[0].mxu0
  %v2436 = vadd.f32 0.0, %v2435
  %v2437 = vpop.f32.mrb[0].mxu0
  %v2438 = vpop.f32.mrb[0].mxu0
  %v2439 = vadd.f32 0.0, %v2438
  %v2440 = vpop.f32.mrb[0].mxu0
  %2441 = vmatprep.mubr.bf16.mxu0 0
  %2442 = vmatmul.mubr.bf16.gmra.mrb[0].mxu0 %v2241
  %v2443 = vpop.f32.mrb[0].mxu0
  %v2444 = vadd.f32 0.0, %v2443
  %v2445 = vpop.f32.mrb[0].mxu0
  %v2446 = vpop.f32.mrb[0].mxu0
  %v2447 = vadd.f32 0.0, %v2446
  %v2448 = vpop.f32.mrb[0].mxu0
  %2449 = vmatprep.mubr.bf16.mxu0 0
  %2450 = vmatmul.mubr.bf16.gmra.mrb[0].mxu0 %v2244
  %v2451 = vpop.f32.mrb[0].mxu0
  %v2452 = vadd.f32 0.0, %v2451
  %v2453 = vpop.f32.mrb[0].mxu0
  %v2454 = vpop.f32.mrb[0].mxu0
  %v2455 = vadd.f32 0.0, %v2454
  %v2456 = vpop.f32.mrb[0].mxu0
  %2457 = vmatprep.mubr.bf16.mxu0 0
  %2458 = vmatmul.mubr.bf16.gmra.mrb[0].mxu0 %v2247
  %v2459 = vpop.f32.mrb[0].mxu0
  %v2460 = vadd.f32 0.0, %v2459
  %v2461 = vpop.f32.mrb[0].mxu0
  %v2462 = vpop.f32.mrb[0].mxu0
  %v2463 = vadd.f32 0.0, %v2462
  %v2464 = vpop.f32.mrb[0].mxu0
  %2465 = vmatprep.mubr.bf16.mxu0 0
  %2466 = vmatmul.mubr.bf16.gmra.mrb[0].mxu0 %v2250
  %v2467 = vpop.f32.mrb[0].mxu0
  %v2468 = vadd.f32 0.0, %v2467
  %v2469 = vpop.f32.mrb[0].mxu0
  %v2470 = vpop.f32.mrb[0].mxu0
  %v2471 = vadd.f32 0.0, %v2470
  %v2472 = vpop.f32.mrb[0].mxu0
  %2473 = vmatprep.mubr.bf16.mxu0 0
  %2474 = vmatmul.mubr.bf16.gmra.mrb[0].mxu0 %v2253
  %v2475 = vpop.f32.mrb[0].mxu0
  %v2476 = vadd.f32 0.0, %v2475
  %v2477 = vpop.f32.mrb[0].mxu0
  %v2478 = vpop.f32.mrb[0].mxu0
  %v2479 = vadd.f32 0.0, %v2478
  %v2480 = vpop.f32.mrb[0].mxu0
  %2481 = vmatprep.mubr.bf16.mxu0 0
  %2482 = vmatmul.mubr.bf16.gmra.mrb[0].mxu0 %v2256
  %v2483 = vpop.f32.mrb[0].mxu0
  %v2484 = vadd.f32 0.0, %v2483
  %v2485 = vpop.f32.mrb[0].mxu0
  %v2486 = vpop.f32.mrb[0].mxu0
  %v2487 = vadd.f32 0.0, %v2486
  %v2488 = vpop.f32.mrb[0].mxu0
  %2489 = vmatprep.mubr.bf16.mxu0 0
  %2490 = vmatmul.mubr.bf16.gmra.mrb[0].mxu0 %v2259
  %v2491 = vpop.f32.mrb[0].mxu0
  %v2492 = vadd.f32 0.0, %v2491
  %v2493 = vpop.f32.mrb[0].mxu0
  %v2494 = vpop.f32.mrb[0].mxu0
  %v2495 = vadd.f32 0.0, %v2494
  %v2496 = vpop.f32.mrb[0].mxu0
  %2497 = vmatprep.mubr.bf16.mxu0 0
  %2498 = vmatmul.mubr.bf16.gmra.mrb[0].mxu0 %v2262
  %v2499 = vpop.f32.mrb[0].mxu0
  %v2500 = vadd.f32 0.0, %v2499
  %v2501 = vpop.f32.mrb[0].mxu0
  %v2502 = vpop.f32.mrb[0].mxu0
  %v2503 = vadd.f32 0.0, %v2502
  %v2504 = vpop.f32.mrb[0].mxu0
  %2505 = vmatprep.mubr.bf16.mxu0 0
  %2506 = vmatmul.mubr.bf16.gmra.mrb[0].mxu0 %v2265
  %v2507 = vpop.f32.mrb[0].mxu0
  %v2508 = vadd.f32 0.0, %v2507
  %v2509 = vpop.f32.mrb[0].mxu0
  %v2510 = vpop.f32.mrb[0].mxu0
  %v2511 = vadd.f32 0.0, %v2510
  %v2512 = vpop.f32.mrb[0].mxu0
  %2513 = vmatprep.mubr.bf16.mxu0 0
  %2514 = vmatmul.mubr.bf16.gmra.mrb[0].mxu0 %v2268
  %v2515 = vpop.f32.mrb[0].mxu0
  %v2516 = vadd.f32 0.0, %v2515
  %v2517 = vpop.f32.mrb[0].mxu0
  %v2518 = vpop.f32.mrb[0].mxu0
  %v2519 = vadd.f32 0.0, %v2518
  %v2520 = vpop.f32.mrb[0].mxu0
  %2521 = vmatprep.mubr.bf16.mxu0 0
  %2522 = vmatmul.mubr.bf16.gmra.mrb[0].mxu0 %v2271
  %v2523 = vpop.f32.mrb[0].mxu0
  %v2524 = vadd.f32 0.0, %v2523
  %v2525 = vpop.f32.mrb[0].mxu0
  %v2526 = vpop.f32.mrb[0].mxu0
  %v2527 = vadd.f32 0.0, %v2526
  %v2528 = vpop.f32.mrb[0].mxu0
  %2529 = vmatprep.mubr.bf16.mxu0 0
  %2530 = vmatmul.mubr.bf16.gmra.mrb[0].mxu0 %v2274
  %v2531 = vpop.f32.mrb[0].mxu0
  %v2532 = vadd.f32 0.0, %v2531
  %v2533 = vpop.f32.mrb[0].mxu0
  %v2534 = vpop.f32.mrb[0].mxu0
  %v2535 = vadd.f32 0.0, %v2534
  %v2536 = vpop.f32.mrb[0].mxu0
  %2537 = vmatprep.mubr.bf16.mxu0 0
  %2538 = vmatmul.mubr.bf16.gmra.mrb[0].mxu0 %v2277
  %v2539 = vpop.f32.mrb[0].mxu0
  %v2540 = vadd.f32 0.0, %v2539
  %v2541 = vpop.f32.mrb[0].mxu0
  %v2542 = vpop.f32.mrb[0].mxu0
  %v2543 = vadd.f32 0.0, %v2542
  %v2544 = vpop.f32.mrb[0].mxu0
  %2545 = vmatprep.mubr.bf16.mxu0 0
  %2546 = vmatmul.mubr.bf16.gmra.mrb[0].mxu0 %v2280
  %v2547 = vpop.f32.mrb[0].mxu0
  %v2548 = vadd.f32 0.0, %v2547
  %v2549 = vpop.f32.mrb[0].mxu0
  %v2550 = vpop.f32.mrb[0].mxu0
  %v2551 = vadd.f32 0.0, %v2550
  %v2552 = vpop.f32.mrb[0].mxu0
  %2553 = vmatprep.mubr.bf16.mxu0 0
  %2554 = vmatmul.mubr.bf16.gmra.mrb[0].mxu0 %v2283
  %v2555 = vpop.f32.mrb[0].mxu0
  %v2556 = vadd.f32 0.0, %v2555
  %v2557 = vpop.f32.mrb[0].mxu0
  %v2558 = vpop.f32.mrb[0].mxu0
  %v2559 = vadd.f32 0.0, %v2558
  %v2560 = vpop.f32.mrb[0].mxu0
  %2561 = vmatprep.mubr.bf16.mxu0 0
  %2562 = vmatmul.mubr.bf16.gmra.mrb[0].mxu0 %v2286
  %v2563 = vpop.f32.mrb[0].mxu0
  %v2564 = vadd.f32 0.0, %v2563
  %v2565 = vpop.f32.mrb[0].mxu0
  %v2566 = vpop.f32.mrb[0].mxu0
  %v2567 = vadd.f32 0.0, %v2566
  %v2568 = vpop.f32.mrb[0].mxu0
  %2569 = vmatprep.mubr.bf16.mxu0 0
  %2570 = vmatmul.mubr.bf16.gmra.mrb[0].mxu0 %v2289
  %v2571 = vpop.f32.mrb[0].mxu0
  %v2572 = vadd.f32 0.0, %v2571
  %v2573 = vpop.f32.mrb[0].mxu0
  %v2574 = vpop.f32.mrb[0].mxu0
  %v2575 = vadd.f32 0.0, %v2574
  %v2576 = vpop.f32.mrb[0].mxu0
  %2577 = vmatprep.mubr.bf16.mxu0 0
  %2578 = vmatmul.mubr.bf16.gmra.mrb[0].mxu0 %v2292
  %v2579 = vpop.f32.mrb[0].mxu0
  %v2580 = vadd.f32 0.0, %v2579
  %v2581 = vpop.f32.mrb[0].mxu0
  %v2582 = vpop.f32.mrb[0].mxu0
  %v2583 = vadd.f32 0.0, %v2582
  %v2584 = vpop.f32.mrb[0].mxu0
  %2585 = vdwg.mxu0
  %v2586 = vadd.f32 %v1944, %v2332
  %v2587 = vadd.f32 %v1947, %v2335
  %v2588 = vadd.f32 %v1952, %v2340
  %v2589 = vadd.f32 %v1955, %v2343
  %v2590 = vadd.f32 %v1960, %v2348
  %v2591 = vadd.f32 %v1963, %v2351
  %v2592 = vadd.f32 %v1968, %v2356
  %v2593 = vadd.f32 %v1971, %v2359
  %v2594 = vadd.f32 %v1976, %v2364
  %v2595 = vadd.f32 %v1979, %v2367
  %v2596 = vadd.f32 %v1984, %v2372
  %v2597 = vadd.f32 %v1987, %v2375
  %v2598 = vadd.f32 %v1992, %v2380
  %v2599 = vadd.f32 %v1995, %v2383
  %v2600 = vadd.f32 %v2000, %v2388
  %v2601 = vadd.f32 %v2003, %v2391
  %v2602 = vadd.f32 %v2008, %v2396
  %v2603 = vadd.f32 %v2011, %v2399
  %v2604 = vadd.f32 %v2016, %v2404
  %v2605 = vadd.f32 %v2019, %v2407
  %v2606 = vadd.f32 %v2024, %v2412
  %v2607 = vadd.f32 %v2027, %v2415
  %v2608 = vadd.f32 %v2032, %v2420
  %v2609 = vadd.f32 %v2035, %v2423
  %v2610 = vadd.f32 %v2040, %v2428
  %v2611 = vadd.f32 %v2043, %v2431
  %v2612 = vadd.f32 %v2048, %v2436
  %v2613 = vadd.f32 %v2051, %v2439
  %v2614 = vadd.f32 %v2056, %v2444
  %v2615 = vadd.f32 %v2059, %v2447
  %v2616 = vadd.f32 %v2064, %v2452
  %v2617 = vadd.f32 %v2067, %v2455
  %v2618 = vadd.f32 %v2072, %v2460
  %v2619 = vadd.f32 %v2075, %v2463
  %v2620 = vadd.f32 %v2080, %v2468
  %v2621 = vadd.f32 %v2083, %v2471
  %v2622 = vadd.f32 %v2088, %v2476
  %v2623 = vadd.f32 %v2091, %v2479
  %v2624 = vadd.f32 %v2096, %v2484
  %v2625 = vadd.f32 %v2099, %v2487
  %v2626 = vadd.f32 %v2104, %v2492
  %v2627 = vadd.f32 %v2107, %v2495
  %v2628 = vadd.f32 %v2112, %v2500
  %v2629 = vadd.f32 %v2115, %v2503
  %v2630 = vadd.f32 %v2120, %v2508
  %v2631 = vadd.f32 %v2123, %v2511
  %v2632 = vadd.f32 %v2128, %v2516
  %v2633 = vadd.f32 %v2131, %v2519
  %v2634 = vadd.f32 %v2136, %v2524
  %v2635 = vadd.f32 %v2139, %v2527
  %v2636 = vadd.f32 %v2144, %v2532
  %v2637 = vadd.f32 %v2147, %v2535
  %v2638 = vadd.f32 %v2152, %v2540
  %v2639 = vadd.f32 %v2155, %v2543
  %v2640 = vadd.f32 %v2160, %v2548
  %v2641 = vadd.f32 %v2163, %v2551
  %v2642 = vadd.f32 %v2168, %v2556
  %v2643 = vadd.f32 %v2171, %v2559
  %v2644 = vadd.f32 %v2176, %v2564
  %v2645 = vadd.f32 %v2179, %v2567
  %v2646 = vadd.f32 %v2184, %v2572
  %v2647 = vadd.f32 %v2187, %v2575
  %v2648 = vadd.f32 %v2192, %v2580
  %v2649 = vadd.f32 %v2195, %v2583
  %v2650 = vmax.f32 %v2586, 0.0
  %v2651 = vmax.f32 %v2587, 0.0
  %v2652 = vmax.f32 %v2588, 0.0
  %v2653 = vmax.f32 %v2589, 0.0
  %v2654 = vmax.f32 %v2590, 0.0
  %v2655 = vmax.f32 %v2591, 0.0
  %v2656 = vmax.f32 %v2592, 0.0
  %v2657 = vmax.f32 %v2593, 0.0
  %v2658 = vmax.f32 %v2594, 0.0
  %v2659 = vmax.f32 %v2595, 0.0
  %v2660 = vmax.f32 %v2596, 0.0
  %v2661 = vmax.f32 %v2597, 0.0
  %v2662 = vmax.f32 %v2598, 0.0
  %v2663 = vmax.f32 %v2599, 0.0
  %v2664 = vmax.f32 %v2600, 0.0
  %v2665 = vmax.f32 %v2601, 0.0
  %v2666 = vmax.f32 %v2602, 0.0
  %v2667 = vmax.f32 %v2603, 0.0
  %v2668 = vmax.f32 %v2604, 0.0
  %v2669 = vmax.f32 %v2605, 0.0
  %v2670 = vmax.f32 %v2606, 0.0
  %v2671 = vmax.f32 %v2607, 0.0
  %v2672 = vmax.f32 %v2608, 0.0
  %v2673 = vmax.f32 %v2609, 0.0
  %v2674 = vmax.f32 %v2610, 0.0
  %v2675 = vmax.f32 %v2611, 0.0
  %v2676 = vmax.f32 %v2612, 0.0
  %v2677 = vmax.f32 %v2613, 0.0
  %v2678 = vmax.f32 %v2614, 0.0
  %v2679 = vmax.f32 %v2615, 0.0
  %v2680 = vmax.f32 %v2616, 0.0
  %v2681 = vmax.f32 %v2617, 0.0
  %v2682 = vmax.f32 %v2618, 0.0
  %v2683 = vmax.f32 %v2619, 0.0
  %v2684 = vmax.f32 %v2620, 0.0
  %v2685 = vmax.f32 %v2621, 0.0
  %v2686 = vmax.f32 %v2622, 0.0
  %v2687 = vmax.f32 %v2623, 0.0
  %v2688 = vmax.f32 %v2624, 0.0
  %v2689 = vmax.f32 %v2625, 0.0
  %v2690 = vmax.f32 %v2626, 0.0
  %v2691 = vmax.f32 %v2627, 0.0
  %v2692 = vmax.f32 %v2628, 0.0
  %v2693 = vmax.f32 %v2629, 0.0
  %v2694 = vmax.f32 %v2630, 0.0
  %v2695 = vmax.f32 %v2631, 0.0
  %v2696 = vmax.f32 %v2632, 0.0
  %v2697 = vmax.f32 %v2633, 0.0
  %v2698 = vmax.f32 %v2634, 0.0
  %v2699 = vmax.f32 %v2635, 0.0
  %v2700 = vmax.f32 %v2636, 0.0
  %v2701 = vmax.f32 %v2637, 0.0
  %v2702 = vmax.f32 %v2638, 0.0
  %v2703 = vmax.f32 %v2639, 0.0
  %v2704 = vmax.f32 %v2640, 0.0
  %v2705 = vmax.f32 %v2641, 0.0
  %v2706 = vmax.f32 %v2642, 0.0
  %v2707 = vmax.f32 %v2643, 0.0
  %v2708 = vmax.f32 %v2644, 0.0
  %v2709 = vmax.f32 %v2645, 0.0
  %v2710 = vmax.f32 %v2646, 0.0
  %v2711 = vmax.f32 %v2647, 0.0
  %v2712 = vmax.f32 %v2648, 0.0
  %v2713 = vmax.f32 %v2649, 0.0
  %v2714 = vpack.c.bf16 %v2651, %v2650
  %v2715 = vpack.c.bf16 %v2653, %v2652
  %v2716 = vpack.c.bf16 %v2655, %v2654
  %v2717 = vpack.c.bf16 %v2657, %v2656
  %v2718 = vpack.c.bf16 %v2659, %v2658
  %v2719 = vpack.c.bf16 %v2661, %v2660
  %v2720 = vpack.c.bf16 %v2663, %v2662
  %v2721 = vpack.c.bf16 %v2665, %v2664
  %v2722 = vpack.c.bf16 %v2667, %v2666
  %v2723 = vpack.c.bf16 %v2669, %v2668
  %v2724 = vpack.c.bf16 %v2671, %v2670
  %v2725 = vpack.c.bf16 %v2673, %v2672
  %v2726 = vpack.c.bf16 %v2675, %v2674
  %v2727 = vpack.c.bf16 %v2677, %v2676
  %v2728 = vpack.c.bf16 %v2679, %v2678
  %v2729 = vpack.c.bf16 %v2681, %v2680
  %v2730 = vpack.c.bf16 %v2683, %v2682
  %v2731 = vpack.c.bf16 %v2685, %v2684
  %v2732 = vpack.c.bf16 %v2687, %v2686
  %v2733 = vpack.c.bf16 %v2689, %v2688
  %v2734 = vpack.c.bf16 %v2691, %v2690
  %v2735 = vpack.c.bf16 %v2693, %v2692
  %v2736 = vpack.c.bf16 %v2695, %v2694
  %v2737 = vpack.c.bf16 %v2697, %v2696
  %v2738 = vpack.c.bf16 %v2699, %v2698
  %v2739 = vpack.c.bf16 %v2701, %v2700
  %v2740 = vpack.c.bf16 %v2703, %v2702
  %v2741 = vpack.c.bf16 %v2705, %v2704
  %v2742 = vpack.c.bf16 %v2707, %v2706
  %v2743 = vpack.c.bf16 %v2709, %v2708
  %v2744 = vpack.c.bf16 %v2711, %v2710
  %v2745 = vpack.c.bf16 %v2713, %v2712
  %v2762 = vunpack.c.l.b16 %v301
  %v2763 = vunpack.c.l.b16 %v302
  %v2764 = vunpack.c.l.b16 %v303
  %v2765 = vunpack.c.l.b16 %v304
  %v2766 = vunpack.c.l.b16 %v305
  %v2767 = vunpack.c.l.b16 %v306
  %v2768 = vunpack.c.l.b16 %v307
  %v2769 = vunpack.c.l.b16 %v308
  %v2770 = vunpack.c.l.b16 %v309
  %v2771 = vunpack.c.l.b16 %v310
  %v2772 = vunpack.c.l.b16 %v311
  %v2773 = vunpack.c.l.b16 %v312
  %v2774 = vunpack.c.l.b16 %v313
  %v2775 = vunpack.c.l.b16 %v314
  %v2776 = vunpack.c.l.b16 %v315
  %v2777 = vunpack.c.l.b16 %v316
  %v2778 = vpack.c.b16 %v2763, %v2762
  %v2779 = vpack.c.b16 %v2765, %v2764
  %v2780 = vpack.c.b16 %v2767, %v2766
  %v2781 = vpack.c.b16 %v2769, %v2768
  %v2782 = vpack.c.b16 %v2771, %v2770
  %v2783 = vpack.c.b16 %v2773, %v2772
  %v2784 = vpack.c.b16 %v2775, %v2774
  %v2785 = vpack.c.b16 %v2777, %v2776
  %2794 = vmatprep.subr.bf16.mxu0 0
  %2795 = vmatpush1.bf16.msra.mxu0 %v2778
  %2796 = vmatprep.subr.bf16.mxu0 0
  %2797 = vmatpush1.bf16.msra.mxu0 %v2779
  %2798 = vmatprep.subr.bf16.mxu0 0
  %2799 = vmatpush1.bf16.msra.mxu0 %v2780
  %2800 = vmatprep.subr.bf16.mxu0 0
  %2801 = vmatpush1.bf16.msra.mxu0 %v2781
  %2802 = vmatprep.subr.bf16.mxu0 0
  %2803 = vmatpush1.bf16.msra.mxu0 %v2782
  %2804 = vmatprep.subr.bf16.mxu0 0
  %2805 = vmatpush1.bf16.msra.mxu0 %v2783
  %2806 = vmatprep.subr.bf16.mxu0 0
  %2807 = vmatpush1.bf16.msra.mxu0 %v2784
  %2808 = vmatprep.subr.bf16.mxu0 0
  %2809 = vmatpush1.bf16.msra.mxu0 %v2785
  %2810 = vmatprep.subr.bf16.mxu0 0
  %2811 = vmatpush1.bf16.msra.mxu0 0
  %2812 = vmatprep.subr.bf16.mxu0 0
  %2813 = vmatpush1.bf16.msra.mxu0 0
  %2814 = vmatprep.subr.bf16.mxu0 0
  %2815 = vmatpush1.bf16.msra.mxu0 0
  %2816 = vmatprep.subr.bf16.mxu0 0
  %2817 = vmatpush1.bf16.msra.mxu0 0
  %2818 = vmatprep.subr.bf16.mxu0 0
  %2819 = vmatpush1.bf16.msra.mxu0 0
  %2820 = vmatprep.subr.bf16.mxu0 0
  %2821 = vmatpush1.bf16.msra.mxu0 0
  %2822 = vmatprep.subr.bf16.mxu0 0
  %2823 = vmatpush1.bf16.msra.mxu0 0
  %2824 = vmatprep.subr.bf16.mxu0 0
  %2825 = vmatpush1.bf16.msra.mxu0 0
  %2826 = vmatprep.mubr.bf16.mxu0 0
  %2827 = vmatmul.mubr.bf16.gmra.mrb[0].mxu0 %v2714
  %v2828 = vpop.f32.mrb[0].mxu0
  %v2829 = vadd.f32 0.0, %v2828
  %v2830 = vpop.f32.mrb[0].mxu0
  %v2831 = vpop.f32.mrb[0].mxu0
  %v2832 = vadd.f32 0.0, %v2831
  %v2833 = vpop.f32.mrb[0].mxu0
  %2834 = vmatprep.mubr.bf16.mxu0 0
  %2835 = vmatmul.mubr.bf16.gmra.mrb[0].mxu0 %v2715
  %v2836 = vpop.f32.mrb[0].mxu0
  %v2837 = vadd.f32 0.0, %v2836
  %v2838 = vpop.f32.mrb[0].mxu0
  %v2839 = vpop.f32.mrb[0].mxu0
  %v2840 = vadd.f32 0.0, %v2839
  %v2841 = vpop.f32.mrb[0].mxu0
  %2842 = vmatprep.mubr.bf16.mxu0 0
  %2843 = vmatmul.mubr.bf16.gmra.mrb[0].mxu0 %v2716
  %v2844 = vpop.f32.mrb[0].mxu0
  %v2845 = vadd.f32 0.0, %v2844
  %v2846 = vpop.f32.mrb[0].mxu0
  %v2847 = vpop.f32.mrb[0].mxu0
  %v2848 = vadd.f32 0.0, %v2847
  %v2849 = vpop.f32.mrb[0].mxu0
  %2850 = vmatprep.mubr.bf16.mxu0 0
  %2851 = vmatmul.mubr.bf16.gmra.mrb[0].mxu0 %v2717
  %v2852 = vpop.f32.mrb[0].mxu0
  %v2853 = vadd.f32 0.0, %v2852
  %v2854 = vpop.f32.mrb[0].mxu0
  %v2855 = vpop.f32.mrb[0].mxu0
  %v2856 = vadd.f32 0.0, %v2855
  %v2857 = vpop.f32.mrb[0].mxu0
  %2858 = vmatprep.mubr.bf16.mxu0 0
  %2859 = vmatmul.mubr.bf16.gmra.mrb[0].mxu0 %v2718
  %v2860 = vpop.f32.mrb[0].mxu0
  %v2861 = vadd.f32 0.0, %v2860
  %v2862 = vpop.f32.mrb[0].mxu0
  %v2863 = vpop.f32.mrb[0].mxu0
  %v2864 = vadd.f32 0.0, %v2863
  %v2865 = vpop.f32.mrb[0].mxu0
  %2866 = vmatprep.mubr.bf16.mxu0 0
  %2867 = vmatmul.mubr.bf16.gmra.mrb[0].mxu0 %v2719
  %v2868 = vpop.f32.mrb[0].mxu0
  %v2869 = vadd.f32 0.0, %v2868
  %v2870 = vpop.f32.mrb[0].mxu0
  %v2871 = vpop.f32.mrb[0].mxu0
  %v2872 = vadd.f32 0.0, %v2871
  %v2873 = vpop.f32.mrb[0].mxu0
  %2874 = vmatprep.mubr.bf16.mxu0 0
  %2875 = vmatmul.mubr.bf16.gmra.mrb[0].mxu0 %v2720
  %v2876 = vpop.f32.mrb[0].mxu0
  %v2877 = vadd.f32 0.0, %v2876
  %v2878 = vpop.f32.mrb[0].mxu0
  %v2879 = vpop.f32.mrb[0].mxu0
  %v2880 = vadd.f32 0.0, %v2879
  %v2881 = vpop.f32.mrb[0].mxu0
  %2882 = vmatprep.mubr.bf16.mxu0 0
  %2883 = vmatmul.mubr.bf16.gmra.mrb[0].mxu0 %v2721
  %v2884 = vpop.f32.mrb[0].mxu0
  %v2885 = vadd.f32 0.0, %v2884
  %v2886 = vpop.f32.mrb[0].mxu0
  %v2887 = vpop.f32.mrb[0].mxu0
  %v2888 = vadd.f32 0.0, %v2887
  %v2889 = vpop.f32.mrb[0].mxu0
  %2890 = vmatprep.mubr.bf16.mxu0 0
  %2891 = vmatmul.mubr.bf16.gmra.mrb[0].mxu0 %v2722
  %v2892 = vpop.f32.mrb[0].mxu0
  %v2893 = vadd.f32 0.0, %v2892
  %v2894 = vpop.f32.mrb[0].mxu0
  %v2895 = vpop.f32.mrb[0].mxu0
  %v2896 = vadd.f32 0.0, %v2895
  %v2897 = vpop.f32.mrb[0].mxu0
  %2898 = vmatprep.mubr.bf16.mxu0 0
  %2899 = vmatmul.mubr.bf16.gmra.mrb[0].mxu0 %v2723
  %v2900 = vpop.f32.mrb[0].mxu0
  %v2901 = vadd.f32 0.0, %v2900
  %v2902 = vpop.f32.mrb[0].mxu0
  %v2903 = vpop.f32.mrb[0].mxu0
  %v2904 = vadd.f32 0.0, %v2903
  %v2905 = vpop.f32.mrb[0].mxu0
  %2906 = vmatprep.mubr.bf16.mxu0 0
  %2907 = vmatmul.mubr.bf16.gmra.mrb[0].mxu0 %v2724
  %v2908 = vpop.f32.mrb[0].mxu0
  %v2909 = vadd.f32 0.0, %v2908
  %v2910 = vpop.f32.mrb[0].mxu0
  %v2911 = vpop.f32.mrb[0].mxu0
  %v2912 = vadd.f32 0.0, %v2911
  %v2913 = vpop.f32.mrb[0].mxu0
  %2914 = vmatprep.mubr.bf16.mxu0 0
  %2915 = vmatmul.mubr.bf16.gmra.mrb[0].mxu0 %v2725
  %v2916 = vpop.f32.mrb[0].mxu0
  %v2917 = vadd.f32 0.0, %v2916
  %v2918 = vpop.f32.mrb[0].mxu0
  %v2919 = vpop.f32.mrb[0].mxu0
  %v2920 = vadd.f32 0.0, %v2919
  %v2921 = vpop.f32.mrb[0].mxu0
  %2922 = vmatprep.mubr.bf16.mxu0 0
  %2923 = vmatmul.mubr.bf16.gmra.mrb[0].mxu0 %v2726
  %v2924 = vpop.f32.mrb[0].mxu0
  %v2925 = vadd.f32 0.0, %v2924
  %v2926 = vpop.f32.mrb[0].mxu0
  %v2927 = vpop.f32.mrb[0].mxu0
  %v2928 = vadd.f32 0.0, %v2927
  %v2929 = vpop.f32.mrb[0].mxu0
  %2930 = vmatprep.mubr.bf16.mxu0 0
  %2931 = vmatmul.mubr.bf16.gmra.mrb[0].mxu0 %v2727
  %v2932 = vpop.f32.mrb[0].mxu0
  %v2933 = vadd.f32 0.0, %v2932
  %v2934 = vpop.f32.mrb[0].mxu0
  %v2935 = vpop.f32.mrb[0].mxu0
  %v2936 = vadd.f32 0.0, %v2935
  %v2937 = vpop.f32.mrb[0].mxu0
  %2938 = vmatprep.mubr.bf16.mxu0 0
  %2939 = vmatmul.mubr.bf16.gmra.mrb[0].mxu0 %v2728
  %v2940 = vpop.f32.mrb[0].mxu0
  %v2941 = vadd.f32 0.0, %v2940
  %v2942 = vpop.f32.mrb[0].mxu0
  %v2943 = vpop.f32.mrb[0].mxu0
  %v2944 = vadd.f32 0.0, %v2943
  %v2945 = vpop.f32.mrb[0].mxu0
  %2946 = vmatprep.mubr.bf16.mxu0 0
  %2947 = vmatmul.mubr.bf16.gmra.mrb[0].mxu0 %v2729
  %v2948 = vpop.f32.mrb[0].mxu0
  %v2949 = vadd.f32 0.0, %v2948
  %v2950 = vpop.f32.mrb[0].mxu0
  %v2951 = vpop.f32.mrb[0].mxu0
  %v2952 = vadd.f32 0.0, %v2951
  %v2953 = vpop.f32.mrb[0].mxu0
  %2954 = vmatprep.mubr.bf16.mxu0 0
  %2955 = vmatmul.mubr.bf16.gmra.mrb[0].mxu0 %v2730
  %v2956 = vpop.f32.mrb[0].mxu0
  %v2957 = vadd.f32 0.0, %v2956
  %v2958 = vpop.f32.mrb[0].mxu0
  %v2959 = vpop.f32.mrb[0].mxu0
  %v2960 = vadd.f32 0.0, %v2959
  %v2961 = vpop.f32.mrb[0].mxu0
  %2962 = vmatprep.mubr.bf16.mxu0 0
  %2963 = vmatmul.mubr.bf16.gmra.mrb[0].mxu0 %v2731
  %v2964 = vpop.f32.mrb[0].mxu0
  %v2965 = vadd.f32 0.0, %v2964
  %v2966 = vpop.f32.mrb[0].mxu0
  %v2967 = vpop.f32.mrb[0].mxu0
  %v2968 = vadd.f32 0.0, %v2967
  %v2969 = vpop.f32.mrb[0].mxu0
  %2970 = vmatprep.mubr.bf16.mxu0 0
  %2971 = vmatmul.mubr.bf16.gmra.mrb[0].mxu0 %v2732
  %v2972 = vpop.f32.mrb[0].mxu0
  %v2973 = vadd.f32 0.0, %v2972
  %v2974 = vpop.f32.mrb[0].mxu0
  %v2975 = vpop.f32.mrb[0].mxu0
  %v2976 = vadd.f32 0.0, %v2975
  %v2977 = vpop.f32.mrb[0].mxu0
  %2978 = vmatprep.mubr.bf16.mxu0 0
  %2979 = vmatmul.mubr.bf16.gmra.mrb[0].mxu0 %v2733
  %v2980 = vpop.f32.mrb[0].mxu0
  %v2981 = vadd.f32 0.0, %v2980
  %v2982 = vpop.f32.mrb[0].mxu0
  %v2983 = vpop.f32.mrb[0].mxu0
  %v2984 = vadd.f32 0.0, %v2983
  %v2985 = vpop.f32.mrb[0].mxu0
  %2986 = vmatprep.mubr.bf16.mxu0 0
  %2987 = vmatmul.mubr.bf16.gmra.mrb[0].mxu0 %v2734
  %v2988 = vpop.f32.mrb[0].mxu0
  %v2989 = vadd.f32 0.0, %v2988
  %v2990 = vpop.f32.mrb[0].mxu0
  %v2991 = vpop.f32.mrb[0].mxu0
  %v2992 = vadd.f32 0.0, %v2991
  %v2993 = vpop.f32.mrb[0].mxu0
  %2994 = vmatprep.mubr.bf16.mxu0 0
  %2995 = vmatmul.mubr.bf16.gmra.mrb[0].mxu0 %v2735
  %v2996 = vpop.f32.mrb[0].mxu0
  %v2997 = vadd.f32 0.0, %v2996
  %v2998 = vpop.f32.mrb[0].mxu0
  %v2999 = vpop.f32.mrb[0].mxu0
  %v3000 = vadd.f32 0.0, %v2999
  %v3001 = vpop.f32.mrb[0].mxu0
  %3002 = vmatprep.mubr.bf16.mxu0 0
  %3003 = vmatmul.mubr.bf16.gmra.mrb[0].mxu0 %v2736
  %v3004 = vpop.f32.mrb[0].mxu0
  %v3005 = vadd.f32 0.0, %v3004
  %v3006 = vpop.f32.mrb[0].mxu0
  %v3007 = vpop.f32.mrb[0].mxu0
  %v3008 = vadd.f32 0.0, %v3007
  %v3009 = vpop.f32.mrb[0].mxu0
  %3010 = vmatprep.mubr.bf16.mxu0 0
  %3011 = vmatmul.mubr.bf16.gmra.mrb[0].mxu0 %v2737
  %v3012 = vpop.f32.mrb[0].mxu0
  %v3013 = vadd.f32 0.0, %v3012
  %v3014 = vpop.f32.mrb[0].mxu0
  %v3015 = vpop.f32.mrb[0].mxu0
  %v3016 = vadd.f32 0.0, %v3015
  %v3017 = vpop.f32.mrb[0].mxu0
  %3018 = vmatprep.mubr.bf16.mxu0 0
  %3019 = vmatmul.mubr.bf16.gmra.mrb[0].mxu0 %v2738
  %v3020 = vpop.f32.mrb[0].mxu0
  %v3021 = vadd.f32 0.0, %v3020
  %v3022 = vpop.f32.mrb[0].mxu0
  %v3023 = vpop.f32.mrb[0].mxu0
  %v3024 = vadd.f32 0.0, %v3023
  %v3025 = vpop.f32.mrb[0].mxu0
  %3026 = vmatprep.mubr.bf16.mxu0 0
  %3027 = vmatmul.mubr.bf16.gmra.mrb[0].mxu0 %v2739
  %v3028 = vpop.f32.mrb[0].mxu0
  %v3029 = vadd.f32 0.0, %v3028
  %v3030 = vpop.f32.mrb[0].mxu0
  %v3031 = vpop.f32.mrb[0].mxu0
  %v3032 = vadd.f32 0.0, %v3031
  %v3033 = vpop.f32.mrb[0].mxu0
  %3034 = vmatprep.mubr.bf16.mxu0 0
  %3035 = vmatmul.mubr.bf16.gmra.mrb[0].mxu0 %v2740
  %v3036 = vpop.f32.mrb[0].mxu0
  %v3037 = vadd.f32 0.0, %v3036
  %v3038 = vpop.f32.mrb[0].mxu0
  %v3039 = vpop.f32.mrb[0].mxu0
  %v3040 = vadd.f32 0.0, %v3039
  %v3041 = vpop.f32.mrb[0].mxu0
  %3042 = vmatprep.mubr.bf16.mxu0 0
  %3043 = vmatmul.mubr.bf16.gmra.mrb[0].mxu0 %v2741
  %v3044 = vpop.f32.mrb[0].mxu0
  %v3045 = vadd.f32 0.0, %v3044
  %v3046 = vpop.f32.mrb[0].mxu0
  %v3047 = vpop.f32.mrb[0].mxu0
  %v3048 = vadd.f32 0.0, %v3047
  %v3049 = vpop.f32.mrb[0].mxu0
  %3050 = vmatprep.mubr.bf16.mxu0 0
  %3051 = vmatmul.mubr.bf16.gmra.mrb[0].mxu0 %v2742
  %v3052 = vpop.f32.mrb[0].mxu0
  %v3053 = vadd.f32 0.0, %v3052
  %v3054 = vpop.f32.mrb[0].mxu0
  %v3055 = vpop.f32.mrb[0].mxu0
  %v3056 = vadd.f32 0.0, %v3055
  %v3057 = vpop.f32.mrb[0].mxu0
  %3058 = vmatprep.mubr.bf16.mxu0 0
  %3059 = vmatmul.mubr.bf16.gmra.mrb[0].mxu0 %v2743
  %v3060 = vpop.f32.mrb[0].mxu0
  %v3061 = vadd.f32 0.0, %v3060
  %v3062 = vpop.f32.mrb[0].mxu0
  %v3063 = vpop.f32.mrb[0].mxu0
  %v3064 = vadd.f32 0.0, %v3063
  %v3065 = vpop.f32.mrb[0].mxu0
  %3066 = vmatprep.mubr.bf16.mxu0 0
  %3067 = vmatmul.mubr.bf16.gmra.mrb[0].mxu0 %v2744
  %v3068 = vpop.f32.mrb[0].mxu0
  %v3069 = vadd.f32 0.0, %v3068
  %v3070 = vpop.f32.mrb[0].mxu0
  %v3071 = vpop.f32.mrb[0].mxu0
  %v3072 = vadd.f32 0.0, %v3071
  %v3073 = vpop.f32.mrb[0].mxu0
  %3074 = vmatprep.mubr.bf16.mxu0 0
  %3075 = vmatmul.mubr.bf16.gmra.mrb[0].mxu0 %v2745
  %v3076 = vpop.f32.mrb[0].mxu0
  %v3077 = vadd.f32 0.0, %v3076
  %v3078 = vpop.f32.mrb[0].mxu0
  %v3079 = vpop.f32.mrb[0].mxu0
  %v3080 = vadd.f32 0.0, %v3079
  %v3081 = vpop.f32.mrb[0].mxu0
  %3082 = vdwg.mxu0
  %v3083 = vmax.f32 %v2829, 0.0
  %v3084 = vmax.f32 %v2832, 0.0
  %v3085 = vmax.f32 %v2837, 0.0
  %v3086 = vmax.f32 %v2840, 0.0
  %v3087 = vmax.f32 %v2845, 0.0
  %v3088 = vmax.f32 %v2848, 0.0
  %v3089 = vmax.f32 %v2853, 0.0
  %v3090 = vmax.f32 %v2856, 0.0
  %v3091 = vmax.f32 %v2861, 0.0
  %v3092 = vmax.f32 %v2864, 0.0
  %v3093 = vmax.f32 %v2869, 0.0
  %v3094 = vmax.f32 %v2872, 0.0
  %v3095 = vmax.f32 %v2877, 0.0
  %v3096 = vmax.f32 %v2880, 0.0
  %v3097 = vmax.f32 %v2885, 0.0
  %v3098 = vmax.f32 %v2888, 0.0
  %v3099 = vmax.f32 %v2893, 0.0
  %v3100 = vmax.f32 %v2896, 0.0
  %v3101 = vmax.f32 %v2901, 0.0
  %v3102 = vmax.f32 %v2904, 0.0
  %v3103 = vmax.f32 %v2909, 0.0
  %v3104 = vmax.f32 %v2912, 0.0
  %v3105 = vmax.f32 %v2917, 0.0
  %v3106 = vmax.f32 %v2920, 0.0
  %v3107 = vmax.f32 %v2925, 0.0
  %v3108 = vmax.f32 %v2928, 0.0
  %v3109 = vmax.f32 %v2933, 0.0
  %v3110 = vmax.f32 %v2936, 0.0
  %v3111 = vmax.f32 %v2941, 0.0
  %v3112 = vmax.f32 %v2944, 0.0
  %v3113 = vmax.f32 %v2949, 0.0
  %v3114 = vmax.f32 %v2952, 0.0
  %v3115 = vmax.f32 %v2957, 0.0
  %v3116 = vmax.f32 %v2960, 0.0
  %v3117 = vmax.f32 %v2965, 0.0
  %v3118 = vmax.f32 %v2968, 0.0
  %v3119 = vmax.f32 %v2973, 0.0
  %v3120 = vmax.f32 %v2976, 0.0
  %v3121 = vmax.f32 %v2981, 0.0
  %v3122 = vmax.f32 %v2984, 0.0
  %v3123 = vmax.f32 %v2989, 0.0
  %v3124 = vmax.f32 %v2992, 0.0
  %v3125 = vmax.f32 %v2997, 0.0
  %v3126 = vmax.f32 %v3000, 0.0
  %v3127 = vmax.f32 %v3005, 0.0
  %v3128 = vmax.f32 %v3008, 0.0
  %v3129 = vmax.f32 %v3013, 0.0
  %v3130 = vmax.f32 %v3016, 0.0
  %v3131 = vmax.f32 %v3021, 0.0
  %v3132 = vmax.f32 %v3024, 0.0
  %v3133 = vmax.f32 %v3029, 0.0
  %v3134 = vmax.f32 %v3032, 0.0
  %v3135 = vmax.f32 %v3037, 0.0
  %v3136 = vmax.f32 %v3040, 0.0
  %v3137 = vmax.f32 %v3045, 0.0
  %v3138 = vmax.f32 %v3048, 0.0
  %v3139 = vmax.f32 %v3053, 0.0
  %v3140 = vmax.f32 %v3056, 0.0
  %v3141 = vmax.f32 %v3061, 0.0
  %v3142 = vmax.f32 %v3064, 0.0
  %v3143 = vmax.f32 %v3069, 0.0
  %v3144 = vmax.f32 %v3072, 0.0
  %v3145 = vmax.f32 %v3077, 0.0
  %v3146 = vmax.f32 %v3080, 0.0
  %v3147 = vpack.c.bf16 %v3084, %v3083
  %v3148 = vpack.c.bf16 %v3086, %v3085
  %v3149 = vpack.c.bf16 %v3088, %v3087
  %v3150 = vpack.c.bf16 %v3090, %v3089
  %v3151 = vpack.c.bf16 %v3092, %v3091
  %v3152 = vpack.c.bf16 %v3094, %v3093
  %v3153 = vpack.c.bf16 %v3096, %v3095
  %v3154 = vpack.c.bf16 %v3098, %v3097
  %v3155 = vpack.c.bf16 %v3100, %v3099
  %v3156 = vpack.c.bf16 %v3102, %v3101
  %v3157 = vpack.c.bf16 %v3104, %v3103
  %v3158 = vpack.c.bf16 %v3106, %v3105
  %v3159 = vpack.c.bf16 %v3108, %v3107
  %v3160 = vpack.c.bf16 %v3110, %v3109
  %v3161 = vpack.c.bf16 %v3112, %v3111
  %v3162 = vpack.c.bf16 %v3114, %v3113
  %v3163 = vpack.c.bf16 %v3116, %v3115
  %v3164 = vpack.c.bf16 %v3118, %v3117
  %v3165 = vpack.c.bf16 %v3120, %v3119
  %v3166 = vpack.c.bf16 %v3122, %v3121
  %v3167 = vpack.c.bf16 %v3124, %v3123
  %v3168 = vpack.c.bf16 %v3126, %v3125
  %v3169 = vpack.c.bf16 %v3128, %v3127
  %v3170 = vpack.c.bf16 %v3130, %v3129
  %v3171 = vpack.c.bf16 %v3132, %v3131
  %v3172 = vpack.c.bf16 %v3134, %v3133
  %v3173 = vpack.c.bf16 %v3136, %v3135
  %v3174 = vpack.c.bf16 %v3138, %v3137
  %v3175 = vpack.c.bf16 %v3140, %v3139
  %v3176 = vpack.c.bf16 %v3142, %v3141
  %v3177 = vpack.c.bf16 %v3144, %v3143
  %v3178 = vpack.c.bf16 %v3146, %v3145
  %v3195 = vunpack.c.l.b16 %v317
  %v3196 = vunpack.c.l.b16 %v318
  %v3197 = vunpack.c.l.b16 %v319
  %v3198 = vunpack.c.l.b16 %v320
  %v3199 = vunpack.c.l.b16 %v321
  %v3200 = vunpack.c.l.b16 %v322
  %v3201 = vunpack.c.l.b16 %v323
  %v3202 = vunpack.c.l.b16 %v324
  %v3203 = vunpack.c.l.b16 %v325
  %v3204 = vunpack.c.l.b16 %v326
  %v3205 = vunpack.c.l.b16 %v327
  %v3206 = vunpack.c.l.b16 %v328
  %v3207 = vunpack.c.l.b16 %v329
  %v3208 = vunpack.c.l.b16 %v330
  %v3209 = vunpack.c.l.b16 %v331
  %v3210 = vunpack.c.l.b16 %v332
  %v3211 = vpack.c.b16 %v3196, %v3195
  %v3212 = vpack.c.b16 %v3198, %v3197
  %v3213 = vpack.c.b16 %v3200, %v3199
  %v3214 = vpack.c.b16 %v3202, %v3201
  %v3215 = vpack.c.b16 %v3204, %v3203
  %v3216 = vpack.c.b16 %v3206, %v3205
  %v3217 = vpack.c.b16 %v3208, %v3207
  %v3218 = vpack.c.b16 %v3210, %v3209
  %3227 = vmatprep.subr.bf16.mxu0 0
  %3228 = vmatpush1.bf16.msra.mxu0 %v3211
  %3229 = vmatprep.subr.bf16.mxu0 0
  %3230 = vmatpush1.bf16.msra.mxu0 %v3212
  %3231 = vmatprep.subr.bf16.mxu0 0
  %3232 = vmatpush1.bf16.msra.mxu0 %v3213
  %3233 = vmatprep.subr.bf16.mxu0 0
  %3234 = vmatpush1.bf16.msra.mxu0 %v3214
  %3235 = vmatprep.subr.bf16.mxu0 0
  %3236 = vmatpush1.bf16.msra.mxu0 %v3215
  %3237 = vmatprep.subr.bf16.mxu0 0
  %3238 = vmatpush1.bf16.msra.mxu0 %v3216
  %3239 = vmatprep.subr.bf16.mxu0 0
  %3240 = vmatpush1.bf16.msra.mxu0 %v3217
  %3241 = vmatprep.subr.bf16.mxu0 0
  %3242 = vmatpush1.bf16.msra.mxu0 %v3218
  %3243 = vmatprep.subr.bf16.mxu0 0
  %3244 = vmatpush1.bf16.msra.mxu0 0
  %3245 = vmatprep.subr.bf16.mxu0 0
  %3246 = vmatpush1.bf16.msra.mxu0 0
  %3247 = vmatprep.subr.bf16.mxu0 0
  %3248 = vmatpush1.bf16.msra.mxu0 0
  %3249 = vmatprep.subr.bf16.mxu0 0
  %3250 = vmatpush1.bf16.msra.mxu0 0
  %3251 = vmatprep.subr.bf16.mxu0 0
  %3252 = vmatpush1.bf16.msra.mxu0 0
  %3253 = vmatprep.subr.bf16.mxu0 0
  %3254 = vmatpush1.bf16.msra.mxu0 0
  %3255 = vmatprep.subr.bf16.mxu0 0
  %3256 = vmatpush1.bf16.msra.mxu0 0
  %3257 = vmatprep.subr.bf16.mxu0 0
  %3258 = vmatpush1.bf16.msra.mxu0 0
  %3259 = vmatprep.mubr.bf16.mxu0 0
  %3260 = vmatmul.mubr.bf16.gmra.mrb[0].mxu0 %v3147
  %v3261 = vpop.f32.mrb[0].mxu0
  %v3262 = vadd.f32 0.0, %v3261
  %v3263 = vpop.f32.mrb[0].mxu0
  %v3264 = vpop.f32.mrb[0].mxu0
  %v3265 = vadd.f32 0.0, %v3264
  %v3266 = vpop.f32.mrb[0].mxu0
  %3267 = vmatprep.mubr.bf16.mxu0 0
  %3268 = vmatmul.mubr.bf16.gmra.mrb[0].mxu0 %v3148
  %v3269 = vpop.f32.mrb[0].mxu0
  %v3270 = vadd.f32 0.0, %v3269
  %v3271 = vpop.f32.mrb[0].mxu0
  %v3272 = vpop.f32.mrb[0].mxu0
  %v3273 = vadd.f32 0.0, %v3272
  %v3274 = vpop.f32.mrb[0].mxu0
  %3275 = vmatprep.mubr.bf16.mxu0 0
  %3276 = vmatmul.mubr.bf16.gmra.mrb[0].mxu0 %v3149
  %v3277 = vpop.f32.mrb[0].mxu0
  %v3278 = vadd.f32 0.0, %v3277
  %v3279 = vpop.f32.mrb[0].mxu0
  %v3280 = vpop.f32.mrb[0].mxu0
  %v3281 = vadd.f32 0.0, %v3280
  %v3282 = vpop.f32.mrb[0].mxu0
  %3283 = vmatprep.mubr.bf16.mxu0 0
  %3284 = vmatmul.mubr.bf16.gmra.mrb[0].mxu0 %v3150
  %v3285 = vpop.f32.mrb[0].mxu0
  %v3286 = vadd.f32 0.0, %v3285
  %v3287 = vpop.f32.mrb[0].mxu0
  %v3288 = vpop.f32.mrb[0].mxu0
  %v3289 = vadd.f32 0.0, %v3288
  %v3290 = vpop.f32.mrb[0].mxu0
  %3291 = vmatprep.mubr.bf16.mxu0 0
  %3292 = vmatmul.mubr.bf16.gmra.mrb[0].mxu0 %v3151
  %v3293 = vpop.f32.mrb[0].mxu0
  %v3294 = vadd.f32 0.0, %v3293
  %v3295 = vpop.f32.mrb[0].mxu0
  %v3296 = vpop.f32.mrb[0].mxu0
  %v3297 = vadd.f32 0.0, %v3296
  %v3298 = vpop.f32.mrb[0].mxu0
  %3299 = vmatprep.mubr.bf16.mxu0 0
  %3300 = vmatmul.mubr.bf16.gmra.mrb[0].mxu0 %v3152
  %v3301 = vpop.f32.mrb[0].mxu0
  %v3302 = vadd.f32 0.0, %v3301
  %v3303 = vpop.f32.mrb[0].mxu0
  %v3304 = vpop.f32.mrb[0].mxu0
  %v3305 = vadd.f32 0.0, %v3304
  %v3306 = vpop.f32.mrb[0].mxu0
  %3307 = vmatprep.mubr.bf16.mxu0 0
  %3308 = vmatmul.mubr.bf16.gmra.mrb[0].mxu0 %v3153
  %v3309 = vpop.f32.mrb[0].mxu0
  %v3310 = vadd.f32 0.0, %v3309
  %v3311 = vpop.f32.mrb[0].mxu0
  %v3312 = vpop.f32.mrb[0].mxu0
  %v3313 = vadd.f32 0.0, %v3312
  %v3314 = vpop.f32.mrb[0].mxu0
  %3315 = vmatprep.mubr.bf16.mxu0 0
  %3316 = vmatmul.mubr.bf16.gmra.mrb[0].mxu0 %v3154
  %v3317 = vpop.f32.mrb[0].mxu0
  %v3318 = vadd.f32 0.0, %v3317
  %v3319 = vpop.f32.mrb[0].mxu0
  %v3320 = vpop.f32.mrb[0].mxu0
  %v3321 = vadd.f32 0.0, %v3320
  %v3322 = vpop.f32.mrb[0].mxu0
  %3323 = vmatprep.mubr.bf16.mxu0 0
  %3324 = vmatmul.mubr.bf16.gmra.mrb[0].mxu0 %v3155
  %v3325 = vpop.f32.mrb[0].mxu0
  %v3326 = vadd.f32 0.0, %v3325
  %v3327 = vpop.f32.mrb[0].mxu0
  %v3328 = vpop.f32.mrb[0].mxu0
  %v3329 = vadd.f32 0.0, %v3328
  %v3330 = vpop.f32.mrb[0].mxu0
  %3331 = vmatprep.mubr.bf16.mxu0 0
  %3332 = vmatmul.mubr.bf16.gmra.mrb[0].mxu0 %v3156
  %v3333 = vpop.f32.mrb[0].mxu0
  %v3334 = vadd.f32 0.0, %v3333
  %v3335 = vpop.f32.mrb[0].mxu0
  %v3336 = vpop.f32.mrb[0].mxu0
  %v3337 = vadd.f32 0.0, %v3336
  %v3338 = vpop.f32.mrb[0].mxu0
  %3339 = vmatprep.mubr.bf16.mxu0 0
  %3340 = vmatmul.mubr.bf16.gmra.mrb[0].mxu0 %v3157
  %v3341 = vpop.f32.mrb[0].mxu0
  %v3342 = vadd.f32 0.0, %v3341
  %v3343 = vpop.f32.mrb[0].mxu0
  %v3344 = vpop.f32.mrb[0].mxu0
  %v3345 = vadd.f32 0.0, %v3344
  %v3346 = vpop.f32.mrb[0].mxu0
  %3347 = vmatprep.mubr.bf16.mxu0 0
  %3348 = vmatmul.mubr.bf16.gmra.mrb[0].mxu0 %v3158
  %v3349 = vpop.f32.mrb[0].mxu0
  %v3350 = vadd.f32 0.0, %v3349
  %v3351 = vpop.f32.mrb[0].mxu0
  %v3352 = vpop.f32.mrb[0].mxu0
  %v3353 = vadd.f32 0.0, %v3352
  %v3354 = vpop.f32.mrb[0].mxu0
  %3355 = vmatprep.mubr.bf16.mxu0 0
  %3356 = vmatmul.mubr.bf16.gmra.mrb[0].mxu0 %v3159
  %v3357 = vpop.f32.mrb[0].mxu0
  %v3358 = vadd.f32 0.0, %v3357
  %v3359 = vpop.f32.mrb[0].mxu0
  %v3360 = vpop.f32.mrb[0].mxu0
  %v3361 = vadd.f32 0.0, %v3360
  %v3362 = vpop.f32.mrb[0].mxu0
  %3363 = vmatprep.mubr.bf16.mxu0 0
  %3364 = vmatmul.mubr.bf16.gmra.mrb[0].mxu0 %v3160
  %v3365 = vpop.f32.mrb[0].mxu0
  %v3366 = vadd.f32 0.0, %v3365
  %v3367 = vpop.f32.mrb[0].mxu0
  %v3368 = vpop.f32.mrb[0].mxu0
  %v3369 = vadd.f32 0.0, %v3368
  %v3370 = vpop.f32.mrb[0].mxu0
  %3371 = vmatprep.mubr.bf16.mxu0 0
  %3372 = vmatmul.mubr.bf16.gmra.mrb[0].mxu0 %v3161
  %v3373 = vpop.f32.mrb[0].mxu0
  %v3374 = vadd.f32 0.0, %v3373
  %v3375 = vpop.f32.mrb[0].mxu0
  %v3376 = vpop.f32.mrb[0].mxu0
  %v3377 = vadd.f32 0.0, %v3376
  %v3378 = vpop.f32.mrb[0].mxu0
  %3379 = vmatprep.mubr.bf16.mxu0 0
  %3380 = vmatmul.mubr.bf16.gmra.mrb[0].mxu0 %v3162
  %v3381 = vpop.f32.mrb[0].mxu0
  %v3382 = vadd.f32 0.0, %v3381
  %v3383 = vpop.f32.mrb[0].mxu0
  %v3384 = vpop.f32.mrb[0].mxu0
  %v3385 = vadd.f32 0.0, %v3384
  %v3386 = vpop.f32.mrb[0].mxu0
  %3387 = vmatprep.mubr.bf16.mxu0 0
  %3388 = vmatmul.mubr.bf16.gmra.mrb[0].mxu0 %v3163
  %v3389 = vpop.f32.mrb[0].mxu0
  %v3390 = vadd.f32 0.0, %v3389
  %v3391 = vpop.f32.mrb[0].mxu0
  %v3392 = vpop.f32.mrb[0].mxu0
  %v3393 = vadd.f32 0.0, %v3392
  %v3394 = vpop.f32.mrb[0].mxu0
  %3395 = vmatprep.mubr.bf16.mxu0 0
  %3396 = vmatmul.mubr.bf16.gmra.mrb[0].mxu0 %v3164
  %v3397 = vpop.f32.mrb[0].mxu0
  %v3398 = vadd.f32 0.0, %v3397
  %v3399 = vpop.f32.mrb[0].mxu0
  %v3400 = vpop.f32.mrb[0].mxu0
  %v3401 = vadd.f32 0.0, %v3400
  %v3402 = vpop.f32.mrb[0].mxu0
  %3403 = vmatprep.mubr.bf16.mxu0 0
  %3404 = vmatmul.mubr.bf16.gmra.mrb[0].mxu0 %v3165
  %v3405 = vpop.f32.mrb[0].mxu0
  %v3406 = vadd.f32 0.0, %v3405
  %v3407 = vpop.f32.mrb[0].mxu0
  %v3408 = vpop.f32.mrb[0].mxu0
  %v3409 = vadd.f32 0.0, %v3408
  %v3410 = vpop.f32.mrb[0].mxu0
  %3411 = vmatprep.mubr.bf16.mxu0 0
  %3412 = vmatmul.mubr.bf16.gmra.mrb[0].mxu0 %v3166
  %v3413 = vpop.f32.mrb[0].mxu0
  %v3414 = vadd.f32 0.0, %v3413
  %v3415 = vpop.f32.mrb[0].mxu0
  %v3416 = vpop.f32.mrb[0].mxu0
  %v3417 = vadd.f32 0.0, %v3416
  %v3418 = vpop.f32.mrb[0].mxu0
  %3419 = vmatprep.mubr.bf16.mxu0 0
  %3420 = vmatmul.mubr.bf16.gmra.mrb[0].mxu0 %v3167
  %v3421 = vpop.f32.mrb[0].mxu0
  %v3422 = vadd.f32 0.0, %v3421
  %v3423 = vpop.f32.mrb[0].mxu0
  %v3424 = vpop.f32.mrb[0].mxu0
  %v3425 = vadd.f32 0.0, %v3424
  %v3426 = vpop.f32.mrb[0].mxu0
  %3427 = vmatprep.mubr.bf16.mxu0 0
  %3428 = vmatmul.mubr.bf16.gmra.mrb[0].mxu0 %v3168
  %v3429 = vpop.f32.mrb[0].mxu0
  %v3430 = vadd.f32 0.0, %v3429
  %v3431 = vpop.f32.mrb[0].mxu0
  %v3432 = vpop.f32.mrb[0].mxu0
  %v3433 = vadd.f32 0.0, %v3432
  %v3434 = vpop.f32.mrb[0].mxu0
  %3435 = vmatprep.mubr.bf16.mxu0 0
  %3436 = vmatmul.mubr.bf16.gmra.mrb[0].mxu0 %v3169
  %v3437 = vpop.f32.mrb[0].mxu0
  %v3438 = vadd.f32 0.0, %v3437
  %v3439 = vpop.f32.mrb[0].mxu0
  %v3440 = vpop.f32.mrb[0].mxu0
  %v3441 = vadd.f32 0.0, %v3440
  %v3442 = vpop.f32.mrb[0].mxu0
  %3443 = vmatprep.mubr.bf16.mxu0 0
  %3444 = vmatmul.mubr.bf16.gmra.mrb[0].mxu0 %v3170
  %v3445 = vpop.f32.mrb[0].mxu0
  %v3446 = vadd.f32 0.0, %v3445
  %v3447 = vpop.f32.mrb[0].mxu0
  %v3448 = vpop.f32.mrb[0].mxu0
  %v3449 = vadd.f32 0.0, %v3448
  %v3450 = vpop.f32.mrb[0].mxu0
  %3451 = vmatprep.mubr.bf16.mxu0 0
  %3452 = vmatmul.mubr.bf16.gmra.mrb[0].mxu0 %v3171
  %v3453 = vpop.f32.mrb[0].mxu0
  %v3454 = vadd.f32 0.0, %v3453
  %v3455 = vpop.f32.mrb[0].mxu0
  %v3456 = vpop.f32.mrb[0].mxu0
  %v3457 = vadd.f32 0.0, %v3456
  %v3458 = vpop.f32.mrb[0].mxu0
  %3459 = vmatprep.mubr.bf16.mxu0 0
  %3460 = vmatmul.mubr.bf16.gmra.mrb[0].mxu0 %v3172
  %v3461 = vpop.f32.mrb[0].mxu0
  %v3462 = vadd.f32 0.0, %v3461
  %v3463 = vpop.f32.mrb[0].mxu0
  %v3464 = vpop.f32.mrb[0].mxu0
  %v3465 = vadd.f32 0.0, %v3464
  %v3466 = vpop.f32.mrb[0].mxu0
  %3467 = vmatprep.mubr.bf16.mxu0 0
  %3468 = vmatmul.mubr.bf16.gmra.mrb[0].mxu0 %v3173
  %v3469 = vpop.f32.mrb[0].mxu0
  %v3470 = vadd.f32 0.0, %v3469
  %v3471 = vpop.f32.mrb[0].mxu0
  %v3472 = vpop.f32.mrb[0].mxu0
  %v3473 = vadd.f32 0.0, %v3472
  %v3474 = vpop.f32.mrb[0].mxu0
  %3475 = vmatprep.mubr.bf16.mxu0 0
  %3476 = vmatmul.mubr.bf16.gmra.mrb[0].mxu0 %v3174
  %v3477 = vpop.f32.mrb[0].mxu0
  %v3478 = vadd.f32 0.0, %v3477
  %v3479 = vpop.f32.mrb[0].mxu0
  %v3480 = vpop.f32.mrb[0].mxu0
  %v3481 = vadd.f32 0.0, %v3480
  %v3482 = vpop.f32.mrb[0].mxu0
  %3483 = vmatprep.mubr.bf16.mxu0 0
  %3484 = vmatmul.mubr.bf16.gmra.mrb[0].mxu0 %v3175
  %v3485 = vpop.f32.mrb[0].mxu0
  %v3486 = vadd.f32 0.0, %v3485
  %v3487 = vpop.f32.mrb[0].mxu0
  %v3488 = vpop.f32.mrb[0].mxu0
  %v3489 = vadd.f32 0.0, %v3488
  %v3490 = vpop.f32.mrb[0].mxu0
  %3491 = vmatprep.mubr.bf16.mxu0 0
  %3492 = vmatmul.mubr.bf16.gmra.mrb[0].mxu0 %v3176
  %v3493 = vpop.f32.mrb[0].mxu0
  %v3494 = vadd.f32 0.0, %v3493
  %v3495 = vpop.f32.mrb[0].mxu0
  %v3496 = vpop.f32.mrb[0].mxu0
  %v3497 = vadd.f32 0.0, %v3496
  %v3498 = vpop.f32.mrb[0].mxu0
  %3499 = vmatprep.mubr.bf16.mxu0 0
  %3500 = vmatmul.mubr.bf16.gmra.mrb[0].mxu0 %v3177
  %v3501 = vpop.f32.mrb[0].mxu0
  %v3502 = vadd.f32 0.0, %v3501
  %v3503 = vpop.f32.mrb[0].mxu0
  %v3504 = vpop.f32.mrb[0].mxu0
  %v3505 = vadd.f32 0.0, %v3504
  %v3506 = vpop.f32.mrb[0].mxu0
  %3507 = vmatprep.mubr.bf16.mxu0 0
  %3508 = vmatmul.mubr.bf16.gmra.mrb[0].mxu0 %v3178
  %v3509 = vpop.f32.mrb[0].mxu0
  %v3510 = vadd.f32 0.0, %v3509
  %v3511 = vpop.f32.mrb[0].mxu0
  %v3512 = vpop.f32.mrb[0].mxu0
  %v3513 = vadd.f32 0.0, %v3512
  %v3514 = vpop.f32.mrb[0].mxu0
  %3515 = vdwg.mxu0
  %vm3516 = vcmp.gt.f32.partialorder %v76, 0.0
  %vm3517 = vcmp.gt.f32.partialorder %v77, 0.0
  %vm3518 = vcmp.gt.f32.partialorder %v78, 0.0
  %vm3519 = vcmp.gt.f32.partialorder %v79, 0.0
  %vm3520 = vcmp.gt.f32.partialorder %v80, 0.0
  %vm3521 = vcmp.gt.f32.partialorder %v81, 0.0
  %vm3522 = vcmp.gt.f32.partialorder %v82, 0.0
  %vm3523 = vcmp.gt.f32.partialorder %v83, 0.0
  %vm3524 = vcmp.gt.f32.partialorder %v84, 0.0
  %vm3525 = vcmp.gt.f32.partialorder %v85, 0.0
  %vm3526 = vcmp.gt.f32.partialorder %v86, 0.0
  %vm3527 = vcmp.gt.f32.partialorder %v87, 0.0
  %vm3528 = vcmp.gt.f32.partialorder %v88, 0.0
  %vm3529 = vcmp.gt.f32.partialorder %v89, 0.0
  %vm3530 = vcmp.gt.f32.partialorder %v90, 0.0
  %vm3531 = vcmp.gt.f32.partialorder %v91, 0.0
  %vm3532 = vcmp.gt.f32.partialorder %v92, 0.0
  %vm3533 = vcmp.gt.f32.partialorder %v93, 0.0
  %vm3534 = vcmp.gt.f32.partialorder %v94, 0.0
  %vm3535 = vcmp.gt.f32.partialorder %v95, 0.0
  %vm3536 = vcmp.gt.f32.partialorder %v96, 0.0
  %vm3537 = vcmp.gt.f32.partialorder %v97, 0.0
  %vm3538 = vcmp.gt.f32.partialorder %v98, 0.0
  %vm3539 = vcmp.gt.f32.partialorder %v99, 0.0
  %vm3540 = vcmp.gt.f32.partialorder %v100, 0.0
  %vm3541 = vcmp.gt.f32.partialorder %v101, 0.0
  %vm3542 = vcmp.gt.f32.partialorder %v102, 0.0
  %vm3543 = vcmp.gt.f32.partialorder %v103, 0.0
  %vm3544 = vcmp.gt.f32.partialorder %v104, 0.0
  %vm3545 = vcmp.gt.f32.partialorder %v105, 0.0
  %vm3546 = vcmp.gt.f32.partialorder %v106, 0.0
  %vm3547 = vcmp.gt.f32.partialorder %v107, 0.0
  %vm3548 = vcmp.gt.f32.partialorder %v108, 0.0
  %vm3549 = vcmp.gt.f32.partialorder %v109, 0.0
  %vm3550 = vcmp.gt.f32.partialorder %v110, 0.0
  %vm3551 = vcmp.gt.f32.partialorder %v111, 0.0
  %vm3552 = vcmp.gt.f32.partialorder %v112, 0.0
  %vm3553 = vcmp.gt.f32.partialorder %v113, 0.0
  %vm3554 = vcmp.gt.f32.partialorder %v114, 0.0
  %vm3555 = vcmp.gt.f32.partialorder %v115, 0.0
  %vm3556 = vcmp.gt.f32.partialorder %v116, 0.0
  %vm3557 = vcmp.gt.f32.partialorder %v117, 0.0
  %vm3558 = vcmp.gt.f32.partialorder %v118, 0.0
  %vm3559 = vcmp.gt.f32.partialorder %v119, 0.0
  %vm3560 = vcmp.gt.f32.partialorder %v120, 0.0
  %vm3561 = vcmp.gt.f32.partialorder %v121, 0.0
  %vm3562 = vcmp.gt.f32.partialorder %v122, 0.0
  %vm3563 = vcmp.gt.f32.partialorder %v123, 0.0
  %vm3564 = vcmp.gt.f32.partialorder %v124, 0.0
  %vm3565 = vcmp.gt.f32.partialorder %v125, 0.0
  %vm3566 = vcmp.gt.f32.partialorder %v126, 0.0
  %vm3567 = vcmp.gt.f32.partialorder %v127, 0.0
  %vm3568 = vcmp.gt.f32.partialorder %v128, 0.0
  %vm3569 = vcmp.gt.f32.partialorder %v129, 0.0
  %vm3570 = vcmp.gt.f32.partialorder %v130, 0.0
  %vm3571 = vcmp.gt.f32.partialorder %v131, 0.0
  %vm3572 = vcmp.gt.f32.partialorder %v132, 0.0
  %vm3573 = vcmp.gt.f32.partialorder %v133, 0.0
  %vm3574 = vcmp.gt.f32.partialorder %v134, 0.0
  %vm3575 = vcmp.gt.f32.partialorder %v135, 0.0
  %vm3576 = vcmp.gt.f32.partialorder %v136, 0.0
  %vm3577 = vcmp.gt.f32.partialorder %v137, 0.0
  %vm3578 = vcmp.gt.f32.partialorder %v138, 0.0
  %vm3579 = vcmp.gt.f32.partialorder %v139, 0.0
  %v3580 = vsel %vm3516, 1, 0
  %v3581 = vsel %vm3517, 1, 0
  %v3582 = vsel %vm3518, 1, 0
  %v3583 = vsel %vm3519, 1, 0
  %v3584 = vsel %vm3520, 1, 0
  %v3585 = vsel %vm3521, 1, 0
  %v3586 = vsel %vm3522, 1, 0
  %v3587 = vsel %vm3523, 1, 0
  %v3588 = vsel %vm3524, 1, 0
  %v3589 = vsel %vm3525, 1, 0
  %v3590 = vsel %vm3526, 1, 0
  %v3591 = vsel %vm3527, 1, 0
  %v3592 = vsel %vm3528, 1, 0
  %v3593 = vsel %vm3529, 1, 0
  %v3594 = vsel %vm3530, 1, 0
  %v3595 = vsel %vm3531, 1, 0
  %v3596 = vsel %vm3532, 1, 0
  %v3597 = vsel %vm3533, 1, 0
  %v3598 = vsel %vm3534, 1, 0
  %v3599 = vsel %vm3535, 1, 0
  %v3600 = vsel %vm3536, 1, 0
  %v3601 = vsel %vm3537, 1, 0
  %v3602 = vsel %vm3538, 1, 0
  %v3603 = vsel %vm3539, 1, 0
  %v3604 = vsel %vm3540, 1, 0
  %v3605 = vsel %vm3541, 1, 0
  %v3606 = vsel %vm3542, 1, 0
  %v3607 = vsel %vm3543, 1, 0
  %v3608 = vsel %vm3544, 1, 0
  %v3609 = vsel %vm3545, 1, 0
  %v3610 = vsel %vm3546, 1, 0
  %v3611 = vsel %vm3547, 1, 0
  %v3612 = vsel %vm3548, 1, 0
  %v3613 = vsel %vm3549, 1, 0
  %v3614 = vsel %vm3550, 1, 0
  %v3615 = vsel %vm3551, 1, 0
  %v3616 = vsel %vm3552, 1, 0
  %v3617 = vsel %vm3553, 1, 0
  %v3618 = vsel %vm3554, 1, 0
  %v3619 = vsel %vm3555, 1, 0
  %v3620 = vsel %vm3556, 1, 0
  %v3621 = vsel %vm3557, 1, 0
  %v3622 = vsel %vm3558, 1, 0
  %v3623 = vsel %vm3559, 1, 0
  %v3624 = vsel %vm3560, 1, 0
  %v3625 = vsel %vm3561, 1, 0
  %v3626 = vsel %vm3562, 1, 0
  %v3627 = vsel %vm3563, 1, 0
  %v3628 = vsel %vm3564, 1, 0
  %v3629 = vsel %vm3565, 1, 0
  %v3630 = vsel %vm3566, 1, 0
  %v3631 = vsel %vm3567, 1, 0
  %v3632 = vsel %vm3568, 1, 0
  %v3633 = vsel %vm3569, 1, 0
  %v3634 = vsel %vm3570, 1, 0
  %v3635 = vsel %vm3571, 1, 0
  %v3636 = vsel %vm3572, 1, 0
  %v3637 = vsel %vm3573, 1, 0
  %v3638 = vsel %vm3574, 1, 0
  %v3639 = vsel %vm3575, 1, 0
  %v3640 = vsel %vm3576, 1, 0
  %v3641 = vsel %vm3577, 1, 0
  %v3642 = vsel %vm3578, 1, 0
  %v3643 = vsel %vm3579, 1, 0
  %v3644 = vcvt.s32.f32 %v3580
  %v3645 = vcvt.s32.f32 %v3581
  %v3646 = vcvt.s32.f32 %v3582
  %v3647 = vcvt.s32.f32 %v3583
  %v3648 = vcvt.s32.f32 %v3584
  %v3649 = vcvt.s32.f32 %v3585
  %v3650 = vcvt.s32.f32 %v3586
  %v3651 = vcvt.s32.f32 %v3587
  %v3652 = vcvt.s32.f32 %v3588
  %v3653 = vcvt.s32.f32 %v3589
  %v3654 = vcvt.s32.f32 %v3590
  %v3655 = vcvt.s32.f32 %v3591
  %v3656 = vcvt.s32.f32 %v3592
  %v3657 = vcvt.s32.f32 %v3593
  %v3658 = vcvt.s32.f32 %v3594
  %v3659 = vcvt.s32.f32 %v3595
  %v3660 = vcvt.s32.f32 %v3596
  %v3661 = vcvt.s32.f32 %v3597
  %v3662 = vcvt.s32.f32 %v3598
  %v3663 = vcvt.s32.f32 %v3599
  %v3664 = vcvt.s32.f32 %v3600
  %v3665 = vcvt.s32.f32 %v3601
  %v3666 = vcvt.s32.f32 %v3602
  %v3667 = vcvt.s32.f32 %v3603
  %v3668 = vcvt.s32.f32 %v3604
  %v3669 = vcvt.s32.f32 %v3605
  %v3670 = vcvt.s32.f32 %v3606
  %v3671 = vcvt.s32.f32 %v3607
  %v3672 = vcvt.s32.f32 %v3608
  %v3673 = vcvt.s32.f32 %v3609
  %v3674 = vcvt.s32.f32 %v3610
  %v3675 = vcvt.s32.f32 %v3611
  %v3676 = vcvt.s32.f32 %v3612
  %v3677 = vcvt.s32.f32 %v3613
  %v3678 = vcvt.s32.f32 %v3614
  %v3679 = vcvt.s32.f32 %v3615
  %v3680 = vcvt.s32.f32 %v3616
  %v3681 = vcvt.s32.f32 %v3617
  %v3682 = vcvt.s32.f32 %v3618
  %v3683 = vcvt.s32.f32 %v3619
  %v3684 = vcvt.s32.f32 %v3620
  %v3685 = vcvt.s32.f32 %v3621
  %v3686 = vcvt.s32.f32 %v3622
  %v3687 = vcvt.s32.f32 %v3623
  %v3688 = vcvt.s32.f32 %v3624
  %v3689 = vcvt.s32.f32 %v3625
  %v3690 = vcvt.s32.f32 %v3626
  %v3691 = vcvt.s32.f32 %v3627
  %v3692 = vcvt.s32.f32 %v3628
  %v3693 = vcvt.s32.f32 %v3629
  %v3694 = vcvt.s32.f32 %v3630
  %v3695 = vcvt.s32.f32 %v3631
  %v3696 = vcvt.s32.f32 %v3632
  %v3697 = vcvt.s32.f32 %v3633
  %v3698 = vcvt.s32.f32 %v3634
  %v3699 = vcvt.s32.f32 %v3635
  %v3700 = vcvt.s32.f32 %v3636
  %v3701 = vcvt.s32.f32 %v3637
  %v3702 = vcvt.s32.f32 %v3638
  %v3703 = vcvt.s32.f32 %v3639
  %v3704 = vcvt.s32.f32 %v3640
  %v3705 = vcvt.s32.f32 %v3641
  %v3706 = vcvt.s32.f32 %v3642
  %v3707 = vcvt.s32.f32 %v3643
  %v3708 = vmul.f32 %v3644, 0.2
  %v3709 = vmul.f32 %v3645, 0.2
  %v3710 = vmul.f32 %v3646, 0.2
  %v3711 = vmul.f32 %v3647, 0.2
  %v3712 = vmul.f32 %v3648, 0.2
  %v3713 = vmul.f32 %v3649, 0.2
  %v3714 = vmul.f32 %v3650, 0.2
  %v3715 = vmul.f32 %v3651, 0.2
  %v3716 = vmul.f32 %v3652, 0.2
  %v3717 = vmul.f32 %v3653, 0.2
  %v3718 = vmul.f32 %v3654, 0.2
  %v3719 = vmul.f32 %v3655, 0.2
  %v3720 = vmul.f32 %v3656, 0.2
  %v3721 = vmul.f32 %v3657, 0.2
  %v3722 = vmul.f32 %v3658, 0.2
  %v3723 = vmul.f32 %v3659, 0.2
  %v3724 = vmul.f32 %v3660, 0.2
  %v3725 = vmul.f32 %v3661, 0.2
  %v3726 = vmul.f32 %v3662, 0.2
  %v3727 = vmul.f32 %v3663, 0.2
  %v3728 = vmul.f32 %v3664, 0.2
  %v3729 = vmul.f32 %v3665, 0.2
  %v3730 = vmul.f32 %v3666, 0.2
  %v3731 = vmul.f32 %v3667, 0.2
  %v3732 = vmul.f32 %v3668, 0.2
  %v3733 = vmul.f32 %v3669, 0.2
  %v3734 = vmul.f32 %v3670, 0.2
  %v3735 = vmul.f32 %v3671, 0.2
  %v3736 = vmul.f32 %v3672, 0.2
  %v3737 = vmul.f32 %v3673, 0.2
  %v3738 = vmul.f32 %v3674, 0.2
  %v3739 = vmul.f32 %v3675, 0.2
  %v3740 = vmul.f32 %v3676, 0.2
  %v3741 = vmul.f32 %v3677, 0.2
  %v3742 = vmul.f32 %v3678, 0.2
  %v3743 = vmul.f32 %v3679, 0.2
  %v3744 = vmul.f32 %v3680, 0.2
  %v3745 = vmul.f32 %v3681, 0.2
  %v3746 = vmul.f32 %v3682, 0.2
  %v3747 = vmul.f32 %v3683, 0.2
  %v3748 = vmul.f32 %v3684, 0.2
  %v3749 = vmul.f32 %v3685, 0.2
  %v3750 = vmul.f32 %v3686, 0.2
  %v3751 = vmul.f32 %v3687, 0.2
  %v3752 = vmul.f32 %v3688, 0.2
  %v3753 = vmul.f32 %v3689, 0.2
  %v3754 = vmul.f32 %v3690, 0.2
  %v3755 = vmul.f32 %v3691, 0.2
  %v3756 = vmul.f32 %v3692, 0.2
  %v3757 = vmul.f32 %v3693, 0.2
  %v3758 = vmul.f32 %v3694, 0.2
  %v3759 = vmul.f32 %v3695, 0.2
  %v3760 = vmul.f32 %v3696, 0.2
  %v3761 = vmul.f32 %v3697, 0.2
  %v3762 = vmul.f32 %v3698, 0.2
  %v3763 = vmul.f32 %v3699, 0.2
  %v3764 = vmul.f32 %v3700, 0.2
  %v3765 = vmul.f32 %v3701, 0.2
  %v3766 = vmul.f32 %v3702, 0.2
  %v3767 = vmul.f32 %v3703, 0.2
  %v3768 = vmul.f32 %v3704, 0.2
  %v3769 = vmul.f32 %v3705, 0.2
  %v3770 = vmul.f32 %v3706, 0.2
  %v3771 = vmul.f32 %v3707, 0.2
  %v3772 = vmul.f32 %v3262, %v3708
  %v3773 = vmul.f32 %v3265, %v3709
  %v3774 = vmul.f32 %v3270, %v3710
  %v3775 = vmul.f32 %v3273, %v3711
  %v3776 = vmul.f32 %v3278, %v3712
  %v3777 = vmul.f32 %v3281, %v3713
  %v3778 = vmul.f32 %v3286, %v3714
  %v3779 = vmul.f32 %v3289, %v3715
  %v3780 = vmul.f32 %v3294, %v3716
  %v3781 = vmul.f32 %v3297, %v3717
  %v3782 = vmul.f32 %v3302, %v3718
  %v3783 = vmul.f32 %v3305, %v3719
  %v3784 = vmul.f32 %v3310, %v3720
  %v3785 = vmul.f32 %v3313, %v3721
  %v3786 = vmul.f32 %v3318, %v3722
  %v3787 = vmul.f32 %v3321, %v3723
  %v3788 = vmul.f32 %v3326, %v3724
  %v3789 = vmul.f32 %v3329, %v3725
  %v3790 = vmul.f32 %v3334, %v3726
  %v3791 = vmul.f32 %v3337, %v3727
  %v3792 = vmul.f32 %v3342, %v3728
  %v3793 = vmul.f32 %v3345, %v3729
  %v3794 = vmul.f32 %v3350, %v3730
  %v3795 = vmul.f32 %v3353, %v3731
  %v3796 = vmul.f32 %v3358, %v3732
  %v3797 = vmul.f32 %v3361, %v3733
  %v3798 = vmul.f32 %v3366, %v3734
  %v3799 = vmul.f32 %v3369, %v3735
  %v3800 = vmul.f32 %v3374, %v3736
  %v3801 = vmul.f32 %v3377, %v3737
  %v3802 = vmul.f32 %v3382, %v3738
  %v3803 = vmul.f32 %v3385, %v3739
  %v3804 = vmul.f32 %v3390, %v3740
  %v3805 = vmul.f32 %v3393, %v3741
  %v3806 = vmul.f32 %v3398, %v3742
  %v3807 = vmul.f32 %v3401, %v3743
  %v3808 = vmul.f32 %v3406, %v3744
  %v3809 = vmul.f32 %v3409, %v3745
  %v3810 = vmul.f32 %v3414, %v3746
  %v3811 = vmul.f32 %v3417, %v3747
  %v3812 = vmul.f32 %v3422, %v3748
  %v3813 = vmul.f32 %v3425, %v3749
  %v3814 = vmul.f32 %v3430, %v3750
  %v3815 = vmul.f32 %v3433, %v3751
  %v3816 = vmul.f32 %v3438, %v3752
  %v3817 = vmul.f32 %v3441, %v3753
  %v3818 = vmul.f32 %v3446, %v3754
  %v3819 = vmul.f32 %v3449, %v3755
  %v3820 = vmul.f32 %v3454, %v3756
  %v3821 = vmul.f32 %v3457, %v3757
  %v3822 = vmul.f32 %v3462, %v3758
  %v3823 = vmul.f32 %v3465, %v3759
  %v3824 = vmul.f32 %v3470, %v3760
  %v3825 = vmul.f32 %v3473, %v3761
  %v3826 = vmul.f32 %v3478, %v3762
  %v3827 = vmul.f32 %v3481, %v3763
  %v3828 = vmul.f32 %v3486, %v3764
  %v3829 = vmul.f32 %v3489, %v3765
  %v3830 = vmul.f32 %v3494, %v3766
  %v3831 = vmul.f32 %v3497, %v3767
  %v3832 = vmul.f32 %v3502, %v3768
  %v3833 = vmul.f32 %v3505, %v3769
  %v3834 = vmul.f32 %v3510, %v3770
  %v3835 = vmul.f32 %v3513, %v3771
  %v3836 = vadd.f32 %v76, %v3772
  %v3837 = vadd.f32 %v77, %v3773
  %v3838 = vadd.f32 %v78, %v3774
  %v3839 = vadd.f32 %v79, %v3775
  %v3840 = vadd.f32 %v80, %v3776
  %v3841 = vadd.f32 %v81, %v3777
  %v3842 = vadd.f32 %v82, %v3778
  %v3843 = vadd.f32 %v83, %v3779
  %v3844 = vadd.f32 %v84, %v3780
  %v3845 = vadd.f32 %v85, %v3781
  %v3846 = vadd.f32 %v86, %v3782
  %v3847 = vadd.f32 %v87, %v3783
  %v3848 = vadd.f32 %v88, %v3784
  %v3849 = vadd.f32 %v89, %v3785
  %v3850 = vadd.f32 %v90, %v3786
  %v3851 = vadd.f32 %v91, %v3787
  %v3852 = vadd.f32 %v92, %v3788
  %v3853 = vadd.f32 %v93, %v3789
  %v3854 = vadd.f32 %v94, %v3790
  %v3855 = vadd.f32 %v95, %v3791
  %v3856 = vadd.f32 %v96, %v3792
  %v3857 = vadd.f32 %v97, %v3793
  %v3858 = vadd.f32 %v98, %v3794
  %v3859 = vadd.f32 %v99, %v3795
  %v3860 = vadd.f32 %v100, %v3796
  %v3861 = vadd.f32 %v101, %v3797
  %v3862 = vadd.f32 %v102, %v3798
  %v3863 = vadd.f32 %v103, %v3799
  %v3864 = vadd.f32 %v104, %v3800
  %v3865 = vadd.f32 %v105, %v3801
  %v3866 = vadd.f32 %v106, %v3802
  %v3867 = vadd.f32 %v107, %v3803
  %v3868 = vadd.f32 %v108, %v3804
  %v3869 = vadd.f32 %v109, %v3805
  %v3870 = vadd.f32 %v110, %v3806
  %v3871 = vadd.f32 %v111, %v3807
  %v3872 = vadd.f32 %v112, %v3808
  %v3873 = vadd.f32 %v113, %v3809
  %v3874 = vadd.f32 %v114, %v3810
  %v3875 = vadd.f32 %v115, %v3811
  %v3876 = vadd.f32 %v116, %v3812
  %v3877 = vadd.f32 %v117, %v3813
  %v3878 = vadd.f32 %v118, %v3814
  %v3879 = vadd.f32 %v119, %v3815
  %v3880 = vadd.f32 %v120, %v3816
  %v3881 = vadd.f32 %v121, %v3817
  %v3882 = vadd.f32 %v122, %v3818
  %v3883 = vadd.f32 %v123, %v3819
  %v3884 = vadd.f32 %v124, %v3820
  %v3885 = vadd.f32 %v125, %v3821
  %v3886 = vadd.f32 %v126, %v3822
  %v3887 = vadd.f32 %v127, %v3823
  %v3888 = vadd.f32 %v128, %v3824
  %v3889 = vadd.f32 %v129, %v3825
  %v3890 = vadd.f32 %v130, %v3826
  %v3891 = vadd.f32 %v131, %v3827
  %v3892 = vadd.f32 %v132, %v3828
  %v3893 = vadd.f32 %v133, %v3829
  %v3894 = vadd.f32 %v134, %v3830
  %v3895 = vadd.f32 %v135, %v3831
  %v3896 = vadd.f32 %v136, %v3832
  %v3897 = vadd.f32 %v137, %v3833
  %v3898 = vadd.f32 %v138, %v3834
  %v3899 = vadd.f32 %v139, %v3835
  %v3900 = vpack.c.bf16 %v3837, %v3836
  %v3901 = vpack.c.bf16 %v3839, %v3838
  %v3902 = vpack.c.bf16 %v3841, %v3840
  %v3903 = vpack.c.bf16 %v3843, %v3842
  %v3904 = vpack.c.bf16 %v3845, %v3844
  %v3905 = vpack.c.bf16 %v3847, %v3846
  %v3906 = vpack.c.bf16 %v3849, %v3848
  %v3907 = vpack.c.bf16 %v3851, %v3850
  %v3908 = vpack.c.bf16 %v3853, %v3852
  %v3909 = vpack.c.bf16 %v3855, %v3854
  %v3910 = vpack.c.bf16 %v3857, %v3856
  %v3911 = vpack.c.bf16 %v3859, %v3858
  %v3912 = vpack.c.bf16 %v3861, %v3860
  %v3913 = vpack.c.bf16 %v3863, %v3862
  %v3914 = vpack.c.bf16 %v3865, %v3864
  %v3915 = vpack.c.bf16 %v3867, %v3866
  %v3916 = vpack.c.bf16 %v3869, %v3868
  %v3917 = vpack.c.bf16 %v3871, %v3870
  %v3918 = vpack.c.bf16 %v3873, %v3872
  %v3919 = vpack.c.bf16 %v3875, %v3874
  %v3920 = vpack.c.bf16 %v3877, %v3876
  %v3921 = vpack.c.bf16 %v3879, %v3878
  %v3922 = vpack.c.bf16 %v3881, %v3880
  %v3923 = vpack.c.bf16 %v3883, %v3882
  %v3924 = vpack.c.bf16 %v3885, %v3884
  %v3925 = vpack.c.bf16 %v3887, %v3886
  %v3926 = vpack.c.bf16 %v3889, %v3888
  %v3927 = vpack.c.bf16 %v3891, %v3890
  %v3928 = vpack.c.bf16 %v3893, %v3892
  %v3929 = vpack.c.bf16 %v3895, %v3894
  %v3930 = vpack.c.bf16 %v3897, %v3896
  %v3931 = vpack.c.bf16 %v3899, %v3898
  %3932 = vmatprep.subr.bf16.mxu0 0
  %3933 = vmatpush1.bf16.msra.mxu0 %v385
  %3934 = vmatprep.subr.bf16.mxu0 0
  %3935 = vmatpush1.bf16.msra.mxu0 %v386
  %3936 = vmatprep.subr.bf16.mxu0 0
  %3937 = vmatpush1.bf16.msra.mxu0 0
  %3938 = vmatprep.subr.bf16.mxu0 0
  %3939 = vmatpush1.bf16.msra.mxu0 0
  %3940 = vmatprep.subr.bf16.mxu0 0
  %3941 = vmatpush1.bf16.msra.mxu0 0
  %3942 = vmatprep.subr.bf16.mxu0 0
  %3943 = vmatpush1.bf16.msra.mxu0 0
  %3944 = vmatprep.subr.bf16.mxu0 0
  %3945 = vmatpush1.bf16.msra.mxu0 0
  %3946 = vmatprep.subr.bf16.mxu0 0
  %3947 = vmatpush1.bf16.msra.mxu0 0
  %3948 = vmatprep.subr.bf16.mxu0 0
  %3949 = vmatpush1.bf16.msra.mxu0 0
  %3950 = vmatprep.subr.bf16.mxu0 0
  %3951 = vmatpush1.bf16.msra.mxu0 0
  %3952 = vmatprep.subr.bf16.mxu0 0
  %3953 = vmatpush1.bf16.msra.mxu0 0
  %3954 = vmatprep.subr.bf16.mxu0 0
  %3955 = vmatpush1.bf16.msra.mxu0 0
  %3956 = vmatprep.subr.bf16.mxu0 0
  %3957 = vmatpush1.bf16.msra.mxu0 0
  %3958 = vmatprep.subr.bf16.mxu0 0
  %3959 = vmatpush1.bf16.msra.mxu0 0
  %3960 = vmatprep.subr.bf16.mxu0 0
  %3961 = vmatpush1.bf16.msra.mxu0 0
  %3962 = vmatprep.subr.bf16.mxu0 0
  %3963 = vmatpush1.bf16.msra.mxu0 0
  %3964 = vmatprep.mubr.bf16.mxu0 0
  %3965 = vmatmul.mubr.bf16.gmra.mrb[0].mxu0 %v1564
  %v3966 = vpop.f32.mrb[0].mxu0
  %v3967 = vadd.f32 %v375, %v3966
  %v3968 = vpop.f32.mrb[0].mxu0
  %v3969 = vpop.f32.mrb[0].mxu0
  %v3970 = vadd.f32 %v375, %v3969
  %v3971 = vpop.f32.mrb[0].mxu0
  %3972 = vmatprep.mubr.bf16.mxu0 0
  %3973 = vmatmul.mubr.bf16.gmra.mrb[0].mxu0 %v1567
  %v3974 = vpop.f32.mrb[0].mxu0
  %v3975 = vadd.f32 %v375, %v3974
  %v3976 = vpop.f32.mrb[0].mxu0
  %v3977 = vpop.f32.mrb[0].mxu0
  %v3978 = vadd.f32 %v375, %v3977
  %v3979 = vpop.f32.mrb[0].mxu0
  %3980 = vmatprep.mubr.bf16.mxu0 0
  %3981 = vmatmul.mubr.bf16.gmra.mrb[0].mxu0 %v1570
  %v3982 = vpop.f32.mrb[0].mxu0
  %v3983 = vadd.f32 %v375, %v3982
  %v3984 = vpop.f32.mrb[0].mxu0
  %v3985 = vpop.f32.mrb[0].mxu0
  %v3986 = vadd.f32 %v375, %v3985
  %v3987 = vpop.f32.mrb[0].mxu0
  %3988 = vmatprep.mubr.bf16.mxu0 0
  %3989 = vmatmul.mubr.bf16.gmra.mrb[0].mxu0 %v1573
  %v3990 = vpop.f32.mrb[0].mxu0
  %v3991 = vadd.f32 %v375, %v3990
  %v3992 = vpop.f32.mrb[0].mxu0
  %v3993 = vpop.f32.mrb[0].mxu0
  %v3994 = vadd.f32 %v375, %v3993
  %v3995 = vpop.f32.mrb[0].mxu0
  %3996 = vdwg.mxu0
  %v3997 = vmul.f32 %v3967, %v3836
  %v3998 = vmul.f32 %v3967, %v3837
  %v3999 = vmul.f32 %v3967, %v3838
  %v4000 = vmul.f32 %v3967, %v3839
  %v4001 = vmul.f32 %v3967, %v3840
  %v4002 = vmul.f32 %v3967, %v3841
  %v4003 = vmul.f32 %v3967, %v3842
  %v4004 = vmul.f32 %v3967, %v3843
  %v4005 = vmul.f32 %v3970, %v3844
  %v4006 = vmul.f32 %v3970, %v3845
  %v4007 = vmul.f32 %v3970, %v3846
  %v4008 = vmul.f32 %v3970, %v3847
  %v4009 = vmul.f32 %v3970, %v3848
  %v4010 = vmul.f32 %v3970, %v3849
  %v4011 = vmul.f32 %v3970, %v3850
  %v4012 = vmul.f32 %v3970, %v3851
  %v4013 = vmul.f32 %v3975, %v3852
  %v4014 = vmul.f32 %v3975, %v3853
  %v4015 = vmul.f32 %v3975, %v3854
  %v4016 = vmul.f32 %v3975, %v3855
  %v4017 = vmul.f32 %v3975, %v3856
  %v4018 = vmul.f32 %v3975, %v3857
  %v4019 = vmul.f32 %v3975, %v3858
  %v4020 = vmul.f32 %v3975, %v3859
  %v4021 = vmul.f32 %v3978, %v3860
  %v4022 = vmul.f32 %v3978, %v3861
  %v4023 = vmul.f32 %v3978, %v3862
  %v4024 = vmul.f32 %v3978, %v3863
  %v4025 = vmul.f32 %v3978, %v3864
  %v4026 = vmul.f32 %v3978, %v3865
  %v4027 = vmul.f32 %v3978, %v3866
  %v4028 = vmul.f32 %v3978, %v3867
  %v4029 = vmul.f32 %v3983, %v3868
  %v4030 = vmul.f32 %v3983, %v3869
  %v4031 = vmul.f32 %v3983, %v3870
  %v4032 = vmul.f32 %v3983, %v3871
  %v4033 = vmul.f32 %v3983, %v3872
  %v4034 = vmul.f32 %v3983, %v3873
  %v4035 = vmul.f32 %v3983, %v3874
  %v4036 = vmul.f32 %v3983, %v3875
  %v4037 = vmul.f32 %v3986, %v3876
  %v4038 = vmul.f32 %v3986, %v3877
  %v4039 = vmul.f32 %v3986, %v3878
  %v4040 = vmul.f32 %v3986, %v3879
  %v4041 = vmul.f32 %v3986, %v3880
  %v4042 = vmul.f32 %v3986, %v3881
  %v4043 = vmul.f32 %v3986, %v3882
  %v4044 = vmul.f32 %v3986, %v3883
  %v4045 = vmul.f32 %v3991, %v3884
  %v4046 = vmul.f32 %v3991, %v3885
  %v4047 = vmul.f32 %v3991, %v3886
  %v4048 = vmul.f32 %v3991, %v3887
  %v4049 = vmul.f32 %v3991, %v3888
  %v4050 = vmul.f32 %v3991, %v3889
  %v4051 = vmul.f32 %v3991, %v3890
  %v4052 = vmul.f32 %v3991, %v3891
  %v4053 = vmul.f32 %v3994, %v3892
  %v4054 = vmul.f32 %v3994, %v3893
  %v4055 = vmul.f32 %v3994, %v3894
  %v4056 = vmul.f32 %v3994, %v3895
  %v4057 = vmul.f32 %v3994, %v3896
  %v4058 = vmul.f32 %v3994, %v3897
  %v4059 = vmul.f32 %v3994, %v3898
  %v4060 = vmul.f32 %v3994, %v3899
  %v4061 = vpack.c.bf16 %v3998, %v3997
  %v4062 = vpack.c.bf16 %v4000, %v3999
  %v4063 = vpack.c.bf16 %v4002, %v4001
  %v4064 = vpack.c.bf16 %v4004, %v4003
  %v4065 = vpack.c.bf16 %v4006, %v4005
  %v4066 = vpack.c.bf16 %v4008, %v4007
  %v4067 = vpack.c.bf16 %v4010, %v4009
  %v4068 = vpack.c.bf16 %v4012, %v4011
  %v4069 = vpack.c.bf16 %v4014, %v4013
  %v4070 = vpack.c.bf16 %v4016, %v4015
  %v4071 = vpack.c.bf16 %v4018, %v4017
  %v4072 = vpack.c.bf16 %v4020, %v4019
  %v4073 = vpack.c.bf16 %v4022, %v4021
  %v4074 = vpack.c.bf16 %v4024, %v4023
  %v4075 = vpack.c.bf16 %v4026, %v4025
  %v4076 = vpack.c.bf16 %v4028, %v4027
  %v4077 = vpack.c.bf16 %v4030, %v4029
  %v4078 = vpack.c.bf16 %v4032, %v4031
  %v4079 = vpack.c.bf16 %v4034, %v4033
  %v4080 = vpack.c.bf16 %v4036, %v4035
  %v4081 = vpack.c.bf16 %v4038, %v4037
  %v4082 = vpack.c.bf16 %v4040, %v4039
  %v4083 = vpack.c.bf16 %v4042, %v4041
  %v4084 = vpack.c.bf16 %v4044, %v4043
  %v4085 = vpack.c.bf16 %v4046, %v4045
  %v4086 = vpack.c.bf16 %v4048, %v4047
  %v4087 = vpack.c.bf16 %v4050, %v4049
  %v4088 = vpack.c.bf16 %v4052, %v4051
  %v4089 = vpack.c.bf16 %v4054, %v4053
  %v4090 = vpack.c.bf16 %v4056, %v4055
  %v4091 = vpack.c.bf16 %v4058, %v4057
  %v4092 = vpack.c.bf16 %v4060, %v4059
  %4093 = vmatprep.subr.bf16.mxu0 0
  %4094 = vmatpush1.bf16.msra.mxu0 %v4061
  %4095 = vmatprep.subr.bf16.mxu0 0
  %4096 = vmatpush1.bf16.msra.mxu0 %v4062
  %4097 = vmatprep.subr.bf16.mxu0 0
  %4098 = vmatpush1.bf16.msra.mxu0 %v4063
  %4099 = vmatprep.subr.bf16.mxu0 0
  %4100 = vmatpush1.bf16.msra.mxu0 %v4064
  %4101 = vmatprep.subr.bf16.mxu0 0
  %4102 = vmatpush1.bf16.msra.mxu0 %v4065
  %4103 = vmatprep.subr.bf16.mxu0 0
  %4104 = vmatpush1.bf16.msra.mxu0 %v4066
  %4105 = vmatprep.subr.bf16.mxu0 0
  %4106 = vmatpush1.bf16.msra.mxu0 %v4067
  %4107 = vmatprep.subr.bf16.mxu0 0
  %4108 = vmatpush1.bf16.msra.mxu0 %v4068
  %4109 = vmatprep.subr.bf16.mxu0 0
  %4110 = vmatpush1.bf16.msra.mxu0 %v4069
  %4111 = vmatprep.subr.bf16.mxu0 0
  %4112 = vmatpush1.bf16.msra.mxu0 %v4070
  %4113 = vmatprep.subr.bf16.mxu0 0
  %4114 = vmatpush1.bf16.msra.mxu0 %v4071
  %4115 = vmatprep.subr.bf16.mxu0 0
  %4116 = vmatpush1.bf16.msra.mxu0 %v4072
  %4117 = vmatprep.subr.bf16.mxu0 0
  %4118 = vmatpush1.bf16.msra.mxu0 %v4073
  %4119 = vmatprep.subr.bf16.mxu0 0
  %4120 = vmatpush1.bf16.msra.mxu0 %v4074
  %4121 = vmatprep.subr.bf16.mxu0 0
  %4122 = vmatpush1.bf16.msra.mxu0 %v4075
  %4123 = vmatprep.subr.bf16.mxu0 0
  %4124 = vmatpush1.bf16.msra.mxu0 %v4076
  %4125 = vmatprep.mubr.bf16.mxu0 %v612
  %4126 = vmatmul.mubr.bf16.gmra.mrb[0].mxu0 %v611
  %v4127 = vpop.f32.mrb[0].mxu0
  %v4128 = vadd.f32 0.0, %v4127
  %v4129 = vpop.f32.mrb[0].mxu0
  %v4130 = vpop.f32.mrb[0].mxu0
  %v4131 = vadd.f32 0.0, %v4130
  %v4132 = vpop.f32.mrb[0].mxu0
  %4133 = vmatprep.mubr.bf16.mxu0 %v616
  %4134 = vmatmul.mubr.bf16.gmra.mrb[0].mxu0 %v615
  %v4135 = vpop.f32.mrb[0].mxu0
  %v4136 = vadd.f32 0.0, %v4135
  %v4137 = vpop.f32.mrb[0].mxu0
  %v4138 = vpop.f32.mrb[0].mxu0
  %v4139 = vadd.f32 0.0, %v4138
  %v4140 = vpop.f32.mrb[0].mxu0
  %4141 = vmatprep.mubr.bf16.mxu0 %v620
  %4142 = vmatmul.mubr.bf16.gmra.mrb[0].mxu0 %v619
  %v4143 = vpop.f32.mrb[0].mxu0
  %v4144 = vadd.f32 0.0, %v4143
  %v4145 = vpop.f32.mrb[0].mxu0
  %v4146 = vpop.f32.mrb[0].mxu0
  %v4147 = vadd.f32 0.0, %v4146
  %v4148 = vpop.f32.mrb[0].mxu0
  %4149 = vmatprep.mubr.bf16.mxu0 %v624
  %4150 = vmatmul.mubr.bf16.gmra.mrb[0].mxu0 %v623
  %v4151 = vpop.f32.mrb[0].mxu0
  %v4152 = vadd.f32 0.0, %v4151
  %v4153 = vpop.f32.mrb[0].mxu0
  %v4154 = vpop.f32.mrb[0].mxu0
  %v4155 = vadd.f32 0.0, %v4154
  %v4156 = vpop.f32.mrb[0].mxu0
  %4157 = vdwg.mxu0
  %4158 = vmatprep.subr.bf16.mxu0 0
  %4159 = vmatpush1.bf16.msra.mxu0 %v4077
  %4160 = vmatprep.subr.bf16.mxu0 0
  %4161 = vmatpush1.bf16.msra.mxu0 %v4078
  %4162 = vmatprep.subr.bf16.mxu0 0
  %4163 = vmatpush1.bf16.msra.mxu0 %v4079
  %4164 = vmatprep.subr.bf16.mxu0 0
  %4165 = vmatpush1.bf16.msra.mxu0 %v4080
  %4166 = vmatprep.subr.bf16.mxu0 0
  %4167 = vmatpush1.bf16.msra.mxu0 %v4081
  %4168 = vmatprep.subr.bf16.mxu0 0
  %4169 = vmatpush1.bf16.msra.mxu0 %v4082
  %4170 = vmatprep.subr.bf16.mxu0 0
  %4171 = vmatpush1.bf16.msra.mxu0 %v4083
  %4172 = vmatprep.subr.bf16.mxu0 0
  %4173 = vmatpush1.bf16.msra.mxu0 %v4084
  %4174 = vmatprep.subr.bf16.mxu0 0
  %4175 = vmatpush1.bf16.msra.mxu0 %v4085
  %4176 = vmatprep.subr.bf16.mxu0 0
  %4177 = vmatpush1.bf16.msra.mxu0 %v4086
  %4178 = vmatprep.subr.bf16.mxu0 0
  %4179 = vmatpush1.bf16.msra.mxu0 %v4087
  %4180 = vmatprep.subr.bf16.mxu0 0
  %4181 = vmatpush1.bf16.msra.mxu0 %v4088
  %4182 = vmatprep.subr.bf16.mxu0 0
  %4183 = vmatpush1.bf16.msra.mxu0 %v4089
  %4184 = vmatprep.subr.bf16.mxu0 0
  %4185 = vmatpush1.bf16.msra.mxu0 %v4090
  %4186 = vmatprep.subr.bf16.mxu0 0
  %4187 = vmatpush1.bf16.msra.mxu0 %v4091
  %4188 = vmatprep.subr.bf16.mxu0 0
  %4189 = vmatpush1.bf16.msra.mxu0 %v4092
  %4190 = vmatprep.mubr.bf16.mxu0 %v614
  %4191 = vmatmul.mubr.bf16.gmra.mrb[0].mxu0 %v613
  %v4192 = vpop.f32.mrb[0].mxu0
  %v4193 = vadd.f32 %v4128, %v4192
  %v4194 = vpop.f32.mrb[0].mxu0
  %v4195 = vpop.f32.mrb[0].mxu0
  %v4196 = vadd.f32 %v4131, %v4195
  %v4197 = vpop.f32.mrb[0].mxu0
  %4198 = vmatprep.mubr.bf16.mxu0 %v618
  %4199 = vmatmul.mubr.bf16.gmra.mrb[0].mxu0 %v617
  %v4200 = vpop.f32.mrb[0].mxu0
  %v4201 = vadd.f32 %v4136, %v4200
  %v4202 = vpop.f32.mrb[0].mxu0
  %v4203 = vpop.f32.mrb[0].mxu0
  %v4204 = vadd.f32 %v4139, %v4203
  %v4205 = vpop.f32.mrb[0].mxu0
  %4206 = vmatprep.mubr.bf16.mxu0 %v622
  %4207 = vmatmul.mubr.bf16.gmra.mrb[0].mxu0 %v621
  %v4208 = vpop.f32.mrb[0].mxu0
  %v4209 = vadd.f32 %v4144, %v4208
  %v4210 = vpop.f32.mrb[0].mxu0
  %v4211 = vpop.f32.mrb[0].mxu0
  %v4212 = vadd.f32 %v4147, %v4211
  %v4213 = vpop.f32.mrb[0].mxu0
  %4214 = vmatprep.mubr.bf16.mxu0 %v626
  %4215 = vmatmul.mubr.bf16.gmra.mrb[0].mxu0 %v625
  %v4216 = vpop.f32.mrb[0].mxu0
  %v4217 = vadd.f32 %v4152, %v4216
  %v4218 = vpop.f32.mrb[0].mxu0
  %v4219 = vpop.f32.mrb[0].mxu0
  %v4220 = vadd.f32 %v4155, %v4219
  %v4221 = vpop.f32.mrb[0].mxu0
  %4222 = vdwg.mxu0
  %v4223 = vpack.c.bf16 %v4196, %v4193
  %v4224 = vpack.c.bf16 %v4204, %v4201
  %v4225 = vpack.c.bf16 %v4212, %v4209
  %v4226 = vpack.c.bf16 %v4220, %v4217
  %v4228 = vsel %vm777, %v4223, 0
  %v4231 = vsel %vm777, %v4224, 0
  %v4234 = vsel %vm777, %v4225, 0
  %v4237 = vsel %vm777, %v4226, 0
  %4239 = vmatprep.subr.bf16.mxu0 0
  %4240 = vmatpush1.bf16.msra.mxu0 %v792
  %4241 = vmatprep.subr.bf16.mxu0 0
  %4242 = vmatpush1.bf16.msra.mxu0 0
  %4243 = vmatprep.subr.bf16.mxu0 0
  %4244 = vmatpush1.bf16.msra.mxu0 0
  %4245 = vmatprep.subr.bf16.mxu0 0
  %4246 = vmatpush1.bf16.msra.mxu0 0
  %4247 = vmatprep.subr.bf16.mxu0 0
  %4248 = vmatpush1.bf16.msra.mxu0 0
  %4249 = vmatprep.subr.bf16.mxu0 0
  %4250 = vmatpush1.bf16.msra.mxu0 0
  %4251 = vmatprep.subr.bf16.mxu0 0
  %4252 = vmatpush1.bf16.msra.mxu0 0
  %4253 = vmatprep.subr.bf16.mxu0 0
  %4254 = vmatpush1.bf16.msra.mxu0 0
  %4255 = vmatprep.subr.bf16.mxu0 0
  %4256 = vmatpush1.bf16.msra.mxu0 0
  %4257 = vmatprep.subr.bf16.mxu0 0
  %4258 = vmatpush1.bf16.msra.mxu0 0
  %4259 = vmatprep.subr.bf16.mxu0 0
  %4260 = vmatpush1.bf16.msra.mxu0 0
  %4261 = vmatprep.subr.bf16.mxu0 0
  %4262 = vmatpush1.bf16.msra.mxu0 0
  %4263 = vmatprep.subr.bf16.mxu0 0
  %4264 = vmatpush1.bf16.msra.mxu0 0
  %4265 = vmatprep.subr.bf16.mxu0 0
  %4266 = vmatpush1.bf16.msra.mxu0 0
  %4267 = vmatprep.subr.bf16.mxu0 0
  %4268 = vmatpush1.bf16.msra.mxu0 0
  %4269 = vmatprep.subr.bf16.mxu0 0
  %4270 = vmatpush1.bf16.msra.mxu0 0
  %4271 = vmatprep.mubr.bf16.mxu0 0
  %4272 = vmatmul.mubr.bf16.gmra.mrb[0].mxu0 %v4228
  %v4273 = vpop.f32.mrb[0].mxu0
  %v4274 = vadd.f32 0.0, %v4273
  %v4275 = vpop.f32.mrb[0].mxu0
  %v4276 = vpop.f32.mrb[0].mxu0
  %v4277 = vadd.f32 0.0, %v4276
  %v4278 = vpop.f32.mrb[0].mxu0
  %4279 = vmatprep.mubr.bf16.mxu0 0
  %4280 = vmatmul.mubr.bf16.gmra.mrb[0].mxu0 %v4231
  %v4281 = vpop.f32.mrb[0].mxu0
  %v4282 = vadd.f32 0.0, %v4281
  %v4283 = vpop.f32.mrb[0].mxu0
  %v4284 = vpop.f32.mrb[0].mxu0
  %v4285 = vadd.f32 0.0, %v4284
  %v4286 = vpop.f32.mrb[0].mxu0
  %4287 = vmatprep.mubr.bf16.mxu0 0
  %4288 = vmatmul.mubr.bf16.gmra.mrb[0].mxu0 %v4234
  %v4289 = vpop.f32.mrb[0].mxu0
  %v4290 = vadd.f32 0.0, %v4289
  %v4291 = vpop.f32.mrb[0].mxu0
  %v4292 = vpop.f32.mrb[0].mxu0
  %v4293 = vadd.f32 0.0, %v4292
  %v4294 = vpop.f32.mrb[0].mxu0
  %4295 = vmatprep.mubr.bf16.mxu0 0
  %4296 = vmatmul.mubr.bf16.gmra.mrb[0].mxu0 %v4237
  %v4297 = vpop.f32.mrb[0].mxu0
  %v4298 = vadd.f32 0.0, %v4297
  %v4299 = vpop.f32.mrb[0].mxu0
  %v4300 = vpop.f32.mrb[0].mxu0
  %v4301 = vadd.f32 0.0, %v4300
  %v4302 = vpop.f32.mrb[0].mxu0
  %4303 = vdwg.mxu0
  %v4304 = vmax.f32 %v4274, 0.0
  %v4305 = vmax.f32 %v4277, 0.0
  %v4306 = vmax.f32 %v4282, 0.0
  %v4307 = vmax.f32 %v4285, 0.0
  %v4308 = vmax.f32 %v4290, 0.0
  %v4309 = vmax.f32 %v4293, 0.0
  %v4310 = vmax.f32 %v4298, 0.0
  %v4311 = vmax.f32 %v4301, 0.0
  %v4312 = vpack.c.bf16 %v4305, %v4304
  %v4313 = vpack.c.bf16 %v4307, %v4306
  %v4314 = vpack.c.bf16 %v4309, %v4308
  %v4315 = vpack.c.bf16 %v4311, %v4310
  %4316 = vmatprep.subr.bf16.mxu0 0
  %4317 = vmatpush1.bf16.msra.mxu0 %v903
  %4318 = vmatprep.subr.bf16.mxu0 0
  %4319 = vmatpush1.bf16.msra.mxu0 %v904
  %4320 = vmatprep.subr.bf16.mxu0 0
  %4321 = vmatpush1.bf16.msra.mxu0 %v905
  %4322 = vmatprep.subr.bf16.mxu0 0
  %4323 = vmatpush1.bf16.msra.mxu0 %v906
  %4324 = vmatprep.subr.bf16.mxu0 0
  %4325 = vmatpush1.bf16.msra.mxu0 %v907
  %4326 = vmatprep.subr.bf16.mxu0 0
  %4327 = vmatpush1.bf16.msra.mxu0 %v908
  %4328 = vmatprep.subr.bf16.mxu0 0
  %4329 = vmatpush1.bf16.msra.mxu0 %v909
  %4330 = vmatprep.subr.bf16.mxu0 0
  %4331 = vmatpush1.bf16.msra.mxu0 %v910
  %4332 = vmatprep.subr.bf16.mxu0 0
  %4333 = vmatpush1.bf16.msra.mxu0 0
  %4334 = vmatprep.subr.bf16.mxu0 0
  %4335 = vmatpush1.bf16.msra.mxu0 0
  %4336 = vmatprep.subr.bf16.mxu0 0
  %4337 = vmatpush1.bf16.msra.mxu0 0
  %4338 = vmatprep.subr.bf16.mxu0 0
  %4339 = vmatpush1.bf16.msra.mxu0 0
  %4340 = vmatprep.subr.bf16.mxu0 0
  %4341 = vmatpush1.bf16.msra.mxu0 0
  %4342 = vmatprep.subr.bf16.mxu0 0
  %4343 = vmatpush1.bf16.msra.mxu0 0
  %4344 = vmatprep.subr.bf16.mxu0 0
  %4345 = vmatpush1.bf16.msra.mxu0 0
  %4346 = vmatprep.subr.bf16.mxu0 0
  %4347 = vmatpush1.bf16.msra.mxu0 0
  %4348 = vmatprep.mubr.bf16.mxu0 0
  %4349 = vmatmul.mubr.bf16.gmra.mrb[0].mxu0 %v4312
  %v4350 = vpop.f32.mrb[0].mxu0
  %v4351 = vadd.f32 0.0, %v4350
  %v4352 = vpop.f32.mrb[0].mxu0
  %v4353 = vpop.f32.mrb[0].mxu0
  %v4354 = vadd.f32 0.0, %v4353
  %v4355 = vpop.f32.mrb[0].mxu0
  %4356 = vmatprep.mubr.bf16.mxu0 0
  %4357 = vmatmul.mubr.bf16.gmra.mrb[0].mxu0 %v4313
  %v4358 = vpop.f32.mrb[0].mxu0
  %v4359 = vadd.f32 0.0, %v4358
  %v4360 = vpop.f32.mrb[0].mxu0
  %v4361 = vpop.f32.mrb[0].mxu0
  %v4362 = vadd.f32 0.0, %v4361
  %v4363 = vpop.f32.mrb[0].mxu0
  %4364 = vmatprep.mubr.bf16.mxu0 0
  %4365 = vmatmul.mubr.bf16.gmra.mrb[0].mxu0 %v4314
  %v4366 = vpop.f32.mrb[0].mxu0
  %v4367 = vadd.f32 0.0, %v4366
  %v4368 = vpop.f32.mrb[0].mxu0
  %v4369 = vpop.f32.mrb[0].mxu0
  %v4370 = vadd.f32 0.0, %v4369
  %v4371 = vpop.f32.mrb[0].mxu0
  %4372 = vmatprep.mubr.bf16.mxu0 0
  %4373 = vmatmul.mubr.bf16.gmra.mrb[0].mxu0 %v4315
  %v4374 = vpop.f32.mrb[0].mxu0
  %v4375 = vadd.f32 0.0, %v4374
  %v4376 = vpop.f32.mrb[0].mxu0
  %v4377 = vpop.f32.mrb[0].mxu0
  %v4378 = vadd.f32 0.0, %v4377
  %v4379 = vpop.f32.mrb[0].mxu0
  %4380 = vdwg.mxu0
  %v4381 = vmax.f32 %v4351, 0.0
  %v4382 = vmax.f32 %v4354, 0.0
  %v4383 = vmax.f32 %v4359, 0.0
  %v4384 = vmax.f32 %v4362, 0.0
  %v4385 = vmax.f32 %v4367, 0.0
  %v4386 = vmax.f32 %v4370, 0.0
  %v4387 = vmax.f32 %v4375, 0.0
  %v4388 = vmax.f32 %v4378, 0.0
  %v4389 = vpack.c.bf16 %v4382, %v4381
  %v4390 = vpack.c.bf16 %v4384, %v4383
  %v4391 = vpack.c.bf16 %v4386, %v4385
  %v4392 = vpack.c.bf16 %v4388, %v4387
  %4393 = vmatprep.subr.bf16.mxu0 0
  %4394 = vmatpush1.bf16.msra.mxu0 %v1028
  %4395 = vmatprep.subr.bf16.mxu0 0
  %4396 = vmatpush1.bf16.msra.mxu0 %v1029
  %4397 = vmatprep.subr.bf16.mxu0 0
  %4398 = vmatpush1.bf16.msra.mxu0 %v1030
  %4399 = vmatprep.subr.bf16.mxu0 0
  %4400 = vmatpush1.bf16.msra.mxu0 %v1031
  %4401 = vmatprep.subr.bf16.mxu0 0
  %4402 = vmatpush1.bf16.msra.mxu0 %v1032
  %4403 = vmatprep.subr.bf16.mxu0 0
  %4404 = vmatpush1.bf16.msra.mxu0 %v1033
  %4405 = vmatprep.subr.bf16.mxu0 0
  %4406 = vmatpush1.bf16.msra.mxu0 %v1034
  %4407 = vmatprep.subr.bf16.mxu0 0
  %4408 = vmatpush1.bf16.msra.mxu0 %v1035
  %4409 = vmatprep.subr.bf16.mxu0 0
  %4410 = vmatpush1.bf16.msra.mxu0 0
  %4411 = vmatprep.subr.bf16.mxu0 0
  %4412 = vmatpush1.bf16.msra.mxu0 0
  %4413 = vmatprep.subr.bf16.mxu0 0
  %4414 = vmatpush1.bf16.msra.mxu0 0
  %4415 = vmatprep.subr.bf16.mxu0 0
  %4416 = vmatpush1.bf16.msra.mxu0 0
  %4417 = vmatprep.subr.bf16.mxu0 0
  %4418 = vmatpush1.bf16.msra.mxu0 0
  %4419 = vmatprep.subr.bf16.mxu0 0
  %4420 = vmatpush1.bf16.msra.mxu0 0
  %4421 = vmatprep.subr.bf16.mxu0 0
  %4422 = vmatpush1.bf16.msra.mxu0 0
  %4423 = vmatprep.subr.bf16.mxu0 0
  %4424 = vmatpush1.bf16.msra.mxu0 0
  %4425 = vmatprep.mubr.bf16.mxu0 0
  %4426 = vmatmul.mubr.bf16.gmra.mrb[0].mxu0 %v4389
  %v4427 = vpop.f32.mrb[0].mxu0
  %v4428 = vadd.f32 0.0, %v4427
  %v4429 = vpop.f32.mrb[0].mxu0
  %v4430 = vpop.f32.mrb[0].mxu0
  %v4431 = vadd.f32 0.0, %v4430
  %v4432 = vpop.f32.mrb[0].mxu0
  %4433 = vmatprep.mubr.bf16.mxu0 0
  %4434 = vmatmul.mubr.bf16.gmra.mrb[0].mxu0 %v4390
  %v4435 = vpop.f32.mrb[0].mxu0
  %v4436 = vadd.f32 0.0, %v4435
  %v4437 = vpop.f32.mrb[0].mxu0
  %v4438 = vpop.f32.mrb[0].mxu0
  %v4439 = vadd.f32 0.0, %v4438
  %v4440 = vpop.f32.mrb[0].mxu0
  %4441 = vmatprep.mubr.bf16.mxu0 0
  %4442 = vmatmul.mubr.bf16.gmra.mrb[0].mxu0 %v4391
  %v4443 = vpop.f32.mrb[0].mxu0
  %v4444 = vadd.f32 0.0, %v4443
  %v4445 = vpop.f32.mrb[0].mxu0
  %v4446 = vpop.f32.mrb[0].mxu0
  %v4447 = vadd.f32 0.0, %v4446
  %v4448 = vpop.f32.mrb[0].mxu0
  %4449 = vmatprep.mubr.bf16.mxu0 0
  %4450 = vmatmul.mubr.bf16.gmra.mrb[0].mxu0 %v4392
  %v4451 = vpop.f32.mrb[0].mxu0
  %v4452 = vadd.f32 0.0, %v4451
  %v4453 = vpop.f32.mrb[0].mxu0
  %v4454 = vpop.f32.mrb[0].mxu0
  %v4455 = vadd.f32 0.0, %v4454
  %v4456 = vpop.f32.mrb[0].mxu0
  %4457 = vdwg.mxu0
  %v4458 = vpack.c.bf16 %v4431, %v4428
  %v4459 = vpack.c.bf16 %v4439, %v4436
  %v4460 = vpack.c.bf16 %v4447, %v4444
  %v4461 = vpack.c.bf16 %v4455, %v4452
  %v4463 = vsel %vm777, %v4458, 0
  %v4466 = vsel %vm777, %v4459, 0
  %v4469 = vsel %vm777, %v4460, 0
  %v4472 = vsel %vm777, %v4461, 0
  %4474 = vmatprep.subr.bf16.mxu0 0
  %4475 = vmatpush1.bf16.msra.mxu0 %v1126
  %4476 = vmatprep.subr.bf16.mxu0 0
  %4477 = vmatpush1.bf16.msra.mxu0 0
  %4478 = vmatprep.subr.bf16.mxu0 0
  %4479 = vmatpush1.bf16.msra.mxu0 0
  %4480 = vmatprep.subr.bf16.mxu0 0
  %4481 = vmatpush1.bf16.msra.mxu0 0
  %4482 = vmatprep.subr.bf16.mxu0 0
  %4483 = vmatpush1.bf16.msra.mxu0 0
  %4484 = vmatprep.subr.bf16.mxu0 0
  %4485 = vmatpush1.bf16.msra.mxu0 0
  %4486 = vmatprep.subr.bf16.mxu0 0
  %4487 = vmatpush1.bf16.msra.mxu0 0
  %4488 = vmatprep.subr.bf16.mxu0 0
  %4489 = vmatpush1.bf16.msra.mxu0 0
  %4490 = vmatprep.subr.bf16.mxu0 0
  %4491 = vmatpush1.bf16.msra.mxu0 0
  %4492 = vmatprep.subr.bf16.mxu0 0
  %4493 = vmatpush1.bf16.msra.mxu0 0
  %4494 = vmatprep.subr.bf16.mxu0 0
  %4495 = vmatpush1.bf16.msra.mxu0 0
  %4496 = vmatprep.subr.bf16.mxu0 0
  %4497 = vmatpush1.bf16.msra.mxu0 0
  %4498 = vmatprep.subr.bf16.mxu0 0
  %4499 = vmatpush1.bf16.msra.mxu0 0
  %4500 = vmatprep.subr.bf16.mxu0 0
  %4501 = vmatpush1.bf16.msra.mxu0 0
  %4502 = vmatprep.subr.bf16.mxu0 0
  %4503 = vmatpush1.bf16.msra.mxu0 0
  %4504 = vmatprep.subr.bf16.mxu0 0
  %4505 = vmatpush1.bf16.msra.mxu0 0
  %4506 = vmatprep.mubr.bf16.mxu0 0
  %4507 = vmatmul.mubr.bf16.gmra.mrb[0].mxu0 %v4463
  %v4508 = vpop.f32.mrb[0].mxu0
  %v4509 = vadd.f32 0.0, %v4508
  %v4510 = vpop.f32.mrb[0].mxu0
  %v4511 = vpop.f32.mrb[0].mxu0
  %v4512 = vadd.f32 0.0, %v4511
  %v4513 = vpop.f32.mrb[0].mxu0
  %4514 = vmatprep.mubr.bf16.mxu0 0
  %4515 = vmatmul.mubr.bf16.gmra.mrb[0].mxu0 %v4466
  %v4516 = vpop.f32.mrb[0].mxu0
  %v4517 = vadd.f32 0.0, %v4516
  %v4518 = vpop.f32.mrb[0].mxu0
  %v4519 = vpop.f32.mrb[0].mxu0
  %v4520 = vadd.f32 0.0, %v4519
  %v4521 = vpop.f32.mrb[0].mxu0
  %4522 = vmatprep.mubr.bf16.mxu0 0
  %4523 = vmatmul.mubr.bf16.gmra.mrb[0].mxu0 %v4469
  %v4524 = vpop.f32.mrb[0].mxu0
  %v4525 = vadd.f32 0.0, %v4524
  %v4526 = vpop.f32.mrb[0].mxu0
  %v4527 = vpop.f32.mrb[0].mxu0
  %v4528 = vadd.f32 0.0, %v4527
  %v4529 = vpop.f32.mrb[0].mxu0
  %4530 = vmatprep.mubr.bf16.mxu0 0
  %4531 = vmatmul.mubr.bf16.gmra.mrb[0].mxu0 %v4472
  %v4532 = vpop.f32.mrb[0].mxu0
  %v4533 = vadd.f32 0.0, %v4532
  %v4534 = vpop.f32.mrb[0].mxu0
  %v4535 = vpop.f32.mrb[0].mxu0
  %v4536 = vadd.f32 0.0, %v4535
  %v4537 = vpop.f32.mrb[0].mxu0
  %4538 = vdwg.mxu0
  %4539 = vmatprep.subr.bf16.mxu0 0
  %4540 = vmatpush1.bf16.msra.mxu0 %v1201
  %4541 = vmatprep.subr.bf16.mxu0 0
  %4542 = vmatpush1.bf16.msra.mxu0 %v1202
  %4543 = vmatprep.subr.bf16.mxu0 0
  %4544 = vmatpush1.bf16.msra.mxu0 0
  %4545 = vmatprep.subr.bf16.mxu0 0
  %4546 = vmatpush1.bf16.msra.mxu0 0
  %4547 = vmatprep.subr.bf16.mxu0 0
  %4548 = vmatpush1.bf16.msra.mxu0 0
  %4549 = vmatprep.subr.bf16.mxu0 0
  %4550 = vmatpush1.bf16.msra.mxu0 0
  %4551 = vmatprep.subr.bf16.mxu0 0
  %4552 = vmatpush1.bf16.msra.mxu0 0
  %4553 = vmatprep.subr.bf16.mxu0 0
  %4554 = vmatpush1.bf16.msra.mxu0 0
  %4555 = vmatprep.subr.bf16.mxu0 0
  %4556 = vmatpush1.bf16.msra.mxu0 0
  %4557 = vmatprep.subr.bf16.mxu0 0
  %4558 = vmatpush1.bf16.msra.mxu0 0
  %4559 = vmatprep.subr.bf16.mxu0 0
  %4560 = vmatpush1.bf16.msra.mxu0 0
  %4561 = vmatprep.subr.bf16.mxu0 0
  %4562 = vmatpush1.bf16.msra.mxu0 0
  %4563 = vmatprep.subr.bf16.mxu0 0
  %4564 = vmatpush1.bf16.msra.mxu0 0
  %4565 = vmatprep.subr.bf16.mxu0 0
  %4566 = vmatpush1.bf16.msra.mxu0 0
  %4567 = vmatprep.subr.bf16.mxu0 0
  %4568 = vmatpush1.bf16.msra.mxu0 0
  %4569 = vmatprep.subr.bf16.mxu0 0
  %4570 = vmatpush1.bf16.msra.mxu0 0
  %4571 = vmatprep.mubr.bf16.mxu0 0
  %4572 = vmatmul.mubr.bf16.gmra.mrb[0].mxu0 %v1564
  %v4573 = vpop.f32.mrb[0].mxu0
  %v4574 = vadd.f32 %v4509, %v4573
  %v4575 = vpop.f32.mrb[0].mxu0
  %v4576 = vpop.f32.mrb[0].mxu0
  %v4577 = vadd.f32 %v4512, %v4576
  %v4578 = vpop.f32.mrb[0].mxu0
  %4579 = vmatprep.mubr.bf16.mxu0 0
  %4580 = vmatmul.mubr.bf16.gmra.mrb[0].mxu0 %v1567
  %v4581 = vpop.f32.mrb[0].mxu0
  %v4582 = vadd.f32 %v4517, %v4581
  %v4583 = vpop.f32.mrb[0].mxu0
  %v4584 = vpop.f32.mrb[0].mxu0
  %v4585 = vadd.f32 %v4520, %v4584
  %v4586 = vpop.f32.mrb[0].mxu0
  %4587 = vmatprep.mubr.bf16.mxu0 0
  %4588 = vmatmul.mubr.bf16.gmra.mrb[0].mxu0 %v1570
  %v4589 = vpop.f32.mrb[0].mxu0
  %v4590 = vadd.f32 %v4525, %v4589
  %v4591 = vpop.f32.mrb[0].mxu0
  %v4592 = vpop.f32.mrb[0].mxu0
  %v4593 = vadd.f32 %v4528, %v4592
  %v4594 = vpop.f32.mrb[0].mxu0
  %4595 = vmatprep.mubr.bf16.mxu0 0
  %4596 = vmatmul.mubr.bf16.gmra.mrb[0].mxu0 %v1573
  %v4597 = vpop.f32.mrb[0].mxu0
  %v4598 = vadd.f32 %v4533, %v4597
  %v4599 = vpop.f32.mrb[0].mxu0
  %v4600 = vpop.f32.mrb[0].mxu0
  %v4601 = vadd.f32 %v4536, %v4600
  %v4602 = vpop.f32.mrb[0].mxu0
  %4603 = vdwg.mxu0
  %v4604 = vmax.f32 %v4574, 0.0
  %v4605 = vmax.f32 %v4577, 0.0
  %v4606 = vmax.f32 %v4582, 0.0
  %v4607 = vmax.f32 %v4585, 0.0
  %v4608 = vmax.f32 %v4590, 0.0
  %v4609 = vmax.f32 %v4593, 0.0
  %v4610 = vmax.f32 %v4598, 0.0
  %v4611 = vmax.f32 %v4601, 0.0
  %v4612 = vpack.c.bf16 %v4605, %v4604
  %v4613 = vpack.c.bf16 %v4607, %v4606
  %v4614 = vpack.c.bf16 %v4609, %v4608
  %v4615 = vpack.c.bf16 %v4611, %v4610
  %4616 = vmatprep.subr.bf16.mxu0 0
  %4617 = vmatpush1.bf16.msra.mxu0 %v1314
  %4618 = vmatprep.subr.bf16.mxu0 0
  %4619 = vmatpush1.bf16.msra.mxu0 %v1315
  %4620 = vmatprep.subr.bf16.mxu0 0
  %4621 = vmatpush1.bf16.msra.mxu0 %v1316
  %4622 = vmatprep.subr.bf16.mxu0 0
  %4623 = vmatpush1.bf16.msra.mxu0 %v1317
  %4624 = vmatprep.subr.bf16.mxu0 0
  %4625 = vmatpush1.bf16.msra.mxu0 %v1318
  %4626 = vmatprep.subr.bf16.mxu0 0
  %4627 = vmatpush1.bf16.msra.mxu0 %v1319
  %4628 = vmatprep.subr.bf16.mxu0 0
  %4629 = vmatpush1.bf16.msra.mxu0 %v1320
  %4630 = vmatprep.subr.bf16.mxu0 0
  %4631 = vmatpush1.bf16.msra.mxu0 %v1321
  %4632 = vmatprep.subr.bf16.mxu0 0
  %4633 = vmatpush1.bf16.msra.mxu0 0
  %4634 = vmatprep.subr.bf16.mxu0 0
  %4635 = vmatpush1.bf16.msra.mxu0 0
  %4636 = vmatprep.subr.bf16.mxu0 0
  %4637 = vmatpush1.bf16.msra.mxu0 0
  %4638 = vmatprep.subr.bf16.mxu0 0
  %4639 = vmatpush1.bf16.msra.mxu0 0
  %4640 = vmatprep.subr.bf16.mxu0 0
  %4641 = vmatpush1.bf16.msra.mxu0 0
  %4642 = vmatprep.subr.bf16.mxu0 0
  %4643 = vmatpush1.bf16.msra.mxu0 0
  %4644 = vmatprep.subr.bf16.mxu0 0
  %4645 = vmatpush1.bf16.msra.mxu0 0
  %4646 = vmatprep.subr.bf16.mxu0 0
  %4647 = vmatpush1.bf16.msra.mxu0 0
  %4648 = vmatprep.mubr.bf16.mxu0 0
  %4649 = vmatmul.mubr.bf16.gmra.mrb[0].mxu0 %v4612
  %v4650 = vpop.f32.mrb[0].mxu0
  %v4651 = vadd.f32 0.0, %v4650
  %v4652 = vpop.f32.mrb[0].mxu0
  %v4653 = vpop.f32.mrb[0].mxu0
  %v4654 = vadd.f32 0.0, %v4653
  %v4655 = vpop.f32.mrb[0].mxu0
  %4656 = vmatprep.mubr.bf16.mxu0 0
  %4657 = vmatmul.mubr.bf16.gmra.mrb[0].mxu0 %v4613
  %v4658 = vpop.f32.mrb[0].mxu0
  %v4659 = vadd.f32 0.0, %v4658
  %v4660 = vpop.f32.mrb[0].mxu0
  %v4661 = vpop.f32.mrb[0].mxu0
  %v4662 = vadd.f32 0.0, %v4661
  %v4663 = vpop.f32.mrb[0].mxu0
  %4664 = vmatprep.mubr.bf16.mxu0 0
  %4665 = vmatmul.mubr.bf16.gmra.mrb[0].mxu0 %v4614
  %v4666 = vpop.f32.mrb[0].mxu0
  %v4667 = vadd.f32 0.0, %v4666
  %v4668 = vpop.f32.mrb[0].mxu0
  %v4669 = vpop.f32.mrb[0].mxu0
  %v4670 = vadd.f32 0.0, %v4669
  %v4671 = vpop.f32.mrb[0].mxu0
  %4672 = vmatprep.mubr.bf16.mxu0 0
  %4673 = vmatmul.mubr.bf16.gmra.mrb[0].mxu0 %v4615
  %v4674 = vpop.f32.mrb[0].mxu0
  %v4675 = vadd.f32 0.0, %v4674
  %v4676 = vpop.f32.mrb[0].mxu0
  %v4677 = vpop.f32.mrb[0].mxu0
  %v4678 = vadd.f32 0.0, %v4677
  %v4679 = vpop.f32.mrb[0].mxu0
  %4680 = vdwg.mxu0
  %v4681 = vmax.f32 %v4651, 0.0
  %v4682 = vmax.f32 %v4654, 0.0
  %v4683 = vmax.f32 %v4659, 0.0
  %v4684 = vmax.f32 %v4662, 0.0
  %v4685 = vmax.f32 %v4667, 0.0
  %v4686 = vmax.f32 %v4670, 0.0
  %v4687 = vmax.f32 %v4675, 0.0
  %v4688 = vmax.f32 %v4678, 0.0
  %v4689 = vpack.c.bf16 %v4682, %v4681
  %v4690 = vpack.c.bf16 %v4684, %v4683
  %v4691 = vpack.c.bf16 %v4686, %v4685
  %v4692 = vpack.c.bf16 %v4688, %v4687
  %4693 = vmatprep.subr.bf16.mxu0 0
  %4694 = vmatpush1.bf16.msra.mxu0 %v1439
  %4695 = vmatprep.subr.bf16.mxu0 0
  %4696 = vmatpush1.bf16.msra.mxu0 %v1440
  %4697 = vmatprep.subr.bf16.mxu0 0
  %4698 = vmatpush1.bf16.msra.mxu0 %v1441
  %4699 = vmatprep.subr.bf16.mxu0 0
  %4700 = vmatpush1.bf16.msra.mxu0 %v1442
  %4701 = vmatprep.subr.bf16.mxu0 0
  %4702 = vmatpush1.bf16.msra.mxu0 %v1443
  %4703 = vmatprep.subr.bf16.mxu0 0
  %4704 = vmatpush1.bf16.msra.mxu0 %v1444
  %4705 = vmatprep.subr.bf16.mxu0 0
  %4706 = vmatpush1.bf16.msra.mxu0 %v1445
  %4707 = vmatprep.subr.bf16.mxu0 0
  %4708 = vmatpush1.bf16.msra.mxu0 %v1446
  %4709 = vmatprep.subr.bf16.mxu0 0
  %4710 = vmatpush1.bf16.msra.mxu0 0
  %4711 = vmatprep.subr.bf16.mxu0 0
  %4712 = vmatpush1.bf16.msra.mxu0 0
  %4713 = vmatprep.subr.bf16.mxu0 0
  %4714 = vmatpush1.bf16.msra.mxu0 0
  %4715 = vmatprep.subr.bf16.mxu0 0
  %4716 = vmatpush1.bf16.msra.mxu0 0
  %4717 = vmatprep.subr.bf16.mxu0 0
  %4718 = vmatpush1.bf16.msra.mxu0 0
  %4719 = vmatprep.subr.bf16.mxu0 0
  %4720 = vmatpush1.bf16.msra.mxu0 0
  %4721 = vmatprep.subr.bf16.mxu0 0
  %4722 = vmatpush1.bf16.msra.mxu0 0
  %4723 = vmatprep.subr.bf16.mxu0 0
  %4724 = vmatpush1.bf16.msra.mxu0 0
  %4725 = vmatprep.mubr.bf16.mxu0 0
  %4726 = vmatmul.mubr.bf16.gmra.mrb[0].mxu0 %v4689
  %v4727 = vpop.f32.mrb[0].mxu0
  %v4728 = vadd.f32 0.0, %v4727
  %v4729 = vpop.f32.mrb[0].mxu0
  %v4730 = vpop.f32.mrb[0].mxu0
  %v4731 = vadd.f32 0.0, %v4730
  %v4732 = vpop.f32.mrb[0].mxu0
  %4733 = vmatprep.mubr.bf16.mxu0 0
  %4734 = vmatmul.mubr.bf16.gmra.mrb[0].mxu0 %v4690
  %v4735 = vpop.f32.mrb[0].mxu0
  %v4736 = vadd.f32 0.0, %v4735
  %v4737 = vpop.f32.mrb[0].mxu0
  %v4738 = vpop.f32.mrb[0].mxu0
  %v4739 = vadd.f32 0.0, %v4738
  %v4740 = vpop.f32.mrb[0].mxu0
  %4741 = vmatprep.mubr.bf16.mxu0 0
  %4742 = vmatmul.mubr.bf16.gmra.mrb[0].mxu0 %v4691
  %v4743 = vpop.f32.mrb[0].mxu0
  %v4744 = vadd.f32 0.0, %v4743
  %v4745 = vpop.f32.mrb[0].mxu0
  %v4746 = vpop.f32.mrb[0].mxu0
  %v4747 = vadd.f32 0.0, %v4746
  %v4748 = vpop.f32.mrb[0].mxu0
  %4749 = vmatprep.mubr.bf16.mxu0 0
  %4750 = vmatmul.mubr.bf16.gmra.mrb[0].mxu0 %v4692
  %v4751 = vpop.f32.mrb[0].mxu0
  %v4752 = vadd.f32 0.0, %v4751
  %v4753 = vpop.f32.mrb[0].mxu0
  %v4754 = vpop.f32.mrb[0].mxu0
  %v4755 = vadd.f32 0.0, %v4754
  %v4756 = vpop.f32.mrb[0].mxu0
  %4757 = vdwg.mxu0
  %v4758 = vadd.f32 %v1520, %v4728
  %v4759 = vadd.f32 %v1521, %v4731
  %v4760 = vadd.f32 %v1522, %v4736
  %v4761 = vadd.f32 %v1523, %v4739
  %v4762 = vadd.f32 %v1524, %v4744
  %v4763 = vadd.f32 %v1525, %v4747
  %v4764 = vadd.f32 %v1526, %v4752
  %v4765 = vadd.f32 %v1527, %v4755
  %v4766 = vpack.c.bf16 %v4759, %v4758
  %v4767 = vpack.c.bf16 %v4761, %v4760
  %v4768 = vpack.c.bf16 %v4763, %v4762
  %v4769 = vpack.c.bf16 %v4765, %v4764
  %v4771 = vsel %vm389, %v4766, 0
  %v4774 = vsel %vm389, %v4767, 0
  %v4777 = vsel %vm389, %v4768, 0
  %v4780 = vsel %vm389, %v4769, 0
  %4782 = vmatprep.subr.bf16.mxu0 %v1556
  %4783 = vmatpush1.bf16.msra.mxu0 %v1555
  %4784 = vmatprep.subr.bf16.mxu0 %v1558
  %4785 = vmatpush1.bf16.msra.mxu0 %v1557
  %4786 = vmatprep.subr.bf16.mxu0 0
  %4787 = vmatpush1.bf16.msra.mxu0 0
  %4788 = vmatprep.subr.bf16.mxu0 0
  %4789 = vmatpush1.bf16.msra.mxu0 0
  %4790 = vmatprep.subr.bf16.mxu0 0
  %4791 = vmatpush1.bf16.msra.mxu0 0
  %4792 = vmatprep.subr.bf16.mxu0 0
  %4793 = vmatpush1.bf16.msra.mxu0 0
  %4794 = vmatprep.subr.bf16.mxu0 0
  %4795 = vmatpush1.bf16.msra.mxu0 0
  %4796 = vmatprep.subr.bf16.mxu0 0
  %4797 = vmatpush1.bf16.msra.mxu0 0
  %4798 = vmatprep.subr.bf16.mxu0 0
  %4799 = vmatpush1.bf16.msra.mxu0 0
  %4800 = vmatprep.subr.bf16.mxu0 0
  %4801 = vmatpush1.bf16.msra.mxu0 0
  %4802 = vmatprep.subr.bf16.mxu0 0
  %4803 = vmatpush1.bf16.msra.mxu0 0
  %4804 = vmatprep.subr.bf16.mxu0 0
  %4805 = vmatpush1.bf16.msra.mxu0 0
  %4806 = vmatprep.subr.bf16.mxu0 0
  %4807 = vmatpush1.bf16.msra.mxu0 0
  %4808 = vmatprep.subr.bf16.mxu0 0
  %4809 = vmatpush1.bf16.msra.mxu0 0
  %4810 = vmatprep.subr.bf16.mxu0 0
  %4811 = vmatpush1.bf16.msra.mxu0 0
  %4812 = vmatprep.subr.bf16.mxu0 0
  %4813 = vmatpush1.bf16.msra.mxu0 0
  %4814 = vmatprep.mubr.bf16.mxu0 0
  %4815 = vmatmul.mubr.bf16.gmra.mrb[0].mxu0 %v4771
  %v4816 = vpop.f32.mrb[0].mxu0
  %v4817 = vadd.f32 %v1536, %v4816
  %v4818 = vpop.f32.mrb[0].mxu0
  %v4819 = vadd.f32 %v1540, %v4818
  %v4820 = vpop.f32.mrb[0].mxu0
  %v4821 = vadd.f32 %v1536, %v4820
  %v4822 = vpop.f32.mrb[0].mxu0
  %v4823 = vadd.f32 %v1540, %v4822
  %4824 = vmatprep.mubr.bf16.mxu0 0
  %4825 = vmatmul.mubr.bf16.gmra.mrb[0].mxu0 %v4774
  %v4826 = vpop.f32.mrb[0].mxu0
  %v4827 = vadd.f32 %v1536, %v4826
  %v4828 = vpop.f32.mrb[0].mxu0
  %v4829 = vadd.f32 %v1540, %v4828
  %v4830 = vpop.f32.mrb[0].mxu0
  %v4831 = vadd.f32 %v1536, %v4830
  %v4832 = vpop.f32.mrb[0].mxu0
  %v4833 = vadd.f32 %v1540, %v4832
  %4834 = vmatprep.mubr.bf16.mxu0 0
  %4835 = vmatmul.mubr.bf16.gmra.mrb[0].mxu0 %v4777
  %v4836 = vpop.f32.mrb[0].mxu0
  %v4837 = vadd.f32 %v1536, %v4836
  %v4838 = vpop.f32.mrb[0].mxu0
  %v4839 = vadd.f32 %v1540, %v4838
  %v4840 = vpop.f32.mrb[0].mxu0
  %v4841 = vadd.f32 %v1536, %v4840
  %v4842 = vpop.f32.mrb[0].mxu0
  %v4843 = vadd.f32 %v1540, %v4842
  %4844 = vmatprep.mubr.bf16.mxu0 0
  %4845 = vmatmul.mubr.bf16.gmra.mrb[0].mxu0 %v4780
  %v4846 = vpop.f32.mrb[0].mxu0
  %v4847 = vadd.f32 %v1536, %v4846
  %v4848 = vpop.f32.mrb[0].mxu0
  %v4849 = vadd.f32 %v1540, %v4848
  %v4850 = vpop.f32.mrb[0].mxu0
  %v4851 = vadd.f32 %v1536, %v4850
  %v4852 = vpop.f32.mrb[0].mxu0
  %v4853 = vadd.f32 %v1540, %v4852
  %4854 = vdwg.mxu0
  %v4855 = vpack.c.bf16 %v4821, %v4817
  %v4856 = vpack.c.bf16 %v4831, %v4827
  %v4857 = vpack.c.bf16 %v4841, %v4837
  %v4858 = vpack.c.bf16 %v4851, %v4847
  %4859 = vmatprep.subr.bf16.mxu0 0
  %4860 = vmatpush1.bf16.msra.mxu0 %v4855
  %4861 = vmatprep.subr.bf16.mxu0 0
  %4862 = vmatpush1.bf16.msra.mxu0 %v4856
  %4863 = vmatprep.subr.bf16.mxu0 0
  %4864 = vmatpush1.bf16.msra.mxu0 %v4857
  %4865 = vmatprep.subr.bf16.mxu0 0
  %4866 = vmatpush1.bf16.msra.mxu0 %v4858
  %4867 = vmatprep.subr.bf16.mxu0 0
  %4868 = vmatpush1.bf16.msra.mxu0 0
  %4869 = vmatprep.subr.bf16.mxu0 0
  %4870 = vmatpush1.bf16.msra.mxu0 0
  %4871 = vmatprep.subr.bf16.mxu0 0
  %4872 = vmatpush1.bf16.msra.mxu0 0
  %4873 = vmatprep.subr.bf16.mxu0 0
  %4874 = vmatpush1.bf16.msra.mxu0 0
  %4875 = vmatprep.subr.bf16.mxu0 0
  %4876 = vmatpush1.bf16.msra.mxu0 0
  %4877 = vmatprep.subr.bf16.mxu0 0
  %4878 = vmatpush1.bf16.msra.mxu0 0
  %4879 = vmatprep.subr.bf16.mxu0 0
  %4880 = vmatpush1.bf16.msra.mxu0 0
  %4881 = vmatprep.subr.bf16.mxu0 0
  %4882 = vmatpush1.bf16.msra.mxu0 0
  %4883 = vmatprep.subr.bf16.mxu0 0
  %4884 = vmatpush1.bf16.msra.mxu0 0
  %4885 = vmatprep.subr.bf16.mxu0 0
  %4886 = vmatpush1.bf16.msra.mxu0 0
  %4887 = vmatprep.subr.bf16.mxu0 0
  %4888 = vmatpush1.bf16.msra.mxu0 0
  %4889 = vmatprep.subr.bf16.mxu0 0
  %4890 = vmatpush1.bf16.msra.mxu0 0
  %4891 = vmatprep.mubr.bf16.mxu0 0
  %4892 = vmatmul.mubr.bf16.gmra.mrb[0].mxu0 %v1814
  %v4893 = vpop.f32.mrb[0].mxu0
  %v4894 = vadd.f32 %v4819, %v4893
  %v4895 = vpop.f32.mrb[0].mxu0
  %v4896 = vpop.f32.mrb[0].mxu0
  %v4897 = vadd.f32 %v4819, %v4896
  %v4898 = vpop.f32.mrb[0].mxu0
  %4899 = vmatprep.mubr.bf16.mxu0 0
  %4900 = vmatmul.mubr.bf16.gmra.mrb[0].mxu0 %v1817
  %v4901 = vpop.f32.mrb[0].mxu0
  %v4902 = vadd.f32 %v4819, %v4901
  %v4903 = vpop.f32.mrb[0].mxu0
  %v4904 = vpop.f32.mrb[0].mxu0
  %v4905 = vadd.f32 %v4819, %v4904
  %v4906 = vpop.f32.mrb[0].mxu0
  %4907 = vmatprep.mubr.bf16.mxu0 0
  %4908 = vmatmul.mubr.bf16.gmra.mrb[0].mxu0 %v1820
  %v4909 = vpop.f32.mrb[0].mxu0
  %v4910 = vadd.f32 %v4819, %v4909
  %v4911 = vpop.f32.mrb[0].mxu0
  %v4912 = vpop.f32.mrb[0].mxu0
  %v4913 = vadd.f32 %v4819, %v4912
  %v4914 = vpop.f32.mrb[0].mxu0
  %4915 = vmatprep.mubr.bf16.mxu0 0
  %4916 = vmatmul.mubr.bf16.gmra.mrb[0].mxu0 %v1823
  %v4917 = vpop.f32.mrb[0].mxu0
  %v4918 = vadd.f32 %v4819, %v4917
  %v4919 = vpop.f32.mrb[0].mxu0
  %v4920 = vpop.f32.mrb[0].mxu0
  %v4921 = vadd.f32 %v4819, %v4920
  %v4922 = vpop.f32.mrb[0].mxu0
  %4923 = vmatprep.mubr.bf16.mxu0 0
  %4924 = vmatmul.mubr.bf16.gmra.mrb[0].mxu0 %v1826
  %v4925 = vpop.f32.mrb[0].mxu0
  %v4926 = vadd.f32 %v4823, %v4925
  %v4927 = vpop.f32.mrb[0].mxu0
  %v4928 = vpop.f32.mrb[0].mxu0
  %v4929 = vadd.f32 %v4823, %v4928
  %v4930 = vpop.f32.mrb[0].mxu0
  %4931 = vmatprep.mubr.bf16.mxu0 0
  %4932 = vmatmul.mubr.bf16.gmra.mrb[0].mxu0 %v1829
  %v4933 = vpop.f32.mrb[0].mxu0
  %v4934 = vadd.f32 %v4823, %v4933
  %v4935 = vpop.f32.mrb[0].mxu0
  %v4936 = vpop.f32.mrb[0].mxu0
  %v4937 = vadd.f32 %v4823, %v4936
  %v4938 = vpop.f32.mrb[0].mxu0
  %4939 = vmatprep.mubr.bf16.mxu0 0
  %4940 = vmatmul.mubr.bf16.gmra.mrb[0].mxu0 %v1832
  %v4941 = vpop.f32.mrb[0].mxu0
  %v4942 = vadd.f32 %v4823, %v4941
  %v4943 = vpop.f32.mrb[0].mxu0
  %v4944 = vpop.f32.mrb[0].mxu0
  %v4945 = vadd.f32 %v4823, %v4944
  %v4946 = vpop.f32.mrb[0].mxu0
  %4947 = vmatprep.mubr.bf16.mxu0 0
  %4948 = vmatmul.mubr.bf16.gmra.mrb[0].mxu0 %v1835
  %v4949 = vpop.f32.mrb[0].mxu0
  %v4950 = vadd.f32 %v4823, %v4949
  %v4951 = vpop.f32.mrb[0].mxu0
  %v4952 = vpop.f32.mrb[0].mxu0
  %v4953 = vadd.f32 %v4823, %v4952
  %v4954 = vpop.f32.mrb[0].mxu0
  %4955 = vmatprep.mubr.bf16.mxu0 0
  %4956 = vmatmul.mubr.bf16.gmra.mrb[0].mxu0 %v1838
  %v4957 = vpop.f32.mrb[0].mxu0
  %v4958 = vadd.f32 %v4829, %v4957
  %v4959 = vpop.f32.mrb[0].mxu0
  %v4960 = vpop.f32.mrb[0].mxu0
  %v4961 = vadd.f32 %v4829, %v4960
  %v4962 = vpop.f32.mrb[0].mxu0
  %4963 = vmatprep.mubr.bf16.mxu0 0
  %4964 = vmatmul.mubr.bf16.gmra.mrb[0].mxu0 %v1841
  %v4965 = vpop.f32.mrb[0].mxu0
  %v4966 = vadd.f32 %v4829, %v4965
  %v4967 = vpop.f32.mrb[0].mxu0
  %v4968 = vpop.f32.mrb[0].mxu0
  %v4969 = vadd.f32 %v4829, %v4968
  %v4970 = vpop.f32.mrb[0].mxu0
  %4971 = vmatprep.mubr.bf16.mxu0 0
  %4972 = vmatmul.mubr.bf16.gmra.mrb[0].mxu0 %v1844
  %v4973 = vpop.f32.mrb[0].mxu0
  %v4974 = vadd.f32 %v4829, %v4973
  %v4975 = vpop.f32.mrb[0].mxu0
  %v4976 = vpop.f32.mrb[0].mxu0
  %v4977 = vadd.f32 %v4829, %v4976
  %v4978 = vpop.f32.mrb[0].mxu0
  %4979 = vmatprep.mubr.bf16.mxu0 0
  %4980 = vmatmul.mubr.bf16.gmra.mrb[0].mxu0 %v1847
  %v4981 = vpop.f32.mrb[0].mxu0
  %v4982 = vadd.f32 %v4829, %v4981
  %v4983 = vpop.f32.mrb[0].mxu0
  %v4984 = vpop.f32.mrb[0].mxu0
  %v4985 = vadd.f32 %v4829, %v4984
  %v4986 = vpop.f32.mrb[0].mxu0
  %4987 = vmatprep.mubr.bf16.mxu0 0
  %4988 = vmatmul.mubr.bf16.gmra.mrb[0].mxu0 %v1850
  %v4989 = vpop.f32.mrb[0].mxu0
  %v4990 = vadd.f32 %v4833, %v4989
  %v4991 = vpop.f32.mrb[0].mxu0
  %v4992 = vpop.f32.mrb[0].mxu0
  %v4993 = vadd.f32 %v4833, %v4992
  %v4994 = vpop.f32.mrb[0].mxu0
  %4995 = vmatprep.mubr.bf16.mxu0 0
  %4996 = vmatmul.mubr.bf16.gmra.mrb[0].mxu0 %v1853
  %v4997 = vpop.f32.mrb[0].mxu0
  %v4998 = vadd.f32 %v4833, %v4997
  %v4999 = vpop.f32.mrb[0].mxu0
  %v5000 = vpop.f32.mrb[0].mxu0
  %v5001 = vadd.f32 %v4833, %v5000
  %v5002 = vpop.f32.mrb[0].mxu0
  %5003 = vmatprep.mubr.bf16.mxu0 0
  %5004 = vmatmul.mubr.bf16.gmra.mrb[0].mxu0 %v1856
  %v5005 = vpop.f32.mrb[0].mxu0
  %v5006 = vadd.f32 %v4833, %v5005
  %v5007 = vpop.f32.mrb[0].mxu0
  %v5008 = vpop.f32.mrb[0].mxu0
  %v5009 = vadd.f32 %v4833, %v5008
  %v5010 = vpop.f32.mrb[0].mxu0
  %5011 = vmatprep.mubr.bf16.mxu0 0
  %5012 = vmatmul.mubr.bf16.gmra.mrb[0].mxu0 %v1859
  %v5013 = vpop.f32.mrb[0].mxu0
  %v5014 = vadd.f32 %v4833, %v5013
  %v5015 = vpop.f32.mrb[0].mxu0
  %v5016 = vpop.f32.mrb[0].mxu0
  %v5017 = vadd.f32 %v4833, %v5016
  %v5018 = vpop.f32.mrb[0].mxu0
  %5019 = vmatprep.mubr.bf16.mxu0 0
  %5020 = vmatmul.mubr.bf16.gmra.mrb[0].mxu0 %v1862
  %v5021 = vpop.f32.mrb[0].mxu0
  %v5022 = vadd.f32 %v4839, %v5021
  %v5023 = vpop.f32.mrb[0].mxu0
  %v5024 = vpop.f32.mrb[0].mxu0
  %v5025 = vadd.f32 %v4839, %v5024
  %v5026 = vpop.f32.mrb[0].mxu0
  %5027 = vmatprep.mubr.bf16.mxu0 0
  %5028 = vmatmul.mubr.bf16.gmra.mrb[0].mxu0 %v1865
  %v5029 = vpop.f32.mrb[0].mxu0
  %v5030 = vadd.f32 %v4839, %v5029
  %v5031 = vpop.f32.mrb[0].mxu0
  %v5032 = vpop.f32.mrb[0].mxu0
  %v5033 = vadd.f32 %v4839, %v5032
  %v5034 = vpop.f32.mrb[0].mxu0
  %5035 = vmatprep.mubr.bf16.mxu0 0
  %5036 = vmatmul.mubr.bf16.gmra.mrb[0].mxu0 %v1868
  %v5037 = vpop.f32.mrb[0].mxu0
  %v5038 = vadd.f32 %v4839, %v5037
  %v5039 = vpop.f32.mrb[0].mxu0
  %v5040 = vpop.f32.mrb[0].mxu0
  %v5041 = vadd.f32 %v4839, %v5040
  %v5042 = vpop.f32.mrb[0].mxu0
  %5043 = vmatprep.mubr.bf16.mxu0 0
  %5044 = vmatmul.mubr.bf16.gmra.mrb[0].mxu0 %v1871
  %v5045 = vpop.f32.mrb[0].mxu0
  %v5046 = vadd.f32 %v4839, %v5045
  %v5047 = vpop.f32.mrb[0].mxu0
  %v5048 = vpop.f32.mrb[0].mxu0
  %v5049 = vadd.f32 %v4839, %v5048
  %v5050 = vpop.f32.mrb[0].mxu0
  %5051 = vmatprep.mubr.bf16.mxu0 0
  %5052 = vmatmul.mubr.bf16.gmra.mrb[0].mxu0 %v1874
  %v5053 = vpop.f32.mrb[0].mxu0
  %v5054 = vadd.f32 %v4843, %v5053
  %v5055 = vpop.f32.mrb[0].mxu0
  %v5056 = vpop.f32.mrb[0].mxu0
  %v5057 = vadd.f32 %v4843, %v5056
  %v5058 = vpop.f32.mrb[0].mxu0
  %5059 = vmatprep.mubr.bf16.mxu0 0
  %5060 = vmatmul.mubr.bf16.gmra.mrb[0].mxu0 %v1877
  %v5061 = vpop.f32.mrb[0].mxu0
  %v5062 = vadd.f32 %v4843, %v5061
  %v5063 = vpop.f32.mrb[0].mxu0
  %v5064 = vpop.f32.mrb[0].mxu0
  %v5065 = vadd.f32 %v4843, %v5064
  %v5066 = vpop.f32.mrb[0].mxu0
  %5067 = vmatprep.mubr.bf16.mxu0 0
  %5068 = vmatmul.mubr.bf16.gmra.mrb[0].mxu0 %v1880
  %v5069 = vpop.f32.mrb[0].mxu0
  %v5070 = vadd.f32 %v4843, %v5069
  %v5071 = vpop.f32.mrb[0].mxu0
  %v5072 = vpop.f32.mrb[0].mxu0
  %v5073 = vadd.f32 %v4843, %v5072
  %v5074 = vpop.f32.mrb[0].mxu0
  %5075 = vmatprep.mubr.bf16.mxu0 0
  %5076 = vmatmul.mubr.bf16.gmra.mrb[0].mxu0 %v1883
  %v5077 = vpop.f32.mrb[0].mxu0
  %v5078 = vadd.f32 %v4843, %v5077
  %v5079 = vpop.f32.mrb[0].mxu0
  %v5080 = vpop.f32.mrb[0].mxu0
  %v5081 = vadd.f32 %v4843, %v5080
  %v5082 = vpop.f32.mrb[0].mxu0
  %5083 = vmatprep.mubr.bf16.mxu0 0
  %5084 = vmatmul.mubr.bf16.gmra.mrb[0].mxu0 %v1886
  %v5085 = vpop.f32.mrb[0].mxu0
  %v5086 = vadd.f32 %v4849, %v5085
  %v5087 = vpop.f32.mrb[0].mxu0
  %v5088 = vpop.f32.mrb[0].mxu0
  %v5089 = vadd.f32 %v4849, %v5088
  %v5090 = vpop.f32.mrb[0].mxu0
  %5091 = vmatprep.mubr.bf16.mxu0 0
  %5092 = vmatmul.mubr.bf16.gmra.mrb[0].mxu0 %v1889
  %v5093 = vpop.f32.mrb[0].mxu0
  %v5094 = vadd.f32 %v4849, %v5093
  %v5095 = vpop.f32.mrb[0].mxu0
  %v5096 = vpop.f32.mrb[0].mxu0
  %v5097 = vadd.f32 %v4849, %v5096
  %v5098 = vpop.f32.mrb[0].mxu0
  %5099 = vmatprep.mubr.bf16.mxu0 0
  %5100 = vmatmul.mubr.bf16.gmra.mrb[0].mxu0 %v1892
  %v5101 = vpop.f32.mrb[0].mxu0
  %v5102 = vadd.f32 %v4849, %v5101
  %v5103 = vpop.f32.mrb[0].mxu0
  %v5104 = vpop.f32.mrb[0].mxu0
  %v5105 = vadd.f32 %v4849, %v5104
  %v5106 = vpop.f32.mrb[0].mxu0
  %5107 = vmatprep.mubr.bf16.mxu0 0
  %5108 = vmatmul.mubr.bf16.gmra.mrb[0].mxu0 %v1895
  %v5109 = vpop.f32.mrb[0].mxu0
  %v5110 = vadd.f32 %v4849, %v5109
  %v5111 = vpop.f32.mrb[0].mxu0
  %v5112 = vpop.f32.mrb[0].mxu0
  %v5113 = vadd.f32 %v4849, %v5112
  %v5114 = vpop.f32.mrb[0].mxu0
  %5115 = vmatprep.mubr.bf16.mxu0 0
  %5116 = vmatmul.mubr.bf16.gmra.mrb[0].mxu0 %v1898
  %v5117 = vpop.f32.mrb[0].mxu0
  %v5118 = vadd.f32 %v4853, %v5117
  %v5119 = vpop.f32.mrb[0].mxu0
  %v5120 = vpop.f32.mrb[0].mxu0
  %v5121 = vadd.f32 %v4853, %v5120
  %v5122 = vpop.f32.mrb[0].mxu0
  %5123 = vmatprep.mubr.bf16.mxu0 0
  %5124 = vmatmul.mubr.bf16.gmra.mrb[0].mxu0 %v1901
  %v5125 = vpop.f32.mrb[0].mxu0
  %v5126 = vadd.f32 %v4853, %v5125
  %v5127 = vpop.f32.mrb[0].mxu0
  %v5128 = vpop.f32.mrb[0].mxu0
  %v5129 = vadd.f32 %v4853, %v5128
  %v5130 = vpop.f32.mrb[0].mxu0
  %5131 = vmatprep.mubr.bf16.mxu0 0
  %5132 = vmatmul.mubr.bf16.gmra.mrb[0].mxu0 %v1904
  %v5133 = vpop.f32.mrb[0].mxu0
  %v5134 = vadd.f32 %v4853, %v5133
  %v5135 = vpop.f32.mrb[0].mxu0
  %v5136 = vpop.f32.mrb[0].mxu0
  %v5137 = vadd.f32 %v4853, %v5136
  %v5138 = vpop.f32.mrb[0].mxu0
  %5139 = vmatprep.mubr.bf16.mxu0 0
  %5140 = vmatmul.mubr.bf16.gmra.mrb[0].mxu0 %v1907
  %v5141 = vpop.f32.mrb[0].mxu0
  %v5142 = vadd.f32 %v4853, %v5141
  %v5143 = vpop.f32.mrb[0].mxu0
  %v5144 = vpop.f32.mrb[0].mxu0
  %v5145 = vadd.f32 %v4853, %v5144
  %v5146 = vpop.f32.mrb[0].mxu0
  %5147 = vdwg.mxu0
  %v5149 = vsel %vm777, %v3900, 0
  %v5152 = vsel %vm777, %v3901, 0
  %v5155 = vsel %vm777, %v3902, 0
  %v5158 = vsel %vm777, %v3903, 0
  %v5161 = vsel %vm777, %v3904, 0
  %v5164 = vsel %vm777, %v3905, 0
  %v5167 = vsel %vm777, %v3906, 0
  %v5170 = vsel %vm777, %v3907, 0
  %v5173 = vsel %vm777, %v3908, 0
  %v5176 = vsel %vm777, %v3909, 0
  %v5179 = vsel %vm777, %v3910, 0
  %v5182 = vsel %vm777, %v3911, 0
  %v5185 = vsel %vm777, %v3912, 0
  %v5188 = vsel %vm777, %v3913, 0
  %v5191 = vsel %vm777, %v3914, 0
  %v5194 = vsel %vm777, %v3915, 0
  %v5197 = vsel %vm777, %v3916, 0
  %v5200 = vsel %vm777, %v3917, 0
  %v5203 = vsel %vm777, %v3918, 0
  %v5206 = vsel %vm777, %v3919, 0
  %v5209 = vsel %vm777, %v3920, 0
  %v5212 = vsel %vm777, %v3921, 0
  %v5215 = vsel %vm777, %v3922, 0
  %v5218 = vsel %vm777, %v3923, 0
  %v5221 = vsel %vm777, %v3924, 0
  %v5224 = vsel %vm777, %v3925, 0
  %v5227 = vsel %vm777, %v3926, 0
  %v5230 = vsel %vm777, %v3927, 0
  %v5233 = vsel %vm777, %v3928, 0
  %v5236 = vsel %vm777, %v3929, 0
  %v5239 = vsel %vm777, %v3930, 0
  %v5242 = vsel %vm777, %v3931, 0
  %5244 = vmatprep.subr.bf16.mxu0 0
  %5245 = vmatpush1.bf16.msra.mxu0 %v2295
  %5246 = vmatprep.subr.bf16.mxu0 0
  %5247 = vmatpush1.bf16.msra.mxu0 0
  %5248 = vmatprep.subr.bf16.mxu0 0
  %5249 = vmatpush1.bf16.msra.mxu0 0
  %5250 = vmatprep.subr.bf16.mxu0 0
  %5251 = vmatpush1.bf16.msra.mxu0 0
  %5252 = vmatprep.subr.bf16.mxu0 0
  %5253 = vmatpush1.bf16.msra.mxu0 0
  %5254 = vmatprep.subr.bf16.mxu0 0
  %5255 = vmatpush1.bf16.msra.mxu0 0
  %5256 = vmatprep.subr.bf16.mxu0 0
  %5257 = vmatpush1.bf16.msra.mxu0 0
  %5258 = vmatprep.subr.bf16.mxu0 0
  %5259 = vmatpush1.bf16.msra.mxu0 0
  %5260 = vmatprep.subr.bf16.mxu0 0
  %5261 = vmatpush1.bf16.msra.mxu0 0
  %5262 = vmatprep.subr.bf16.mxu0 0
  %5263 = vmatpush1.bf16.msra.mxu0 0
  %5264 = vmatprep.subr.bf16.mxu0 0
  %5265 = vmatpush1.bf16.msra.mxu0 0
  %5266 = vmatprep.subr.bf16.mxu0 0
  %5267 = vmatpush1.bf16.msra.mxu0 0
  %5268 = vmatprep.subr.bf16.mxu0 0
  %5269 = vmatpush1.bf16.msra.mxu0 0
  %5270 = vmatprep.subr.bf16.mxu0 0
  %5271 = vmatpush1.bf16.msra.mxu0 0
  %5272 = vmatprep.subr.bf16.mxu0 0
  %5273 = vmatpush1.bf16.msra.mxu0 0
  %5274 = vmatprep.subr.bf16.mxu0 0
  %5275 = vmatpush1.bf16.msra.mxu0 0
  %5276 = vmatprep.mubr.bf16.mxu0 0
  %5277 = vmatmul.mubr.bf16.gmra.mrb[0].mxu0 %v5149
  %v5278 = vpop.f32.mrb[0].mxu0
  %v5279 = vadd.f32 0.0, %v5278
  %v5280 = vpop.f32.mrb[0].mxu0
  %v5281 = vpop.f32.mrb[0].mxu0
  %v5282 = vadd.f32 0.0, %v5281
  %v5283 = vpop.f32.mrb[0].mxu0
  %5284 = vmatprep.mubr.bf16.mxu0 0
  %5285 = vmatmul.mubr.bf16.gmra.mrb[0].mxu0 %v5152
  %v5286 = vpop.f32.mrb[0].mxu0
  %v5287 = vadd.f32 0.0, %v5286
  %v5288 = vpop.f32.mrb[0].mxu0
  %v5289 = vpop.f32.mrb[0].mxu0
  %v5290 = vadd.f32 0.0, %v5289
  %v5291 = vpop.f32.mrb[0].mxu0
  %5292 = vmatprep.mubr.bf16.mxu0 0
  %5293 = vmatmul.mubr.bf16.gmra.mrb[0].mxu0 %v5155
  %v5294 = vpop.f32.mrb[0].mxu0
  %v5295 = vadd.f32 0.0, %v5294
  %v5296 = vpop.f32.mrb[0].mxu0
  %v5297 = vpop.f32.mrb[0].mxu0
  %v5298 = vadd.f32 0.0, %v5297
  %v5299 = vpop.f32.mrb[0].mxu0
  %5300 = vmatprep.mubr.bf16.mxu0 0
  %5301 = vmatmul.mubr.bf16.gmra.mrb[0].mxu0 %v5158
  %v5302 = vpop.f32.mrb[0].mxu0
  %v5303 = vadd.f32 0.0, %v5302
  %v5304 = vpop.f32.mrb[0].mxu0
  %v5305 = vpop.f32.mrb[0].mxu0
  %v5306 = vadd.f32 0.0, %v5305
  %v5307 = vpop.f32.mrb[0].mxu0
  %5308 = vmatprep.mubr.bf16.mxu0 0
  %5309 = vmatmul.mubr.bf16.gmra.mrb[0].mxu0 %v5161
  %v5310 = vpop.f32.mrb[0].mxu0
  %v5311 = vadd.f32 0.0, %v5310
  %v5312 = vpop.f32.mrb[0].mxu0
  %v5313 = vpop.f32.mrb[0].mxu0
  %v5314 = vadd.f32 0.0, %v5313
  %v5315 = vpop.f32.mrb[0].mxu0
  %5316 = vmatprep.mubr.bf16.mxu0 0
  %5317 = vmatmul.mubr.bf16.gmra.mrb[0].mxu0 %v5164
  %v5318 = vpop.f32.mrb[0].mxu0
  %v5319 = vadd.f32 0.0, %v5318
  %v5320 = vpop.f32.mrb[0].mxu0
  %v5321 = vpop.f32.mrb[0].mxu0
  %v5322 = vadd.f32 0.0, %v5321
  %v5323 = vpop.f32.mrb[0].mxu0
  %5324 = vmatprep.mubr.bf16.mxu0 0
  %5325 = vmatmul.mubr.bf16.gmra.mrb[0].mxu0 %v5167
  %v5326 = vpop.f32.mrb[0].mxu0
  %v5327 = vadd.f32 0.0, %v5326
  %v5328 = vpop.f32.mrb[0].mxu0
  %v5329 = vpop.f32.mrb[0].mxu0
  %v5330 = vadd.f32 0.0, %v5329
  %v5331 = vpop.f32.mrb[0].mxu0
  %5332 = vmatprep.mubr.bf16.mxu0 0
  %5333 = vmatmul.mubr.bf16.gmra.mrb[0].mxu0 %v5170
  %v5334 = vpop.f32.mrb[0].mxu0
  %v5335 = vadd.f32 0.0, %v5334
  %v5336 = vpop.f32.mrb[0].mxu0
  %v5337 = vpop.f32.mrb[0].mxu0
  %v5338 = vadd.f32 0.0, %v5337
  %v5339 = vpop.f32.mrb[0].mxu0
  %5340 = vmatprep.mubr.bf16.mxu0 0
  %5341 = vmatmul.mubr.bf16.gmra.mrb[0].mxu0 %v5173
  %v5342 = vpop.f32.mrb[0].mxu0
  %v5343 = vadd.f32 0.0, %v5342
  %v5344 = vpop.f32.mrb[0].mxu0
  %v5345 = vpop.f32.mrb[0].mxu0
  %v5346 = vadd.f32 0.0, %v5345
  %v5347 = vpop.f32.mrb[0].mxu0
  %5348 = vmatprep.mubr.bf16.mxu0 0
  %5349 = vmatmul.mubr.bf16.gmra.mrb[0].mxu0 %v5176
  %v5350 = vpop.f32.mrb[0].mxu0
  %v5351 = vadd.f32 0.0, %v5350
  %v5352 = vpop.f32.mrb[0].mxu0
  %v5353 = vpop.f32.mrb[0].mxu0
  %v5354 = vadd.f32 0.0, %v5353
  %v5355 = vpop.f32.mrb[0].mxu0
  %5356 = vmatprep.mubr.bf16.mxu0 0
  %5357 = vmatmul.mubr.bf16.gmra.mrb[0].mxu0 %v5179
  %v5358 = vpop.f32.mrb[0].mxu0
  %v5359 = vadd.f32 0.0, %v5358
  %v5360 = vpop.f32.mrb[0].mxu0
  %v5361 = vpop.f32.mrb[0].mxu0
  %v5362 = vadd.f32 0.0, %v5361
  %v5363 = vpop.f32.mrb[0].mxu0
  %5364 = vmatprep.mubr.bf16.mxu0 0
  %5365 = vmatmul.mubr.bf16.gmra.mrb[0].mxu0 %v5182
  %v5366 = vpop.f32.mrb[0].mxu0
  %v5367 = vadd.f32 0.0, %v5366
  %v5368 = vpop.f32.mrb[0].mxu0
  %v5369 = vpop.f32.mrb[0].mxu0
  %v5370 = vadd.f32 0.0, %v5369
  %v5371 = vpop.f32.mrb[0].mxu0
  %5372 = vmatprep.mubr.bf16.mxu0 0
  %5373 = vmatmul.mubr.bf16.gmra.mrb[0].mxu0 %v5185
  %v5374 = vpop.f32.mrb[0].mxu0
  %v5375 = vadd.f32 0.0, %v5374
  %v5376 = vpop.f32.mrb[0].mxu0
  %v5377 = vpop.f32.mrb[0].mxu0
  %v5378 = vadd.f32 0.0, %v5377
  %v5379 = vpop.f32.mrb[0].mxu0
  %5380 = vmatprep.mubr.bf16.mxu0 0
  %5381 = vmatmul.mubr.bf16.gmra.mrb[0].mxu0 %v5188
  %v5382 = vpop.f32.mrb[0].mxu0
  %v5383 = vadd.f32 0.0, %v5382
  %v5384 = vpop.f32.mrb[0].mxu0
  %v5385 = vpop.f32.mrb[0].mxu0
  %v5386 = vadd.f32 0.0, %v5385
  %v5387 = vpop.f32.mrb[0].mxu0
  %5388 = vmatprep.mubr.bf16.mxu0 0
  %5389 = vmatmul.mubr.bf16.gmra.mrb[0].mxu0 %v5191
  %v5390 = vpop.f32.mrb[0].mxu0
  %v5391 = vadd.f32 0.0, %v5390
  %v5392 = vpop.f32.mrb[0].mxu0
  %v5393 = vpop.f32.mrb[0].mxu0
  %v5394 = vadd.f32 0.0, %v5393
  %v5395 = vpop.f32.mrb[0].mxu0
  %5396 = vmatprep.mubr.bf16.mxu0 0
  %5397 = vmatmul.mubr.bf16.gmra.mrb[0].mxu0 %v5194
  %v5398 = vpop.f32.mrb[0].mxu0
  %v5399 = vadd.f32 0.0, %v5398
  %v5400 = vpop.f32.mrb[0].mxu0
  %v5401 = vpop.f32.mrb[0].mxu0
  %v5402 = vadd.f32 0.0, %v5401
  %v5403 = vpop.f32.mrb[0].mxu0
  %5404 = vmatprep.mubr.bf16.mxu0 0
  %5405 = vmatmul.mubr.bf16.gmra.mrb[0].mxu0 %v5197
  %v5406 = vpop.f32.mrb[0].mxu0
  %v5407 = vadd.f32 0.0, %v5406
  %v5408 = vpop.f32.mrb[0].mxu0
  %v5409 = vpop.f32.mrb[0].mxu0
  %v5410 = vadd.f32 0.0, %v5409
  %v5411 = vpop.f32.mrb[0].mxu0
  %5412 = vmatprep.mubr.bf16.mxu0 0
  %5413 = vmatmul.mubr.bf16.gmra.mrb[0].mxu0 %v5200
  %v5414 = vpop.f32.mrb[0].mxu0
  %v5415 = vadd.f32 0.0, %v5414
  %v5416 = vpop.f32.mrb[0].mxu0
  %v5417 = vpop.f32.mrb[0].mxu0
  %v5418 = vadd.f32 0.0, %v5417
  %v5419 = vpop.f32.mrb[0].mxu0
  %5420 = vmatprep.mubr.bf16.mxu0 0
  %5421 = vmatmul.mubr.bf16.gmra.mrb[0].mxu0 %v5203
  %v5422 = vpop.f32.mrb[0].mxu0
  %v5423 = vadd.f32 0.0, %v5422
  %v5424 = vpop.f32.mrb[0].mxu0
  %v5425 = vpop.f32.mrb[0].mxu0
  %v5426 = vadd.f32 0.0, %v5425
  %v5427 = vpop.f32.mrb[0].mxu0
  %5428 = vmatprep.mubr.bf16.mxu0 0
  %5429 = vmatmul.mubr.bf16.gmra.mrb[0].mxu0 %v5206
  %v5430 = vpop.f32.mrb[0].mxu0
  %v5431 = vadd.f32 0.0, %v5430
  %v5432 = vpop.f32.mrb[0].mxu0
  %v5433 = vpop.f32.mrb[0].mxu0
  %v5434 = vadd.f32 0.0, %v5433
  %v5435 = vpop.f32.mrb[0].mxu0
  %5436 = vmatprep.mubr.bf16.mxu0 0
  %5437 = vmatmul.mubr.bf16.gmra.mrb[0].mxu0 %v5209
  %v5438 = vpop.f32.mrb[0].mxu0
  %v5439 = vadd.f32 0.0, %v5438
  %v5440 = vpop.f32.mrb[0].mxu0
  %v5441 = vpop.f32.mrb[0].mxu0
  %v5442 = vadd.f32 0.0, %v5441
  %v5443 = vpop.f32.mrb[0].mxu0
  %5444 = vmatprep.mubr.bf16.mxu0 0
  %5445 = vmatmul.mubr.bf16.gmra.mrb[0].mxu0 %v5212
  %v5446 = vpop.f32.mrb[0].mxu0
  %v5447 = vadd.f32 0.0, %v5446
  %v5448 = vpop.f32.mrb[0].mxu0
  %v5449 = vpop.f32.mrb[0].mxu0
  %v5450 = vadd.f32 0.0, %v5449
  %v5451 = vpop.f32.mrb[0].mxu0
  %5452 = vmatprep.mubr.bf16.mxu0 0
  %5453 = vmatmul.mubr.bf16.gmra.mrb[0].mxu0 %v5215
  %v5454 = vpop.f32.mrb[0].mxu0
  %v5455 = vadd.f32 0.0, %v5454
  %v5456 = vpop.f32.mrb[0].mxu0
  %v5457 = vpop.f32.mrb[0].mxu0
  %v5458 = vadd.f32 0.0, %v5457
  %v5459 = vpop.f32.mrb[0].mxu0
  %5460 = vmatprep.mubr.bf16.mxu0 0
  %5461 = vmatmul.mubr.bf16.gmra.mrb[0].mxu0 %v5218
  %v5462 = vpop.f32.mrb[0].mxu0
  %v5463 = vadd.f32 0.0, %v5462
  %v5464 = vpop.f32.mrb[0].mxu0
  %v5465 = vpop.f32.mrb[0].mxu0
  %v5466 = vadd.f32 0.0, %v5465
  %v5467 = vpop.f32.mrb[0].mxu0
  %5468 = vmatprep.mubr.bf16.mxu0 0
  %5469 = vmatmul.mubr.bf16.gmra.mrb[0].mxu0 %v5221
  %v5470 = vpop.f32.mrb[0].mxu0
  %v5471 = vadd.f32 0.0, %v5470
  %v5472 = vpop.f32.mrb[0].mxu0
  %v5473 = vpop.f32.mrb[0].mxu0
  %v5474 = vadd.f32 0.0, %v5473
  %v5475 = vpop.f32.mrb[0].mxu0
  %5476 = vmatprep.mubr.bf16.mxu0 0
  %5477 = vmatmul.mubr.bf16.gmra.mrb[0].mxu0 %v5224
  %v5478 = vpop.f32.mrb[0].mxu0
  %v5479 = vadd.f32 0.0, %v5478
  %v5480 = vpop.f32.mrb[0].mxu0
  %v5481 = vpop.f32.mrb[0].mxu0
  %v5482 = vadd.f32 0.0, %v5481
  %v5483 = vpop.f32.mrb[0].mxu0
  %5484 = vmatprep.mubr.bf16.mxu0 0
  %5485 = vmatmul.mubr.bf16.gmra.mrb[0].mxu0 %v5227
  %v5486 = vpop.f32.mrb[0].mxu0
  %v5487 = vadd.f32 0.0, %v5486
  %v5488 = vpop.f32.mrb[0].mxu0
  %v5489 = vpop.f32.mrb[0].mxu0
  %v5490 = vadd.f32 0.0, %v5489
  %v5491 = vpop.f32.mrb[0].mxu0
  %5492 = vmatprep.mubr.bf16.mxu0 0
  %5493 = vmatmul.mubr.bf16.gmra.mrb[0].mxu0 %v5230
  %v5494 = vpop.f32.mrb[0].mxu0
  %v5495 = vadd.f32 0.0, %v5494
  %v5496 = vpop.f32.mrb[0].mxu0
  %v5497 = vpop.f32.mrb[0].mxu0
  %v5498 = vadd.f32 0.0, %v5497
  %v5499 = vpop.f32.mrb[0].mxu0
  %5500 = vmatprep.mubr.bf16.mxu0 0
  %5501 = vmatmul.mubr.bf16.gmra.mrb[0].mxu0 %v5233
  %v5502 = vpop.f32.mrb[0].mxu0
  %v5503 = vadd.f32 0.0, %v5502
  %v5504 = vpop.f32.mrb[0].mxu0
  %v5505 = vpop.f32.mrb[0].mxu0
  %v5506 = vadd.f32 0.0, %v5505
  %v5507 = vpop.f32.mrb[0].mxu0
  %5508 = vmatprep.mubr.bf16.mxu0 0
  %5509 = vmatmul.mubr.bf16.gmra.mrb[0].mxu0 %v5236
  %v5510 = vpop.f32.mrb[0].mxu0
  %v5511 = vadd.f32 0.0, %v5510
  %v5512 = vpop.f32.mrb[0].mxu0
  %v5513 = vpop.f32.mrb[0].mxu0
  %v5514 = vadd.f32 0.0, %v5513
  %v5515 = vpop.f32.mrb[0].mxu0
  %5516 = vmatprep.mubr.bf16.mxu0 0
  %5517 = vmatmul.mubr.bf16.gmra.mrb[0].mxu0 %v5239
  %v5518 = vpop.f32.mrb[0].mxu0
  %v5519 = vadd.f32 0.0, %v5518
  %v5520 = vpop.f32.mrb[0].mxu0
  %v5521 = vpop.f32.mrb[0].mxu0
  %v5522 = vadd.f32 0.0, %v5521
  %v5523 = vpop.f32.mrb[0].mxu0
  %5524 = vmatprep.mubr.bf16.mxu0 0
  %5525 = vmatmul.mubr.bf16.gmra.mrb[0].mxu0 %v5242
  %v5526 = vpop.f32.mrb[0].mxu0
  %v5527 = vadd.f32 0.0, %v5526
  %v5528 = vpop.f32.mrb[0].mxu0
  %v5529 = vpop.f32.mrb[0].mxu0
  %v5530 = vadd.f32 0.0, %v5529
  %v5531 = vpop.f32.mrb[0].mxu0
  %5532 = vdwg.mxu0
  %v5533 = vadd.f32 %v4894, %v5279
  %v5534 = vadd.f32 %v4897, %v5282
  %v5535 = vadd.f32 %v4902, %v5287
  %v5536 = vadd.f32 %v4905, %v5290
  %v5537 = vadd.f32 %v4910, %v5295
  %v5538 = vadd.f32 %v4913, %v5298
  %v5539 = vadd.f32 %v4918, %v5303
  %v5540 = vadd.f32 %v4921, %v5306
  %v5541 = vadd.f32 %v4926, %v5311
  %v5542 = vadd.f32 %v4929, %v5314
  %v5543 = vadd.f32 %v4934, %v5319
  %v5544 = vadd.f32 %v4937, %v5322
  %v5545 = vadd.f32 %v4942, %v5327
  %v5546 = vadd.f32 %v4945, %v5330
  %v5547 = vadd.f32 %v4950, %v5335
  %v5548 = vadd.f32 %v4953, %v5338
  %v5549 = vadd.f32 %v4958, %v5343
  %v5550 = vadd.f32 %v4961, %v5346
  %v5551 = vadd.f32 %v4966, %v5351
  %v5552 = vadd.f32 %v4969, %v5354
  %v5553 = vadd.f32 %v4974, %v5359
  %v5554 = vadd.f32 %v4977, %v5362
  %v5555 = vadd.f32 %v4982, %v5367
  %v5556 = vadd.f32 %v4985, %v5370
  %v5557 = vadd.f32 %v4990, %v5375
  %v5558 = vadd.f32 %v4993, %v5378
  %v5559 = vadd.f32 %v4998, %v5383
  %v5560 = vadd.f32 %v5001, %v5386
  %v5561 = vadd.f32 %v5006, %v5391
  %v5562 = vadd.f32 %v5009, %v5394
  %v5563 = vadd.f32 %v5014, %v5399
  %v5564 = vadd.f32 %v5017, %v5402
  %v5565 = vadd.f32 %v5022, %v5407
  %v5566 = vadd.f32 %v5025, %v5410
  %v5567 = vadd.f32 %v5030, %v5415
  %v5568 = vadd.f32 %v5033, %v5418
  %v5569 = vadd.f32 %v5038, %v5423
  %v5570 = vadd.f32 %v5041, %v5426
  %v5571 = vadd.f32 %v5046, %v5431
  %v5572 = vadd.f32 %v5049, %v5434
  %v5573 = vadd.f32 %v5054, %v5439
  %v5574 = vadd.f32 %v5057, %v5442
  %v5575 = vadd.f32 %v5062, %v5447
  %v5576 = vadd.f32 %v5065, %v5450
  %v5577 = vadd.f32 %v5070, %v5455
  %v5578 = vadd.f32 %v5073, %v5458
  %v5579 = vadd.f32 %v5078, %v5463
  %v5580 = vadd.f32 %v5081, %v5466
  %v5581 = vadd.f32 %v5086, %v5471
  %v5582 = vadd.f32 %v5089, %v5474
  %v5583 = vadd.f32 %v5094, %v5479
  %v5584 = vadd.f32 %v5097, %v5482
  %v5585 = vadd.f32 %v5102, %v5487
  %v5586 = vadd.f32 %v5105, %v5490
  %v5587 = vadd.f32 %v5110, %v5495
  %v5588 = vadd.f32 %v5113, %v5498
  %v5589 = vadd.f32 %v5118, %v5503
  %v5590 = vadd.f32 %v5121, %v5506
  %v5591 = vadd.f32 %v5126, %v5511
  %v5592 = vadd.f32 %v5129, %v5514
  %v5593 = vadd.f32 %v5134, %v5519
  %v5594 = vadd.f32 %v5137, %v5522
  %v5595 = vadd.f32 %v5142, %v5527
  %v5596 = vadd.f32 %v5145, %v5530
  %v5597 = vmax.f32 %v5533, 0.0
  %v5598 = vmax.f32 %v5534, 0.0
  %v5599 = vmax.f32 %v5535, 0.0
  %v5600 = vmax.f32 %v5536, 0.0
  %v5601 = vmax.f32 %v5537, 0.0
  %v5602 = vmax.f32 %v5538, 0.0
  %v5603 = vmax.f32 %v5539, 0.0
  %v5604 = vmax.f32 %v5540, 0.0
  %v5605 = vmax.f32 %v5541, 0.0
  %v5606 = vmax.f32 %v5542, 0.0
  %v5607 = vmax.f32 %v5543, 0.0
  %v5608 = vmax.f32 %v5544, 0.0
  %v5609 = vmax.f32 %v5545, 0.0
  %v5610 = vmax.f32 %v5546, 0.0
  %v5611 = vmax.f32 %v5547, 0.0
  %v5612 = vmax.f32 %v5548, 0.0
  %v5613 = vmax.f32 %v5549, 0.0
  %v5614 = vmax.f32 %v5550, 0.0
  %v5615 = vmax.f32 %v5551, 0.0
  %v5616 = vmax.f32 %v5552, 0.0
  %v5617 = vmax.f32 %v5553, 0.0
  %v5618 = vmax.f32 %v5554, 0.0
  %v5619 = vmax.f32 %v5555, 0.0
  %v5620 = vmax.f32 %v5556, 0.0
  %v5621 = vmax.f32 %v5557, 0.0
  %v5622 = vmax.f32 %v5558, 0.0
  %v5623 = vmax.f32 %v5559, 0.0
  %v5624 = vmax.f32 %v5560, 0.0
  %v5625 = vmax.f32 %v5561, 0.0
  %v5626 = vmax.f32 %v5562, 0.0
  %v5627 = vmax.f32 %v5563, 0.0
  %v5628 = vmax.f32 %v5564, 0.0
  %v5629 = vmax.f32 %v5565, 0.0
  %v5630 = vmax.f32 %v5566, 0.0
  %v5631 = vmax.f32 %v5567, 0.0
  %v5632 = vmax.f32 %v5568, 0.0
  %v5633 = vmax.f32 %v5569, 0.0
  %v5634 = vmax.f32 %v5570, 0.0
  %v5635 = vmax.f32 %v5571, 0.0
  %v5636 = vmax.f32 %v5572, 0.0
  %v5637 = vmax.f32 %v5573, 0.0
  %v5638 = vmax.f32 %v5574, 0.0
  %v5639 = vmax.f32 %v5575, 0.0
  %v5640 = vmax.f32 %v5576, 0.0
  %v5641 = vmax.f32 %v5577, 0.0
  %v5642 = vmax.f32 %v5578, 0.0
  %v5643 = vmax.f32 %v5579, 0.0
  %v5644 = vmax.f32 %v5580, 0.0
  %v5645 = vmax.f32 %v5581, 0.0
  %v5646 = vmax.f32 %v5582, 0.0
  %v5647 = vmax.f32 %v5583, 0.0
  %v5648 = vmax.f32 %v5584, 0.0
  %v5649 = vmax.f32 %v5585, 0.0
  %v5650 = vmax.f32 %v5586, 0.0
  %v5651 = vmax.f32 %v5587, 0.0
  %v5652 = vmax.f32 %v5588, 0.0
  %v5653 = vmax.f32 %v5589, 0.0
  %v5654 = vmax.f32 %v5590, 0.0
  %v5655 = vmax.f32 %v5591, 0.0
  %v5656 = vmax.f32 %v5592, 0.0
  %v5657 = vmax.f32 %v5593, 0.0
  %v5658 = vmax.f32 %v5594, 0.0
  %v5659 = vmax.f32 %v5595, 0.0
  %v5660 = vmax.f32 %v5596, 0.0
  %v5661 = vpack.c.bf16 %v5598, %v5597
  %v5662 = vpack.c.bf16 %v5600, %v5599
  %v5663 = vpack.c.bf16 %v5602, %v5601
  %v5664 = vpack.c.bf16 %v5604, %v5603
  %v5665 = vpack.c.bf16 %v5606, %v5605
  %v5666 = vpack.c.bf16 %v5608, %v5607
  %v5667 = vpack.c.bf16 %v5610, %v5609
  %v5668 = vpack.c.bf16 %v5612, %v5611
  %v5669 = vpack.c.bf16 %v5614, %v5613
  %v5670 = vpack.c.bf16 %v5616, %v5615
  %v5671 = vpack.c.bf16 %v5618, %v5617
  %v5672 = vpack.c.bf16 %v5620, %v5619
  %v5673 = vpack.c.bf16 %v5622, %v5621
  %v5674 = vpack.c.bf16 %v5624, %v5623
  %v5675 = vpack.c.bf16 %v5626, %v5625
  %v5676 = vpack.c.bf16 %v5628, %v5627
  %v5677 = vpack.c.bf16 %v5630, %v5629
  %v5678 = vpack.c.bf16 %v5632, %v5631
  %v5679 = vpack.c.bf16 %v5634, %v5633
  %v5680 = vpack.c.bf16 %v5636, %v5635
  %v5681 = vpack.c.bf16 %v5638, %v5637
  %v5682 = vpack.c.bf16 %v5640, %v5639
  %v5683 = vpack.c.bf16 %v5642, %v5641
  %v5684 = vpack.c.bf16 %v5644, %v5643
  %v5685 = vpack.c.bf16 %v5646, %v5645
  %v5686 = vpack.c.bf16 %v5648, %v5647
  %v5687 = vpack.c.bf16 %v5650, %v5649
  %v5688 = vpack.c.bf16 %v5652, %v5651
  %v5689 = vpack.c.bf16 %v5654, %v5653
  %v5690 = vpack.c.bf16 %v5656, %v5655
  %v5691 = vpack.c.bf16 %v5658, %v5657
  %v5692 = vpack.c.bf16 %v5660, %v5659
  %5693 = vmatprep.subr.bf16.mxu0 0
  %5694 = vmatpush1.bf16.msra.mxu0 %v2778
  %5695 = vmatprep.subr.bf16.mxu0 0
  %5696 = vmatpush1.bf16.msra.mxu0 %v2779
  %5697 = vmatprep.subr.bf16.mxu0 0
  %5698 = vmatpush1.bf16.msra.mxu0 %v2780
  %5699 = vmatprep.subr.bf16.mxu0 0
  %5700 = vmatpush1.bf16.msra.mxu0 %v2781
  %5701 = vmatprep.subr.bf16.mxu0 0
  %5702 = vmatpush1.bf16.msra.mxu0 %v2782
  %5703 = vmatprep.subr.bf16.mxu0 0
  %5704 = vmatpush1.bf16.msra.mxu0 %v2783
  %5705 = vmatprep.subr.bf16.mxu0 0
  %5706 = vmatpush1.bf16.msra.mxu0 %v2784
  %5707 = vmatprep.subr.bf16.mxu0 0
  %5708 = vmatpush1.bf16.msra.mxu0 %v2785
  %5709 = vmatprep.subr.bf16.mxu0 0
  %5710 = vmatpush1.bf16.msra.mxu0 0
  %5711 = vmatprep.subr.bf16.mxu0 0
  %5712 = vmatpush1.bf16.msra.mxu0 0
  %5713 = vmatprep.subr.bf16.mxu0 0
  %5714 = vmatpush1.bf16.msra.mxu0 0
  %5715 = vmatprep.subr.bf16.mxu0 0
  %5716 = vmatpush1.bf16.msra.mxu0 0
  %5717 = vmatprep.subr.bf16.mxu0 0
  %5718 = vmatpush1.bf16.msra.mxu0 0
  %5719 = vmatprep.subr.bf16.mxu0 0
  %5720 = vmatpush1.bf16.msra.mxu0 0
  %5721 = vmatprep.subr.bf16.mxu0 0
  %5722 = vmatpush1.bf16.msra.mxu0 0
  %5723 = vmatprep.subr.bf16.mxu0 0
  %5724 = vmatpush1.bf16.msra.mxu0 0
  %5725 = vmatprep.mubr.bf16.mxu0 0
  %5726 = vmatmul.mubr.bf16.gmra.mrb[0].mxu0 %v5661
  %v5727 = vpop.f32.mrb[0].mxu0
  %v5728 = vadd.f32 0.0, %v5727
  %v5729 = vpop.f32.mrb[0].mxu0
  %v5730 = vpop.f32.mrb[0].mxu0
  %v5731 = vadd.f32 0.0, %v5730
  %v5732 = vpop.f32.mrb[0].mxu0
  %5733 = vmatprep.mubr.bf16.mxu0 0
  %5734 = vmatmul.mubr.bf16.gmra.mrb[0].mxu0 %v5662
  %v5735 = vpop.f32.mrb[0].mxu0
  %v5736 = vadd.f32 0.0, %v5735
  %v5737 = vpop.f32.mrb[0].mxu0
  %v5738 = vpop.f32.mrb[0].mxu0
  %v5739 = vadd.f32 0.0, %v5738
  %v5740 = vpop.f32.mrb[0].mxu0
  %5741 = vmatprep.mubr.bf16.mxu0 0
  %5742 = vmatmul.mubr.bf16.gmra.mrb[0].mxu0 %v5663
  %v5743 = vpop.f32.mrb[0].mxu0
  %v5744 = vadd.f32 0.0, %v5743
  %v5745 = vpop.f32.mrb[0].mxu0
  %v5746 = vpop.f32.mrb[0].mxu0
  %v5747 = vadd.f32 0.0, %v5746
  %v5748 = vpop.f32.mrb[0].mxu0
  %5749 = vmatprep.mubr.bf16.mxu0 0
  %5750 = vmatmul.mubr.bf16.gmra.mrb[0].mxu0 %v5664
  %v5751 = vpop.f32.mrb[0].mxu0
  %v5752 = vadd.f32 0.0, %v5751
  %v5753 = vpop.f32.mrb[0].mxu0
  %v5754 = vpop.f32.mrb[0].mxu0
  %v5755 = vadd.f32 0.0, %v5754
  %v5756 = vpop.f32.mrb[0].mxu0
  %5757 = vmatprep.mubr.bf16.mxu0 0
  %5758 = vmatmul.mubr.bf16.gmra.mrb[0].mxu0 %v5665
  %v5759 = vpop.f32.mrb[0].mxu0
  %v5760 = vadd.f32 0.0, %v5759
  %v5761 = vpop.f32.mrb[0].mxu0
  %v5762 = vpop.f32.mrb[0].mxu0
  %v5763 = vadd.f32 0.0, %v5762
  %v5764 = vpop.f32.mrb[0].mxu0
  %5765 = vmatprep.mubr.bf16.mxu0 0
  %5766 = vmatmul.mubr.bf16.gmra.mrb[0].mxu0 %v5666
  %v5767 = vpop.f32.mrb[0].mxu0
  %v5768 = vadd.f32 0.0, %v5767
  %v5769 = vpop.f32.mrb[0].mxu0
  %v5770 = vpop.f32.mrb[0].mxu0
  %v5771 = vadd.f32 0.0, %v5770
  %v5772 = vpop.f32.mrb[0].mxu0
  %5773 = vmatprep.mubr.bf16.mxu0 0
  %5774 = vmatmul.mubr.bf16.gmra.mrb[0].mxu0 %v5667
  %v5775 = vpop.f32.mrb[0].mxu0
  %v5776 = vadd.f32 0.0, %v5775
  %v5777 = vpop.f32.mrb[0].mxu0
  %v5778 = vpop.f32.mrb[0].mxu0
  %v5779 = vadd.f32 0.0, %v5778
  %v5780 = vpop.f32.mrb[0].mxu0
  %5781 = vmatprep.mubr.bf16.mxu0 0
  %5782 = vmatmul.mubr.bf16.gmra.mrb[0].mxu0 %v5668
  %v5783 = vpop.f32.mrb[0].mxu0
  %v5784 = vadd.f32 0.0, %v5783
  %v5785 = vpop.f32.mrb[0].mxu0
  %v5786 = vpop.f32.mrb[0].mxu0
  %v5787 = vadd.f32 0.0, %v5786
  %v5788 = vpop.f32.mrb[0].mxu0
  %5789 = vmatprep.mubr.bf16.mxu0 0
  %5790 = vmatmul.mubr.bf16.gmra.mrb[0].mxu0 %v5669
  %v5791 = vpop.f32.mrb[0].mxu0
  %v5792 = vadd.f32 0.0, %v5791
  %v5793 = vpop.f32.mrb[0].mxu0
  %v5794 = vpop.f32.mrb[0].mxu0
  %v5795 = vadd.f32 0.0, %v5794
  %v5796 = vpop.f32.mrb[0].mxu0
  %5797 = vmatprep.mubr.bf16.mxu0 0
  %5798 = vmatmul.mubr.bf16.gmra.mrb[0].mxu0 %v5670
  %v5799 = vpop.f32.mrb[0].mxu0
  %v5800 = vadd.f32 0.0, %v5799
  %v5801 = vpop.f32.mrb[0].mxu0
  %v5802 = vpop.f32.mrb[0].mxu0
  %v5803 = vadd.f32 0.0, %v5802
  %v5804 = vpop.f32.mrb[0].mxu0
  %5805 = vmatprep.mubr.bf16.mxu0 0
  %5806 = vmatmul.mubr.bf16.gmra.mrb[0].mxu0 %v5671
  %v5807 = vpop.f32.mrb[0].mxu0
  %v5808 = vadd.f32 0.0, %v5807
  %v5809 = vpop.f32.mrb[0].mxu0
  %v5810 = vpop.f32.mrb[0].mxu0
  %v5811 = vadd.f32 0.0, %v5810
  %v5812 = vpop.f32.mrb[0].mxu0
  %5813 = vmatprep.mubr.bf16.mxu0 0
  %5814 = vmatmul.mubr.bf16.gmra.mrb[0].mxu0 %v5672
  %v5815 = vpop.f32.mrb[0].mxu0
  %v5816 = vadd.f32 0.0, %v5815
  %v5817 = vpop.f32.mrb[0].mxu0
  %v5818 = vpop.f32.mrb[0].mxu0
  %v5819 = vadd.f32 0.0, %v5818
  %v5820 = vpop.f32.mrb[0].mxu0
  %5821 = vmatprep.mubr.bf16.mxu0 0
  %5822 = vmatmul.mubr.bf16.gmra.mrb[0].mxu0 %v5673
  %v5823 = vpop.f32.mrb[0].mxu0
  %v5824 = vadd.f32 0.0, %v5823
  %v5825 = vpop.f32.mrb[0].mxu0
  %v5826 = vpop.f32.mrb[0].mxu0
  %v5827 = vadd.f32 0.0, %v5826
  %v5828 = vpop.f32.mrb[0].mxu0
  %5829 = vmatprep.mubr.bf16.mxu0 0
  %5830 = vmatmul.mubr.bf16.gmra.mrb[0].mxu0 %v5674
  %v5831 = vpop.f32.mrb[0].mxu0
  %v5832 = vadd.f32 0.0, %v5831
  %v5833 = vpop.f32.mrb[0].mxu0
  %v5834 = vpop.f32.mrb[0].mxu0
  %v5835 = vadd.f32 0.0, %v5834
  %v5836 = vpop.f32.mrb[0].mxu0
  %5837 = vmatprep.mubr.bf16.mxu0 0
  %5838 = vmatmul.mubr.bf16.gmra.mrb[0].mxu0 %v5675
  %v5839 = vpop.f32.mrb[0].mxu0
  %v5840 = vadd.f32 0.0, %v5839
  %v5841 = vpop.f32.mrb[0].mxu0
  %v5842 = vpop.f32.mrb[0].mxu0
  %v5843 = vadd.f32 0.0, %v5842
  %v5844 = vpop.f32.mrb[0].mxu0
  %5845 = vmatprep.mubr.bf16.mxu0 0
  %5846 = vmatmul.mubr.bf16.gmra.mrb[0].mxu0 %v5676
  %v5847 = vpop.f32.mrb[0].mxu0
  %v5848 = vadd.f32 0.0, %v5847
  %v5849 = vpop.f32.mrb[0].mxu0
  %v5850 = vpop.f32.mrb[0].mxu0
  %v5851 = vadd.f32 0.0, %v5850
  %v5852 = vpop.f32.mrb[0].mxu0
  %5853 = vmatprep.mubr.bf16.mxu0 0
  %5854 = vmatmul.mubr.bf16.gmra.mrb[0].mxu0 %v5677
  %v5855 = vpop.f32.mrb[0].mxu0
  %v5856 = vadd.f32 0.0, %v5855
  %v5857 = vpop.f32.mrb[0].mxu0
  %v5858 = vpop.f32.mrb[0].mxu0
  %v5859 = vadd.f32 0.0, %v5858
  %v5860 = vpop.f32.mrb[0].mxu0
  %5861 = vmatprep.mubr.bf16.mxu0 0
  %5862 = vmatmul.mubr.bf16.gmra.mrb[0].mxu0 %v5678
  %v5863 = vpop.f32.mrb[0].mxu0
  %v5864 = vadd.f32 0.0, %v5863
  %v5865 = vpop.f32.mrb[0].mxu0
  %v5866 = vpop.f32.mrb[0].mxu0
  %v5867 = vadd.f32 0.0, %v5866
  %v5868 = vpop.f32.mrb[0].mxu0
  %5869 = vmatprep.mubr.bf16.mxu0 0
  %5870 = vmatmul.mubr.bf16.gmra.mrb[0].mxu0 %v5679
  %v5871 = vpop.f32.mrb[0].mxu0
  %v5872 = vadd.f32 0.0, %v5871
  %v5873 = vpop.f32.mrb[0].mxu0
  %v5874 = vpop.f32.mrb[0].mxu0
  %v5875 = vadd.f32 0.0, %v5874
  %v5876 = vpop.f32.mrb[0].mxu0
  %5877 = vmatprep.mubr.bf16.mxu0 0
  %5878 = vmatmul.mubr.bf16.gmra.mrb[0].mxu0 %v5680
  %v5879 = vpop.f32.mrb[0].mxu0
  %v5880 = vadd.f32 0.0, %v5879
  %v5881 = vpop.f32.mrb[0].mxu0
  %v5882 = vpop.f32.mrb[0].mxu0
  %v5883 = vadd.f32 0.0, %v5882
  %v5884 = vpop.f32.mrb[0].mxu0
  %5885 = vmatprep.mubr.bf16.mxu0 0
  %5886 = vmatmul.mubr.bf16.gmra.mrb[0].mxu0 %v5681
  %v5887 = vpop.f32.mrb[0].mxu0
  %v5888 = vadd.f32 0.0, %v5887
  %v5889 = vpop.f32.mrb[0].mxu0
  %v5890 = vpop.f32.mrb[0].mxu0
  %v5891 = vadd.f32 0.0, %v5890
  %v5892 = vpop.f32.mrb[0].mxu0
  %5893 = vmatprep.mubr.bf16.mxu0 0
  %5894 = vmatmul.mubr.bf16.gmra.mrb[0].mxu0 %v5682
  %v5895 = vpop.f32.mrb[0].mxu0
  %v5896 = vadd.f32 0.0, %v5895
  %v5897 = vpop.f32.mrb[0].mxu0
  %v5898 = vpop.f32.mrb[0].mxu0
  %v5899 = vadd.f32 0.0, %v5898
  %v5900 = vpop.f32.mrb[0].mxu0
  %5901 = vmatprep.mubr.bf16.mxu0 0
  %5902 = vmatmul.mubr.bf16.gmra.mrb[0].mxu0 %v5683
  %v5903 = vpop.f32.mrb[0].mxu0
  %v5904 = vadd.f32 0.0, %v5903
  %v5905 = vpop.f32.mrb[0].mxu0
  %v5906 = vpop.f32.mrb[0].mxu0
  %v5907 = vadd.f32 0.0, %v5906
  %v5908 = vpop.f32.mrb[0].mxu0
  %5909 = vmatprep.mubr.bf16.mxu0 0
  %5910 = vmatmul.mubr.bf16.gmra.mrb[0].mxu0 %v5684
  %v5911 = vpop.f32.mrb[0].mxu0
  %v5912 = vadd.f32 0.0, %v5911
  %v5913 = vpop.f32.mrb[0].mxu0
  %v5914 = vpop.f32.mrb[0].mxu0
  %v5915 = vadd.f32 0.0, %v5914
  %v5916 = vpop.f32.mrb[0].mxu0
  %5917 = vmatprep.mubr.bf16.mxu0 0
  %5918 = vmatmul.mubr.bf16.gmra.mrb[0].mxu0 %v5685
  %v5919 = vpop.f32.mrb[0].mxu0
  %v5920 = vadd.f32 0.0, %v5919
  %v5921 = vpop.f32.mrb[0].mxu0
  %v5922 = vpop.f32.mrb[0].mxu0
  %v5923 = vadd.f32 0.0, %v5922
  %v5924 = vpop.f32.mrb[0].mxu0
  %5925 = vmatprep.mubr.bf16.mxu0 0
  %5926 = vmatmul.mubr.bf16.gmra.mrb[0].mxu0 %v5686
  %v5927 = vpop.f32.mrb[0].mxu0
  %v5928 = vadd.f32 0.0, %v5927
  %v5929 = vpop.f32.mrb[0].mxu0
  %v5930 = vpop.f32.mrb[0].mxu0
  %v5931 = vadd.f32 0.0, %v5930
  %v5932 = vpop.f32.mrb[0].mxu0
  %5933 = vmatprep.mubr.bf16.mxu0 0
  %5934 = vmatmul.mubr.bf16.gmra.mrb[0].mxu0 %v5687
  %v5935 = vpop.f32.mrb[0].mxu0
  %v5936 = vadd.f32 0.0, %v5935
  %v5937 = vpop.f32.mrb[0].mxu0
  %v5938 = vpop.f32.mrb[0].mxu0
  %v5939 = vadd.f32 0.0, %v5938
  %v5940 = vpop.f32.mrb[0].mxu0
  %5941 = vmatprep.mubr.bf16.mxu0 0
  %5942 = vmatmul.mubr.bf16.gmra.mrb[0].mxu0 %v5688
  %v5943 = vpop.f32.mrb[0].mxu0
  %v5944 = vadd.f32 0.0, %v5943
  %v5945 = vpop.f32.mrb[0].mxu0
  %v5946 = vpop.f32.mrb[0].mxu0
  %v5947 = vadd.f32 0.0, %v5946
  %v5948 = vpop.f32.mrb[0].mxu0
  %5949 = vmatprep.mubr.bf16.mxu0 0
  %5950 = vmatmul.mubr.bf16.gmra.mrb[0].mxu0 %v5689
  %v5951 = vpop.f32.mrb[0].mxu0
  %v5952 = vadd.f32 0.0, %v5951
  %v5953 = vpop.f32.mrb[0].mxu0
  %v5954 = vpop.f32.mrb[0].mxu0
  %v5955 = vadd.f32 0.0, %v5954
  %v5956 = vpop.f32.mrb[0].mxu0
  %5957 = vmatprep.mubr.bf16.mxu0 0
  %5958 = vmatmul.mubr.bf16.gmra.mrb[0].mxu0 %v5690
  %v5959 = vpop.f32.mrb[0].mxu0
  %v5960 = vadd.f32 0.0, %v5959
  %v5961 = vpop.f32.mrb[0].mxu0
  %v5962 = vpop.f32.mrb[0].mxu0
  %v5963 = vadd.f32 0.0, %v5962
  %v5964 = vpop.f32.mrb[0].mxu0
  %5965 = vmatprep.mubr.bf16.mxu0 0
  %5966 = vmatmul.mubr.bf16.gmra.mrb[0].mxu0 %v5691
  %v5967 = vpop.f32.mrb[0].mxu0
  %v5968 = vadd.f32 0.0, %v5967
  %v5969 = vpop.f32.mrb[0].mxu0
  %v5970 = vpop.f32.mrb[0].mxu0
  %v5971 = vadd.f32 0.0, %v5970
  %v5972 = vpop.f32.mrb[0].mxu0
  %5973 = vmatprep.mubr.bf16.mxu0 0
  %5974 = vmatmul.mubr.bf16.gmra.mrb[0].mxu0 %v5692
  %v5975 = vpop.f32.mrb[0].mxu0
  %v5976 = vadd.f32 0.0, %v5975
  %v5977 = vpop.f32.mrb[0].mxu0
  %v5978 = vpop.f32.mrb[0].mxu0
  %v5979 = vadd.f32 0.0, %v5978
  %v5980 = vpop.f32.mrb[0].mxu0
  %5981 = vdwg.mxu0
  %v5982 = vmax.f32 %v5728, 0.0
  %v5983 = vmax.f32 %v5731, 0.0
  %v5984 = vmax.f32 %v5736, 0.0
  %v5985 = vmax.f32 %v5739, 0.0
  %v5986 = vmax.f32 %v5744, 0.0
  %v5987 = vmax.f32 %v5747, 0.0
  %v5988 = vmax.f32 %v5752, 0.0
  %v5989 = vmax.f32 %v5755, 0.0
  %v5990 = vmax.f32 %v5760, 0.0
  %v5991 = vmax.f32 %v5763, 0.0
  %v5992 = vmax.f32 %v5768, 0.0
  %v5993 = vmax.f32 %v5771, 0.0
  %v5994 = vmax.f32 %v5776, 0.0
  %v5995 = vmax.f32 %v5779, 0.0
  %v5996 = vmax.f32 %v5784, 0.0
  %v5997 = vmax.f32 %v5787, 0.0
  %v5998 = vmax.f32 %v5792, 0.0
  %v5999 = vmax.f32 %v5795, 0.0
  %v6000 = vmax.f32 %v5800, 0.0
  %v6001 = vmax.f32 %v5803, 0.0
  %v6002 = vmax.f32 %v5808, 0.0
  %v6003 = vmax.f32 %v5811, 0.0
  %v6004 = vmax.f32 %v5816, 0.0
  %v6005 = vmax.f32 %v5819, 0.0
  %v6006 = vmax.f32 %v5824, 0.0
  %v6007 = vmax.f32 %v5827, 0.0
  %v6008 = vmax.f32 %v5832, 0.0
  %v6009 = vmax.f32 %v5835, 0.0
  %v6010 = vmax.f32 %v5840, 0.0
  %v6011 = vmax.f32 %v5843, 0.0
  %v6012 = vmax.f32 %v5848, 0.0
  %v6013 = vmax.f32 %v5851, 0.0
  %v6014 = vmax.f32 %v5856, 0.0
  %v6015 = vmax.f32 %v5859, 0.0
  %v6016 = vmax.f32 %v5864, 0.0
  %v6017 = vmax.f32 %v5867, 0.0
  %v6018 = vmax.f32 %v5872, 0.0
  %v6019 = vmax.f32 %v5875, 0.0
  %v6020 = vmax.f32 %v5880, 0.0
  %v6021 = vmax.f32 %v5883, 0.0
  %v6022 = vmax.f32 %v5888, 0.0
  %v6023 = vmax.f32 %v5891, 0.0
  %v6024 = vmax.f32 %v5896, 0.0
  %v6025 = vmax.f32 %v5899, 0.0
  %v6026 = vmax.f32 %v5904, 0.0
  %v6027 = vmax.f32 %v5907, 0.0
  %v6028 = vmax.f32 %v5912, 0.0
  %v6029 = vmax.f32 %v5915, 0.0
  %v6030 = vmax.f32 %v5920, 0.0
  %v6031 = vmax.f32 %v5923, 0.0
  %v6032 = vmax.f32 %v5928, 0.0
  %v6033 = vmax.f32 %v5931, 0.0
  %v6034 = vmax.f32 %v5936, 0.0
  %v6035 = vmax.f32 %v5939, 0.0
  %v6036 = vmax.f32 %v5944, 0.0
  %v6037 = vmax.f32 %v5947, 0.0
  %v6038 = vmax.f32 %v5952, 0.0
  %v6039 = vmax.f32 %v5955, 0.0
  %v6040 = vmax.f32 %v5960, 0.0
  %v6041 = vmax.f32 %v5963, 0.0
  %v6042 = vmax.f32 %v5968, 0.0
  %v6043 = vmax.f32 %v5971, 0.0
  %v6044 = vmax.f32 %v5976, 0.0
  %v6045 = vmax.f32 %v5979, 0.0
  %v6046 = vpack.c.bf16 %v5983, %v5982
  %v6047 = vpack.c.bf16 %v5985, %v5984
  %v6048 = vpack.c.bf16 %v5987, %v5986
  %v6049 = vpack.c.bf16 %v5989, %v5988
  %v6050 = vpack.c.bf16 %v5991, %v5990
  %v6051 = vpack.c.bf16 %v5993, %v5992
  %v6052 = vpack.c.bf16 %v5995, %v5994
  %v6053 = vpack.c.bf16 %v5997, %v5996
  %v6054 = vpack.c.bf16 %v5999, %v5998
  %v6055 = vpack.c.bf16 %v6001, %v6000
  %v6056 = vpack.c.bf16 %v6003, %v6002
  %v6057 = vpack.c.bf16 %v6005, %v6004
  %v6058 = vpack.c.bf16 %v6007, %v6006
  %v6059 = vpack.c.bf16 %v6009, %v6008
  %v6060 = vpack.c.bf16 %v6011, %v6010
  %v6061 = vpack.c.bf16 %v6013, %v6012
  %v6062 = vpack.c.bf16 %v6015, %v6014
  %v6063 = vpack.c.bf16 %v6017, %v6016
  %v6064 = vpack.c.bf16 %v6019, %v6018
  %v6065 = vpack.c.bf16 %v6021, %v6020
  %v6066 = vpack.c.bf16 %v6023, %v6022
  %v6067 = vpack.c.bf16 %v6025, %v6024
  %v6068 = vpack.c.bf16 %v6027, %v6026
  %v6069 = vpack.c.bf16 %v6029, %v6028
  %v6070 = vpack.c.bf16 %v6031, %v6030
  %v6071 = vpack.c.bf16 %v6033, %v6032
  %v6072 = vpack.c.bf16 %v6035, %v6034
  %v6073 = vpack.c.bf16 %v6037, %v6036
  %v6074 = vpack.c.bf16 %v6039, %v6038
  %v6075 = vpack.c.bf16 %v6041, %v6040
  %v6076 = vpack.c.bf16 %v6043, %v6042
  %v6077 = vpack.c.bf16 %v6045, %v6044
  %6078 = vmatprep.subr.bf16.mxu0 0
  %6079 = vmatpush1.bf16.msra.mxu0 %v3211
  %6080 = vmatprep.subr.bf16.mxu0 0
  %6081 = vmatpush1.bf16.msra.mxu0 %v3212
  %6082 = vmatprep.subr.bf16.mxu0 0
  %6083 = vmatpush1.bf16.msra.mxu0 %v3213
  %6084 = vmatprep.subr.bf16.mxu0 0
  %6085 = vmatpush1.bf16.msra.mxu0 %v3214
  %6086 = vmatprep.subr.bf16.mxu0 0
  %6087 = vmatpush1.bf16.msra.mxu0 %v3215
  %6088 = vmatprep.subr.bf16.mxu0 0
  %6089 = vmatpush1.bf16.msra.mxu0 %v3216
  %6090 = vmatprep.subr.bf16.mxu0 0
  %6091 = vmatpush1.bf16.msra.mxu0 %v3217
  %6092 = vmatprep.subr.bf16.mxu0 0
  %6093 = vmatpush1.bf16.msra.mxu0 %v3218
  %6094 = vmatprep.subr.bf16.mxu0 0
  %6095 = vmatpush1.bf16.msra.mxu0 0
  %6096 = vmatprep.subr.bf16.mxu0 0
  %6097 = vmatpush1.bf16.msra.mxu0 0
  %6098 = vmatprep.subr.bf16.mxu0 0
  %6099 = vmatpush1.bf16.msra.mxu0 0
  %6100 = vmatprep.subr.bf16.mxu0 0
  %6101 = vmatpush1.bf16.msra.mxu0 0
  %6102 = vmatprep.subr.bf16.mxu0 0
  %6103 = vmatpush1.bf16.msra.mxu0 0
  %6104 = vmatprep.subr.bf16.mxu0 0
  %6105 = vmatpush1.bf16.msra.mxu0 0
  %6106 = vmatprep.subr.bf16.mxu0 0
  %6107 = vmatpush1.bf16.msra.mxu0 0
  %6108 = vmatprep.subr.bf16.mxu0 0
  %6109 = vmatpush1.bf16.msra.mxu0 0
  %6110 = vmatprep.mubr.bf16.mxu0 0
  %6111 = vmatmul.mubr.bf16.gmra.mrb[0].mxu0 %v6046
  %v6112 = vpop.f32.mrb[0].mxu0
  %v6113 = vadd.f32 0.0, %v6112
  %v6114 = vpop.f32.mrb[0].mxu0
  %v6115 = vpop.f32.mrb[0].mxu0
  %v6116 = vadd.f32 0.0, %v6115
  %v6117 = vpop.f32.mrb[0].mxu0
  %6118 = vmatprep.mubr.bf16.mxu0 0
  %6119 = vmatmul.mubr.bf16.gmra.mrb[0].mxu0 %v6047
  %v6120 = vpop.f32.mrb[0].mxu0
  %v6121 = vadd.f32 0.0, %v6120
  %v6122 = vpop.f32.mrb[0].mxu0
  %v6123 = vpop.f32.mrb[0].mxu0
  %v6124 = vadd.f32 0.0, %v6123
  %v6125 = vpop.f32.mrb[0].mxu0
  %6126 = vmatprep.mubr.bf16.mxu0 0
  %6127 = vmatmul.mubr.bf16.gmra.mrb[0].mxu0 %v6048
  %v6128 = vpop.f32.mrb[0].mxu0
  %v6129 = vadd.f32 0.0, %v6128
  %v6130 = vpop.f32.mrb[0].mxu0
  %v6131 = vpop.f32.mrb[0].mxu0
  %v6132 = vadd.f32 0.0, %v6131
  %v6133 = vpop.f32.mrb[0].mxu0
  %6134 = vmatprep.mubr.bf16.mxu0 0
  %6135 = vmatmul.mubr.bf16.gmra.mrb[0].mxu0 %v6049
  %v6136 = vpop.f32.mrb[0].mxu0
  %v6137 = vadd.f32 0.0, %v6136
  %v6138 = vpop.f32.mrb[0].mxu0
  %v6139 = vpop.f32.mrb[0].mxu0
  %v6140 = vadd.f32 0.0, %v6139
  %v6141 = vpop.f32.mrb[0].mxu0
  %6142 = vmatprep.mubr.bf16.mxu0 0
  %6143 = vmatmul.mubr.bf16.gmra.mrb[0].mxu0 %v6050
  %v6144 = vpop.f32.mrb[0].mxu0
  %v6145 = vadd.f32 0.0, %v6144
  %v6146 = vpop.f32.mrb[0].mxu0
  %v6147 = vpop.f32.mrb[0].mxu0
  %v6148 = vadd.f32 0.0, %v6147
  %v6149 = vpop.f32.mrb[0].mxu0
  %6150 = vmatprep.mubr.bf16.mxu0 0
  %6151 = vmatmul.mubr.bf16.gmra.mrb[0].mxu0 %v6051
  %v6152 = vpop.f32.mrb[0].mxu0
  %v6153 = vadd.f32 0.0, %v6152
  %v6154 = vpop.f32.mrb[0].mxu0
  %v6155 = vpop.f32.mrb[0].mxu0
  %v6156 = vadd.f32 0.0, %v6155
  %v6157 = vpop.f32.mrb[0].mxu0
  %6158 = vmatprep.mubr.bf16.mxu0 0
  %6159 = vmatmul.mubr.bf16.gmra.mrb[0].mxu0 %v6052
  %v6160 = vpop.f32.mrb[0].mxu0
  %v6161 = vadd.f32 0.0, %v6160
  %v6162 = vpop.f32.mrb[0].mxu0
  %v6163 = vpop.f32.mrb[0].mxu0
  %v6164 = vadd.f32 0.0, %v6163
  %v6165 = vpop.f32.mrb[0].mxu0
  %6166 = vmatprep.mubr.bf16.mxu0 0
  %6167 = vmatmul.mubr.bf16.gmra.mrb[0].mxu0 %v6053
  %v6168 = vpop.f32.mrb[0].mxu0
  %v6169 = vadd.f32 0.0, %v6168
  %v6170 = vpop.f32.mrb[0].mxu0
  %v6171 = vpop.f32.mrb[0].mxu0
  %v6172 = vadd.f32 0.0, %v6171
  %v6173 = vpop.f32.mrb[0].mxu0
  %6174 = vmatprep.mubr.bf16.mxu0 0
  %6175 = vmatmul.mubr.bf16.gmra.mrb[0].mxu0 %v6054
  %v6176 = vpop.f32.mrb[0].mxu0
  %v6177 = vadd.f32 0.0, %v6176
  %v6178 = vpop.f32.mrb[0].mxu0
  %v6179 = vpop.f32.mrb[0].mxu0
  %v6180 = vadd.f32 0.0, %v6179
  %v6181 = vpop.f32.mrb[0].mxu0
  %6182 = vmatprep.mubr.bf16.mxu0 0
  %6183 = vmatmul.mubr.bf16.gmra.mrb[0].mxu0 %v6055
  %v6184 = vpop.f32.mrb[0].mxu0
  %v6185 = vadd.f32 0.0, %v6184
  %v6186 = vpop.f32.mrb[0].mxu0
  %v6187 = vpop.f32.mrb[0].mxu0
  %v6188 = vadd.f32 0.0, %v6187
  %v6189 = vpop.f32.mrb[0].mxu0
  %6190 = vmatprep.mubr.bf16.mxu0 0
  %6191 = vmatmul.mubr.bf16.gmra.mrb[0].mxu0 %v6056
  %v6192 = vpop.f32.mrb[0].mxu0
  %v6193 = vadd.f32 0.0, %v6192
  %v6194 = vpop.f32.mrb[0].mxu0
  %v6195 = vpop.f32.mrb[0].mxu0
  %v6196 = vadd.f32 0.0, %v6195
  %v6197 = vpop.f32.mrb[0].mxu0
  %6198 = vmatprep.mubr.bf16.mxu0 0
  %6199 = vmatmul.mubr.bf16.gmra.mrb[0].mxu0 %v6057
  %v6200 = vpop.f32.mrb[0].mxu0
  %v6201 = vadd.f32 0.0, %v6200
  %v6202 = vpop.f32.mrb[0].mxu0
  %v6203 = vpop.f32.mrb[0].mxu0
  %v6204 = vadd.f32 0.0, %v6203
  %v6205 = vpop.f32.mrb[0].mxu0
  %6206 = vmatprep.mubr.bf16.mxu0 0
  %6207 = vmatmul.mubr.bf16.gmra.mrb[0].mxu0 %v6058
  %v6208 = vpop.f32.mrb[0].mxu0
  %v6209 = vadd.f32 0.0, %v6208
  %v6210 = vpop.f32.mrb[0].mxu0
  %v6211 = vpop.f32.mrb[0].mxu0
  %v6212 = vadd.f32 0.0, %v6211
  %v6213 = vpop.f32.mrb[0].mxu0
  %6214 = vmatprep.mubr.bf16.mxu0 0
  %6215 = vmatmul.mubr.bf16.gmra.mrb[0].mxu0 %v6059
  %v6216 = vpop.f32.mrb[0].mxu0
  %v6217 = vadd.f32 0.0, %v6216
  %v6218 = vpop.f32.mrb[0].mxu0
  %v6219 = vpop.f32.mrb[0].mxu0
  %v6220 = vadd.f32 0.0, %v6219
  %v6221 = vpop.f32.mrb[0].mxu0
  %6222 = vmatprep.mubr.bf16.mxu0 0
  %6223 = vmatmul.mubr.bf16.gmra.mrb[0].mxu0 %v6060
  %v6224 = vpop.f32.mrb[0].mxu0
  %v6225 = vadd.f32 0.0, %v6224
  %v6226 = vpop.f32.mrb[0].mxu0
  %v6227 = vpop.f32.mrb[0].mxu0
  %v6228 = vadd.f32 0.0, %v6227
  %v6229 = vpop.f32.mrb[0].mxu0
  %6230 = vmatprep.mubr.bf16.mxu0 0
  %6231 = vmatmul.mubr.bf16.gmra.mrb[0].mxu0 %v6061
  %v6232 = vpop.f32.mrb[0].mxu0
  %v6233 = vadd.f32 0.0, %v6232
  %v6234 = vpop.f32.mrb[0].mxu0
  %v6235 = vpop.f32.mrb[0].mxu0
  %v6236 = vadd.f32 0.0, %v6235
  %v6237 = vpop.f32.mrb[0].mxu0
  %6238 = vmatprep.mubr.bf16.mxu0 0
  %6239 = vmatmul.mubr.bf16.gmra.mrb[0].mxu0 %v6062
  %v6240 = vpop.f32.mrb[0].mxu0
  %v6241 = vadd.f32 0.0, %v6240
  %v6242 = vpop.f32.mrb[0].mxu0
  %v6243 = vpop.f32.mrb[0].mxu0
  %v6244 = vadd.f32 0.0, %v6243
  %v6245 = vpop.f32.mrb[0].mxu0
  %6246 = vmatprep.mubr.bf16.mxu0 0
  %6247 = vmatmul.mubr.bf16.gmra.mrb[0].mxu0 %v6063
  %v6248 = vpop.f32.mrb[0].mxu0
  %v6249 = vadd.f32 0.0, %v6248
  %v6250 = vpop.f32.mrb[0].mxu0
  %v6251 = vpop.f32.mrb[0].mxu0
  %v6252 = vadd.f32 0.0, %v6251
  %v6253 = vpop.f32.mrb[0].mxu0
  %6254 = vmatprep.mubr.bf16.mxu0 0
  %6255 = vmatmul.mubr.bf16.gmra.mrb[0].mxu0 %v6064
  %v6256 = vpop.f32.mrb[0].mxu0
  %v6257 = vadd.f32 0.0, %v6256
  %v6258 = vpop.f32.mrb[0].mxu0
  %v6259 = vpop.f32.mrb[0].mxu0
  %v6260 = vadd.f32 0.0, %v6259
  %v6261 = vpop.f32.mrb[0].mxu0
  %6262 = vmatprep.mubr.bf16.mxu0 0
  %6263 = vmatmul.mubr.bf16.gmra.mrb[0].mxu0 %v6065
  %v6264 = vpop.f32.mrb[0].mxu0
  %v6265 = vadd.f32 0.0, %v6264
  %v6266 = vpop.f32.mrb[0].mxu0
  %v6267 = vpop.f32.mrb[0].mxu0
  %v6268 = vadd.f32 0.0, %v6267
  %v6269 = vpop.f32.mrb[0].mxu0
  %6270 = vmatprep.mubr.bf16.mxu0 0
  %6271 = vmatmul.mubr.bf16.gmra.mrb[0].mxu0 %v6066
  %v6272 = vpop.f32.mrb[0].mxu0
  %v6273 = vadd.f32 0.0, %v6272
  %v6274 = vpop.f32.mrb[0].mxu0
  %v6275 = vpop.f32.mrb[0].mxu0
  %v6276 = vadd.f32 0.0, %v6275
  %v6277 = vpop.f32.mrb[0].mxu0
  %6278 = vmatprep.mubr.bf16.mxu0 0
  %6279 = vmatmul.mubr.bf16.gmra.mrb[0].mxu0 %v6067
  %v6280 = vpop.f32.mrb[0].mxu0
  %v6281 = vadd.f32 0.0, %v6280
  %v6282 = vpop.f32.mrb[0].mxu0
  %v6283 = vpop.f32.mrb[0].mxu0
  %v6284 = vadd.f32 0.0, %v6283
  %v6285 = vpop.f32.mrb[0].mxu0
  %6286 = vmatprep.mubr.bf16.mxu0 0
  %6287 = vmatmul.mubr.bf16.gmra.mrb[0].mxu0 %v6068
  %v6288 = vpop.f32.mrb[0].mxu0
  %v6289 = vadd.f32 0.0, %v6288
  %v6290 = vpop.f32.mrb[0].mxu0
  %v6291 = vpop.f32.mrb[0].mxu0
  %v6292 = vadd.f32 0.0, %v6291
  %v6293 = vpop.f32.mrb[0].mxu0
  %6294 = vmatprep.mubr.bf16.mxu0 0
  %6295 = vmatmul.mubr.bf16.gmra.mrb[0].mxu0 %v6069
  %v6296 = vpop.f32.mrb[0].mxu0
  %v6297 = vadd.f32 0.0, %v6296
  %v6298 = vpop.f32.mrb[0].mxu0
  %v6299 = vpop.f32.mrb[0].mxu0
  %v6300 = vadd.f32 0.0, %v6299
  %v6301 = vpop.f32.mrb[0].mxu0
  %6302 = vmatprep.mubr.bf16.mxu0 0
  %6303 = vmatmul.mubr.bf16.gmra.mrb[0].mxu0 %v6070
  %v6304 = vpop.f32.mrb[0].mxu0
  %v6305 = vadd.f32 0.0, %v6304
  %v6306 = vpop.f32.mrb[0].mxu0
  %v6307 = vpop.f32.mrb[0].mxu0
  %v6308 = vadd.f32 0.0, %v6307
  %v6309 = vpop.f32.mrb[0].mxu0
  %6310 = vmatprep.mubr.bf16.mxu0 0
  %6311 = vmatmul.mubr.bf16.gmra.mrb[0].mxu0 %v6071
  %v6312 = vpop.f32.mrb[0].mxu0
  %v6313 = vadd.f32 0.0, %v6312
  %v6314 = vpop.f32.mrb[0].mxu0
  %v6315 = vpop.f32.mrb[0].mxu0
  %v6316 = vadd.f32 0.0, %v6315
  %v6317 = vpop.f32.mrb[0].mxu0
  %6318 = vmatprep.mubr.bf16.mxu0 0
  %6319 = vmatmul.mubr.bf16.gmra.mrb[0].mxu0 %v6072
  %v6320 = vpop.f32.mrb[0].mxu0
  %v6321 = vadd.f32 0.0, %v6320
  %v6322 = vpop.f32.mrb[0].mxu0
  %v6323 = vpop.f32.mrb[0].mxu0
  %v6324 = vadd.f32 0.0, %v6323
  %v6325 = vpop.f32.mrb[0].mxu0
  %6326 = vmatprep.mubr.bf16.mxu0 0
  %6327 = vmatmul.mubr.bf16.gmra.mrb[0].mxu0 %v6073
  %v6328 = vpop.f32.mrb[0].mxu0
  %v6329 = vadd.f32 0.0, %v6328
  %v6330 = vpop.f32.mrb[0].mxu0
  %v6331 = vpop.f32.mrb[0].mxu0
  %v6332 = vadd.f32 0.0, %v6331
  %v6333 = vpop.f32.mrb[0].mxu0
  %6334 = vmatprep.mubr.bf16.mxu0 0
  %6335 = vmatmul.mubr.bf16.gmra.mrb[0].mxu0 %v6074
  %v6336 = vpop.f32.mrb[0].mxu0
  %v6337 = vadd.f32 0.0, %v6336
  %v6338 = vpop.f32.mrb[0].mxu0
  %v6339 = vpop.f32.mrb[0].mxu0
  %v6340 = vadd.f32 0.0, %v6339
  %v6341 = vpop.f32.mrb[0].mxu0
  %6342 = vmatprep.mubr.bf16.mxu0 0
  %6343 = vmatmul.mubr.bf16.gmra.mrb[0].mxu0 %v6075
  %v6344 = vpop.f32.mrb[0].mxu0
  %v6345 = vadd.f32 0.0, %v6344
  %v6346 = vpop.f32.mrb[0].mxu0
  %v6347 = vpop.f32.mrb[0].mxu0
  %v6348 = vadd.f32 0.0, %v6347
  %v6349 = vpop.f32.mrb[0].mxu0
  %6350 = vmatprep.mubr.bf16.mxu0 0
  %6351 = vmatmul.mubr.bf16.gmra.mrb[0].mxu0 %v6076
  %v6352 = vpop.f32.mrb[0].mxu0
  %v6353 = vadd.f32 0.0, %v6352
  %v6354 = vpop.f32.mrb[0].mxu0
  %v6355 = vpop.f32.mrb[0].mxu0
  %v6356 = vadd.f32 0.0, %v6355
  %v6357 = vpop.f32.mrb[0].mxu0
  %6358 = vmatprep.mubr.bf16.mxu0 0
  %6359 = vmatmul.mubr.bf16.gmra.mrb[0].mxu0 %v6077
  %v6360 = vpop.f32.mrb[0].mxu0
  %v6361 = vadd.f32 0.0, %v6360
  %v6362 = vpop.f32.mrb[0].mxu0
  %v6363 = vpop.f32.mrb[0].mxu0
  %v6364 = vadd.f32 0.0, %v6363
  %v6365 = vpop.f32.mrb[0].mxu0
  %6366 = vdwg.mxu0
  %vm6367 = vcmp.gt.f32.partialorder %v3836, 0.0
  %vm6368 = vcmp.gt.f32.partialorder %v3837, 0.0
  %vm6369 = vcmp.gt.f32.partialorder %v3838, 0.0
  %vm6370 = vcmp.gt.f32.partialorder %v3839, 0.0
  %vm6371 = vcmp.gt.f32.partialorder %v3840, 0.0
  %vm6372 = vcmp.gt.f32.partialorder %v3841, 0.0
  %vm6373 = vcmp.gt.f32.partialorder %v3842, 0.0
  %vm6374 = vcmp.gt.f32.partialorder %v3843, 0.0
  %vm6375 = vcmp.gt.f32.partialorder %v3844, 0.0
  %vm6376 = vcmp.gt.f32.partialorder %v3845, 0.0
  %vm6377 = vcmp.gt.f32.partialorder %v3846, 0.0
  %vm6378 = vcmp.gt.f32.partialorder %v3847, 0.0
  %vm6379 = vcmp.gt.f32.partialorder %v3848, 0.0
  %vm6380 = vcmp.gt.f32.partialorder %v3849, 0.0
  %vm6381 = vcmp.gt.f32.partialorder %v3850, 0.0
  %vm6382 = vcmp.gt.f32.partialorder %v3851, 0.0
  %vm6383 = vcmp.gt.f32.partialorder %v3852, 0.0
  %vm6384 = vcmp.gt.f32.partialorder %v3853, 0.0
  %vm6385 = vcmp.gt.f32.partialorder %v3854, 0.0
  %vm6386 = vcmp.gt.f32.partialorder %v3855, 0.0
  %vm6387 = vcmp.gt.f32.partialorder %v3856, 0.0
  %vm6388 = vcmp.gt.f32.partialorder %v3857, 0.0
  %vm6389 = vcmp.gt.f32.partialorder %v3858, 0.0
  %vm6390 = vcmp.gt.f32.partialorder %v3859, 0.0
  %vm6391 = vcmp.gt.f32.partialorder %v3860, 0.0
  %vm6392 = vcmp.gt.f32.partialorder %v3861, 0.0
  %vm6393 = vcmp.gt.f32.partialorder %v3862, 0.0
  %vm6394 = vcmp.gt.f32.partialorder %v3863, 0.0
  %vm6395 = vcmp.gt.f32.partialorder %v3864, 0.0
  %vm6396 = vcmp.gt.f32.partialorder %v3865, 0.0
  %vm6397 = vcmp.gt.f32.partialorder %v3866, 0.0
  %vm6398 = vcmp.gt.f32.partialorder %v3867, 0.0
  %vm6399 = vcmp.gt.f32.partialorder %v3868, 0.0
  %vm6400 = vcmp.gt.f32.partialorder %v3869, 0.0
  %vm6401 = vcmp.gt.f32.partialorder %v3870, 0.0
  %vm6402 = vcmp.gt.f32.partialorder %v3871, 0.0
  %vm6403 = vcmp.gt.f32.partialorder %v3872, 0.0
  %vm6404 = vcmp.gt.f32.partialorder %v3873, 0.0
  %vm6405 = vcmp.gt.f32.partialorder %v3874, 0.0
  %vm6406 = vcmp.gt.f32.partialorder %v3875, 0.0
  %vm6407 = vcmp.gt.f32.partialorder %v3876, 0.0
  %vm6408 = vcmp.gt.f32.partialorder %v3877, 0.0
  %vm6409 = vcmp.gt.f32.partialorder %v3878, 0.0
  %vm6410 = vcmp.gt.f32.partialorder %v3879, 0.0
  %vm6411 = vcmp.gt.f32.partialorder %v3880, 0.0
  %vm6412 = vcmp.gt.f32.partialorder %v3881, 0.0
  %vm6413 = vcmp.gt.f32.partialorder %v3882, 0.0
  %vm6414 = vcmp.gt.f32.partialorder %v3883, 0.0
  %vm6415 = vcmp.gt.f32.partialorder %v3884, 0.0
  %vm6416 = vcmp.gt.f32.partialorder %v3885, 0.0
  %vm6417 = vcmp.gt.f32.partialorder %v3886, 0.0
  %vm6418 = vcmp.gt.f32.partialorder %v3887, 0.0
  %vm6419 = vcmp.gt.f32.partialorder %v3888, 0.0
  %vm6420 = vcmp.gt.f32.partialorder %v3889, 0.0
  %vm6421 = vcmp.gt.f32.partialorder %v3890, 0.0
  %vm6422 = vcmp.gt.f32.partialorder %v3891, 0.0
  %vm6423 = vcmp.gt.f32.partialorder %v3892, 0.0
  %vm6424 = vcmp.gt.f32.partialorder %v3893, 0.0
  %vm6425 = vcmp.gt.f32.partialorder %v3894, 0.0
  %vm6426 = vcmp.gt.f32.partialorder %v3895, 0.0
  %vm6427 = vcmp.gt.f32.partialorder %v3896, 0.0
  %vm6428 = vcmp.gt.f32.partialorder %v3897, 0.0
  %vm6429 = vcmp.gt.f32.partialorder %v3898, 0.0
  %vm6430 = vcmp.gt.f32.partialorder %v3899, 0.0
  %v6431 = vsel %vm6367, 1, 0
  %v6432 = vsel %vm6368, 1, 0
  %v6433 = vsel %vm6369, 1, 0
  %v6434 = vsel %vm6370, 1, 0
  %v6435 = vsel %vm6371, 1, 0
  %v6436 = vsel %vm6372, 1, 0
  %v6437 = vsel %vm6373, 1, 0
  %v6438 = vsel %vm6374, 1, 0
  %v6439 = vsel %vm6375, 1, 0
  %v6440 = vsel %vm6376, 1, 0
  %v6441 = vsel %vm6377, 1, 0
  %v6442 = vsel %vm6378, 1, 0
  %v6443 = vsel %vm6379, 1, 0
  %v6444 = vsel %vm6380, 1, 0
  %v6445 = vsel %vm6381, 1, 0
  %v6446 = vsel %vm6382, 1, 0
  %v6447 = vsel %vm6383, 1, 0
  %v6448 = vsel %vm6384, 1, 0
  %v6449 = vsel %vm6385, 1, 0
  %v6450 = vsel %vm6386, 1, 0
  %v6451 = vsel %vm6387, 1, 0
  %v6452 = vsel %vm6388, 1, 0
  %v6453 = vsel %vm6389, 1, 0
  %v6454 = vsel %vm6390, 1, 0
  %v6455 = vsel %vm6391, 1, 0
  %v6456 = vsel %vm6392, 1, 0
  %v6457 = vsel %vm6393, 1, 0
  %v6458 = vsel %vm6394, 1, 0
  %v6459 = vsel %vm6395, 1, 0
  %v6460 = vsel %vm6396, 1, 0
  %v6461 = vsel %vm6397, 1, 0
  %v6462 = vsel %vm6398, 1, 0
  %v6463 = vsel %vm6399, 1, 0
  %v6464 = vsel %vm6400, 1, 0
  %v6465 = vsel %vm6401, 1, 0
  %v6466 = vsel %vm6402, 1, 0
  %v6467 = vsel %vm6403, 1, 0
  %v6468 = vsel %vm6404, 1, 0
  %v6469 = vsel %vm6405, 1, 0
  %v6470 = vsel %vm6406, 1, 0
  %v6471 = vsel %vm6407, 1, 0
  %v6472 = vsel %vm6408, 1, 0
  %v6473 = vsel %vm6409, 1, 0
  %v6474 = vsel %vm6410, 1, 0
  %v6475 = vsel %vm6411, 1, 0
  %v6476 = vsel %vm6412, 1, 0
  %v6477 = vsel %vm6413, 1, 0
  %v6478 = vsel %vm6414, 1, 0
  %v6479 = vsel %vm6415, 1, 0
  %v6480 = vsel %vm6416, 1, 0
  %v6481 = vsel %vm6417, 1, 0
  %v6482 = vsel %vm6418, 1, 0
  %v6483 = vsel %vm6419, 1, 0
  %v6484 = vsel %vm6420, 1, 0
  %v6485 = vsel %vm6421, 1, 0
  %v6486 = vsel %vm6422, 1, 0
  %v6487 = vsel %vm6423, 1, 0
  %v6488 = vsel %vm6424, 1, 0
  %v6489 = vsel %vm6425, 1, 0
  %v6490 = vsel %vm6426, 1, 0
  %v6491 = vsel %vm6427, 1, 0
  %v6492 = vsel %vm6428, 1, 0
  %v6493 = vsel %vm6429, 1, 0
  %v6494 = vsel %vm6430, 1, 0
  %v6495 = vcvt.s32.f32 %v6431
  %v6496 = vcvt.s32.f32 %v6432
  %v6497 = vcvt.s32.f32 %v6433
  %v6498 = vcvt.s32.f32 %v6434
  %v6499 = vcvt.s32.f32 %v6435
  %v6500 = vcvt.s32.f32 %v6436
  %v6501 = vcvt.s32.f32 %v6437
  %v6502 = vcvt.s32.f32 %v6438
  %v6503 = vcvt.s32.f32 %v6439
  %v6504 = vcvt.s32.f32 %v6440
  %v6505 = vcvt.s32.f32 %v6441
  %v6506 = vcvt.s32.f32 %v6442
  %v6507 = vcvt.s32.f32 %v6443
  %v6508 = vcvt.s32.f32 %v6444
  %v6509 = vcvt.s32.f32 %v6445
  %v6510 = vcvt.s32.f32 %v6446
  %v6511 = vcvt.s32.f32 %v6447
  %v6512 = vcvt.s32.f32 %v6448
  %v6513 = vcvt.s32.f32 %v6449
  %v6514 = vcvt.s32.f32 %v6450
  %v6515 = vcvt.s32.f32 %v6451
  %v6516 = vcvt.s32.f32 %v6452
  %v6517 = vcvt.s32.f32 %v6453
  %v6518 = vcvt.s32.f32 %v6454
  %v6519 = vcvt.s32.f32 %v6455
  %v6520 = vcvt.s32.f32 %v6456
  %v6521 = vcvt.s32.f32 %v6457
  %v6522 = vcvt.s32.f32 %v6458
  %v6523 = vcvt.s32.f32 %v6459
  %v6524 = vcvt.s32.f32 %v6460
  %v6525 = vcvt.s32.f32 %v6461
  %v6526 = vcvt.s32.f32 %v6462
  %v6527 = vcvt.s32.f32 %v6463
  %v6528 = vcvt.s32.f32 %v6464
  %v6529 = vcvt.s32.f32 %v6465
  %v6530 = vcvt.s32.f32 %v6466
  %v6531 = vcvt.s32.f32 %v6467
  %v6532 = vcvt.s32.f32 %v6468
  %v6533 = vcvt.s32.f32 %v6469
  %v6534 = vcvt.s32.f32 %v6470
  %v6535 = vcvt.s32.f32 %v6471
  %v6536 = vcvt.s32.f32 %v6472
  %v6537 = vcvt.s32.f32 %v6473
  %v6538 = vcvt.s32.f32 %v6474
  %v6539 = vcvt.s32.f32 %v6475
  %v6540 = vcvt.s32.f32 %v6476
  %v6541 = vcvt.s32.f32 %v6477
  %v6542 = vcvt.s32.f32 %v6478
  %v6543 = vcvt.s32.f32 %v6479
  %v6544 = vcvt.s32.f32 %v6480
  %v6545 = vcvt.s32.f32 %v6481
  %v6546 = vcvt.s32.f32 %v6482
  %v6547 = vcvt.s32.f32 %v6483
  %v6548 = vcvt.s32.f32 %v6484
  %v6549 = vcvt.s32.f32 %v6485
  %v6550 = vcvt.s32.f32 %v6486
  %v6551 = vcvt.s32.f32 %v6487
  %v6552 = vcvt.s32.f32 %v6488
  %v6553 = vcvt.s32.f32 %v6489
  %v6554 = vcvt.s32.f32 %v6490
  %v6555 = vcvt.s32.f32 %v6491
  %v6556 = vcvt.s32.f32 %v6492
  %v6557 = vcvt.s32.f32 %v6493
  %v6558 = vcvt.s32.f32 %v6494
  %v6559 = vmul.f32 %v6495, 0.2
  %v6560 = vmul.f32 %v6496, 0.2
  %v6561 = vmul.f32 %v6497, 0.2
  %v6562 = vmul.f32 %v6498, 0.2
  %v6563 = vmul.f32 %v6499, 0.2
  %v6564 = vmul.f32 %v6500, 0.2
  %v6565 = vmul.f32 %v6501, 0.2
  %v6566 = vmul.f32 %v6502, 0.2
  %v6567 = vmul.f32 %v6503, 0.2
  %v6568 = vmul.f32 %v6504, 0.2
  %v6569 = vmul.f32 %v6505, 0.2
  %v6570 = vmul.f32 %v6506, 0.2
  %v6571 = vmul.f32 %v6507, 0.2
  %v6572 = vmul.f32 %v6508, 0.2
  %v6573 = vmul.f32 %v6509, 0.2
  %v6574 = vmul.f32 %v6510, 0.2
  %v6575 = vmul.f32 %v6511, 0.2
  %v6576 = vmul.f32 %v6512, 0.2
  %v6577 = vmul.f32 %v6513, 0.2
  %v6578 = vmul.f32 %v6514, 0.2
  %v6579 = vmul.f32 %v6515, 0.2
  %v6580 = vmul.f32 %v6516, 0.2
  %v6581 = vmul.f32 %v6517, 0.2
  %v6582 = vmul.f32 %v6518, 0.2
  %v6583 = vmul.f32 %v6519, 0.2
  %v6584 = vmul.f32 %v6520, 0.2
  %v6585 = vmul.f32 %v6521, 0.2
  %v6586 = vmul.f32 %v6522, 0.2
  %v6587 = vmul.f32 %v6523, 0.2
  %v6588 = vmul.f32 %v6524, 0.2
  %v6589 = vmul.f32 %v6525, 0.2
  %v6590 = vmul.f32 %v6526, 0.2
  %v6591 = vmul.f32 %v6527, 0.2
  %v6592 = vmul.f32 %v6528, 0.2
  %v6593 = vmul.f32 %v6529, 0.2
  %v6594 = vmul.f32 %v6530, 0.2
  %v6595 = vmul.f32 %v6531, 0.2
  %v6596 = vmul.f32 %v6532, 0.2
  %v6597 = vmul.f32 %v6533, 0.2
  %v6598 = vmul.f32 %v6534, 0.2
  %v6599 = vmul.f32 %v6535, 0.2
  %v6600 = vmul.f32 %v6536, 0.2
  %v6601 = vmul.f32 %v6537, 0.2
  %v6602 = vmul.f32 %v6538, 0.2
  %v6603 = vmul.f32 %v6539, 0.2
  %v6604 = vmul.f32 %v6540, 0.2
  %v6605 = vmul.f32 %v6541, 0.2
  %v6606 = vmul.f32 %v6542, 0.2
  %v6607 = vmul.f32 %v6543, 0.2
  %v6608 = vmul.f32 %v6544, 0.2
  %v6609 = vmul.f32 %v6545, 0.2
  %v6610 = vmul.f32 %v6546, 0.2
  %v6611 = vmul.f32 %v6547, 0.2
  %v6612 = vmul.f32 %v6548, 0.2
  %v6613 = vmul.f32 %v6549, 0.2
  %v6614 = vmul.f32 %v6550, 0.2
  %v6615 = vmul.f32 %v6551, 0.2
  %v6616 = vmul.f32 %v6552, 0.2
  %v6617 = vmul.f32 %v6553, 0.2
  %v6618 = vmul.f32 %v6554, 0.2
  %v6619 = vmul.f32 %v6555, 0.2
  %v6620 = vmul.f32 %v6556, 0.2
  %v6621 = vmul.f32 %v6557, 0.2
  %v6622 = vmul.f32 %v6558, 0.2
  %v6623 = vmul.f32 %v6113, %v6559
  %v6624 = vmul.f32 %v6116, %v6560
  %v6625 = vmul.f32 %v6121, %v6561
  %v6626 = vmul.f32 %v6124, %v6562
  %v6627 = vmul.f32 %v6129, %v6563
  %v6628 = vmul.f32 %v6132, %v6564
  %v6629 = vmul.f32 %v6137, %v6565
  %v6630 = vmul.f32 %v6140, %v6566
  %v6631 = vmul.f32 %v6145, %v6567
  %v6632 = vmul.f32 %v6148, %v6568
  %v6633 = vmul.f32 %v6153, %v6569
  %v6634 = vmul.f32 %v6156, %v6570
  %v6635 = vmul.f32 %v6161, %v6571
  %v6636 = vmul.f32 %v6164, %v6572
  %v6637 = vmul.f32 %v6169, %v6573
  %v6638 = vmul.f32 %v6172, %v6574
  %v6639 = vmul.f32 %v6177, %v6575
  %v6640 = vmul.f32 %v6180, %v6576
  %v6641 = vmul.f32 %v6185, %v6577
  %v6642 = vmul.f32 %v6188, %v6578
  %v6643 = vmul.f32 %v6193, %v6579
  %v6644 = vmul.f32 %v6196, %v6580
  %v6645 = vmul.f32 %v6201, %v6581
  %v6646 = vmul.f32 %v6204, %v6582
  %v6647 = vmul.f32 %v6209, %v6583
  %v6648 = vmul.f32 %v6212, %v6584
  %v6649 = vmul.f32 %v6217, %v6585
  %v6650 = vmul.f32 %v6220, %v6586
  %v6651 = vmul.f32 %v6225, %v6587
  %v6652 = vmul.f32 %v6228, %v6588
  %v6653 = vmul.f32 %v6233, %v6589
  %v6654 = vmul.f32 %v6236, %v6590
  %v6655 = vmul.f32 %v6241, %v6591
  %v6656 = vmul.f32 %v6244, %v6592
  %v6657 = vmul.f32 %v6249, %v6593
  %v6658 = vmul.f32 %v6252, %v6594
  %v6659 = vmul.f32 %v6257, %v6595
  %v6660 = vmul.f32 %v6260, %v6596
  %v6661 = vmul.f32 %v6265, %v6597
  %v6662 = vmul.f32 %v6268, %v6598
  %v6663 = vmul.f32 %v6273, %v6599
  %v6664 = vmul.f32 %v6276, %v6600
  %v6665 = vmul.f32 %v6281, %v6601
  %v6666 = vmul.f32 %v6284, %v6602
  %v6667 = vmul.f32 %v6289, %v6603
  %v6668 = vmul.f32 %v6292, %v6604
  %v6669 = vmul.f32 %v6297, %v6605
  %v6670 = vmul.f32 %v6300, %v6606
  %v6671 = vmul.f32 %v6305, %v6607
  %v6672 = vmul.f32 %v6308, %v6608
  %v6673 = vmul.f32 %v6313, %v6609
  %v6674 = vmul.f32 %v6316, %v6610
  %v6675 = vmul.f32 %v6321, %v6611
  %v6676 = vmul.f32 %v6324, %v6612
  %v6677 = vmul.f32 %v6329, %v6613
  %v6678 = vmul.f32 %v6332, %v6614
  %v6679 = vmul.f32 %v6337, %v6615
  %v6680 = vmul.f32 %v6340, %v6616
  %v6681 = vmul.f32 %v6345, %v6617
  %v6682 = vmul.f32 %v6348, %v6618
  %v6683 = vmul.f32 %v6353, %v6619
  %v6684 = vmul.f32 %v6356, %v6620
  %v6685 = vmul.f32 %v6361, %v6621
  %v6686 = vmul.f32 %v6364, %v6622
  %v6687 = vadd.f32 %v3836, %v6623
  %v6688 = vadd.f32 %v3837, %v6624
  %v6689 = vadd.f32 %v3838, %v6625
  %v6690 = vadd.f32 %v3839, %v6626
  %v6691 = vadd.f32 %v3840, %v6627
  %v6692 = vadd.f32 %v3841, %v6628
  %v6693 = vadd.f32 %v3842, %v6629
  %v6694 = vadd.f32 %v3843, %v6630
  %v6695 = vadd.f32 %v3844, %v6631
  %v6696 = vadd.f32 %v3845, %v6632
  %v6697 = vadd.f32 %v3846, %v6633
  %v6698 = vadd.f32 %v3847, %v6634
  %v6699 = vadd.f32 %v3848, %v6635
  %v6700 = vadd.f32 %v3849, %v6636
  %v6701 = vadd.f32 %v3850, %v6637
  %v6702 = vadd.f32 %v3851, %v6638
  %v6703 = vadd.f32 %v3852, %v6639
  %v6704 = vadd.f32 %v3853, %v6640
  %v6705 = vadd.f32 %v3854, %v6641
  %v6706 = vadd.f32 %v3855, %v6642
  %v6707 = vadd.f32 %v3856, %v6643
  %v6708 = vadd.f32 %v3857, %v6644
  %v6709 = vadd.f32 %v3858, %v6645
  %v6710 = vadd.f32 %v3859, %v6646
  %v6711 = vadd.f32 %v3860, %v6647
  %v6712 = vadd.f32 %v3861, %v6648
  %v6713 = vadd.f32 %v3862, %v6649
  %v6714 = vadd.f32 %v3863, %v6650
  %v6715 = vadd.f32 %v3864, %v6651
  %v6716 = vadd.f32 %v3865, %v6652
  %v6717 = vadd.f32 %v3866, %v6653
  %v6718 = vadd.f32 %v3867, %v6654
  %v6719 = vadd.f32 %v3868, %v6655
  %v6720 = vadd.f32 %v3869, %v6656
  %v6721 = vadd.f32 %v3870, %v6657
  %v6722 = vadd.f32 %v3871, %v6658
  %v6723 = vadd.f32 %v3872, %v6659
  %v6724 = vadd.f32 %v3873, %v6660
  %v6725 = vadd.f32 %v3874, %v6661
  %v6726 = vadd.f32 %v3875, %v6662
  %v6727 = vadd.f32 %v3876, %v6663
  %v6728 = vadd.f32 %v3877, %v6664
  %v6729 = vadd.f32 %v3878, %v6665
  %v6730 = vadd.f32 %v3879, %v6666
  %v6731 = vadd.f32 %v3880, %v6667
  %v6732 = vadd.f32 %v3881, %v6668
  %v6733 = vadd.f32 %v3882, %v6669
  %v6734 = vadd.f32 %v3883, %v6670
  %v6735 = vadd.f32 %v3884, %v6671
  %v6736 = vadd.f32 %v3885, %v6672
  %v6737 = vadd.f32 %v3886, %v6673
  %v6738 = vadd.f32 %v3887, %v6674
  %v6739 = vadd.f32 %v3888, %v6675
  %v6740 = vadd.f32 %v3889, %v6676
  %v6741 = vadd.f32 %v3890, %v6677
  %v6742 = vadd.f32 %v3891, %v6678
  %v6743 = vadd.f32 %v3892, %v6679
  %v6744 = vadd.f32 %v3893, %v6680
  %v6745 = vadd.f32 %v3894, %v6681
  %v6746 = vadd.f32 %v3895, %v6682
  %v6747 = vadd.f32 %v3896, %v6683
  %v6748 = vadd.f32 %v3897, %v6684
  %v6749 = vadd.f32 %v3898, %v6685
  %v6750 = vadd.f32 %v3899, %v6686
  %6751 = vst.msk [vmem:[%s20] sm:$0xff] %vm389, %v4758
  %6752 = vst.msk [vmem:[%s20 + $0x8] sm:$0xff] %vm389, %v4759
  %6753 = vst.msk [vmem:[%s20 + $0x10] sm:$0xff] %vm389, %v4760
  %6754 = vst.msk [vmem:[%s20 + $0x18] sm:$0xff] %vm389, %v4761
  %6755 = vst.msk [vmem:[%s20 + $0x20] sm:$0xff] %vm389, %v4762
  %6756 = vst.msk [vmem:[%s20 + $0x28] sm:$0xff] %vm389, %v4763
  %6757 = vst.msk [vmem:[%s20 + $0x30] sm:$0xff] %vm389, %v4764
  %6758 = vst.msk [vmem:[%s20 + $0x38] sm:$0xff] %vm389, %v4765
  %v6759 = vpack.c.bf16 %v6688, %v6687
  %v6760 = vpack.c.bf16 %v6690, %v6689
  %v6761 = vpack.c.bf16 %v6692, %v6691
  %v6762 = vpack.c.bf16 %v6694, %v6693
  %v6763 = vpack.c.bf16 %v6696, %v6695
  %v6764 = vpack.c.bf16 %v6698, %v6697
  %v6765 = vpack.c.bf16 %v6700, %v6699
  %v6766 = vpack.c.bf16 %v6702, %v6701
  %v6767 = vpack.c.bf16 %v6704, %v6703
  %v6768 = vpack.c.bf16 %v6706, %v6705
  %v6769 = vpack.c.bf16 %v6708, %v6707
  %v6770 = vpack.c.bf16 %v6710, %v6709
  %v6771 = vpack.c.bf16 %v6712, %v6711
  %v6772 = vpack.c.bf16 %v6714, %v6713
  %v6773 = vpack.c.bf16 %v6716, %v6715
  %v6774 = vpack.c.bf16 %v6718, %v6717
  %v6775 = vpack.c.bf16 %v6720, %v6719
  %v6776 = vpack.c.bf16 %v6722, %v6721
  %v6777 = vpack.c.bf16 %v6724, %v6723
  %v6778 = vpack.c.bf16 %v6726, %v6725
  %v6779 = vpack.c.bf16 %v6728, %v6727
  %v6780 = vpack.c.bf16 %v6730, %v6729
  %v6781 = vpack.c.bf16 %v6732, %v6731
  %v6782 = vpack.c.bf16 %v6734, %v6733
  %v6783 = vpack.c.bf16 %v6736, %v6735
  %v6784 = vpack.c.bf16 %v6738, %v6737
  %v6785 = vpack.c.bf16 %v6740, %v6739
  %v6786 = vpack.c.bf16 %v6742, %v6741
  %v6787 = vpack.c.bf16 %v6744, %v6743
  %v6788 = vpack.c.bf16 %v6746, %v6745
  %v6789 = vpack.c.bf16 %v6748, %v6747
  %v6790 = vpack.c.bf16 %v6750, %v6749
  %v6792 = vlaneseq
  %v6793 = vshrl.u32 %v6792, 7
  %v6794 = vsub.s32 0, %v6793
  %v6795 = vrot.slane %v334, %v6794
  %v6798 = vsel %vm777, %v6759, 0
  %v6801 = vsel %vm777, %v6760, 0
  %v6804 = vsel %vm777, %v6761, 0
  %v6807 = vsel %vm777, %v6762, 0
  %v6810 = vsel %vm777, %v6763, 0
  %v6813 = vsel %vm777, %v6764, 0
  %v6816 = vsel %vm777, %v6765, 0
  %v6819 = vsel %vm777, %v6766, 0
  %v6822 = vsel %vm777, %v6767, 0
  %v6825 = vsel %vm777, %v6768, 0
  %v6828 = vsel %vm777, %v6769, 0
  %v6831 = vsel %vm777, %v6770, 0
  %v6834 = vsel %vm777, %v6771, 0
  %v6837 = vsel %vm777, %v6772, 0
  %v6840 = vsel %vm777, %v6773, 0
  %v6843 = vsel %vm777, %v6774, 0
  %v6846 = vsel %vm777, %v6775, 0
  %v6849 = vsel %vm777, %v6776, 0
  %v6852 = vsel %vm777, %v6777, 0
  %v6855 = vsel %vm777, %v6778, 0
  %v6858 = vsel %vm777, %v6779, 0
  %v6861 = vsel %vm777, %v6780, 0
  %v6864 = vsel %vm777, %v6781, 0
  %v6867 = vsel %vm777, %v6782, 0
  %v6870 = vsel %vm777, %v6783, 0
  %v6873 = vsel %vm777, %v6784, 0
  %v6876 = vsel %vm777, %v6785, 0
  %v6879 = vsel %vm777, %v6786, 0
  %v6882 = vsel %vm777, %v6787, 0
  %v6885 = vsel %vm777, %v6788, 0
  %v6888 = vsel %vm777, %v6789, 0
  %v6891 = vsel %vm777, %v6790, 0
  %v6894 = vsel %vm790, %v333, 0
  %6896 = vmatprep.subr.bf16.mxu0 0
  %6897 = vmatpush1.bf16.msra.mxu0 %v6894
  %6898 = vmatprep.subr.bf16.mxu0 0
  %6899 = vmatpush1.bf16.msra.mxu0 0
  %6900 = vmatprep.subr.bf16.mxu0 0
  %6901 = vmatpush1.bf16.msra.mxu0 0
  %6902 = vmatprep.subr.bf16.mxu0 0
  %6903 = vmatpush1.bf16.msra.mxu0 0
  %6904 = vmatprep.subr.bf16.mxu0 0
  %6905 = vmatpush1.bf16.msra.mxu0 0
  %6906 = vmatprep.subr.bf16.mxu0 0
  %6907 = vmatpush1.bf16.msra.mxu0 0
  %6908 = vmatprep.subr.bf16.mxu0 0
  %6909 = vmatpush1.bf16.msra.mxu0 0
  %6910 = vmatprep.subr.bf16.mxu0 0
  %6911 = vmatpush1.bf16.msra.mxu0 0
  %6912 = vmatprep.subr.bf16.mxu0 0
  %6913 = vmatpush1.bf16.msra.mxu0 0
  %6914 = vmatprep.subr.bf16.mxu0 0
  %6915 = vmatpush1.bf16.msra.mxu0 0
  %6916 = vmatprep.subr.bf16.mxu0 0
  %6917 = vmatpush1.bf16.msra.mxu0 0
  %6918 = vmatprep.subr.bf16.mxu0 0
  %6919 = vmatpush1.bf16.msra.mxu0 0
  %6920 = vmatprep.subr.bf16.mxu0 0
  %6921 = vmatpush1.bf16.msra.mxu0 0
  %6922 = vmatprep.subr.bf16.mxu0 0
  %6923 = vmatpush1.bf16.msra.mxu0 0
  %6924 = vmatprep.subr.bf16.mxu0 0
  %6925 = vmatpush1.bf16.msra.mxu0 0
  %6926 = vmatprep.subr.bf16.mxu0 0
  %6927 = vmatpush1.bf16.msra.mxu0 0
  %6928 = vmatprep.mubr.bf16.mxu0 0
  %6929 = vmatmul.mubr.bf16.gmra.mrb[0].mxu0 %v6798
  %v6930 = vpop.f32.mrb[0].mxu0
  %v6931 = vadd.f32 %v6795, %v6930
  %v6932 = vpop.f32.mrb[0].mxu0
  %v6933 = vpop.f32.mrb[0].mxu0
  %v6934 = vadd.f32 %v6795, %v6933
  %v6935 = vpop.f32.mrb[0].mxu0
  %6936 = vmatprep.mubr.bf16.mxu0 0
  %6937 = vmatmul.mubr.bf16.gmra.mrb[0].mxu0 %v6801
  %v6938 = vpop.f32.mrb[0].mxu0
  %v6939 = vadd.f32 %v6795, %v6938
  %v6940 = vpop.f32.mrb[0].mxu0
  %v6941 = vpop.f32.mrb[0].mxu0
  %v6942 = vadd.f32 %v6795, %v6941
  %v6943 = vpop.f32.mrb[0].mxu0
  %6944 = vmatprep.mubr.bf16.mxu0 0
  %6945 = vmatmul.mubr.bf16.gmra.mrb[0].mxu0 %v6804
  %v6946 = vpop.f32.mrb[0].mxu0
  %v6947 = vadd.f32 %v6795, %v6946
  %v6948 = vpop.f32.mrb[0].mxu0
  %v6949 = vpop.f32.mrb[0].mxu0
  %v6950 = vadd.f32 %v6795, %v6949
  %v6951 = vpop.f32.mrb[0].mxu0
  %6952 = vmatprep.mubr.bf16.mxu0 0
  %6953 = vmatmul.mubr.bf16.gmra.mrb[0].mxu0 %v6807
  %v6954 = vpop.f32.mrb[0].mxu0
  %v6955 = vadd.f32 %v6795, %v6954
  %v6956 = vpop.f32.mrb[0].mxu0
  %v6957 = vpop.f32.mrb[0].mxu0
  %v6958 = vadd.f32 %v6795, %v6957
  %v6959 = vpop.f32.mrb[0].mxu0
  %6960 = vmatprep.mubr.bf16.mxu0 0
  %6961 = vmatmul.mubr.bf16.gmra.mrb[0].mxu0 %v6810
  %v6962 = vpop.f32.mrb[0].mxu0
  %v6963 = vadd.f32 %v6795, %v6962
  %v6964 = vpop.f32.mrb[0].mxu0
  %v6965 = vpop.f32.mrb[0].mxu0
  %v6966 = vadd.f32 %v6795, %v6965
  %v6967 = vpop.f32.mrb[0].mxu0
  %6968 = vmatprep.mubr.bf16.mxu0 0
  %6969 = vmatmul.mubr.bf16.gmra.mrb[0].mxu0 %v6813
  %v6970 = vpop.f32.mrb[0].mxu0
  %v6971 = vadd.f32 %v6795, %v6970
  %v6972 = vpop.f32.mrb[0].mxu0
  %v6973 = vpop.f32.mrb[0].mxu0
  %v6974 = vadd.f32 %v6795, %v6973
  %v6975 = vpop.f32.mrb[0].mxu0
  %6976 = vmatprep.mubr.bf16.mxu0 0
  %6977 = vmatmul.mubr.bf16.gmra.mrb[0].mxu0 %v6816
  %v6978 = vpop.f32.mrb[0].mxu0
  %v6979 = vadd.f32 %v6795, %v6978
  %v6980 = vpop.f32.mrb[0].mxu0
  %v6981 = vpop.f32.mrb[0].mxu0
  %v6982 = vadd.f32 %v6795, %v6981
  %v6983 = vpop.f32.mrb[0].mxu0
  %6984 = vmatprep.mubr.bf16.mxu0 0
  %6985 = vmatmul.mubr.bf16.gmra.mrb[0].mxu0 %v6819
  %v6986 = vpop.f32.mrb[0].mxu0
  %v6987 = vadd.f32 %v6795, %v6986
  %v6988 = vpop.f32.mrb[0].mxu0
  %v6989 = vpop.f32.mrb[0].mxu0
  %v6990 = vadd.f32 %v6795, %v6989
  %v6991 = vpop.f32.mrb[0].mxu0
  %6992 = vmatprep.mubr.bf16.mxu0 0
  %6993 = vmatmul.mubr.bf16.gmra.mrb[0].mxu0 %v6822
  %v6994 = vpop.f32.mrb[0].mxu0
  %v6995 = vadd.f32 %v6795, %v6994
  %v6996 = vpop.f32.mrb[0].mxu0
  %v6997 = vpop.f32.mrb[0].mxu0
  %v6998 = vadd.f32 %v6795, %v6997
  %v6999 = vpop.f32.mrb[0].mxu0
  %7000 = vmatprep.mubr.bf16.mxu0 0
  %7001 = vmatmul.mubr.bf16.gmra.mrb[0].mxu0 %v6825
  %v7002 = vpop.f32.mrb[0].mxu0
  %v7003 = vadd.f32 %v6795, %v7002
  %v7004 = vpop.f32.mrb[0].mxu0
  %v7005 = vpop.f32.mrb[0].mxu0
  %v7006 = vadd.f32 %v6795, %v7005
  %v7007 = vpop.f32.mrb[0].mxu0
  %7008 = vmatprep.mubr.bf16.mxu0 0
  %7009 = vmatmul.mubr.bf16.gmra.mrb[0].mxu0 %v6828
  %v7010 = vpop.f32.mrb[0].mxu0
  %v7011 = vadd.f32 %v6795, %v7010
  %v7012 = vpop.f32.mrb[0].mxu0
  %v7013 = vpop.f32.mrb[0].mxu0
  %v7014 = vadd.f32 %v6795, %v7013
  %v7015 = vpop.f32.mrb[0].mxu0
  %7016 = vmatprep.mubr.bf16.mxu0 0
  %7017 = vmatmul.mubr.bf16.gmra.mrb[0].mxu0 %v6831
  %v7018 = vpop.f32.mrb[0].mxu0
  %v7019 = vadd.f32 %v6795, %v7018
  %v7020 = vpop.f32.mrb[0].mxu0
  %v7021 = vpop.f32.mrb[0].mxu0
  %v7022 = vadd.f32 %v6795, %v7021
  %v7023 = vpop.f32.mrb[0].mxu0
  %7024 = vmatprep.mubr.bf16.mxu0 0
  %7025 = vmatmul.mubr.bf16.gmra.mrb[0].mxu0 %v6834
  %v7026 = vpop.f32.mrb[0].mxu0
  %v7027 = vadd.f32 %v6795, %v7026
  %v7028 = vpop.f32.mrb[0].mxu0
  %v7029 = vpop.f32.mrb[0].mxu0
  %v7030 = vadd.f32 %v6795, %v7029
  %v7031 = vpop.f32.mrb[0].mxu0
  %7032 = vmatprep.mubr.bf16.mxu0 0
  %7033 = vmatmul.mubr.bf16.gmra.mrb[0].mxu0 %v6837
  %v7034 = vpop.f32.mrb[0].mxu0
  %v7035 = vadd.f32 %v6795, %v7034
  %v7036 = vpop.f32.mrb[0].mxu0
  %v7037 = vpop.f32.mrb[0].mxu0
  %v7038 = vadd.f32 %v6795, %v7037
  %v7039 = vpop.f32.mrb[0].mxu0
  %7040 = vmatprep.mubr.bf16.mxu0 0
  %7041 = vmatmul.mubr.bf16.gmra.mrb[0].mxu0 %v6840
  %v7042 = vpop.f32.mrb[0].mxu0
  %v7043 = vadd.f32 %v6795, %v7042
  %v7044 = vpop.f32.mrb[0].mxu0
  %v7045 = vpop.f32.mrb[0].mxu0
  %v7046 = vadd.f32 %v6795, %v7045
  %v7047 = vpop.f32.mrb[0].mxu0
  %7048 = vmatprep.mubr.bf16.mxu0 0
  %7049 = vmatmul.mubr.bf16.gmra.mrb[0].mxu0 %v6843
  %v7050 = vpop.f32.mrb[0].mxu0
  %v7051 = vadd.f32 %v6795, %v7050
  %v7052 = vpop.f32.mrb[0].mxu0
  %v7053 = vpop.f32.mrb[0].mxu0
  %v7054 = vadd.f32 %v6795, %v7053
  %v7055 = vpop.f32.mrb[0].mxu0
  %7056 = vmatprep.mubr.bf16.mxu0 0
  %7057 = vmatmul.mubr.bf16.gmra.mrb[0].mxu0 %v6846
  %v7058 = vpop.f32.mrb[0].mxu0
  %v7059 = vadd.f32 %v6795, %v7058
  %v7060 = vpop.f32.mrb[0].mxu0
  %v7061 = vpop.f32.mrb[0].mxu0
  %v7062 = vadd.f32 %v6795, %v7061
  %v7063 = vpop.f32.mrb[0].mxu0
  %7064 = vmatprep.mubr.bf16.mxu0 0
  %7065 = vmatmul.mubr.bf16.gmra.mrb[0].mxu0 %v6849
  %v7066 = vpop.f32.mrb[0].mxu0
  %v7067 = vadd.f32 %v6795, %v7066
  %v7068 = vpop.f32.mrb[0].mxu0
  %v7069 = vpop.f32.mrb[0].mxu0
  %v7070 = vadd.f32 %v6795, %v7069
  %v7071 = vpop.f32.mrb[0].mxu0
  %7072 = vmatprep.mubr.bf16.mxu0 0
  %7073 = vmatmul.mubr.bf16.gmra.mrb[0].mxu0 %v6852
  %v7074 = vpop.f32.mrb[0].mxu0
  %v7075 = vadd.f32 %v6795, %v7074
  %v7076 = vpop.f32.mrb[0].mxu0
  %v7077 = vpop.f32.mrb[0].mxu0
  %v7078 = vadd.f32 %v6795, %v7077
  %v7079 = vpop.f32.mrb[0].mxu0
  %7080 = vmatprep.mubr.bf16.mxu0 0
  %7081 = vmatmul.mubr.bf16.gmra.mrb[0].mxu0 %v6855
  %v7082 = vpop.f32.mrb[0].mxu0
  %v7083 = vadd.f32 %v6795, %v7082
  %v7084 = vpop.f32.mrb[0].mxu0
  %v7085 = vpop.f32.mrb[0].mxu0
  %v7086 = vadd.f32 %v6795, %v7085
  %v7087 = vpop.f32.mrb[0].mxu0
  %7088 = vmatprep.mubr.bf16.mxu0 0
  %7089 = vmatmul.mubr.bf16.gmra.mrb[0].mxu0 %v6858
  %v7090 = vpop.f32.mrb[0].mxu0
  %v7091 = vadd.f32 %v6795, %v7090
  %v7092 = vpop.f32.mrb[0].mxu0
  %v7093 = vpop.f32.mrb[0].mxu0
  %v7094 = vadd.f32 %v6795, %v7093
  %v7095 = vpop.f32.mrb[0].mxu0
  %7096 = vmatprep.mubr.bf16.mxu0 0
  %7097 = vmatmul.mubr.bf16.gmra.mrb[0].mxu0 %v6861
  %v7098 = vpop.f32.mrb[0].mxu0
  %v7099 = vadd.f32 %v6795, %v7098
  %v7100 = vpop.f32.mrb[0].mxu0
  %v7101 = vpop.f32.mrb[0].mxu0
  %v7102 = vadd.f32 %v6795, %v7101
  %v7103 = vpop.f32.mrb[0].mxu0
  %7104 = vmatprep.mubr.bf16.mxu0 0
  %7105 = vmatmul.mubr.bf16.gmra.mrb[0].mxu0 %v6864
  %v7106 = vpop.f32.mrb[0].mxu0
  %v7107 = vadd.f32 %v6795, %v7106
  %v7108 = vpop.f32.mrb[0].mxu0
  %v7109 = vpop.f32.mrb[0].mxu0
  %v7110 = vadd.f32 %v6795, %v7109
  %v7111 = vpop.f32.mrb[0].mxu0
  %7112 = vmatprep.mubr.bf16.mxu0 0
  %7113 = vmatmul.mubr.bf16.gmra.mrb[0].mxu0 %v6867
  %v7114 = vpop.f32.mrb[0].mxu0
  %v7115 = vadd.f32 %v6795, %v7114
  %v7116 = vpop.f32.mrb[0].mxu0
  %v7117 = vpop.f32.mrb[0].mxu0
  %v7118 = vadd.f32 %v6795, %v7117
  %v7119 = vpop.f32.mrb[0].mxu0
  %7120 = vmatprep.mubr.bf16.mxu0 0
  %7121 = vmatmul.mubr.bf16.gmra.mrb[0].mxu0 %v6870
  %v7122 = vpop.f32.mrb[0].mxu0
  %v7123 = vadd.f32 %v6795, %v7122
  %v7124 = vpop.f32.mrb[0].mxu0
  %v7125 = vpop.f32.mrb[0].mxu0
  %v7126 = vadd.f32 %v6795, %v7125
  %v7127 = vpop.f32.mrb[0].mxu0
  %7128 = vmatprep.mubr.bf16.mxu0 0
  %7129 = vmatmul.mubr.bf16.gmra.mrb[0].mxu0 %v6873
  %v7130 = vpop.f32.mrb[0].mxu0
  %v7131 = vadd.f32 %v6795, %v7130
  %v7132 = vpop.f32.mrb[0].mxu0
  %v7133 = vpop.f32.mrb[0].mxu0
  %v7134 = vadd.f32 %v6795, %v7133
  %v7135 = vpop.f32.mrb[0].mxu0
  %7136 = vmatprep.mubr.bf16.mxu0 0
  %7137 = vmatmul.mubr.bf16.gmra.mrb[0].mxu0 %v6876
  %v7138 = vpop.f32.mrb[0].mxu0
  %v7139 = vadd.f32 %v6795, %v7138
  %v7140 = vpop.f32.mrb[0].mxu0
  %v7141 = vpop.f32.mrb[0].mxu0
  %v7142 = vadd.f32 %v6795, %v7141
  %v7143 = vpop.f32.mrb[0].mxu0
  %7144 = vmatprep.mubr.bf16.mxu0 0
  %7145 = vmatmul.mubr.bf16.gmra.mrb[0].mxu0 %v6879
  %v7146 = vpop.f32.mrb[0].mxu0
  %v7147 = vadd.f32 %v6795, %v7146
  %v7148 = vpop.f32.mrb[0].mxu0
  %v7149 = vpop.f32.mrb[0].mxu0
  %v7150 = vadd.f32 %v6795, %v7149
  %v7151 = vpop.f32.mrb[0].mxu0
  %7152 = vmatprep.mubr.bf16.mxu0 0
  %7153 = vmatmul.mubr.bf16.gmra.mrb[0].mxu0 %v6882
  %v7154 = vpop.f32.mrb[0].mxu0
  %v7155 = vadd.f32 %v6795, %v7154
  %v7156 = vpop.f32.mrb[0].mxu0
  %v7157 = vpop.f32.mrb[0].mxu0
  %v7158 = vadd.f32 %v6795, %v7157
  %v7159 = vpop.f32.mrb[0].mxu0
  %7160 = vmatprep.mubr.bf16.mxu0 0
  %7161 = vmatmul.mubr.bf16.gmra.mrb[0].mxu0 %v6885
  %v7162 = vpop.f32.mrb[0].mxu0
  %v7163 = vadd.f32 %v6795, %v7162
  %v7164 = vpop.f32.mrb[0].mxu0
  %v7165 = vpop.f32.mrb[0].mxu0
  %v7166 = vadd.f32 %v6795, %v7165
  %v7167 = vpop.f32.mrb[0].mxu0
  %7168 = vmatprep.mubr.bf16.mxu0 0
  %7169 = vmatmul.mubr.bf16.gmra.mrb[0].mxu0 %v6888
  %v7170 = vpop.f32.mrb[0].mxu0
  %v7171 = vadd.f32 %v6795, %v7170
  %v7172 = vpop.f32.mrb[0].mxu0
  %v7173 = vpop.f32.mrb[0].mxu0
  %v7174 = vadd.f32 %v6795, %v7173
  %v7175 = vpop.f32.mrb[0].mxu0
  %7176 = vmatprep.mubr.bf16.mxu0 0
  %7177 = vmatmul.mubr.bf16.gmra.mrb[0].mxu0 %v6891
  %v7178 = vpop.f32.mrb[0].mxu0
  %v7179 = vadd.f32 %v6795, %v7178
  %v7180 = vpop.f32.mrb[0].mxu0
  %v7181 = vpop.f32.mrb[0].mxu0
  %v7182 = vadd.f32 %v6795, %v7181
  %v7183 = vpop.f32.mrb[0].mxu0
  %7184 = vdwg.mxu0
  %vm7185 = vcmask 31744
  %7186 = vst.msk [vmem:[%s21] sm:$0xff] %vm7185, %v6931
  %7187 = vst.msk [vmem:[%s21 + $0x8] sm:$0xff] %vm7185, %v6934
  %7188 = vst.msk [vmem:[%s21 + $0x10] sm:$0xff] %vm7185, %v6939
  %7189 = vst.msk [vmem:[%s21 + $0x18] sm:$0xff] %vm7185, %v6942
  %7190 = vst.msk [vmem:[%s21 + $0x20] sm:$0xff] %vm7185, %v6947
  %7191 = vst.msk [vmem:[%s21 + $0x28] sm:$0xff] %vm7185, %v6950
  %7192 = vst.msk [vmem:[%s21 + $0x30] sm:$0xff] %vm7185, %v6955
  %7193 = vst.msk [vmem:[%s21 + $0x38] sm:$0xff] %vm7185, %v6958
  %7194 = vst.msk [vmem:[%s21 + $0x40] sm:$0xff] %vm7185, %v6963
  %7195 = vst.msk [vmem:[%s21 + $0x48] sm:$0xff] %vm7185, %v6966
  %7196 = vst.msk [vmem:[%s21 + $0x50] sm:$0xff] %vm7185, %v6971
  %7197 = vst.msk [vmem:[%s21 + $0x58] sm:$0xff] %vm7185, %v6974
  %7198 = vst.msk [vmem:[%s21 + $0x60] sm:$0xff] %vm7185, %v6979
  %7199 = vst.msk [vmem:[%s21 + $0x68] sm:$0xff] %vm7185, %v6982
  %7200 = vst.msk [vmem:[%s21 + $0x70] sm:$0xff] %vm7185, %v6987
  %7201 = vst.msk [vmem:[%s21 + $0x78] sm:$0xff] %vm7185, %v6990
  %7202 = vst.msk [vmem:[%s21 + $0x80] sm:$0xff] %vm7185, %v6995
  %7203 = vst.msk [vmem:[%s21 + $0x88] sm:$0xff] %vm7185, %v6998
  %7204 = vst.msk [vmem:[%s21 + $0x90] sm:$0xff] %vm7185, %v7003
  %7205 = vst.msk [vmem:[%s21 + $0x98] sm:$0xff] %vm7185, %v7006
  %7206 = vst.msk [vmem:[%s21 + $0xa0] sm:$0xff] %vm7185, %v7011
  %7207 = vst.msk [vmem:[%s21 + $0xa8] sm:$0xff] %vm7185, %v7014
  %7208 = vst.msk [vmem:[%s21 + $0xb0] sm:$0xff] %vm7185, %v7019
  %7209 = vst.msk [vmem:[%s21 + $0xb8] sm:$0xff] %vm7185, %v7022
  %7210 = vst.msk [vmem:[%s21 + $0xc0] sm:$0xff] %vm7185, %v7027
  %7211 = vst.msk [vmem:[%s21 + $0xc8] sm:$0xff] %vm7185, %v7030
  %7212 = vst.msk [vmem:[%s21 + $0xd0] sm:$0xff] %vm7185, %v7035
  %7213 = vst.msk [vmem:[%s21 + $0xd8] sm:$0xff] %vm7185, %v7038
  %7214 = vst.msk [vmem:[%s21 + $0xe0] sm:$0xff] %vm7185, %v7043
  %7215 = vst.msk [vmem:[%s21 + $0xe8] sm:$0xff] %vm7185, %v7046
  %7216 = vst.msk [vmem:[%s21 + $0xf0] sm:$0xff] %vm7185, %v7051
  %7217 = vst.msk [vmem:[%s21 + $0xf8] sm:$0xff] %vm7185, %v7054
  %7218 = vst.msk [vmem:[%s21 + $0x100] sm:$0xff] %vm7185, %v7059
  %7219 = vst.msk [vmem:[%s21 + $0x108] sm:$0xff] %vm7185, %v7062
  %7220 = vst.msk [vmem:[%s21 + $0x110] sm:$0xff] %vm7185, %v7067
  %7221 = vst.msk [vmem:[%s21 + $0x118] sm:$0xff] %vm7185, %v7070
  %7222 = vst.msk [vmem:[%s21 + $0x120] sm:$0xff] %vm7185, %v7075
  %7223 = vst.msk [vmem:[%s21 + $0x128] sm:$0xff] %vm7185, %v7078
  %7224 = vst.msk [vmem:[%s21 + $0x130] sm:$0xff] %vm7185, %v7083
  %7225 = vst.msk [vmem:[%s21 + $0x138] sm:$0xff] %vm7185, %v7086
  %7226 = vst.msk [vmem:[%s21 + $0x140] sm:$0xff] %vm7185, %v7091
  %7227 = vst.msk [vmem:[%s21 + $0x148] sm:$0xff] %vm7185, %v7094
  %7228 = vst.msk [vmem:[%s21 + $0x150] sm:$0xff] %vm7185, %v7099
  %7229 = vst.msk [vmem:[%s21 + $0x158] sm:$0xff] %vm7185, %v7102
  %7230 = vst.msk [vmem:[%s21 + $0x160] sm:$0xff] %vm7185, %v7107
  %7231 = vst.msk [vmem:[%s21 + $0x168] sm:$0xff] %vm7185, %v7110
  %7232 = vst.msk [vmem:[%s21 + $0x170] sm:$0xff] %vm7185, %v7115
  %7233 = vst.msk [vmem:[%s21 + $0x178] sm:$0xff] %vm7185, %v7118
  %7234 = vst.msk [vmem:[%s21 + $0x180] sm:$0xff] %vm7185, %v7123
  %7235 = vst.msk [vmem:[%s21 + $0x188] sm:$0xff] %vm7185, %v7126
  %7236 = vst.msk [vmem:[%s21 + $0x190] sm:$0xff] %vm7185, %v7131
  %7237 = vst.msk [vmem:[%s21 + $0x198] sm:$0xff] %vm7185, %v7134
  %7238 = vst.msk [vmem:[%s21 + $0x1a0] sm:$0xff] %vm7185, %v7139
  %7239 = vst.msk [vmem:[%s21 + $0x1a8] sm:$0xff] %vm7185, %v7142
  %7240 = vst.msk [vmem:[%s21 + $0x1b0] sm:$0xff] %vm7185, %v7147
  %7241 = vst.msk [vmem:[%s21 + $0x1b8] sm:$0xff] %vm7185, %v7150
  %7242 = vst.msk [vmem:[%s21 + $0x1c0] sm:$0xff] %vm7185, %v7155
  %7243 = vst.msk [vmem:[%s21 + $0x1c8] sm:$0xff] %vm7185, %v7158
  %7244 = vst.msk [vmem:[%s21 + $0x1d0] sm:$0xff] %vm7185, %v7163
  %7245 = vst.msk [vmem:[%s21 + $0x1d8] sm:$0xff] %vm7185, %v7166
  %7246 = vst.msk [vmem:[%s21 + $0x1e0] sm:$0xff] %vm7185, %v7171
  %7247 = vst.msk [vmem:[%s21 + $0x1e8] sm:$0xff] %vm7185, %v7174
  %7248 = vst.msk [vmem:[%s21 + $0x1f0] sm:$0xff] %vm7185, %v7179
  %7249 = vst.msk [vmem:[%s21 + $0x1f8] sm:$0xff] %vm7185, %v7182
  // Predicated region
  $region82: #{tpu_custom_call.1} parent=0 // pred_check
    _
  $region83: #{tpu_custom_call.1} parent=0 // pred_check_branch
    %7251 = sbr.rel (0) target = $region85
  $region84: #{tpu_custom_call.1} parent=0 // pred_region
    _
  $region85: #{tpu_custom_call.1} parent=0 // pred_fallthru
    _
  // Predicated region
  $region86: #{tpu_custom_call.1} parent=0 // pred_check
    _
  $region87: #{tpu_custom_call.1} parent=0 // pred_check_branch
    %7253 = sbr.rel (0) target = $region89
  $region88: #{tpu_custom_call.1} parent=0 // pred_region
    _
  $region89: #{tpu_custom_call.1} parent=0 // pred_fallthru
    _
  // Predicated region
  $region90: #{tpu_custom_call.1} parent=0 // pred_check
    _
  $region91: #{tpu_custom_call.1} parent=0 // pred_check_branch
    %7255 = sbr.rel (0) target = $region93
  $region92: #{tpu_custom_call.1} parent=0 // pred_region
    _
  $region93: #{tpu_custom_call.1} parent=0 // pred_fallthru
    _
  // Predicated region
  $region94: #{tpu_custom_call.1} parent=0 // pred_check
    _
  $region95: #{tpu_custom_call.1} parent=0 // pred_check_branch
    %7257 = sbr.rel (0) target = $region97
  $region96: #{tpu_custom_call.1} parent=0 // pred_region
    _
  $region97: #{tpu_custom_call.1} parent=0 // pred_fallthru
    _

</llo_original>
